<compile_context>
chip_gen: v7x
topology: tpu7x:2x2x1
jax: 0.10.0
libtpu: 0.0.40
codegen_flags: <defaults>
</compile_context>

<pallas_src>
import numpy as np
import jax
import jax.numpy as jnp
from jax import lax
from jax.experimental import pallas as pl
from jax.experimental.pallas import tpu as pltpu


def _pad2d(a, p):
    """Zero-pad the first two (spatial) dims of an (A, B, C) value by p."""
    A, B, C = a.shape
    z0 = jnp.zeros((p, B, C), a.dtype)
    a = jnp.concatenate([z0, a, z0], axis=0)
    z1 = jnp.zeros((A + 2 * p, p, C), a.dtype)
    return jnp.concatenate([z1, a, z1], axis=1)


def _automap_ifft_kernel(w1_ref, b1_ref,   # (75, 64) f32, (1, 64) f32   folded conv_1tom1
                         w2_ref, b2_ref,   # (5, 320, 64) bf16, (1, 64) f32  conv_m1tom2
                         w3_ref, b3_ref,   # (64, 98) bf16, (1, 2) f32   conv_transpose_m2to2
                         x_ref,            # (A, B, 2) f32
                         o_ref):           # (A, B, 2) f32
    A, B, _ = x_ref.shape
    M1 = b1_ref.shape[1]                   # 64
    M2 = b2_ref.shape[1]                   # 64
    N3 = w3_ref.shape[1]                   # 98 = 49 taps * 2 out channels

    # ---- stage 1: folded 1x1 chain + conv_1tom1 (5x5, 3->64), ReLU --------
    # The folded 1x1 constant term uses the all-ones third channel; padding it
    # with zeros reproduces the original "pad after the 1x1s" semantics exactly.
    ones = jnp.ones((A, B, 1), jnp.float32)
    x3 = jnp.concatenate([x_ref[...], ones], axis=-1)                 # (A, B, 3)
    x3p = _pad2d(x3, 2)                                               # (A+4, B+4, 3)
    xcat = jnp.concatenate([x3p[:, dx:dx + B, :] for dx in range(5)],
                           axis=-1)                                   # (A+4, B, 15)
    xim = jnp.concatenate([xcat[dy:dy + A] for dy in range(5)],
                          axis=-1).reshape(A * B, 5 * 5 * 3)          # (A*B, 75)
    a1 = jnp.dot(xim, w1_ref[...], preferred_element_type=jnp.float32)
    a1 = jnp.maximum(a1 + b1_ref[...], 0.0).astype(jnp.bfloat16)      # (A*B, 64)

    # ---- stage 2: conv_m1tom2 (5x5, 64->64), ReLU -------------------------
    # dx-shifted copies are stacked along K once (5 relayout copies total);
    # each dy is a leading-axis slice (no relayout) -> 5 matmuls with K=320.
    a1p = _pad2d(a1.reshape(A, B, M1), 2)                             # (A+4, B+4, 64) bf16
    a1cat = jnp.concatenate([a1p[:, dx:dx + B, :] for dx in range(5)],
                            axis=-1)                                  # (A+4, B, 320) bf16
    acc2 = jnp.zeros((A * B, M2), jnp.float32) + b2_ref[...]
    for dy in range(5):                                               # short loop, tiny live set
        sh = a1cat[dy:dy + A].reshape(A * B, 5 * M1)
        acc2 = acc2 + jnp.dot(sh, w2_ref[dy],
                              preferred_element_type=jnp.float32)
    a2 = jnp.maximum(acc2, 0.0).astype(jnp.bfloat16)                  # (A*B, 64)

    # ---- stage 3: conv_transpose_m2to2 == 7x7 conv, flipped kernel, pad 3 --
    # One MXU matmul produces all 49 tap x 2 channel partial results; the
    # spatial gathering is 49 small VPU shift-adds on otherwise idle slots.
    z = jnp.dot(a2, w3_ref[...], preferred_element_type=jnp.float32)  # (A*B, 98)
    zp = _pad2d(z.reshape(A, B, N3), 3)                               # (A+6, B+6, 98)
    acc3 = jnp.zeros((A, B, 2), jnp.float32) + b3_ref[...]
    for dy in range(7):
        for dx in range(7):
            c = (dy * 7 + dx) * 2
            acc3 = acc3 + zp[dy:dy + A, dx:dx + B, c:c + 2]
    o_ref[...] = acc3


@jax.jit
def automap_ifft(x, kernel_params):
    """x: (1, H, W, 2) float32 -> (1, H, W, 2) float32 (mirrors torch forward)."""
    w1, b1, w2, b2, w3, b3 = kernel_params
    _, H, W, _ = x.shape
    A, B = W, H                                               # torch conv spatial axes
    xk = jnp.transpose(x[0], (1, 0, 2)).astype(jnp.float32)   # (W, H, 2)

    vmem = pl.BlockSpec(memory_space=pltpu.MemorySpace.VMEM)

    out_k = pl.pallas_call(
        _automap_ifft_kernel,
        out_shape=jax.ShapeDtypeStruct((A, B, 2), jnp.float32),
        in_specs=[vmem, vmem, vmem, vmem, vmem, vmem, vmem],
        out_specs=vmem,
    )(w1, b1, w2, b2, w3, b3, xk)

    return jnp.transpose(out_k, (1, 0, 2))[None]              # (1, H, W, 2)


def init_params(key):
    """Deterministic weights in torch layouts, plus kernel-layout versions."""
    ks = jax.random.split(key, 12)

    def u(k, shape, fan_in):
        bnd = 1.0 / float(fan_in) ** 0.5
        return jax.random.uniform(k, shape, jnp.float32, -bnd, bnd)

    # torch-layout parameters (Conv2d: OIHW, ConvTranspose2d: IOHW)
    tp = dict(
        w_2to1=u(ks[0], (1, 2, 1, 1), 2),        b_2to1=u(ks[1], (1,), 2),
        w_low=u(ks[2], (1, 1, 1, 1), 1),         b_low=u(ks[3], (1,), 1),
        w_high=u(ks[4], (1, 1, 1, 1), 1),        b_high=u(ks[5], (1,), 1),
        w_1tom1=u(ks[6], (64, 1, 5, 5), 25),     b_1tom1=u(ks[7], (64,), 25),
        w_m1tom2=u(ks[8], (64, 64, 5, 5), 64 * 25), b_m1tom2=u(ks[9], (64,), 64 * 25),
        w_tm2to2=u(ks[10], (64, 2, 7, 7), 64 * 49), b_tm2to2=u(ks[11], (2,), 64 * 49),
    )

    # Fold conv_2to1 -> conv_1to1_low -> conv_1to1_high into one per-pixel
    # affine y = alpha*x0 + beta*x1 + gamma, then bake (alpha, beta, gamma)
    # into conv_1tom1 as three input channels (third channel = ones plane).
    w20 = tp['w_2to1'][0, :, 0, 0]
    wl, bl = tp['w_low'][0, 0, 0, 0], tp['b_low'][0]
    wh, bh = tp['w_high'][0, 0, 0, 0], tp['b_high'][0]
    alpha = wh * wl * w20[0]
    beta = wh * wl * w20[1]
    gamma = wh * (wl * tp['b_2to1'][0] + bl) + bh

    base1 = jnp.transpose(tp['w_1tom1'], (2, 3, 1, 0))            # (5,5,1,64) [dy,dx,0,o]
    k_w1 = jnp.concatenate([alpha * base1, beta * base1, gamma * base1],
                           axis=2).reshape(75, 64)                # row = dy*15 + dx*3 + c
    k_b1 = tp['b_1tom1'].reshape(1, 64)

    # conv_m1tom2 weights, K stacked per dy: (5, 5*64, 64), bf16 MXU operands.
    k_w2 = jnp.transpose(tp['w_m1tom2'], (2, 3, 1, 0)).reshape(5, 5 * 64, 64)
    k_w2 = k_w2.astype(jnp.bfloat16)
    k_b2 = tp['b_m1tom2'].reshape(1, 64)

    # ConvTranspose2d(7, stride 1, pad 3) == conv with flipped kernel, pad 3.
    # Flattened so column (dy*7+dx)*2 + o holds w_eq[o, :, dy, dx].
    k_w3 = jnp.transpose(jnp.flip(tp['w_tm2to2'], (2, 3)), (0, 2, 3, 1))
    k_w3 = k_w3.reshape(64, 98).astype(jnp.bfloat16)
    k_b3 = tp['b_tm2to2'].reshape(1, 2)

    return (k_w1, k_b1, k_w2, k_b2, k_w3, k_b3), tp


def reference_ifft(x, tp):
    """Pure-JAX (XLA conv, f32) reference mirroring the torch forward exactly."""
    def conv(z, w, b, p):
        out = lax.conv_general_dilated(
            z, w, window_strides=(1, 1), padding=[(p, p), (p, p)],
            dimension_numbers=('NCHW', 'OIHW', 'NCHW'),
            precision=lax.Precision.HIGHEST)
        return out + b[None, :, None, None]

    z = jnp.transpose(x, (0, 3, 2, 1))                    # x.transpose(-1,-3): (1,2,W,H)
    z = conv(z, tp['w_2to1'], tp['b_2to1'], 0)
    z = conv(z, tp['w_low'], tp['b_low'], 0)
    z = conv(z, tp['w_high'], tp['b_high'], 0)
    z = jax.nn.relu(conv(z, tp['w_1tom1'], tp['b_1tom1'], 2))
    z = jax.nn.relu(conv(z, tp['w_m1tom2'], tp['b_m1tom2'], 2))
    w_eq = jnp.transpose(jnp.flip(tp['w_tm2to2'], (2, 3)), (1, 0, 2, 3))  # (2,64,7,7)
    z = conv(z, w_eq, tp['b_tm2to2'], 3)                  # ConvTranspose2d(7, pad=3) equiv.
    return jnp.transpose(z[0], (2, 1, 0))[None]           # transpose(-1,-3).unsqueeze(0)


if __name__ == "__main__":
    key = jax.random.PRNGKey(0)
    kx, kp = jax.random.split(key)
    H, W = 16, 16
    x = jax.random.normal(kx, (1, H, W, 2), jnp.float32)

    kernel_params, torch_params = init_params(kp)

    out = automap_ifft(x, kernel_params)
    out = jax.block_until_ready(out)
    assert out.shape == (1, H, W, 2)

    ref = reference_ifft(x, torch_params)
    # The two large matmul stages use bf16 operands with f32 accumulation on
    # the MXU (per the perf review); 1e-2 comfortably covers the bf16 operand
    # rounding relative to the pure-f32 reference.
    np.testing.assert_allclose(np.asarray(out), np.asarray(ref), rtol=1e-2, atol=1e-2)

    print("KERNEL_OK")
</pallas_src>

<mosaic_0001>
module attributes {stable_mosaic.version = 11 : i64} {
  func.func @_automap_ifft_kernel(%arg0: memref<75x64xf32, #tpu.memory_space<vmem>>, %arg1: memref<1x64xf32, #tpu.memory_space<vmem>>, %arg2: memref<5x320x64xbf16, #tpu.memory_space<vmem>>, %arg3: memref<1x64xf32, #tpu.memory_space<vmem>>, %arg4: memref<64x98xbf16, #tpu.memory_space<vmem>>, %arg5: memref<1x2xf32, #tpu.memory_space<vmem>>, %arg6: memref<16x16x2xf32, #tpu.memory_space<vmem>>, %arg7: memref<16x16x2xf32, #tpu.memory_space<vmem>>) attributes {dimension_semantics = [], scalar_prefetch = 0 : i64, scratch_operands = 0 : i64, tpu.core_type = #tpu.core_type<tc>} {
    %cst = arith.constant 1.000000e+00 : f32
    %0 = vector.broadcast %cst : f32 to vector<16x16x1xf32>
    %c0 = arith.constant 0 : index
    %c0_0 = arith.constant 0 : index
    %c0_1 = arith.constant 0 : index
    %1 = vector.load %arg6[%c0, %c0_0, %c0_1] : memref<16x16x2xf32, #tpu.memory_space<vmem>>, vector<16x16x2xf32>
    %2 = tpu.concatenate %1, %0 in 2 : vector<16x16x2xf32>, vector<16x16x1xf32> -> vector<16x16x3xf32>
    %cst_2 = arith.constant 0.000000e+00 : f32
    %3 = vector.broadcast %cst_2 : f32 to vector<2x16x3xf32>
    %4 = tpu.concatenate %3, %2, %3 in 0 : vector<2x16x3xf32>, vector<16x16x3xf32>, vector<2x16x3xf32> -> vector<20x16x3xf32>
    %cst_3 = arith.constant 0.000000e+00 : f32
    %5 = vector.broadcast %cst_3 : f32 to vector<20x2x3xf32>
    %6 = tpu.concatenate %5, %4, %5 in 1 : vector<20x2x3xf32>, vector<20x16x3xf32>, vector<20x2x3xf32> -> vector<20x20x3xf32>
    %7 = vector.extract_strided_slice %6 {offsets = [0, 0, 0], sizes = [20, 16, 3], strides = [1, 1, 1]} : vector<20x20x3xf32> to vector<20x16x3xf32>
    %8 = vector.extract_strided_slice %6 {offsets = [0, 1, 0], sizes = [20, 16, 3], strides = [1, 1, 1]} : vector<20x20x3xf32> to vector<20x16x3xf32>
    %9 = vector.extract_strided_slice %6 {offsets = [0, 2, 0], sizes = [20, 16, 3], strides = [1, 1, 1]} : vector<20x20x3xf32> to vector<20x16x3xf32>
    %10 = vector.extract_strided_slice %6 {offsets = [0, 3, 0], sizes = [20, 16, 3], strides = [1, 1, 1]} : vector<20x20x3xf32> to vector<20x16x3xf32>
    %11 = vector.extract_strided_slice %6 {offsets = [0, 4, 0], sizes = [20, 16, 3], strides = [1, 1, 1]} : vector<20x20x3xf32> to vector<20x16x3xf32>
    %12 = tpu.concatenate %7, %8, %9, %10, %11 in 2 : vector<20x16x3xf32>, vector<20x16x3xf32>, vector<20x16x3xf32>, vector<20x16x3xf32>, vector<20x16x3xf32> -> vector<20x16x15xf32>
    %13 = vector.extract_strided_slice %12 {offsets = [0, 0, 0], sizes = [16, 16, 15], strides = [1, 1, 1]} : vector<20x16x15xf32> to vector<16x16x15xf32>
    %14 = vector.extract_strided_slice %12 {offsets = [1, 0, 0], sizes = [16, 16, 15], strides = [1, 1, 1]} : vector<20x16x15xf32> to vector<16x16x15xf32>
    %15 = vector.extract_strided_slice %12 {offsets = [2, 0, 0], sizes = [16, 16, 15], strides = [1, 1, 1]} : vector<20x16x15xf32> to vector<16x16x15xf32>
    %16 = vector.extract_strided_slice %12 {offsets = [3, 0, 0], sizes = [16, 16, 15], strides = [1, 1, 1]} : vector<20x16x15xf32> to vector<16x16x15xf32>
    %17 = vector.extract_strided_slice %12 {offsets = [4, 0, 0], sizes = [16, 16, 15], strides = [1, 1, 1]} : vector<20x16x15xf32> to vector<16x16x15xf32>
    %18 = tpu.concatenate %13, %14, %15, %16, %17 in 2 : vector<16x16x15xf32>, vector<16x16x15xf32>, vector<16x16x15xf32>, vector<16x16x15xf32>, vector<16x16x15xf32> -> vector<16x16x75xf32>
    %19 = vector.shape_cast %18 : vector<16x16x75xf32> to vector<256x75xf32>
    %c0_4 = arith.constant 0 : index
    %c0_5 = arith.constant 0 : index
    %20 = vector.load %arg0[%c0_4, %c0_5] : memref<75x64xf32, #tpu.memory_space<vmem>>, vector<75x64xf32>
    %cst_6 = arith.constant dense<0.000000e+00> : vector<256x64xf32>
    %21 = tpu.matmul %19, %20, %cst_6 {dimension_numbers = #tpu.dot_dimension_numbers<[1], [0], [0], [1], [0, 0, 1, 1], [], []>} : vector<256x75xf32>, vector<75x64xf32>, vector<256x64xf32> -> vector<256x64xf32>
    %c0_7 = arith.constant 0 : index
    %c0_8 = arith.constant 0 : index
    %22 = vector.load %arg1[%c0_7, %c0_8] : memref<1x64xf32, #tpu.memory_space<vmem>>, vector<1x64xf32>
    %23 = vector.broadcast %22 : vector<1x64xf32> to vector<256x64xf32>
    %24 = arith.addf %21, %23 : vector<256x64xf32>
    %cst_9 = arith.constant 0.000000e+00 : f32
    %25 = vector.broadcast %cst_9 : f32 to vector<256x64xf32>
    %26 = arith.maximumf %24, %25 : vector<256x64xf32>
    %27 = arith.truncf %26 : vector<256x64xf32> to vector<256x64xbf16>
    %28 = vector.shape_cast %27 : vector<256x64xbf16> to vector<16x16x64xbf16>
    %cst_10 = arith.constant 0.000000e+00 : bf16
    %29 = vector.broadcast %cst_10 : bf16 to vector<2x16x64xbf16>
    %30 = tpu.concatenate %29, %28, %29 in 0 : vector<2x16x64xbf16>, vector<16x16x64xbf16>, vector<2x16x64xbf16> -> vector<20x16x64xbf16>
    %cst_11 = arith.constant 0.000000e+00 : bf16
    %31 = vector.broadcast %cst_11 : bf16 to vector<20x2x64xbf16>
    %32 = tpu.concatenate %31, %30, %31 in 1 : vector<20x2x64xbf16>, vector<20x16x64xbf16>, vector<20x2x64xbf16> -> vector<20x20x64xbf16>
    %33 = vector.extract_strided_slice %32 {offsets = [0, 0, 0], sizes = [20, 16, 64], strides = [1, 1, 1]} : vector<20x20x64xbf16> to vector<20x16x64xbf16>
    %34 = vector.extract_strided_slice %32 {offsets = [0, 1, 0], sizes = [20, 16, 64], strides = [1, 1, 1]} : vector<20x20x64xbf16> to vector<20x16x64xbf16>
    %35 = vector.extract_strided_slice %32 {offsets = [0, 2, 0], sizes = [20, 16, 64], strides = [1, 1, 1]} : vector<20x20x64xbf16> to vector<20x16x64xbf16>
    %36 = vector.extract_strided_slice %32 {offsets = [0, 3, 0], sizes = [20, 16, 64], strides = [1, 1, 1]} : vector<20x20x64xbf16> to vector<20x16x64xbf16>
    %37 = vector.extract_strided_slice %32 {offsets = [0, 4, 0], sizes = [20, 16, 64], strides = [1, 1, 1]} : vector<20x20x64xbf16> to vector<20x16x64xbf16>
    %38 = tpu.concatenate %33, %34, %35, %36, %37 in 2 : vector<20x16x64xbf16>, vector<20x16x64xbf16>, vector<20x16x64xbf16>, vector<20x16x64xbf16>, vector<20x16x64xbf16> -> vector<20x16x320xbf16>
    %cst_12 = arith.constant 0.000000e+00 : f32
    %39 = vector.broadcast %cst_12 : f32 to vector<256x64xf32>
    %c0_13 = arith.constant 0 : index
    %c0_14 = arith.constant 0 : index
    %40 = vector.load %arg3[%c0_13, %c0_14] : memref<1x64xf32, #tpu.memory_space<vmem>>, vector<1x64xf32>
    %41 = vector.broadcast %40 : vector<1x64xf32> to vector<256x64xf32>
    %42 = arith.addf %39, %41 : vector<256x64xf32>
    %43 = vector.extract_strided_slice %38 {offsets = [0, 0, 0], sizes = [16, 16, 320], strides = [1, 1, 1]} : vector<20x16x320xbf16> to vector<16x16x320xbf16>
    %44 = vector.shape_cast %43 : vector<16x16x320xbf16> to vector<256x320xbf16>
    %c0_15 = arith.constant 0 : index
    %c0_16 = arith.constant 0 : index
    %c0_17 = arith.constant 0 : index
    %45 = vector.load %arg2[%c0_15, %c0_16, %c0_17] : memref<5x320x64xbf16, #tpu.memory_space<vmem>>, vector<1x320x64xbf16>
    %46 = vector.shape_cast %45 : vector<1x320x64xbf16> to vector<320x64xbf16>
    %cst_18 = arith.constant dense<0.000000e+00> : vector<256x64xf32>
    %47 = tpu.matmul %44, %46, %cst_18 {dimension_numbers = #tpu.dot_dimension_numbers<[1], [0], [0], [1], [0, 0, 1, 1], [], []>} : vector<256x320xbf16>, vector<320x64xbf16>, vector<256x64xf32> -> vector<256x64xf32>
    %48 = arith.addf %42, %47 : vector<256x64xf32>
    %49 = vector.extract_strided_slice %38 {offsets = [1, 0, 0], sizes = [16, 16, 320], strides = [1, 1, 1]} : vector<20x16x320xbf16> to vector<16x16x320xbf16>
    %50 = vector.shape_cast %49 : vector<16x16x320xbf16> to vector<256x320xbf16>
    %c1 = arith.constant 1 : index
    %c0_19 = arith.constant 0 : index
    %c0_20 = arith.constant 0 : index
    %51 = vector.load %arg2[%c1, %c0_19, %c0_20] : memref<5x320x64xbf16, #tpu.memory_space<vmem>>, vector<1x320x64xbf16>
    %52 = vector.shape_cast %51 : vector<1x320x64xbf16> to vector<320x64xbf16>
    %cst_21 = arith.constant dense<0.000000e+00> : vector<256x64xf32>
    %53 = tpu.matmul %50, %52, %cst_21 {dimension_numbers = #tpu.dot_dimension_numbers<[1], [0], [0], [1], [0, 0, 1, 1], [], []>} : vector<256x320xbf16>, vector<320x64xbf16>, vector<256x64xf32> -> vector<256x64xf32>
    %54 = arith.addf %48, %53 : vector<256x64xf32>
    %55 = vector.extract_strided_slice %38 {offsets = [2, 0, 0], sizes = [16, 16, 320], strides = [1, 1, 1]} : vector<20x16x320xbf16> to vector<16x16x320xbf16>
    %56 = vector.shape_cast %55 : vector<16x16x320xbf16> to vector<256x320xbf16>
    %c2 = arith.constant 2 : index
    %c0_22 = arith.constant 0 : index
    %c0_23 = arith.constant 0 : index
    %57 = vector.load %arg2[%c2, %c0_22, %c0_23] : memref<5x320x64xbf16, #tpu.memory_space<vmem>>, vector<1x320x64xbf16>
    %58 = vector.shape_cast %57 : vector<1x320x64xbf16> to vector<320x64xbf16>
    %cst_24 = arith.constant dense<0.000000e+00> : vector<256x64xf32>
    %59 = tpu.matmul %56, %58, %cst_24 {dimension_numbers = #tpu.dot_dimension_numbers<[1], [0], [0], [1], [0, 0, 1, 1], [], []>} : vector<256x320xbf16>, vector<320x64xbf16>, vector<256x64xf32> -> vector<256x64xf32>
    %60 = arith.addf %54, %59 : vector<256x64xf32>
    %61 = vector.extract_strided_slice %38 {offsets = [3, 0, 0], sizes = [16, 16, 320], strides = [1, 1, 1]} : vector<20x16x320xbf16> to vector<16x16x320xbf16>
    %62 = vector.shape_cast %61 : vector<16x16x320xbf16> to vector<256x320xbf16>
    %c3 = arith.constant 3 : index
    %c0_25 = arith.constant 0 : index
    %c0_26 = arith.constant 0 : index
    %63 = vector.load %arg2[%c3, %c0_25, %c0_26] : memref<5x320x64xbf16, #tpu.memory_space<vmem>>, vector<1x320x64xbf16>
    %64 = vector.shape_cast %63 : vector<1x320x64xbf16> to vector<320x64xbf16>
    %cst_27 = arith.constant dense<0.000000e+00> : vector<256x64xf32>
    %65 = tpu.matmul %62, %64, %cst_27 {dimension_numbers = #tpu.dot_dimension_numbers<[1], [0], [0], [1], [0, 0, 1, 1], [], []>} : vector<256x320xbf16>, vector<320x64xbf16>, vector<256x64xf32> -> vector<256x64xf32>
    %66 = arith.addf %60, %65 : vector<256x64xf32>
    %67 = vector.extract_strided_slice %38 {offsets = [4, 0, 0], sizes = [16, 16, 320], strides = [1, 1, 1]} : vector<20x16x320xbf16> to vector<16x16x320xbf16>
    %68 = vector.shape_cast %67 : vector<16x16x320xbf16> to vector<256x320xbf16>
    %c4 = arith.constant 4 : index
    %c0_28 = arith.constant 0 : index
    %c0_29 = arith.constant 0 : index
    %69 = vector.load %arg2[%c4, %c0_28, %c0_29] : memref<5x320x64xbf16, #tpu.memory_space<vmem>>, vector<1x320x64xbf16>
    %70 = vector.shape_cast %69 : vector<1x320x64xbf16> to vector<320x64xbf16>
    %cst_30 = arith.constant dense<0.000000e+00> : vector<256x64xf32>
    %71 = tpu.matmul %68, %70, %cst_30 {dimension_numbers = #tpu.dot_dimension_numbers<[1], [0], [0], [1], [0, 0, 1, 1], [], []>} : vector<256x320xbf16>, vector<320x64xbf16>, vector<256x64xf32> -> vector<256x64xf32>
    %72 = arith.addf %66, %71 : vector<256x64xf32>
    %cst_31 = arith.constant 0.000000e+00 : f32
    %73 = vector.broadcast %cst_31 : f32 to vector<256x64xf32>
    %74 = arith.maximumf %72, %73 : vector<256x64xf32>
    %75 = arith.truncf %74 : vector<256x64xf32> to vector<256x64xbf16>
    %c0_32 = arith.constant 0 : index
    %c0_33 = arith.constant 0 : index
    %76 = vector.load %arg4[%c0_32, %c0_33] : memref<64x98xbf16, #tpu.memory_space<vmem>>, vector<64x98xbf16>
    %cst_34 = arith.constant dense<0.000000e+00> : vector<256x98xf32>
    %77 = tpu.matmul %75, %76, %cst_34 {dimension_numbers = #tpu.dot_dimension_numbers<[1], [0], [0], [1], [0, 0, 1, 1], [], []>} : vector<256x64xbf16>, vector<64x98xbf16>, vector<256x98xf32> -> vector<256x98xf32>
    %78 = vector.shape_cast %77 : vector<256x98xf32> to vector<16x16x98xf32>
    %cst_35 = arith.constant 0.000000e+00 : f32
    %79 = vector.broadcast %cst_35 : f32 to vector<3x16x98xf32>
    %80 = tpu.concatenate %79, %78, %79 in 0 : vector<3x16x98xf32>, vector<16x16x98xf32>, vector<3x16x98xf32> -> vector<22x16x98xf32>
    %cst_36 = arith.constant 0.000000e+00 : f32
    %81 = vector.broadcast %cst_36 : f32 to vector<22x3x98xf32>
    %82 = tpu.concatenate %81, %80, %81 in 1 : vector<22x3x98xf32>, vector<22x16x98xf32>, vector<22x3x98xf32> -> vector<22x22x98xf32>
    %cst_37 = arith.constant 0.000000e+00 : f32
    %83 = vector.broadcast %cst_37 : f32 to vector<16x16x2xf32>
    %c0_38 = arith.constant 0 : index
    %c0_39 = arith.constant 0 : index
    %84 = vector.load %arg5[%c0_38, %c0_39] : memref<1x2xf32, #tpu.memory_space<vmem>>, vector<1x2xf32>
    %85 = vector.shape_cast %84 : vector<1x2xf32> to vector<1x1x2xf32>
    %86 = vector.broadcast %85 : vector<1x1x2xf32> to vector<16x16x2xf32>
    %87 = arith.addf %83, %86 : vector<16x16x2xf32>
    %88 = vector.extract_strided_slice %82 {offsets = [0, 0, 0], sizes = [16, 16, 2], strides = [1, 1, 1]} : vector<22x22x98xf32> to vector<16x16x2xf32>
    %89 = arith.addf %87, %88 : vector<16x16x2xf32>
    %90 = vector.extract_strided_slice %82 {offsets = [0, 1, 2], sizes = [16, 16, 2], strides = [1, 1, 1]} : vector<22x22x98xf32> to vector<16x16x2xf32>
    %91 = arith.addf %89, %90 : vector<16x16x2xf32>
    %92 = vector.extract_strided_slice %82 {offsets = [0, 2, 4], sizes = [16, 16, 2], strides = [1, 1, 1]} : vector<22x22x98xf32> to vector<16x16x2xf32>
    %93 = arith.addf %91, %92 : vector<16x16x2xf32>
    %94 = vector.extract_strided_slice %82 {offsets = [0, 3, 6], sizes = [16, 16, 2], strides = [1, 1, 1]} : vector<22x22x98xf32> to vector<16x16x2xf32>
    %95 = arith.addf %93, %94 : vector<16x16x2xf32>
    %96 = vector.extract_strided_slice %82 {offsets = [0, 4, 8], sizes = [16, 16, 2], strides = [1, 1, 1]} : vector<22x22x98xf32> to vector<16x16x2xf32>
    %97 = arith.addf %95, %96 : vector<16x16x2xf32>
    %98 = vector.extract_strided_slice %82 {offsets = [0, 5, 10], sizes = [16, 16, 2], strides = [1, 1, 1]} : vector<22x22x98xf32> to vector<16x16x2xf32>
    %99 = arith.addf %97, %98 : vector<16x16x2xf32>
    %100 = vector.extract_strided_slice %82 {offsets = [0, 6, 12], sizes = [16, 16, 2], strides = [1, 1, 1]} : vector<22x22x98xf32> to vector<16x16x2xf32>
    %101 = arith.addf %99, %100 : vector<16x16x2xf32>
    %102 = vector.extract_strided_slice %82 {offsets = [1, 0, 14], sizes = [16, 16, 2], strides = [1, 1, 1]} : vector<22x22x98xf32> to vector<16x16x2xf32>
    %103 = arith.addf %101, %102 : vector<16x16x2xf32>
    %104 = vector.extract_strided_slice %82 {offsets = [1, 1, 16], sizes = [16, 16, 2], strides = [1, 1, 1]} : vector<22x22x98xf32> to vector<16x16x2xf32>
    %105 = arith.addf %103, %104 : vector<16x16x2xf32>
    %106 = vector.extract_strided_slice %82 {offsets = [1, 2, 18], sizes = [16, 16, 2], strides = [1, 1, 1]} : vector<22x22x98xf32> to vector<16x16x2xf32>
    %107 = arith.addf %105, %106 : vector<16x16x2xf32>
    %108 = vector.extract_strided_slice %82 {offsets = [1, 3, 20], sizes = [16, 16, 2], strides = [1, 1, 1]} : vector<22x22x98xf32> to vector<16x16x2xf32>
    %109 = arith.addf %107, %108 : vector<16x16x2xf32>
    %110 = vector.extract_strided_slice %82 {offsets = [1, 4, 22], sizes = [16, 16, 2], strides = [1, 1, 1]} : vector<22x22x98xf32> to vector<16x16x2xf32>
    %111 = arith.addf %109, %110 : vector<16x16x2xf32>
    %112 = vector.extract_strided_slice %82 {offsets = [1, 5, 24], sizes = [16, 16, 2], strides = [1, 1, 1]} : vector<22x22x98xf32> to vector<16x16x2xf32>
    %113 = arith.addf %111, %112 : vector<16x16x2xf32>
    %114 = vector.extract_strided_slice %82 {offsets = [1, 6, 26], sizes = [16, 16, 2], strides = [1, 1, 1]} : vector<22x22x98xf32> to vector<16x16x2xf32>
    %115 = arith.addf %113, %114 : vector<16x16x2xf32>
    %116 = vector.extract_strided_slice %82 {offsets = [2, 0, 28], sizes = [16, 16, 2], strides = [1, 1, 1]} : vector<22x22x98xf32> to vector<16x16x2xf32>
    %117 = arith.addf %115, %116 : vector<16x16x2xf32>
    %118 = vector.extract_strided_slice %82 {offsets = [2, 1, 30], sizes = [16, 16, 2], strides = [1, 1, 1]} : vector<22x22x98xf32> to vector<16x16x2xf32>
    %119 = arith.addf %117, %118 : vector<16x16x2xf32>
    %120 = vector.extract_strided_slice %82 {offsets = [2, 2, 32], sizes = [16, 16, 2], strides = [1, 1, 1]} : vector<22x22x98xf32> to vector<16x16x2xf32>
    %121 = arith.addf %119, %120 : vector<16x16x2xf32>
    %122 = vector.extract_strided_slice %82 {offsets = [2, 3, 34], sizes = [16, 16, 2], strides = [1, 1, 1]} : vector<22x22x98xf32> to vector<16x16x2xf32>
    %123 = arith.addf %121, %122 : vector<16x16x2xf32>
    %124 = vector.extract_strided_slice %82 {offsets = [2, 4, 36], sizes = [16, 16, 2], strides = [1, 1, 1]} : vector<22x22x98xf32> to vector<16x16x2xf32>
    %125 = arith.addf %123, %124 : vector<16x16x2xf32>
    %126 = vector.extract_strided_slice %82 {offsets = [2, 5, 38], sizes = [16, 16, 2], strides = [1, 1, 1]} : vector<22x22x98xf32> to vector<16x16x2xf32>
    %127 = arith.addf %125, %126 : vector<16x16x2xf32>
    %128 = vector.extract_strided_slice %82 {offsets = [2, 6, 40], sizes = [16, 16, 2], strides = [1, 1, 1]} : vector<22x22x98xf32> to vector<16x16x2xf32>
    %129 = arith.addf %127, %128 : vector<16x16x2xf32>
    %130 = vector.extract_strided_slice %82 {offsets = [3, 0, 42], sizes = [16, 16, 2], strides = [1, 1, 1]} : vector<22x22x98xf32> to vector<16x16x2xf32>
    %131 = arith.addf %129, %130 : vector<16x16x2xf32>
    %132 = vector.extract_strided_slice %82 {offsets = [3, 1, 44], sizes = [16, 16, 2], strides = [1, 1, 1]} : vector<22x22x98xf32> to vector<16x16x2xf32>
    %133 = arith.addf %131, %132 : vector<16x16x2xf32>
    %134 = vector.extract_strided_slice %82 {offsets = [3, 2, 46], sizes = [16, 16, 2], strides = [1, 1, 1]} : vector<22x22x98xf32> to vector<16x16x2xf32>
    %135 = arith.addf %133, %134 : vector<16x16x2xf32>
    %136 = vector.extract_strided_slice %82 {offsets = [3, 3, 48], sizes = [16, 16, 2], strides = [1, 1, 1]} : vector<22x22x98xf32> to vector<16x16x2xf32>
    %137 = arith.addf %135, %136 : vector<16x16x2xf32>
    %138 = vector.extract_strided_slice %82 {offsets = [3, 4, 50], sizes = [16, 16, 2], strides = [1, 1, 1]} : vector<22x22x98xf32> to vector<16x16x2xf32>
    %139 = arith.addf %137, %138 : vector<16x16x2xf32>
    %140 = vector.extract_strided_slice %82 {offsets = [3, 5, 52], sizes = [16, 16, 2], strides = [1, 1, 1]} : vector<22x22x98xf32> to vector<16x16x2xf32>
    %141 = arith.addf %139, %140 : vector<16x16x2xf32>
    %142 = vector.extract_strided_slice %82 {offsets = [3, 6, 54], sizes = [16, 16, 2], strides = [1, 1, 1]} : vector<22x22x98xf32> to vector<16x16x2xf32>
    %143 = arith.addf %141, %142 : vector<16x16x2xf32>
    %144 = vector.extract_strided_slice %82 {offsets = [4, 0, 56], sizes = [16, 16, 2], strides = [1, 1, 1]} : vector<22x22x98xf32> to vector<16x16x2xf32>
    %145 = arith.addf %143, %144 : vector<16x16x2xf32>
    %146 = vector.extract_strided_slice %82 {offsets = [4, 1, 58], sizes = [16, 16, 2], strides = [1, 1, 1]} : vector<22x22x98xf32> to vector<16x16x2xf32>
    %147 = arith.addf %145, %146 : vector<16x16x2xf32>
    %148 = vector.extract_strided_slice %82 {offsets = [4, 2, 60], sizes = [16, 16, 2], strides = [1, 1, 1]} : vector<22x22x98xf32> to vector<16x16x2xf32>
    %149 = arith.addf %147, %148 : vector<16x16x2xf32>
    %150 = vector.extract_strided_slice %82 {offsets = [4, 3, 62], sizes = [16, 16, 2], strides = [1, 1, 1]} : vector<22x22x98xf32> to vector<16x16x2xf32>
    %151 = arith.addf %149, %150 : vector<16x16x2xf32>
    %152 = vector.extract_strided_slice %82 {offsets = [4, 4, 64], sizes = [16, 16, 2], strides = [1, 1, 1]} : vector<22x22x98xf32> to vector<16x16x2xf32>
    %153 = arith.addf %151, %152 : vector<16x16x2xf32>
    %154 = vector.extract_strided_slice %82 {offsets = [4, 5, 66], sizes = [16, 16, 2], strides = [1, 1, 1]} : vector<22x22x98xf32> to vector<16x16x2xf32>
    %155 = arith.addf %153, %154 : vector<16x16x2xf32>
    %156 = vector.extract_strided_slice %82 {offsets = [4, 6, 68], sizes = [16, 16, 2], strides = [1, 1, 1]} : vector<22x22x98xf32> to vector<16x16x2xf32>
    %157 = arith.addf %155, %156 : vector<16x16x2xf32>
    %158 = vector.extract_strided_slice %82 {offsets = [5, 0, 70], sizes = [16, 16, 2], strides = [1, 1, 1]} : vector<22x22x98xf32> to vector<16x16x2xf32>
    %159 = arith.addf %157, %158 : vector<16x16x2xf32>
    %160 = vector.extract_strided_slice %82 {offsets = [5, 1, 72], sizes = [16, 16, 2], strides = [1, 1, 1]} : vector<22x22x98xf32> to vector<16x16x2xf32>
    %161 = arith.addf %159, %160 : vector<16x16x2xf32>
    %162 = vector.extract_strided_slice %82 {offsets = [5, 2, 74], sizes = [16, 16, 2], strides = [1, 1, 1]} : vector<22x22x98xf32> to vector<16x16x2xf32>
    %163 = arith.addf %161, %162 : vector<16x16x2xf32>
    %164 = vector.extract_strided_slice %82 {offsets = [5, 3, 76], sizes = [16, 16, 2], strides = [1, 1, 1]} : vector<22x22x98xf32> to vector<16x16x2xf32>
    %165 = arith.addf %163, %164 : vector<16x16x2xf32>
    %166 = vector.extract_strided_slice %82 {offsets = [5, 4, 78], sizes = [16, 16, 2], strides = [1, 1, 1]} : vector<22x22x98xf32> to vector<16x16x2xf32>
    %167 = arith.addf %165, %166 : vector<16x16x2xf32>
    %168 = vector.extract_strided_slice %82 {offsets = [5, 5, 80], sizes = [16, 16, 2], strides = [1, 1, 1]} : vector<22x22x98xf32> to vector<16x16x2xf32>
    %169 = arith.addf %167, %168 : vector<16x16x2xf32>
    %170 = vector.extract_strided_slice %82 {offsets = [5, 6, 82], sizes = [16, 16, 2], strides = [1, 1, 1]} : vector<22x22x98xf32> to vector<16x16x2xf32>
    %171 = arith.addf %169, %170 : vector<16x16x2xf32>
    %172 = vector.extract_strided_slice %82 {offsets = [6, 0, 84], sizes = [16, 16, 2], strides = [1, 1, 1]} : vector<22x22x98xf32> to vector<16x16x2xf32>
    %173 = arith.addf %171, %172 : vector<16x16x2xf32>
    %174 = vector.extract_strided_slice %82 {offsets = [6, 1, 86], sizes = [16, 16, 2], strides = [1, 1, 1]} : vector<22x22x98xf32> to vector<16x16x2xf32>
    %175 = arith.addf %173, %174 : vector<16x16x2xf32>
    %176 = vector.extract_strided_slice %82 {offsets = [6, 2, 88], sizes = [16, 16, 2], strides = [1, 1, 1]} : vector<22x22x98xf32> to vector<16x16x2xf32>
    %177 = arith.addf %175, %176 : vector<16x16x2xf32>
    %178 = vector.extract_strided_slice %82 {offsets = [6, 3, 90], sizes = [16, 16, 2], strides = [1, 1, 1]} : vector<22x22x98xf32> to vector<16x16x2xf32>
    %179 = arith.addf %177, %178 : vector<16x16x2xf32>
    %180 = vector.extract_strided_slice %82 {offsets = [6, 4, 92], sizes = [16, 16, 2], strides = [1, 1, 1]} : vector<22x22x98xf32> to vector<16x16x2xf32>
    %181 = arith.addf %179, %180 : vector<16x16x2xf32>
    %182 = vector.extract_strided_slice %82 {offsets = [6, 5, 94], sizes = [16, 16, 2], strides = [1, 1, 1]} : vector<22x22x98xf32> to vector<16x16x2xf32>
    %183 = arith.addf %181, %182 : vector<16x16x2xf32>
    %184 = vector.extract_strided_slice %82 {offsets = [6, 6, 96], sizes = [16, 16, 2], strides = [1, 1, 1]} : vector<22x22x98xf32> to vector<16x16x2xf32>
    %185 = arith.addf %183, %184 : vector<16x16x2xf32>
    %c0_40 = arith.constant 0 : index
    %c0_41 = arith.constant 0 : index
    %c0_42 = arith.constant 0 : index
    %186 = vector.load %arg7[%c0_40, %c0_41, %c0_42] : memref<16x16x2xf32, #tpu.memory_space<vmem>>, vector<16x16x2xf32>
    tpu.vector_store %arg7[%c0_40, %c0_41, %c0_42], %185 {strides = array<i32>} : memref<16x16x2xf32, #tpu.memory_space<vmem>>, vector<16x16x2xf32>,
    return
  }
}

</mosaic_0001>

<llo_original>
// kernel: automap_ifft.1
$region0: #{automap_ifft.1}
  #allocation0 [shape = 'u32[]', space=smem, size = 0x4, offset = 0x4, fixed_abs, tag = 'smem constant byte address 0x4 - core index']
  #allocation1 [shape = 'u32[144,128]{1,0:T(1,128)}', space=vmem, size = 0x12000, scoped, tag = 'internal scratch']
  %s0 = inlined_call_operand.vmem [shape: f32[75,64], index: 0, kind: input, shape index: {}]
  %s1 = inlined_call_operand.vmem [shape: f32[1,64], index: 1, kind: input, shape index: {}]
  %s2 = inlined_call_operand.vmem [shape: bf16[5,320,64], index: 2, kind: input, shape index: {}]
  %s3 = inlined_call_operand.vmem [shape: f32[1,64], index: 3, kind: input, shape index: {}]
  %s4 = inlined_call_operand.vmem [shape: bf16[64,98], index: 4, kind: input, shape index: {}]
  %s5 = inlined_call_operand.vmem [shape: f32[1,2], index: 5, kind: input, shape index: {}]
  %s6 = inlined_call_operand.vmem [shape: f32[16,16,2], index: 6, kind: input, shape index: {}]
  %s7 = inlined_call_operand.vmem [shape: f32[16,16,2], index: 7, kind: output, shape index: {}]
  %s8 = sld [smem:[#allocation0]]
  $region38: #{automap_ifft.1} parent=0
    _
  %s10 = ssub.s32 1, %s8
  %s11 = scalar_select 0, %s10, %s8
  // Predicated region
  $region2: #{automap_ifft.1} parent=0 // pred_check
    _
  $region3: #{automap_ifft.1} parent=0 // pred_check_branch
    %13 = sbr.rel (0) target = $region5
  $region4: #{automap_ifft.1} parent=0 // pred_region
    _
  $region5: #{automap_ifft.1} parent=0 // pred_fallthru
    _
  // Predicated region
  $region6: #{automap_ifft.1} parent=0 // pred_check
    _
  $region7: #{automap_ifft.1} parent=0 // pred_check_branch
    %15 = sbr.rel (0) target = $region9
  $region8: #{automap_ifft.1} parent=0 // pred_region
    _
  $region9: #{automap_ifft.1} parent=0 // pred_fallthru
    _
  // Predicated region
  $region10: #{automap_ifft.1} parent=0 // pred_check
    _
  $region11: #{automap_ifft.1} parent=0 // pred_check_branch
    %17 = sbr.rel (0) target = $region13
  $region12: #{automap_ifft.1} parent=0 // pred_region
    _
  $region13: #{automap_ifft.1} parent=0 // pred_fallthru
    _
  // Predicated region
  $region14: #{automap_ifft.1} parent=0 // pred_check
    _
  $region15: #{automap_ifft.1} parent=0 // pred_check_branch
    %19 = sbr.rel (0) target = $region17
  $region16: #{automap_ifft.1} parent=0 // pred_region
    _
  $region17: #{automap_ifft.1} parent=0 // pred_fallthru
    _
  // Predicated region
  $region18: #{automap_ifft.1} parent=0 // pred_check
    _
  $region19: #{automap_ifft.1} parent=0 // pred_check_branch
    %21 = sbr.rel (0) target = $region21
  $region20: #{automap_ifft.1} parent=0 // pred_region
    _
  $region21: #{automap_ifft.1} parent=0 // pred_fallthru
    _
  // Predicated region
  $region22: #{automap_ifft.1} parent=0 // pred_check
    _
  $region23: #{automap_ifft.1} parent=0 // pred_check_branch
    %23 = sbr.rel (0) target = $region25
  $region24: #{automap_ifft.1} parent=0 // pred_region
    _
  $region25: #{automap_ifft.1} parent=0 // pred_fallthru
    _
  // Predicated region
  $region26: #{automap_ifft.1} parent=0 // pred_check
    _
  $region27: #{automap_ifft.1} parent=0 // pred_check_branch
    %25 = sbr.rel (0) target = $region29
  $region28: #{automap_ifft.1} parent=0 // pred_region
    _
  $region29: #{automap_ifft.1} parent=0 // pred_fallthru
    _
  %v27 = vld [vmem:[%s6] sm:$0xff]
  %v28 = vld [vmem:[%s6 + $0x8] sm:$0xff]
  %v29 = vld [vmem:[%s6 + $0x10] sm:$0xff]
  %v30 = vld [vmem:[%s6 + $0x18] sm:$0xff]
  %v31 = vld [vmem:[%s6 + $0x20] sm:$0xff]
  %v32 = vld [vmem:[%s6 + $0x28] sm:$0xff]
  %v33 = vld [vmem:[%s6 + $0x30] sm:$0xff]
  %v34 = vld [vmem:[%s6 + $0x38] sm:$0xff]
  %v35 = vld [vmem:[%s6 + $0x40] sm:$0xff]
  %v36 = vld [vmem:[%s6 + $0x48] sm:$0xff]
  %v37 = vld [vmem:[%s6 + $0x50] sm:$0xff]
  %v38 = vld [vmem:[%s6 + $0x58] sm:$0xff]
  %v39 = vld [vmem:[%s6 + $0x60] sm:$0xff]
  %v40 = vld [vmem:[%s6 + $0x68] sm:$0xff]
  %v41 = vld [vmem:[%s6 + $0x70] sm:$0xff]
  %v42 = vld [vmem:[%s6 + $0x78] sm:$0xff]
  %v43 = vld [vmem:[%s6 + $0x80] sm:$0xff]
  %v44 = vld [vmem:[%s6 + $0x88] sm:$0xff]
  %v45 = vld [vmem:[%s6 + $0x90] sm:$0xff]
  %v46 = vld [vmem:[%s6 + $0x98] sm:$0xff]
  %v47 = vld [vmem:[%s6 + $0xa0] sm:$0xff]
  %v48 = vld [vmem:[%s6 + $0xa8] sm:$0xff]
  %v49 = vld [vmem:[%s6 + $0xb0] sm:$0xff]
  %v50 = vld [vmem:[%s6 + $0xb8] sm:$0xff]
  %v51 = vld [vmem:[%s6 + $0xc0] sm:$0xff]
  %v52 = vld [vmem:[%s6 + $0xc8] sm:$0xff]
  %v53 = vld [vmem:[%s6 + $0xd0] sm:$0xff]
  %v54 = vld [vmem:[%s6 + $0xd8] sm:$0xff]
  %v55 = vld [vmem:[%s6 + $0xe0] sm:$0xff]
  %v56 = vld [vmem:[%s6 + $0xe8] sm:$0xff]
  %v57 = vld [vmem:[%s6 + $0xf0] sm:$0xff]
  %v58 = vld [vmem:[%s6 + $0xf8] sm:$0xff]
  %vm59 = vcmask 15360
  %v60 = vsel %vm59, %v27, 1.0
  %v61 = vsel %vm59, %v28, 1.0
  %v62 = vsel %vm59, %v29, 1.0
  %v63 = vsel %vm59, %v30, 1.0
  %v64 = vsel %vm59, %v31, 1.0
  %v65 = vsel %vm59, %v32, 1.0
  %v66 = vsel %vm59, %v33, 1.0
  %v67 = vsel %vm59, %v34, 1.0
  %v68 = vsel %vm59, %v35, 1.0
  %v69 = vsel %vm59, %v36, 1.0
  %v70 = vsel %vm59, %v37, 1.0
  %v71 = vsel %vm59, %v38, 1.0
  %v72 = vsel %vm59, %v39, 1.0
  %v73 = vsel %vm59, %v40, 1.0
  %v74 = vsel %vm59, %v41, 1.0
  %v75 = vsel %vm59, %v42, 1.0
  %v76 = vsel %vm59, %v43, 1.0
  %v77 = vsel %vm59, %v44, 1.0
  %v78 = vsel %vm59, %v45, 1.0
  %v79 = vsel %vm59, %v46, 1.0
  %v80 = vsel %vm59, %v47, 1.0
  %v81 = vsel %vm59, %v48, 1.0
  %v82 = vsel %vm59, %v49, 1.0
  %v83 = vsel %vm59, %v50, 1.0
  %v84 = vsel %vm59, %v51, 1.0
  %v85 = vsel %vm59, %v52, 1.0
  %v86 = vsel %vm59, %v53, 1.0
  %v87 = vsel %vm59, %v54, 1.0
  %v88 = vsel %vm59, %v55, 1.0
  %v89 = vsel %vm59, %v56, 1.0
  %v90 = vsel %vm59, %v57, 1.0
  %v91 = vsel %vm59, %v58, 1.0
  %vm125 = vcmask 1041408
  %v126 = vrot.slane 0.0, 6
  %v127 = vsel %vm125, %v126, %v126
  %v128 = vrot.slane %v60, 6
  %v129 = vrot.slane %v61, 6
  %v130 = vsel %vm125, %v128, %v129
  %v131 = vrot.slane %v62, 6
  %v132 = vrot.slane %v63, 6
  %v133 = vsel %vm125, %v131, %v132
  %v134 = vrot.slane %v64, 6
  %v135 = vrot.slane %v65, 6
  %v136 = vsel %vm125, %v134, %v135
  %v137 = vrot.slane %v66, 6
  %v138 = vrot.slane %v67, 6
  %v139 = vsel %vm125, %v137, %v138
  %v140 = vrot.slane %v68, 6
  %v141 = vrot.slane %v69, 6
  %v142 = vsel %vm125, %v140, %v141
  %v143 = vrot.slane %v70, 6
  %v144 = vrot.slane %v71, 6
  %v145 = vsel %vm125, %v143, %v144
  %v146 = vrot.slane %v72, 6
  %v147 = vrot.slane %v73, 6
  %v148 = vsel %vm125, %v146, %v147
  %v149 = vrot.slane %v74, 6
  %v150 = vrot.slane %v75, 6
  %v151 = vsel %vm125, %v149, %v150
  %v152 = vrot.slane %v76, 6
  %v153 = vrot.slane %v77, 6
  %v154 = vsel %vm125, %v152, %v153
  %v155 = vrot.slane %v78, 6
  %v156 = vrot.slane %v79, 6
  %v157 = vsel %vm125, %v155, %v156
  %v158 = vrot.slane %v80, 6
  %v159 = vrot.slane %v81, 6
  %v160 = vsel %vm125, %v158, %v159
  %v161 = vrot.slane %v82, 6
  %v162 = vrot.slane %v83, 6
  %v163 = vsel %vm125, %v161, %v162
  %v164 = vrot.slane %v84, 6
  %v165 = vrot.slane %v85, 6
  %v166 = vsel %vm125, %v164, %v165
  %v167 = vrot.slane %v86, 6
  %v168 = vrot.slane %v87, 6
  %v169 = vsel %vm125, %v167, %v168
  %v170 = vrot.slane %v88, 6
  %v171 = vrot.slane %v89, 6
  %v172 = vsel %vm125, %v170, %v171
  %v173 = vrot.slane %v90, 6
  %v174 = vrot.slane %v91, 6
  %v175 = vsel %vm125, %v173, %v174
  %v226 = vsel %vm125, 0.0, %v126
  %v227 = vsel %vm125, 0.0, %v128
  %v228 = vsel %vm125, 0.0, %v131
  %v229 = vsel %vm125, 0.0, %v134
  %v230 = vsel %vm125, 0.0, %v137
  %v231 = vsel %vm125, 0.0, %v140
  %v232 = vsel %vm125, 0.0, %v143
  %v233 = vsel %vm125, 0.0, %v146
  %v234 = vsel %vm125, 0.0, %v149
  %v235 = vsel %vm125, 0.0, %v152
  %v236 = vsel %vm125, 0.0, %v155
  %v237 = vsel %vm125, 0.0, %v158
  %v238 = vsel %vm125, 0.0, %v161
  %v239 = vsel %vm125, 0.0, %v164
  %v240 = vsel %vm125, 0.0, %v167
  %v241 = vsel %vm125, 0.0, %v170
  %v242 = vsel %vm125, 0.0, %v173
  %v243 = vsel %vm125, %v126, 0.0
  %v244 = vsel %vm125, %v129, 0.0
  %v245 = vsel %vm125, %v132, 0.0
  %v246 = vsel %vm125, %v135, 0.0
  %v247 = vsel %vm125, %v138, 0.0
  %v248 = vsel %vm125, %v141, 0.0
  %v249 = vsel %vm125, %v144, 0.0
  %v250 = vsel %vm125, %v147, 0.0
  %v251 = vsel %vm125, %v150, 0.0
  %v252 = vsel %vm125, %v153, 0.0
  %v253 = vsel %vm125, %v156, 0.0
  %v254 = vsel %vm125, %v159, 0.0
  %v255 = vsel %vm125, %v162, 0.0
  %v256 = vsel %vm125, %v165, 0.0
  %v257 = vsel %vm125, %v168, 0.0
  %v258 = vsel %vm125, %v171, 0.0
  %v259 = vsel %vm125, %v174, 0.0
  %vm294 = vcmask 1046528
  %v295 = vrot.slane %v226, 1
  %v296 = vrot.slane %v127, 1
  %v297 = vsel %vm294, %v295, %v296
  %v298 = vrot.slane %v243, 1
  %v299 = vsel %vm294, %v296, %v298
  %v300 = vrot.slane %v227, 1
  %v301 = vrot.slane %v130, 1
  %v302 = vsel %vm294, %v300, %v301
  %v303 = vrot.slane %v244, 1
  %v304 = vsel %vm294, %v301, %v303
  %v305 = vrot.slane %v228, 1
  %v306 = vrot.slane %v133, 1
  %v307 = vsel %vm294, %v305, %v306
  %v308 = vrot.slane %v245, 1
  %v309 = vsel %vm294, %v306, %v308
  %v310 = vrot.slane %v229, 1
  %v311 = vrot.slane %v136, 1
  %v312 = vsel %vm294, %v310, %v311
  %v313 = vrot.slane %v246, 1
  %v314 = vsel %vm294, %v311, %v313
  %v315 = vrot.slane %v230, 1
  %v316 = vrot.slane %v139, 1
  %v317 = vsel %vm294, %v315, %v316
  %v318 = vrot.slane %v247, 1
  %v319 = vsel %vm294, %v316, %v318
  %v320 = vrot.slane %v231, 1
  %v321 = vrot.slane %v142, 1
  %v322 = vsel %vm294, %v320, %v321
  %v323 = vrot.slane %v248, 1
  %v324 = vsel %vm294, %v321, %v323
  %v325 = vrot.slane %v232, 1
  %v326 = vrot.slane %v145, 1
  %v327 = vsel %vm294, %v325, %v326
  %v328 = vrot.slane %v249, 1
  %v329 = vsel %vm294, %v326, %v328
  %v330 = vrot.slane %v233, 1
  %v331 = vrot.slane %v148, 1
  %v332 = vsel %vm294, %v330, %v331
  %v333 = vrot.slane %v250, 1
  %v334 = vsel %vm294, %v331, %v333
  %v335 = vrot.slane %v234, 1
  %v336 = vrot.slane %v151, 1
  %v337 = vsel %vm294, %v335, %v336
  %v338 = vrot.slane %v251, 1
  %v339 = vsel %vm294, %v336, %v338
  %v340 = vrot.slane %v235, 1
  %v341 = vrot.slane %v154, 1
  %v342 = vsel %vm294, %v340, %v341
  %v343 = vrot.slane %v252, 1
  %v344 = vsel %vm294, %v341, %v343
  %v345 = vrot.slane %v236, 1
  %v346 = vrot.slane %v157, 1
  %v347 = vsel %vm294, %v345, %v346
  %v348 = vrot.slane %v253, 1
  %v349 = vsel %vm294, %v346, %v348
  %v350 = vrot.slane %v237, 1
  %v351 = vrot.slane %v160, 1
  %v352 = vsel %vm294, %v350, %v351
  %v353 = vrot.slane %v254, 1
  %v354 = vsel %vm294, %v351, %v353
  %v355 = vrot.slane %v238, 1
  %v356 = vrot.slane %v163, 1
  %v357 = vsel %vm294, %v355, %v356
  %v358 = vrot.slane %v255, 1
  %v359 = vsel %vm294, %v356, %v358
  %v360 = vrot.slane %v239, 1
  %v361 = vrot.slane %v166, 1
  %v362 = vsel %vm294, %v360, %v361
  %v363 = vrot.slane %v256, 1
  %v364 = vsel %vm294, %v361, %v363
  %v365 = vrot.slane %v240, 1
  %v366 = vrot.slane %v169, 1
  %v367 = vsel %vm294, %v365, %v366
  %v368 = vrot.slane %v257, 1
  %v369 = vsel %vm294, %v366, %v368
  %v370 = vrot.slane %v241, 1
  %v371 = vrot.slane %v172, 1
  %v372 = vsel %vm294, %v370, %v371
  %v373 = vrot.slane %v258, 1
  %v374 = vsel %vm294, %v371, %v373
  %v375 = vrot.slane %v242, 1
  %v376 = vrot.slane %v175, 1
  %v377 = vsel %vm294, %v375, %v376
  %v378 = vrot.slane %v259, 1
  %v379 = vsel %vm294, %v376, %v378
  %380 = vrot.lane.b32.xlu0 %v297, 3
  %v381 = vpop.permute.xlu0 %380
  %382 = vrot.lane.b32.xlu0 %v299, 3
  %v383 = vpop.permute.xlu0 %382
  %384 = vrot.lane.b32.xlu0 %v302, 3
  %v385 = vpop.permute.xlu0 %384
  %386 = vrot.lane.b32.xlu0 %v304, 3
  %v387 = vpop.permute.xlu0 %386
  %388 = vrot.lane.b32.xlu0 %v307, 3
  %v389 = vpop.permute.xlu0 %388
  %390 = vrot.lane.b32.xlu0 %v309, 3
  %v391 = vpop.permute.xlu0 %390
  %392 = vrot.lane.b32.xlu0 %v312, 3
  %v393 = vpop.permute.xlu0 %392
  %394 = vrot.lane.b32.xlu0 %v314, 3
  %v395 = vpop.permute.xlu0 %394
  %396 = vrot.lane.b32.xlu0 %v317, 3
  %v397 = vpop.permute.xlu0 %396
  %398 = vrot.lane.b32.xlu0 %v319, 3
  %v399 = vpop.permute.xlu0 %398
  %400 = vrot.lane.b32.xlu0 %v322, 3
  %v401 = vpop.permute.xlu0 %400
  %402 = vrot.lane.b32.xlu0 %v324, 3
  %v403 = vpop.permute.xlu0 %402
  %404 = vrot.lane.b32.xlu0 %v327, 3
  %v405 = vpop.permute.xlu0 %404
  %406 = vrot.lane.b32.xlu0 %v329, 3
  %v407 = vpop.permute.xlu0 %406
  %408 = vrot.lane.b32.xlu0 %v332, 3
  %v409 = vpop.permute.xlu0 %408
  %410 = vrot.lane.b32.xlu0 %v334, 3
  %v411 = vpop.permute.xlu0 %410
  %412 = vrot.lane.b32.xlu0 %v337, 3
  %v413 = vpop.permute.xlu0 %412
  %414 = vrot.lane.b32.xlu0 %v339, 3
  %v415 = vpop.permute.xlu0 %414
  %416 = vrot.lane.b32.xlu0 %v342, 3
  %v417 = vpop.permute.xlu0 %416
  %418 = vrot.lane.b32.xlu0 %v344, 3
  %v419 = vpop.permute.xlu0 %418
  %420 = vrot.lane.b32.xlu0 %v347, 3
  %v421 = vpop.permute.xlu0 %420
  %422 = vrot.lane.b32.xlu0 %v349, 3
  %v423 = vpop.permute.xlu0 %422
  %424 = vrot.lane.b32.xlu0 %v352, 3
  %v425 = vpop.permute.xlu0 %424
  %426 = vrot.lane.b32.xlu0 %v354, 3
  %v427 = vpop.permute.xlu0 %426
  %428 = vrot.lane.b32.xlu0 %v357, 3
  %v429 = vpop.permute.xlu0 %428
  %430 = vrot.lane.b32.xlu0 %v359, 3
  %v431 = vpop.permute.xlu0 %430
  %432 = vrot.lane.b32.xlu0 %v362, 3
  %v433 = vpop.permute.xlu0 %432
  %434 = vrot.lane.b32.xlu0 %v364, 3
  %v435 = vpop.permute.xlu0 %434
  %436 = vrot.lane.b32.xlu0 %v367, 3
  %v437 = vpop.permute.xlu0 %436
  %438 = vrot.lane.b32.xlu0 %v369, 3
  %v439 = vpop.permute.xlu0 %438
  %440 = vrot.lane.b32.xlu0 %v372, 3
  %v441 = vpop.permute.xlu0 %440
  %442 = vrot.lane.b32.xlu0 %v374, 3
  %v443 = vpop.permute.xlu0 %442
  %444 = vrot.lane.b32.xlu0 %v377, 3
  %v445 = vpop.permute.xlu0 %444
  %446 = vrot.lane.b32.xlu0 %v379, 3
  %v447 = vpop.permute.xlu0 %446
  %vm482 = vcmask 1045504
  %v483 = vrot.slane %v226, 2
  %v484 = vrot.slane %v127, 2
  %v485 = vsel %vm482, %v483, %v484
  %v486 = vrot.slane %v243, 2
  %v487 = vsel %vm482, %v484, %v486
  %v488 = vrot.slane %v227, 2
  %v489 = vrot.slane %v130, 2
  %v490 = vsel %vm482, %v488, %v489
  %v491 = vrot.slane %v244, 2
  %v492 = vsel %vm482, %v489, %v491
  %v493 = vrot.slane %v228, 2
  %v494 = vrot.slane %v133, 2
  %v495 = vsel %vm482, %v493, %v494
  %v496 = vrot.slane %v245, 2
  %v497 = vsel %vm482, %v494, %v496
  %v498 = vrot.slane %v229, 2
  %v499 = vrot.slane %v136, 2
  %v500 = vsel %vm482, %v498, %v499
  %v501 = vrot.slane %v246, 2
  %v502 = vsel %vm482, %v499, %v501
  %v503 = vrot.slane %v230, 2
  %v504 = vrot.slane %v139, 2
  %v505 = vsel %vm482, %v503, %v504
  %v506 = vrot.slane %v247, 2
  %v507 = vsel %vm482, %v504, %v506
  %v508 = vrot.slane %v231, 2
  %v509 = vrot.slane %v142, 2
  %v510 = vsel %vm482, %v508, %v509
  %v511 = vrot.slane %v248, 2
  %v512 = vsel %vm482, %v509, %v511
  %v513 = vrot.slane %v232, 2
  %v514 = vrot.slane %v145, 2
  %v515 = vsel %vm482, %v513, %v514
  %v516 = vrot.slane %v249, 2
  %v517 = vsel %vm482, %v514, %v516
  %v518 = vrot.slane %v233, 2
  %v519 = vrot.slane %v148, 2
  %v520 = vsel %vm482, %v518, %v519
  %v521 = vrot.slane %v250, 2
  %v522 = vsel %vm482, %v519, %v521
  %v523 = vrot.slane %v234, 2
  %v524 = vrot.slane %v151, 2
  %v525 = vsel %vm482, %v523, %v524
  %v526 = vrot.slane %v251, 2
  %v527 = vsel %vm482, %v524, %v526
  %v528 = vrot.slane %v235, 2
  %v529 = vrot.slane %v154, 2
  %v530 = vsel %vm482, %v528, %v529
  %v531 = vrot.slane %v252, 2
  %v532 = vsel %vm482, %v529, %v531
  %v533 = vrot.slane %v236, 2
  %v534 = vrot.slane %v157, 2
  %v535 = vsel %vm482, %v533, %v534
  %v536 = vrot.slane %v253, 2
  %v537 = vsel %vm482, %v534, %v536
  %v538 = vrot.slane %v237, 2
  %v539 = vrot.slane %v160, 2
  %v540 = vsel %vm482, %v538, %v539
  %v541 = vrot.slane %v254, 2
  %v542 = vsel %vm482, %v539, %v541
  %v543 = vrot.slane %v238, 2
  %v544 = vrot.slane %v163, 2
  %v545 = vsel %vm482, %v543, %v544
  %v546 = vrot.slane %v255, 2
  %v547 = vsel %vm482, %v544, %v546
  %v548 = vrot.slane %v239, 2
  %v549 = vrot.slane %v166, 2
  %v550 = vsel %vm482, %v548, %v549
  %v551 = vrot.slane %v256, 2
  %v552 = vsel %vm482, %v549, %v551
  %v553 = vrot.slane %v240, 2
  %v554 = vrot.slane %v169, 2
  %v555 = vsel %vm482, %v553, %v554
  %v556 = vrot.slane %v257, 2
  %v557 = vsel %vm482, %v554, %v556
  %v558 = vrot.slane %v241, 2
  %v559 = vrot.slane %v172, 2
  %v560 = vsel %vm482, %v558, %v559
  %v561 = vrot.slane %v258, 2
  %v562 = vsel %vm482, %v559, %v561
  %v563 = vrot.slane %v242, 2
  %v564 = vrot.slane %v175, 2
  %v565 = vsel %vm482, %v563, %v564
  %v566 = vrot.slane %v259, 2
  %v567 = vsel %vm482, %v564, %v566
  %568 = vrot.lane.b32.xlu0 %v485, 6
  %v569 = vpop.permute.xlu0 %568
  %570 = vrot.lane.b32.xlu0 %v487, 6
  %v571 = vpop.permute.xlu0 %570
  %572 = vrot.lane.b32.xlu0 %v490, 6
  %v573 = vpop.permute.xlu0 %572
  %574 = vrot.lane.b32.xlu0 %v492, 6
  %v575 = vpop.permute.xlu0 %574
  %576 = vrot.lane.b32.xlu0 %v495, 6
  %v577 = vpop.permute.xlu0 %576
  %578 = vrot.lane.b32.xlu0 %v497, 6
  %v579 = vpop.permute.xlu0 %578
  %580 = vrot.lane.b32.xlu0 %v500, 6
  %v581 = vpop.permute.xlu0 %580
  %582 = vrot.lane.b32.xlu0 %v502, 6
  %v583 = vpop.permute.xlu0 %582
  %584 = vrot.lane.b32.xlu0 %v505, 6
  %v585 = vpop.permute.xlu0 %584
  %586 = vrot.lane.b32.xlu0 %v507, 6
  %v587 = vpop.permute.xlu0 %586
  %588 = vrot.lane.b32.xlu0 %v510, 6
  %v589 = vpop.permute.xlu0 %588
  %590 = vrot.lane.b32.xlu0 %v512, 6
  %v591 = vpop.permute.xlu0 %590
  %592 = vrot.lane.b32.xlu0 %v515, 6
  %v593 = vpop.permute.xlu0 %592
  %594 = vrot.lane.b32.xlu0 %v517, 6
  %v595 = vpop.permute.xlu0 %594
  %596 = vrot.lane.b32.xlu0 %v520, 6
  %v597 = vpop.permute.xlu0 %596
  %598 = vrot.lane.b32.xlu0 %v522, 6
  %v599 = vpop.permute.xlu0 %598
  %600 = vrot.lane.b32.xlu0 %v525, 6
  %v601 = vpop.permute.xlu0 %600
  %602 = vrot.lane.b32.xlu0 %v527, 6
  %v603 = vpop.permute.xlu0 %602
  %604 = vrot.lane.b32.xlu0 %v530, 6
  %v605 = vpop.permute.xlu0 %604
  %606 = vrot.lane.b32.xlu0 %v532, 6
  %v607 = vpop.permute.xlu0 %606
  %608 = vrot.lane.b32.xlu0 %v535, 6
  %v609 = vpop.permute.xlu0 %608
  %610 = vrot.lane.b32.xlu0 %v537, 6
  %v611 = vpop.permute.xlu0 %610
  %612 = vrot.lane.b32.xlu0 %v540, 6
  %v613 = vpop.permute.xlu0 %612
  %614 = vrot.lane.b32.xlu0 %v542, 6
  %v615 = vpop.permute.xlu0 %614
  %616 = vrot.lane.b32.xlu0 %v545, 6
  %v617 = vpop.permute.xlu0 %616
  %618 = vrot.lane.b32.xlu0 %v547, 6
  %v619 = vpop.permute.xlu0 %618
  %620 = vrot.lane.b32.xlu0 %v550, 6
  %v621 = vpop.permute.xlu0 %620
  %622 = vrot.lane.b32.xlu0 %v552, 6
  %v623 = vpop.permute.xlu0 %622
  %624 = vrot.lane.b32.xlu0 %v555, 6
  %v625 = vpop.permute.xlu0 %624
  %626 = vrot.lane.b32.xlu0 %v557, 6
  %v627 = vpop.permute.xlu0 %626
  %628 = vrot.lane.b32.xlu0 %v560, 6
  %v629 = vpop.permute.xlu0 %628
  %630 = vrot.lane.b32.xlu0 %v562, 6
  %v631 = vpop.permute.xlu0 %630
  %632 = vrot.lane.b32.xlu0 %v565, 6
  %v633 = vpop.permute.xlu0 %632
  %634 = vrot.lane.b32.xlu0 %v567, 6
  %v635 = vpop.permute.xlu0 %634
  %vm670 = vcmask 1044480
  %v671 = vrot.slane %v226, 3
  %v672 = vrot.slane %v127, 3
  %v673 = vsel %vm670, %v671, %v672
  %v674 = vrot.slane %v243, 3
  %v675 = vsel %vm670, %v672, %v674
  %v676 = vrot.slane %v227, 3
  %v677 = vrot.slane %v130, 3
  %v678 = vsel %vm670, %v676, %v677
  %v679 = vrot.slane %v244, 3
  %v680 = vsel %vm670, %v677, %v679
  %v681 = vrot.slane %v228, 3
  %v682 = vrot.slane %v133, 3
  %v683 = vsel %vm670, %v681, %v682
  %v684 = vrot.slane %v245, 3
  %v685 = vsel %vm670, %v682, %v684
  %v686 = vrot.slane %v229, 3
  %v687 = vrot.slane %v136, 3
  %v688 = vsel %vm670, %v686, %v687
  %v689 = vrot.slane %v246, 3
  %v690 = vsel %vm670, %v687, %v689
  %v691 = vrot.slane %v230, 3
  %v692 = vrot.slane %v139, 3
  %v693 = vsel %vm670, %v691, %v692
  %v694 = vrot.slane %v247, 3
  %v695 = vsel %vm670, %v692, %v694
  %v696 = vrot.slane %v231, 3
  %v697 = vrot.slane %v142, 3
  %v698 = vsel %vm670, %v696, %v697
  %v699 = vrot.slane %v248, 3
  %v700 = vsel %vm670, %v697, %v699
  %v701 = vrot.slane %v232, 3
  %v702 = vrot.slane %v145, 3
  %v703 = vsel %vm670, %v701, %v702
  %v704 = vrot.slane %v249, 3
  %v705 = vsel %vm670, %v702, %v704
  %v706 = vrot.slane %v233, 3
  %v707 = vrot.slane %v148, 3
  %v708 = vsel %vm670, %v706, %v707
  %v709 = vrot.slane %v250, 3
  %v710 = vsel %vm670, %v707, %v709
  %v711 = vrot.slane %v234, 3
  %v712 = vrot.slane %v151, 3
  %v713 = vsel %vm670, %v711, %v712
  %v714 = vrot.slane %v251, 3
  %v715 = vsel %vm670, %v712, %v714
  %v716 = vrot.slane %v235, 3
  %v717 = vrot.slane %v154, 3
  %v718 = vsel %vm670, %v716, %v717
  %v719 = vrot.slane %v252, 3
  %v720 = vsel %vm670, %v717, %v719
  %v721 = vrot.slane %v236, 3
  %v722 = vrot.slane %v157, 3
  %v723 = vsel %vm670, %v721, %v722
  %v724 = vrot.slane %v253, 3
  %v725 = vsel %vm670, %v722, %v724
  %v726 = vrot.slane %v237, 3
  %v727 = vrot.slane %v160, 3
  %v728 = vsel %vm670, %v726, %v727
  %v729 = vrot.slane %v254, 3
  %v730 = vsel %vm670, %v727, %v729
  %v731 = vrot.slane %v238, 3
  %v732 = vrot.slane %v163, 3
  %v733 = vsel %vm670, %v731, %v732
  %v734 = vrot.slane %v255, 3
  %v735 = vsel %vm670, %v732, %v734
  %v736 = vrot.slane %v239, 3
  %v737 = vrot.slane %v166, 3
  %v738 = vsel %vm670, %v736, %v737
  %v739 = vrot.slane %v256, 3
  %v740 = vsel %vm670, %v737, %v739
  %v741 = vrot.slane %v240, 3
  %v742 = vrot.slane %v169, 3
  %v743 = vsel %vm670, %v741, %v742
  %v744 = vrot.slane %v257, 3
  %v745 = vsel %vm670, %v742, %v744
  %v746 = vrot.slane %v241, 3
  %v747 = vrot.slane %v172, 3
  %v748 = vsel %vm670, %v746, %v747
  %v749 = vrot.slane %v258, 3
  %v750 = vsel %vm670, %v747, %v749
  %v751 = vrot.slane %v242, 3
  %v752 = vrot.slane %v175, 3
  %v753 = vsel %vm670, %v751, %v752
  %v754 = vrot.slane %v259, 3
  %v755 = vsel %vm670, %v752, %v754
  %756 = vrot.lane.b32.xlu0 %v673, 9
  %v757 = vpop.permute.xlu0 %756
  %758 = vrot.lane.b32.xlu0 %v675, 9
  %v759 = vpop.permute.xlu0 %758
  %760 = vrot.lane.b32.xlu0 %v678, 9
  %v761 = vpop.permute.xlu0 %760
  %762 = vrot.lane.b32.xlu0 %v680, 9
  %v763 = vpop.permute.xlu0 %762
  %764 = vrot.lane.b32.xlu0 %v683, 9
  %v765 = vpop.permute.xlu0 %764
  %766 = vrot.lane.b32.xlu0 %v685, 9
  %v767 = vpop.permute.xlu0 %766
  %768 = vrot.lane.b32.xlu0 %v688, 9
  %v769 = vpop.permute.xlu0 %768
  %770 = vrot.lane.b32.xlu0 %v690, 9
  %v771 = vpop.permute.xlu0 %770
  %772 = vrot.lane.b32.xlu0 %v693, 9
  %v773 = vpop.permute.xlu0 %772
  %774 = vrot.lane.b32.xlu0 %v695, 9
  %v775 = vpop.permute.xlu0 %774
  %776 = vrot.lane.b32.xlu0 %v698, 9
  %v777 = vpop.permute.xlu0 %776
  %778 = vrot.lane.b32.xlu0 %v700, 9
  %v779 = vpop.permute.xlu0 %778
  %780 = vrot.lane.b32.xlu0 %v703, 9
  %v781 = vpop.permute.xlu0 %780
  %782 = vrot.lane.b32.xlu0 %v705, 9
  %v783 = vpop.permute.xlu0 %782
  %784 = vrot.lane.b32.xlu0 %v708, 9
  %v785 = vpop.permute.xlu0 %784
  %786 = vrot.lane.b32.xlu0 %v710, 9
  %v787 = vpop.permute.xlu0 %786
  %788 = vrot.lane.b32.xlu0 %v713, 9
  %v789 = vpop.permute.xlu0 %788
  %790 = vrot.lane.b32.xlu0 %v715, 9
  %v791 = vpop.permute.xlu0 %790
  %792 = vrot.lane.b32.xlu0 %v718, 9
  %v793 = vpop.permute.xlu0 %792
  %794 = vrot.lane.b32.xlu0 %v720, 9
  %v795 = vpop.permute.xlu0 %794
  %796 = vrot.lane.b32.xlu0 %v723, 9
  %v797 = vpop.permute.xlu0 %796
  %798 = vrot.lane.b32.xlu0 %v725, 9
  %v799 = vpop.permute.xlu0 %798
  %800 = vrot.lane.b32.xlu0 %v728, 9
  %v801 = vpop.permute.xlu0 %800
  %802 = vrot.lane.b32.xlu0 %v730, 9
  %v803 = vpop.permute.xlu0 %802
  %804 = vrot.lane.b32.xlu0 %v733, 9
  %v805 = vpop.permute.xlu0 %804
  %806 = vrot.lane.b32.xlu0 %v735, 9
  %v807 = vpop.permute.xlu0 %806
  %808 = vrot.lane.b32.xlu0 %v738, 9
  %v809 = vpop.permute.xlu0 %808
  %810 = vrot.lane.b32.xlu0 %v740, 9
  %v811 = vpop.permute.xlu0 %810
  %812 = vrot.lane.b32.xlu0 %v743, 9
  %v813 = vpop.permute.xlu0 %812
  %814 = vrot.lane.b32.xlu0 %v745, 9
  %v815 = vpop.permute.xlu0 %814
  %816 = vrot.lane.b32.xlu0 %v748, 9
  %v817 = vpop.permute.xlu0 %816
  %818 = vrot.lane.b32.xlu0 %v750, 9
  %v819 = vpop.permute.xlu0 %818
  %820 = vrot.lane.b32.xlu0 %v753, 9
  %v821 = vpop.permute.xlu0 %820
  %822 = vrot.lane.b32.xlu0 %v755, 9
  %v823 = vpop.permute.xlu0 %822
  %vm858 = vcmask 1043456
  %v859 = vrot.slane %v226, 4
  %v860 = vrot.slane %v127, 4
  %v861 = vsel %vm858, %v859, %v860
  %v862 = vrot.slane %v243, 4
  %v863 = vsel %vm858, %v860, %v862
  %v864 = vrot.slane %v227, 4
  %v865 = vrot.slane %v130, 4
  %v866 = vsel %vm858, %v864, %v865
  %v867 = vrot.slane %v244, 4
  %v868 = vsel %vm858, %v865, %v867
  %v869 = vrot.slane %v228, 4
  %v870 = vrot.slane %v133, 4
  %v871 = vsel %vm858, %v869, %v870
  %v872 = vrot.slane %v245, 4
  %v873 = vsel %vm858, %v870, %v872
  %v874 = vrot.slane %v229, 4
  %v875 = vrot.slane %v136, 4
  %v876 = vsel %vm858, %v874, %v875
  %v877 = vrot.slane %v246, 4
  %v878 = vsel %vm858, %v875, %v877
  %v879 = vrot.slane %v230, 4
  %v880 = vrot.slane %v139, 4
  %v881 = vsel %vm858, %v879, %v880
  %v882 = vrot.slane %v247, 4
  %v883 = vsel %vm858, %v880, %v882
  %v884 = vrot.slane %v231, 4
  %v885 = vrot.slane %v142, 4
  %v886 = vsel %vm858, %v884, %v885
  %v887 = vrot.slane %v248, 4
  %v888 = vsel %vm858, %v885, %v887
  %v889 = vrot.slane %v232, 4
  %v890 = vrot.slane %v145, 4
  %v891 = vsel %vm858, %v889, %v890
  %v892 = vrot.slane %v249, 4
  %v893 = vsel %vm858, %v890, %v892
  %v894 = vrot.slane %v233, 4
  %v895 = vrot.slane %v148, 4
  %v896 = vsel %vm858, %v894, %v895
  %v897 = vrot.slane %v250, 4
  %v898 = vsel %vm858, %v895, %v897
  %v899 = vrot.slane %v234, 4
  %v900 = vrot.slane %v151, 4
  %v901 = vsel %vm858, %v899, %v900
  %v902 = vrot.slane %v251, 4
  %v903 = vsel %vm858, %v900, %v902
  %v904 = vrot.slane %v235, 4
  %v905 = vrot.slane %v154, 4
  %v906 = vsel %vm858, %v904, %v905
  %v907 = vrot.slane %v252, 4
  %v908 = vsel %vm858, %v905, %v907
  %v909 = vrot.slane %v236, 4
  %v910 = vrot.slane %v157, 4
  %v911 = vsel %vm858, %v909, %v910
  %v912 = vrot.slane %v253, 4
  %v913 = vsel %vm858, %v910, %v912
  %v914 = vrot.slane %v237, 4
  %v915 = vrot.slane %v160, 4
  %v916 = vsel %vm858, %v914, %v915
  %v917 = vrot.slane %v254, 4
  %v918 = vsel %vm858, %v915, %v917
  %v919 = vrot.slane %v238, 4
  %v920 = vrot.slane %v163, 4
  %v921 = vsel %vm858, %v919, %v920
  %v922 = vrot.slane %v255, 4
  %v923 = vsel %vm858, %v920, %v922
  %v924 = vrot.slane %v239, 4
  %v925 = vrot.slane %v166, 4
  %v926 = vsel %vm858, %v924, %v925
  %v927 = vrot.slane %v256, 4
  %v928 = vsel %vm858, %v925, %v927
  %v929 = vrot.slane %v240, 4
  %v930 = vrot.slane %v169, 4
  %v931 = vsel %vm858, %v929, %v930
  %v932 = vrot.slane %v257, 4
  %v933 = vsel %vm858, %v930, %v932
  %v934 = vrot.slane %v241, 4
  %v935 = vrot.slane %v172, 4
  %v936 = vsel %vm858, %v934, %v935
  %v937 = vrot.slane %v258, 4
  %v938 = vsel %vm858, %v935, %v937
  %v939 = vrot.slane %v242, 4
  %v940 = vrot.slane %v175, 4
  %v941 = vsel %vm858, %v939, %v940
  %v942 = vrot.slane %v259, 4
  %v943 = vsel %vm858, %v940, %v942
  %944 = vrot.lane.b32.xlu0 %v861, 12
  %v945 = vpop.permute.xlu0 %944
  %946 = vrot.lane.b32.xlu0 %v863, 12
  %v947 = vpop.permute.xlu0 %946
  %948 = vrot.lane.b32.xlu0 %v866, 12
  %v949 = vpop.permute.xlu0 %948
  %950 = vrot.lane.b32.xlu0 %v868, 12
  %v951 = vpop.permute.xlu0 %950
  %952 = vrot.lane.b32.xlu0 %v871, 12
  %v953 = vpop.permute.xlu0 %952
  %954 = vrot.lane.b32.xlu0 %v873, 12
  %v955 = vpop.permute.xlu0 %954
  %956 = vrot.lane.b32.xlu0 %v876, 12
  %v957 = vpop.permute.xlu0 %956
  %958 = vrot.lane.b32.xlu0 %v878, 12
  %v959 = vpop.permute.xlu0 %958
  %960 = vrot.lane.b32.xlu0 %v881, 12
  %v961 = vpop.permute.xlu0 %960
  %962 = vrot.lane.b32.xlu0 %v883, 12
  %v963 = vpop.permute.xlu0 %962
  %964 = vrot.lane.b32.xlu0 %v886, 12
  %v965 = vpop.permute.xlu0 %964
  %966 = vrot.lane.b32.xlu0 %v888, 12
  %v967 = vpop.permute.xlu0 %966
  %968 = vrot.lane.b32.xlu0 %v891, 12
  %v969 = vpop.permute.xlu0 %968
  %970 = vrot.lane.b32.xlu0 %v893, 12
  %v971 = vpop.permute.xlu0 %970
  %972 = vrot.lane.b32.xlu0 %v896, 12
  %v973 = vpop.permute.xlu0 %972
  %974 = vrot.lane.b32.xlu0 %v898, 12
  %v975 = vpop.permute.xlu0 %974
  %976 = vrot.lane.b32.xlu0 %v901, 12
  %v977 = vpop.permute.xlu0 %976
  %978 = vrot.lane.b32.xlu0 %v903, 12
  %v979 = vpop.permute.xlu0 %978
  %980 = vrot.lane.b32.xlu0 %v906, 12
  %v981 = vpop.permute.xlu0 %980
  %982 = vrot.lane.b32.xlu0 %v908, 12
  %v983 = vpop.permute.xlu0 %982
  %984 = vrot.lane.b32.xlu0 %v911, 12
  %v985 = vpop.permute.xlu0 %984
  %986 = vrot.lane.b32.xlu0 %v913, 12
  %v987 = vpop.permute.xlu0 %986
  %988 = vrot.lane.b32.xlu0 %v916, 12
  %v989 = vpop.permute.xlu0 %988
  %990 = vrot.lane.b32.xlu0 %v918, 12
  %v991 = vpop.permute.xlu0 %990
  %992 = vrot.lane.b32.xlu0 %v921, 12
  %v993 = vpop.permute.xlu0 %992
  %994 = vrot.lane.b32.xlu0 %v923, 12
  %v995 = vpop.permute.xlu0 %994
  %996 = vrot.lane.b32.xlu0 %v926, 12
  %v997 = vpop.permute.xlu0 %996
  %998 = vrot.lane.b32.xlu0 %v928, 12
  %v999 = vpop.permute.xlu0 %998
  %1000 = vrot.lane.b32.xlu0 %v931, 12
  %v1001 = vpop.permute.xlu0 %1000
  %1002 = vrot.lane.b32.xlu0 %v933, 12
  %v1003 = vpop.permute.xlu0 %1002
  %1004 = vrot.lane.b32.xlu0 %v936, 12
  %v1005 = vpop.permute.xlu0 %1004
  %1006 = vrot.lane.b32.xlu0 %v938, 12
  %v1007 = vpop.permute.xlu0 %1006
  %1008 = vrot.lane.b32.xlu0 %v941, 12
  %v1009 = vpop.permute.xlu0 %1008
  %1010 = vrot.lane.b32.xlu0 %v943, 12
  %v1011 = vpop.permute.xlu0 %1010
  %vm1046 = vcmask 23552
  %v1047 = vsel %vm1046, %v226, %v381
  %v1048 = vsel %vm1046, %v127, %v383
  %v1049 = vsel %vm1046, %v227, %v385
  %v1050 = vsel %vm1046, %v130, %v387
  %v1051 = vsel %vm1046, %v228, %v389
  %v1052 = vsel %vm1046, %v133, %v391
  %v1053 = vsel %vm1046, %v229, %v393
  %v1054 = vsel %vm1046, %v136, %v395
  %v1055 = vsel %vm1046, %v230, %v397
  %v1056 = vsel %vm1046, %v139, %v399
  %v1057 = vsel %vm1046, %v231, %v401
  %v1058 = vsel %vm1046, %v142, %v403
  %v1059 = vsel %vm1046, %v232, %v405
  %v1060 = vsel %vm1046, %v145, %v407
  %v1061 = vsel %vm1046, %v233, %v409
  %v1062 = vsel %vm1046, %v148, %v411
  %v1063 = vsel %vm1046, %v234, %v413
  %v1064 = vsel %vm1046, %v151, %v415
  %v1065 = vsel %vm1046, %v235, %v417
  %v1066 = vsel %vm1046, %v154, %v419
  %v1067 = vsel %vm1046, %v236, %v421
  %v1068 = vsel %vm1046, %v157, %v423
  %v1069 = vsel %vm1046, %v237, %v425
  %v1070 = vsel %vm1046, %v160, %v427
  %v1071 = vsel %vm1046, %v238, %v429
  %v1072 = vsel %vm1046, %v163, %v431
  %v1073 = vsel %vm1046, %v239, %v433
  %v1074 = vsel %vm1046, %v166, %v435
  %v1075 = vsel %vm1046, %v240, %v437
  %v1076 = vsel %vm1046, %v169, %v439
  %v1077 = vsel %vm1046, %v241, %v441
  %v1078 = vsel %vm1046, %v172, %v443
  %v1079 = vsel %vm1046, %v242, %v445
  %v1080 = vsel %vm1046, %v175, %v447
  %vm1081 = vcmask 48128
  %v1082 = vsel %vm1081, %v1047, %v569
  %v1083 = vsel %vm1081, %v1048, %v571
  %v1084 = vsel %vm1081, %v1049, %v573
  %v1085 = vsel %vm1081, %v1050, %v575
  %v1086 = vsel %vm1081, %v1051, %v577
  %v1087 = vsel %vm1081, %v1052, %v579
  %v1088 = vsel %vm1081, %v1053, %v581
  %v1089 = vsel %vm1081, %v1054, %v583
  %v1090 = vsel %vm1081, %v1055, %v585
  %v1091 = vsel %vm1081, %v1056, %v587
  %v1092 = vsel %vm1081, %v1057, %v589
  %v1093 = vsel %vm1081, %v1058, %v591
  %v1094 = vsel %vm1081, %v1059, %v593
  %v1095 = vsel %vm1081, %v1060, %v595
  %v1096 = vsel %vm1081, %v1061, %v597
  %v1097 = vsel %vm1081, %v1062, %v599
  %v1098 = vsel %vm1081, %v1063, %v601
  %v1099 = vsel %vm1081, %v1064, %v603
  %v1100 = vsel %vm1081, %v1065, %v605
  %v1101 = vsel %vm1081, %v1066, %v607
  %v1102 = vsel %vm1081, %v1067, %v609
  %v1103 = vsel %vm1081, %v1068, %v611
  %v1104 = vsel %vm1081, %v1069, %v613
  %v1105 = vsel %vm1081, %v1070, %v615
  %v1106 = vsel %vm1081, %v1071, %v617
  %v1107 = vsel %vm1081, %v1072, %v619
  %v1108 = vsel %vm1081, %v1073, %v621
  %v1109 = vsel %vm1081, %v1074, %v623
  %v1110 = vsel %vm1081, %v1075, %v625
  %v1111 = vsel %vm1081, %v1076, %v627
  %v1112 = vsel %vm1081, %v1077, %v629
  %v1113 = vsel %vm1081, %v1078, %v631
  %v1114 = vsel %vm1081, %v1079, %v633
  %v1115 = vsel %vm1081, %v1080, %v635
  %vm1116 = vcmask 72704
  %v1117 = vsel %vm1116, %v1082, %v757
  %v1118 = vsel %vm1116, %v1083, %v759
  %v1119 = vsel %vm1116, %v1084, %v761
  %v1120 = vsel %vm1116, %v1085, %v763
  %v1121 = vsel %vm1116, %v1086, %v765
  %v1122 = vsel %vm1116, %v1087, %v767
  %v1123 = vsel %vm1116, %v1088, %v769
  %v1124 = vsel %vm1116, %v1089, %v771
  %v1125 = vsel %vm1116, %v1090, %v773
  %v1126 = vsel %vm1116, %v1091, %v775
  %v1127 = vsel %vm1116, %v1092, %v777
  %v1128 = vsel %vm1116, %v1093, %v779
  %v1129 = vsel %vm1116, %v1094, %v781
  %v1130 = vsel %vm1116, %v1095, %v783
  %v1131 = vsel %vm1116, %v1096, %v785
  %v1132 = vsel %vm1116, %v1097, %v787
  %v1133 = vsel %vm1116, %v1098, %v789
  %v1134 = vsel %vm1116, %v1099, %v791
  %v1135 = vsel %vm1116, %v1100, %v793
  %v1136 = vsel %vm1116, %v1101, %v795
  %v1137 = vsel %vm1116, %v1102, %v797
  %v1138 = vsel %vm1116, %v1103, %v799
  %v1139 = vsel %vm1116, %v1104, %v801
  %v1140 = vsel %vm1116, %v1105, %v803
  %v1141 = vsel %vm1116, %v1106, %v805
  %v1142 = vsel %vm1116, %v1107, %v807
  %v1143 = vsel %vm1116, %v1108, %v809
  %v1144 = vsel %vm1116, %v1109, %v811
  %v1145 = vsel %vm1116, %v1110, %v813
  %v1146 = vsel %vm1116, %v1111, %v815
  %v1147 = vsel %vm1116, %v1112, %v817
  %v1148 = vsel %vm1116, %v1113, %v819
  %v1149 = vsel %vm1116, %v1114, %v821
  %v1150 = vsel %vm1116, %v1115, %v823
  %vm1151 = vcmask 97280
  %v1152 = vsel %vm1151, %v1117, %v945
  %v1153 = vsel %vm1151, %v1118, %v947
  %v1154 = vsel %vm1151, %v1119, %v949
  %v1155 = vsel %vm1151, %v1120, %v951
  %v1156 = vsel %vm1151, %v1121, %v953
  %v1157 = vsel %vm1151, %v1122, %v955
  %v1158 = vsel %vm1151, %v1123, %v957
  %v1159 = vsel %vm1151, %v1124, %v959
  %v1160 = vsel %vm1151, %v1125, %v961
  %v1161 = vsel %vm1151, %v1126, %v963
  %v1162 = vsel %vm1151, %v1127, %v965
  %v1163 = vsel %vm1151, %v1128, %v967
  %v1164 = vsel %vm1151, %v1129, %v969
  %v1165 = vsel %vm1151, %v1130, %v971
  %v1166 = vsel %vm1151, %v1131, %v973
  %v1167 = vsel %vm1151, %v1132, %v975
  %v1168 = vsel %vm1151, %v1133, %v977
  %v1169 = vsel %vm1151, %v1134, %v979
  %v1170 = vsel %vm1151, %v1135, %v981
  %v1171 = vsel %vm1151, %v1136, %v983
  %v1172 = vsel %vm1151, %v1137, %v985
  %v1173 = vsel %vm1151, %v1138, %v987
  %v1174 = vsel %vm1151, %v1139, %v989
  %v1175 = vsel %vm1151, %v1140, %v991
  %v1176 = vsel %vm1151, %v1141, %v993
  %v1177 = vsel %vm1151, %v1142, %v995
  %v1178 = vsel %vm1151, %v1143, %v997
  %v1179 = vsel %vm1151, %v1144, %v999
  %v1180 = vsel %vm1151, %v1145, %v1001
  %v1181 = vsel %vm1151, %v1146, %v1003
  %v1182 = vsel %vm1151, %v1147, %v1005
  %v1183 = vsel %vm1151, %v1148, %v1007
  %v1184 = vsel %vm1151, %v1149, %v1009
  %v1185 = vsel %vm1151, %v1150, %v1011
  %1218 = vrot.lane.b32.xlu0 %v1152, 15
  %v1219 = vpop.permute.xlu0 %1218
  %1220 = vrot.lane.b32.xlu0 %v1153, 15
  %v1221 = vpop.permute.xlu0 %1220
  %1222 = vrot.lane.b32.xlu0 %v1154, 15
  %v1223 = vpop.permute.xlu0 %1222
  %1224 = vrot.lane.b32.xlu0 %v1155, 15
  %v1225 = vpop.permute.xlu0 %1224
  %1226 = vrot.lane.b32.xlu0 %v1156, 15
  %v1227 = vpop.permute.xlu0 %1226
  %1228 = vrot.lane.b32.xlu0 %v1157, 15
  %v1229 = vpop.permute.xlu0 %1228
  %1230 = vrot.lane.b32.xlu0 %v1158, 15
  %v1231 = vpop.permute.xlu0 %1230
  %1232 = vrot.lane.b32.xlu0 %v1159, 15
  %v1233 = vpop.permute.xlu0 %1232
  %1234 = vrot.lane.b32.xlu0 %v1160, 15
  %v1235 = vpop.permute.xlu0 %1234
  %1236 = vrot.lane.b32.xlu0 %v1161, 15
  %v1237 = vpop.permute.xlu0 %1236
  %1238 = vrot.lane.b32.xlu0 %v1162, 15
  %v1239 = vpop.permute.xlu0 %1238
  %1240 = vrot.lane.b32.xlu0 %v1163, 15
  %v1241 = vpop.permute.xlu0 %1240
  %1242 = vrot.lane.b32.xlu0 %v1164, 15
  %v1243 = vpop.permute.xlu0 %1242
  %1244 = vrot.lane.b32.xlu0 %v1165, 15
  %v1245 = vpop.permute.xlu0 %1244
  %1246 = vrot.lane.b32.xlu0 %v1166, 15
  %v1247 = vpop.permute.xlu0 %1246
  %1248 = vrot.lane.b32.xlu0 %v1167, 15
  %v1249 = vpop.permute.xlu0 %1248
  %1250 = vrot.lane.b32.xlu0 %v1168, 15
  %v1251 = vpop.permute.xlu0 %1250
  %1252 = vrot.lane.b32.xlu0 %v1169, 15
  %v1253 = vpop.permute.xlu0 %1252
  %1254 = vrot.lane.b32.xlu0 %v1170, 15
  %v1255 = vpop.permute.xlu0 %1254
  %1256 = vrot.lane.b32.xlu0 %v1171, 15
  %v1257 = vpop.permute.xlu0 %1256
  %1258 = vrot.lane.b32.xlu0 %v1172, 15
  %v1259 = vpop.permute.xlu0 %1258
  %1260 = vrot.lane.b32.xlu0 %v1173, 15
  %v1261 = vpop.permute.xlu0 %1260
  %1262 = vrot.lane.b32.xlu0 %v1174, 15
  %v1263 = vpop.permute.xlu0 %1262
  %1264 = vrot.lane.b32.xlu0 %v1175, 15
  %v1265 = vpop.permute.xlu0 %1264
  %1266 = vrot.lane.b32.xlu0 %v1176, 15
  %v1267 = vpop.permute.xlu0 %1266
  %1268 = vrot.lane.b32.xlu0 %v1177, 15
  %v1269 = vpop.permute.xlu0 %1268
  %1270 = vrot.lane.b32.xlu0 %v1178, 15
  %v1271 = vpop.permute.xlu0 %1270
  %1272 = vrot.lane.b32.xlu0 %v1179, 15
  %v1273 = vpop.permute.xlu0 %1272
  %1274 = vrot.lane.b32.xlu0 %v1180, 15
  %v1275 = vpop.permute.xlu0 %1274
  %1276 = vrot.lane.b32.xlu0 %v1181, 15
  %v1277 = vpop.permute.xlu0 %1276
  %1278 = vrot.lane.b32.xlu0 %v1182, 15
  %v1279 = vpop.permute.xlu0 %1278
  %1280 = vrot.lane.b32.xlu0 %v1183, 15
  %v1281 = vpop.permute.xlu0 %1280
  %1316 = vrot.lane.b32.xlu0 %v1154, 30
  %v1317 = vpop.permute.xlu0 %1316
  %1318 = vrot.lane.b32.xlu0 %v1155, 30
  %v1319 = vpop.permute.xlu0 %1318
  %1320 = vrot.lane.b32.xlu0 %v1156, 30
  %v1321 = vpop.permute.xlu0 %1320
  %1322 = vrot.lane.b32.xlu0 %v1157, 30
  %v1323 = vpop.permute.xlu0 %1322
  %1324 = vrot.lane.b32.xlu0 %v1158, 30
  %v1325 = vpop.permute.xlu0 %1324
  %1326 = vrot.lane.b32.xlu0 %v1159, 30
  %v1327 = vpop.permute.xlu0 %1326
  %1328 = vrot.lane.b32.xlu0 %v1160, 30
  %v1329 = vpop.permute.xlu0 %1328
  %1330 = vrot.lane.b32.xlu0 %v1161, 30
  %v1331 = vpop.permute.xlu0 %1330
  %1332 = vrot.lane.b32.xlu0 %v1162, 30
  %v1333 = vpop.permute.xlu0 %1332
  %1334 = vrot.lane.b32.xlu0 %v1163, 30
  %v1335 = vpop.permute.xlu0 %1334
  %1336 = vrot.lane.b32.xlu0 %v1164, 30
  %v1337 = vpop.permute.xlu0 %1336
  %1338 = vrot.lane.b32.xlu0 %v1165, 30
  %v1339 = vpop.permute.xlu0 %1338
  %1340 = vrot.lane.b32.xlu0 %v1166, 30
  %v1341 = vpop.permute.xlu0 %1340
  %1342 = vrot.lane.b32.xlu0 %v1167, 30
  %v1343 = vpop.permute.xlu0 %1342
  %1344 = vrot.lane.b32.xlu0 %v1168, 30
  %v1345 = vpop.permute.xlu0 %1344
  %1346 = vrot.lane.b32.xlu0 %v1169, 30
  %v1347 = vpop.permute.xlu0 %1346
  %1348 = vrot.lane.b32.xlu0 %v1170, 30
  %v1349 = vpop.permute.xlu0 %1348
  %1350 = vrot.lane.b32.xlu0 %v1171, 30
  %v1351 = vpop.permute.xlu0 %1350
  %1352 = vrot.lane.b32.xlu0 %v1172, 30
  %v1353 = vpop.permute.xlu0 %1352
  %1354 = vrot.lane.b32.xlu0 %v1173, 30
  %v1355 = vpop.permute.xlu0 %1354
  %1356 = vrot.lane.b32.xlu0 %v1174, 30
  %v1357 = vpop.permute.xlu0 %1356
  %1358 = vrot.lane.b32.xlu0 %v1175, 30
  %v1359 = vpop.permute.xlu0 %1358
  %1360 = vrot.lane.b32.xlu0 %v1176, 30
  %v1361 = vpop.permute.xlu0 %1360
  %1362 = vrot.lane.b32.xlu0 %v1177, 30
  %v1363 = vpop.permute.xlu0 %1362
  %1364 = vrot.lane.b32.xlu0 %v1178, 30
  %v1365 = vpop.permute.xlu0 %1364
  %1366 = vrot.lane.b32.xlu0 %v1179, 30
  %v1367 = vpop.permute.xlu0 %1366
  %1368 = vrot.lane.b32.xlu0 %v1180, 30
  %v1369 = vpop.permute.xlu0 %1368
  %1370 = vrot.lane.b32.xlu0 %v1181, 30
  %v1371 = vpop.permute.xlu0 %1370
  %1372 = vrot.lane.b32.xlu0 %v1182, 30
  %v1373 = vpop.permute.xlu0 %1372
  %1374 = vrot.lane.b32.xlu0 %v1183, 30
  %v1375 = vpop.permute.xlu0 %1374
  %1376 = vrot.lane.b32.xlu0 %v1184, 30
  %v1377 = vpop.permute.xlu0 %1376
  %1378 = vrot.lane.b32.xlu0 %v1185, 30
  %v1379 = vpop.permute.xlu0 %1378
  %1412 = vrot.lane.b32.xlu0 %v1156, 45
  %v1413 = vpop.permute.xlu0 %1412
  %1414 = vrot.lane.b32.xlu0 %v1157, 45
  %v1415 = vpop.permute.xlu0 %1414
  %1416 = vrot.lane.b32.xlu0 %v1158, 45
  %v1417 = vpop.permute.xlu0 %1416
  %1418 = vrot.lane.b32.xlu0 %v1159, 45
  %v1419 = vpop.permute.xlu0 %1418
  %1420 = vrot.lane.b32.xlu0 %v1160, 45
  %v1421 = vpop.permute.xlu0 %1420
  %1422 = vrot.lane.b32.xlu0 %v1161, 45
  %v1423 = vpop.permute.xlu0 %1422
  %1424 = vrot.lane.b32.xlu0 %v1162, 45
  %v1425 = vpop.permute.xlu0 %1424
  %1426 = vrot.lane.b32.xlu0 %v1163, 45
  %v1427 = vpop.permute.xlu0 %1426
  %1428 = vrot.lane.b32.xlu0 %v1164, 45
  %v1429 = vpop.permute.xlu0 %1428
  %1430 = vrot.lane.b32.xlu0 %v1165, 45
  %v1431 = vpop.permute.xlu0 %1430
  %1432 = vrot.lane.b32.xlu0 %v1166, 45
  %v1433 = vpop.permute.xlu0 %1432
  %1434 = vrot.lane.b32.xlu0 %v1167, 45
  %v1435 = vpop.permute.xlu0 %1434
  %1436 = vrot.lane.b32.xlu0 %v1168, 45
  %v1437 = vpop.permute.xlu0 %1436
  %1438 = vrot.lane.b32.xlu0 %v1169, 45
  %v1439 = vpop.permute.xlu0 %1438
  %1440 = vrot.lane.b32.xlu0 %v1170, 45
  %v1441 = vpop.permute.xlu0 %1440
  %1442 = vrot.lane.b32.xlu0 %v1171, 45
  %v1443 = vpop.permute.xlu0 %1442
  %1444 = vrot.lane.b32.xlu0 %v1172, 45
  %v1445 = vpop.permute.xlu0 %1444
  %1446 = vrot.lane.b32.xlu0 %v1173, 45
  %v1447 = vpop.permute.xlu0 %1446
  %1448 = vrot.lane.b32.xlu0 %v1174, 45
  %v1449 = vpop.permute.xlu0 %1448
  %1450 = vrot.lane.b32.xlu0 %v1175, 45
  %v1451 = vpop.permute.xlu0 %1450
  %1452 = vrot.lane.b32.xlu0 %v1176, 45
  %v1453 = vpop.permute.xlu0 %1452
  %1454 = vrot.lane.b32.xlu0 %v1177, 45
  %v1455 = vpop.permute.xlu0 %1454
  %1456 = vrot.lane.b32.xlu0 %v1178, 45
  %v1457 = vpop.permute.xlu0 %1456
  %1458 = vrot.lane.b32.xlu0 %v1179, 45
  %v1459 = vpop.permute.xlu0 %1458
  %1460 = vrot.lane.b32.xlu0 %v1180, 45
  %v1461 = vpop.permute.xlu0 %1460
  %1462 = vrot.lane.b32.xlu0 %v1181, 45
  %v1463 = vpop.permute.xlu0 %1462
  %1464 = vrot.lane.b32.xlu0 %v1182, 45
  %v1465 = vpop.permute.xlu0 %1464
  %1466 = vrot.lane.b32.xlu0 %v1183, 45
  %v1467 = vpop.permute.xlu0 %1466
  %1468 = vrot.lane.b32.xlu0 %v1184, 45
  %v1469 = vpop.permute.xlu0 %1468
  %1470 = vrot.lane.b32.xlu0 %v1185, 45
  %v1471 = vpop.permute.xlu0 %1470
  %1472 = vrot.lane.b32.xlu0 %v1152, 45
  %v1473 = vpop.permute.xlu0 %1472
  %1474 = vrot.lane.b32.xlu0 %v1153, 45
  %v1475 = vpop.permute.xlu0 %1474
  %1508 = vrot.lane.b32.xlu0 %v1158, 60
  %v1509 = vpop.permute.xlu0 %1508
  %1510 = vrot.lane.b32.xlu0 %v1159, 60
  %v1511 = vpop.permute.xlu0 %1510
  %1512 = vrot.lane.b32.xlu0 %v1160, 60
  %v1513 = vpop.permute.xlu0 %1512
  %1514 = vrot.lane.b32.xlu0 %v1161, 60
  %v1515 = vpop.permute.xlu0 %1514
  %1516 = vrot.lane.b32.xlu0 %v1162, 60
  %v1517 = vpop.permute.xlu0 %1516
  %1518 = vrot.lane.b32.xlu0 %v1163, 60
  %v1519 = vpop.permute.xlu0 %1518
  %1520 = vrot.lane.b32.xlu0 %v1164, 60
  %v1521 = vpop.permute.xlu0 %1520
  %1522 = vrot.lane.b32.xlu0 %v1165, 60
  %v1523 = vpop.permute.xlu0 %1522
  %1524 = vrot.lane.b32.xlu0 %v1166, 60
  %v1525 = vpop.permute.xlu0 %1524
  %1526 = vrot.lane.b32.xlu0 %v1167, 60
  %v1527 = vpop.permute.xlu0 %1526
  %1528 = vrot.lane.b32.xlu0 %v1168, 60
  %v1529 = vpop.permute.xlu0 %1528
  %1530 = vrot.lane.b32.xlu0 %v1169, 60
  %v1531 = vpop.permute.xlu0 %1530
  %1532 = vrot.lane.b32.xlu0 %v1170, 60
  %v1533 = vpop.permute.xlu0 %1532
  %1534 = vrot.lane.b32.xlu0 %v1171, 60
  %v1535 = vpop.permute.xlu0 %1534
  %1536 = vrot.lane.b32.xlu0 %v1172, 60
  %v1537 = vpop.permute.xlu0 %1536
  %1538 = vrot.lane.b32.xlu0 %v1173, 60
  %v1539 = vpop.permute.xlu0 %1538
  %1540 = vrot.lane.b32.xlu0 %v1174, 60
  %v1541 = vpop.permute.xlu0 %1540
  %1542 = vrot.lane.b32.xlu0 %v1175, 60
  %v1543 = vpop.permute.xlu0 %1542
  %1544 = vrot.lane.b32.xlu0 %v1176, 60
  %v1545 = vpop.permute.xlu0 %1544
  %1546 = vrot.lane.b32.xlu0 %v1177, 60
  %v1547 = vpop.permute.xlu0 %1546
  %1548 = vrot.lane.b32.xlu0 %v1178, 60
  %v1549 = vpop.permute.xlu0 %1548
  %1550 = vrot.lane.b32.xlu0 %v1179, 60
  %v1551 = vpop.permute.xlu0 %1550
  %1552 = vrot.lane.b32.xlu0 %v1180, 60
  %v1553 = vpop.permute.xlu0 %1552
  %1554 = vrot.lane.b32.xlu0 %v1181, 60
  %v1555 = vpop.permute.xlu0 %1554
  %1556 = vrot.lane.b32.xlu0 %v1182, 60
  %v1557 = vpop.permute.xlu0 %1556
  %1558 = vrot.lane.b32.xlu0 %v1183, 60
  %v1559 = vpop.permute.xlu0 %1558
  %1560 = vrot.lane.b32.xlu0 %v1184, 60
  %v1561 = vpop.permute.xlu0 %1560
  %1562 = vrot.lane.b32.xlu0 %v1185, 60
  %v1563 = vpop.permute.xlu0 %1562
  %1564 = vrot.lane.b32.xlu0 %v1152, 60
  %v1565 = vpop.permute.xlu0 %1564
  %1566 = vrot.lane.b32.xlu0 %v1153, 60
  %v1567 = vpop.permute.xlu0 %1566
  %vm1598 = vcmask 121856
  %v1599 = vsel %vm1598, %v1152, %v1219
  %v1600 = vsel %vm1598, %v1153, %v1221
  %v1601 = vsel %vm1598, %v1152, %v1223
  %v1602 = vsel %vm1598, %v1153, %v1225
  %v1603 = vsel %vm1598, %v1154, %v1227
  %v1604 = vsel %vm1598, %v1155, %v1229
  %v1605 = vsel %vm1598, %v1156, %v1231
  %v1606 = vsel %vm1598, %v1157, %v1233
  %v1607 = vsel %vm1598, %v1158, %v1235
  %v1608 = vsel %vm1598, %v1159, %v1237
  %v1609 = vsel %vm1598, %v1160, %v1239
  %v1610 = vsel %vm1598, %v1161, %v1241
  %v1611 = vsel %vm1598, %v1162, %v1243
  %v1612 = vsel %vm1598, %v1163, %v1245
  %v1613 = vsel %vm1598, %v1164, %v1247
  %v1614 = vsel %vm1598, %v1165, %v1249
  %v1615 = vsel %vm1598, %v1166, %v1251
  %v1616 = vsel %vm1598, %v1167, %v1253
  %v1617 = vsel %vm1598, %v1168, %v1255
  %v1618 = vsel %vm1598, %v1169, %v1257
  %v1619 = vsel %vm1598, %v1170, %v1259
  %v1620 = vsel %vm1598, %v1171, %v1261
  %v1621 = vsel %vm1598, %v1172, %v1263
  %v1622 = vsel %vm1598, %v1173, %v1265
  %v1623 = vsel %vm1598, %v1174, %v1267
  %v1624 = vsel %vm1598, %v1175, %v1269
  %v1625 = vsel %vm1598, %v1176, %v1271
  %v1626 = vsel %vm1598, %v1177, %v1273
  %v1627 = vsel %vm1598, %v1178, %v1275
  %v1628 = vsel %vm1598, %v1179, %v1277
  %v1629 = vsel %vm1598, %v1180, %v1279
  %v1630 = vsel %vm1598, %v1181, %v1281
  %vm1631 = vcmask 244736
  %v1632 = vsel %vm1631, %v1599, %v1317
  %v1633 = vsel %vm1631, %v1600, %v1319
  %v1634 = vsel %vm1631, %v1601, %v1321
  %v1635 = vsel %vm1631, %v1602, %v1323
  %v1636 = vsel %vm1631, %v1603, %v1325
  %v1637 = vsel %vm1631, %v1604, %v1327
  %v1638 = vsel %vm1631, %v1605, %v1329
  %v1639 = vsel %vm1631, %v1606, %v1331
  %v1640 = vsel %vm1631, %v1607, %v1333
  %v1641 = vsel %vm1631, %v1608, %v1335
  %v1642 = vsel %vm1631, %v1609, %v1337
  %v1643 = vsel %vm1631, %v1610, %v1339
  %v1644 = vsel %vm1631, %v1611, %v1341
  %v1645 = vsel %vm1631, %v1612, %v1343
  %v1646 = vsel %vm1631, %v1613, %v1345
  %v1647 = vsel %vm1631, %v1614, %v1347
  %v1648 = vsel %vm1631, %v1615, %v1349
  %v1649 = vsel %vm1631, %v1616, %v1351
  %v1650 = vsel %vm1631, %v1617, %v1353
  %v1651 = vsel %vm1631, %v1618, %v1355
  %v1652 = vsel %vm1631, %v1619, %v1357
  %v1653 = vsel %vm1631, %v1620, %v1359
  %v1654 = vsel %vm1631, %v1621, %v1361
  %v1655 = vsel %vm1631, %v1622, %v1363
  %v1656 = vsel %vm1631, %v1623, %v1365
  %v1657 = vsel %vm1631, %v1624, %v1367
  %v1658 = vsel %vm1631, %v1625, %v1369
  %v1659 = vsel %vm1631, %v1626, %v1371
  %v1660 = vsel %vm1631, %v1627, %v1373
  %v1661 = vsel %vm1631, %v1628, %v1375
  %v1662 = vsel %vm1631, %v1629, %v1377
  %v1663 = vsel %vm1631, %v1630, %v1379
  %vm1664 = vcmask 367616
  %v1665 = vsel %vm1664, %v1632, %v1413
  %v1666 = vsel %vm1664, %v1633, %v1415
  %v1667 = vsel %vm1664, %v1634, %v1417
  %v1668 = vsel %vm1664, %v1635, %v1419
  %v1669 = vsel %vm1664, %v1636, %v1421
  %v1670 = vsel %vm1664, %v1637, %v1423
  %v1671 = vsel %vm1664, %v1638, %v1425
  %v1672 = vsel %vm1664, %v1639, %v1427
  %v1673 = vsel %vm1664, %v1640, %v1429
  %v1674 = vsel %vm1664, %v1641, %v1431
  %v1675 = vsel %vm1664, %v1642, %v1433
  %v1676 = vsel %vm1664, %v1643, %v1435
  %v1677 = vsel %vm1664, %v1644, %v1437
  %v1678 = vsel %vm1664, %v1645, %v1439
  %v1679 = vsel %vm1664, %v1646, %v1441
  %v1680 = vsel %vm1664, %v1647, %v1443
  %v1681 = vsel %vm1664, %v1648, %v1445
  %v1682 = vsel %vm1664, %v1649, %v1447
  %v1683 = vsel %vm1664, %v1650, %v1449
  %v1684 = vsel %vm1664, %v1651, %v1451
  %v1685 = vsel %vm1664, %v1652, %v1453
  %v1686 = vsel %vm1664, %v1653, %v1455
  %v1687 = vsel %vm1664, %v1654, %v1457
  %v1688 = vsel %vm1664, %v1655, %v1459
  %v1689 = vsel %vm1664, %v1656, %v1461
  %v1690 = vsel %vm1664, %v1657, %v1463
  %v1691 = vsel %vm1664, %v1658, %v1465
  %v1692 = vsel %vm1664, %v1659, %v1467
  %v1693 = vsel %vm1664, %v1660, %v1469
  %v1694 = vsel %vm1664, %v1661, %v1471
  %v1695 = vsel %vm1664, %v1662, %v1473
  %v1696 = vsel %vm1664, %v1663, %v1475
  %vm1697 = vcmask 490496
  %v1698 = vsel %vm1697, %v1665, %v1509
  %v1699 = vsel %vm1697, %v1666, %v1511
  %v1700 = vsel %vm1697, %v1667, %v1513
  %v1701 = vsel %vm1697, %v1668, %v1515
  %v1702 = vsel %vm1697, %v1669, %v1517
  %v1703 = vsel %vm1697, %v1670, %v1519
  %v1704 = vsel %vm1697, %v1671, %v1521
  %v1705 = vsel %vm1697, %v1672, %v1523
  %v1706 = vsel %vm1697, %v1673, %v1525
  %v1707 = vsel %vm1697, %v1674, %v1527
  %v1708 = vsel %vm1697, %v1675, %v1529
  %v1709 = vsel %vm1697, %v1676, %v1531
  %v1710 = vsel %vm1697, %v1677, %v1533
  %v1711 = vsel %vm1697, %v1678, %v1535
  %v1712 = vsel %vm1697, %v1679, %v1537
  %v1713 = vsel %vm1697, %v1680, %v1539
  %v1714 = vsel %vm1697, %v1681, %v1541
  %v1715 = vsel %vm1697, %v1682, %v1543
  %v1716 = vsel %vm1697, %v1683, %v1545
  %v1717 = vsel %vm1697, %v1684, %v1547
  %v1718 = vsel %vm1697, %v1685, %v1549
  %v1719 = vsel %vm1697, %v1686, %v1551
  %v1720 = vsel %vm1697, %v1687, %v1553
  %v1721 = vsel %vm1697, %v1688, %v1555
  %v1722 = vsel %vm1697, %v1689, %v1557
  %v1723 = vsel %vm1697, %v1690, %v1559
  %v1724 = vsel %vm1697, %v1691, %v1561
  %v1725 = vsel %vm1697, %v1692, %v1563
  %v1726 = vsel %vm1697, %v1693, %v1565
  %v1727 = vsel %vm1697, %v1694, %v1567
  %v1728 = vsel %vm1697, %v1695, %v1565
  %v1729 = vsel %vm1697, %v1696, %v1567
  %v1730 = vld [vmem:[%s0] sm:$0xff]
  %v1731 = vld [vmem:[%s0 + $0x8] sm:$0xff]
  %v1732 = vld [vmem:[%s0 + $0x10] sm:$0xff]
  %v1733 = vld [vmem:[%s0 + $0x18] sm:$0xff]
  %v1734 = vld [vmem:[%s0 + $0x20] sm:$0xff]
  %v1735 = vld [vmem:[%s0 + $0x28] sm:$0xff]
  %v1736 = vld [vmem:[%s0 + $0x30] sm:$0xff]
  %v1737 = vld [vmem:[%s0 + $0x38] sm:$0xff]
  %v1738 = vld [vmem:[%s0 + $0x40] sm:$0xff]
  %v1739 = vld [vmem:[%s0 + $0x48] sm:$0x7]
  %v1740 = vld [vmem:[%s1] sm:$0x1]
  %v1742 = vlaneseq
  %v1743 = vshrl.u32 %v1742, 7
  %v1744 = vsub.s32 0, %v1743
  %v1745 = vrot.slane %v1740, %v1744
  %vm1747 = vcmask 613376
  %v1749 = vsel %vm1747, %v1698, 0
  %v1752 = vsel %vm1747, %v1699, 0
  %v1755 = vsel %vm1747, %v1700, 0
  %v1758 = vsel %vm1747, %v1701, 0
  %v1761 = vsel %vm1747, %v1702, 0
  %v1764 = vsel %vm1747, %v1703, 0
  %v1767 = vsel %vm1747, %v1704, 0
  %v1770 = vsel %vm1747, %v1705, 0
  %v1773 = vsel %vm1747, %v1706, 0
  %v1776 = vsel %vm1747, %v1707, 0
  %v1779 = vsel %vm1747, %v1708, 0
  %v1782 = vsel %vm1747, %v1709, 0
  %v1785 = vsel %vm1747, %v1710, 0
  %v1788 = vsel %vm1747, %v1711, 0
  %v1791 = vsel %vm1747, %v1712, 0
  %v1794 = vsel %vm1747, %v1713, 0
  %v1797 = vsel %vm1747, %v1714, 0
  %v1800 = vsel %vm1747, %v1715, 0
  %v1803 = vsel %vm1747, %v1716, 0
  %v1806 = vsel %vm1747, %v1717, 0
  %v1809 = vsel %vm1747, %v1718, 0
  %v1812 = vsel %vm1747, %v1719, 0
  %v1815 = vsel %vm1747, %v1720, 0
  %v1818 = vsel %vm1747, %v1721, 0
  %v1821 = vsel %vm1747, %v1722, 0
  %v1824 = vsel %vm1747, %v1723, 0
  %v1827 = vsel %vm1747, %v1724, 0
  %v1830 = vsel %vm1747, %v1725, 0
  %v1833 = vsel %vm1747, %v1726, 0
  %v1836 = vsel %vm1747, %v1727, 0
  %v1839 = vsel %vm1747, %v1728, 0
  %v1842 = vsel %vm1747, %v1729, 0
  %vm1844 = vcmask 1042432
  %v1846 = vsel %vm1844, %v1739, 0
  %1848 = vmatprep.subr.mxu0 0.0
  %1849 = vmatpush1.msra.mxu0 %v1730
  %1850 = vmatprep.subr.mxu0 0.0
  %1851 = vmatpush1.msra.mxu0 %v1731
  %1852 = vmatprep.subr.mxu0 0.0
  %1853 = vmatpush1.msra.mxu0 %v1732
  %1854 = vmatprep.subr.mxu0 0.0
  %1855 = vmatpush1.msra.mxu0 %v1733
  %1856 = vmatprep.subr.mxu0 0.0
  %1857 = vmatpush1.msra.mxu0 %v1734
  %1858 = vmatprep.subr.mxu0 0.0
  %1859 = vmatpush1.msra.mxu0 %v1735
  %1860 = vmatprep.subr.mxu0 0.0
  %1861 = vmatpush1.msra.mxu0 %v1736
  %1862 = vmatprep.subr.mxu0 0.0
  %1863 = vmatpush1.msra.mxu0 %v1737
  %1864 = vmatprep.subr.mxu0 0.0
  %1865 = vmatpush1.msra.mxu0 %v1738
  %1866 = vmatprep.subr.mxu0 0.0
  %1867 = vmatpush1.msra.mxu0 %v1846
  %1868 = vmatprep.subr.mxu0 0.0
  %1869 = vmatpush1.msra.mxu0 0.0
  %1870 = vmatprep.subr.mxu0 0.0
  %1871 = vmatpush1.msra.mxu0 0.0
  %1872 = vmatprep.subr.mxu0 0.0
  %1873 = vmatpush1.msra.mxu0 0.0
  %1874 = vmatprep.subr.mxu0 0.0
  %1875 = vmatpush1.msra.mxu0 0.0
  %1876 = vmatprep.subr.mxu0 0.0
  %1877 = vmatpush1.msra.mxu0 0.0
  %1878 = vmatprep.subr.mxu0 0.0
  %1879 = vmatpush1.msra.mxu0 0.0
  %1880 = vmatprep.subr.mxu0 0.0
  %1881 = vmatpush1.msra.mxu0 0.0
  %1882 = vmatprep.subr.mxu0 0.0
  %1883 = vmatpush1.msra.mxu0 0.0
  %1884 = vmatprep.subr.mxu0 0.0
  %1885 = vmatpush1.msra.mxu0 0.0
  %1886 = vmatprep.subr.mxu0 0.0
  %1887 = vmatpush1.msra.mxu0 0.0
  %1888 = vmatprep.subr.mxu0 0.0
  %1889 = vmatpush1.msra.mxu0 0.0
  %1890 = vmatprep.subr.mxu0 0.0
  %1891 = vmatpush1.msra.mxu0 0.0
  %1892 = vmatprep.subr.mxu0 0.0
  %1893 = vmatpush1.msra.mxu0 0.0
  %1894 = vmatprep.subr.mxu0 0.0
  %1895 = vmatpush1.msra.mxu0 0.0
  %1896 = vmatprep.subr.mxu0 0.0
  %1897 = vmatpush1.msra.mxu0 0.0
  %1898 = vmatprep.subr.mxu0 0.0
  %1899 = vmatpush1.msra.mxu0 0.0
  %1900 = vmatprep.subr.mxu0 0.0
  %1901 = vmatpush1.msra.mxu0 0.0
  %1902 = vmatprep.subr.mxu0 0.0
  %1903 = vmatpush1.msra.mxu0 0.0
  %1904 = vmatprep.subr.mxu0 0.0
  %1905 = vmatpush1.msra.mxu0 0.0
  %1906 = vmatprep.subr.mxu0 0.0
  %1907 = vmatpush1.msra.mxu0 0.0
  %1908 = vmatprep.subr.mxu0 0.0
  %1909 = vmatpush1.msra.mxu0 0.0
  %1910 = vmatprep.subr.mxu0 0.0
  %1911 = vmatpush1.msra.mxu0 0.0
  %1912 = vmatprep.mubr.f32.mxu0 0.0
  %1913 = vmatmul.mubr.f32.gmra.mrb[0].mxu0 %v1749
  %v1914 = vpop.f32.mrb[0].mxu0
  %v1915 = vadd.f32 %v1745, %v1914
  %v1916 = vpop.f32.mrb[0].mxu0
  %1917 = vmatprep.mubr.f32.mxu0 0.0
  %1918 = vmatmul.mubr.f32.gmra.mrb[0].mxu0 %v1752
  %v1919 = vpop.f32.mrb[0].mxu0
  %v1920 = vadd.f32 %v1745, %v1919
  %v1921 = vpop.f32.mrb[0].mxu0
  %1922 = vmatprep.mubr.f32.mxu0 0.0
  %1923 = vmatmul.mubr.f32.gmra.mrb[0].mxu0 %v1755
  %v1924 = vpop.f32.mrb[0].mxu0
  %v1925 = vadd.f32 %v1745, %v1924
  %v1926 = vpop.f32.mrb[0].mxu0
  %1927 = vmatprep.mubr.f32.mxu0 0.0
  %1928 = vmatmul.mubr.f32.gmra.mrb[0].mxu0 %v1758
  %v1929 = vpop.f32.mrb[0].mxu0
  %v1930 = vadd.f32 %v1745, %v1929
  %v1931 = vpop.f32.mrb[0].mxu0
  %1932 = vmatprep.mubr.f32.mxu0 0.0
  %1933 = vmatmul.mubr.f32.gmra.mrb[0].mxu0 %v1761
  %v1934 = vpop.f32.mrb[0].mxu0
  %v1935 = vadd.f32 %v1745, %v1934
  %v1936 = vpop.f32.mrb[0].mxu0
  %1937 = vmatprep.mubr.f32.mxu0 0.0
  %1938 = vmatmul.mubr.f32.gmra.mrb[0].mxu0 %v1764
  %v1939 = vpop.f32.mrb[0].mxu0
  %v1940 = vadd.f32 %v1745, %v1939
  %v1941 = vpop.f32.mrb[0].mxu0
  %1942 = vmatprep.mubr.f32.mxu0 0.0
  %1943 = vmatmul.mubr.f32.gmra.mrb[0].mxu0 %v1767
  %v1944 = vpop.f32.mrb[0].mxu0
  %v1945 = vadd.f32 %v1745, %v1944
  %v1946 = vpop.f32.mrb[0].mxu0
  %1947 = vmatprep.mubr.f32.mxu0 0.0
  %1948 = vmatmul.mubr.f32.gmra.mrb[0].mxu0 %v1770
  %v1949 = vpop.f32.mrb[0].mxu0
  %v1950 = vadd.f32 %v1745, %v1949
  %v1951 = vpop.f32.mrb[0].mxu0
  %1952 = vmatprep.mubr.f32.mxu0 0.0
  %1953 = vmatmul.mubr.f32.gmra.mrb[0].mxu0 %v1773
  %v1954 = vpop.f32.mrb[0].mxu0
  %v1955 = vadd.f32 %v1745, %v1954
  %v1956 = vpop.f32.mrb[0].mxu0
  %1957 = vmatprep.mubr.f32.mxu0 0.0
  %1958 = vmatmul.mubr.f32.gmra.mrb[0].mxu0 %v1776
  %v1959 = vpop.f32.mrb[0].mxu0
  %v1960 = vadd.f32 %v1745, %v1959
  %v1961 = vpop.f32.mrb[0].mxu0
  %1962 = vmatprep.mubr.f32.mxu0 0.0
  %1963 = vmatmul.mubr.f32.gmra.mrb[0].mxu0 %v1779
  %v1964 = vpop.f32.mrb[0].mxu0
  %v1965 = vadd.f32 %v1745, %v1964
  %v1966 = vpop.f32.mrb[0].mxu0
  %1967 = vmatprep.mubr.f32.mxu0 0.0
  %1968 = vmatmul.mubr.f32.gmra.mrb[0].mxu0 %v1782
  %v1969 = vpop.f32.mrb[0].mxu0
  %v1970 = vadd.f32 %v1745, %v1969
  %v1971 = vpop.f32.mrb[0].mxu0
  %1972 = vmatprep.mubr.f32.mxu0 0.0
  %1973 = vmatmul.mubr.f32.gmra.mrb[0].mxu0 %v1785
  %v1974 = vpop.f32.mrb[0].mxu0
  %v1975 = vadd.f32 %v1745, %v1974
  %v1976 = vpop.f32.mrb[0].mxu0
  %1977 = vmatprep.mubr.f32.mxu0 0.0
  %1978 = vmatmul.mubr.f32.gmra.mrb[0].mxu0 %v1788
  %v1979 = vpop.f32.mrb[0].mxu0
  %v1980 = vadd.f32 %v1745, %v1979
  %v1981 = vpop.f32.mrb[0].mxu0
  %1982 = vmatprep.mubr.f32.mxu0 0.0
  %1983 = vmatmul.mubr.f32.gmra.mrb[0].mxu0 %v1791
  %v1984 = vpop.f32.mrb[0].mxu0
  %v1985 = vadd.f32 %v1745, %v1984
  %v1986 = vpop.f32.mrb[0].mxu0
  %1987 = vmatprep.mubr.f32.mxu0 0.0
  %1988 = vmatmul.mubr.f32.gmra.mrb[0].mxu0 %v1794
  %v1989 = vpop.f32.mrb[0].mxu0
  %v1990 = vadd.f32 %v1745, %v1989
  %v1991 = vpop.f32.mrb[0].mxu0
  %1992 = vmatprep.mubr.f32.mxu0 0.0
  %1993 = vmatmul.mubr.f32.gmra.mrb[0].mxu0 %v1797
  %v1994 = vpop.f32.mrb[0].mxu0
  %v1995 = vadd.f32 %v1745, %v1994
  %v1996 = vpop.f32.mrb[0].mxu0
  %1997 = vmatprep.mubr.f32.mxu0 0.0
  %1998 = vmatmul.mubr.f32.gmra.mrb[0].mxu0 %v1800
  %v1999 = vpop.f32.mrb[0].mxu0
  %v2000 = vadd.f32 %v1745, %v1999
  %v2001 = vpop.f32.mrb[0].mxu0
  %2002 = vmatprep.mubr.f32.mxu0 0.0
  %2003 = vmatmul.mubr.f32.gmra.mrb[0].mxu0 %v1803
  %v2004 = vpop.f32.mrb[0].mxu0
  %v2005 = vadd.f32 %v1745, %v2004
  %v2006 = vpop.f32.mrb[0].mxu0
  %2007 = vmatprep.mubr.f32.mxu0 0.0
  %2008 = vmatmul.mubr.f32.gmra.mrb[0].mxu0 %v1806
  %v2009 = vpop.f32.mrb[0].mxu0
  %v2010 = vadd.f32 %v1745, %v2009
  %v2011 = vpop.f32.mrb[0].mxu0
  %2012 = vmatprep.mubr.f32.mxu0 0.0
  %2013 = vmatmul.mubr.f32.gmra.mrb[0].mxu0 %v1809
  %v2014 = vpop.f32.mrb[0].mxu0
  %v2015 = vadd.f32 %v1745, %v2014
  %v2016 = vpop.f32.mrb[0].mxu0
  %2017 = vmatprep.mubr.f32.mxu0 0.0
  %2018 = vmatmul.mubr.f32.gmra.mrb[0].mxu0 %v1812
  %v2019 = vpop.f32.mrb[0].mxu0
  %v2020 = vadd.f32 %v1745, %v2019
  %v2021 = vpop.f32.mrb[0].mxu0
  %2022 = vmatprep.mubr.f32.mxu0 0.0
  %2023 = vmatmul.mubr.f32.gmra.mrb[0].mxu0 %v1815
  %v2024 = vpop.f32.mrb[0].mxu0
  %v2025 = vadd.f32 %v1745, %v2024
  %v2026 = vpop.f32.mrb[0].mxu0
  %2027 = vmatprep.mubr.f32.mxu0 0.0
  %2028 = vmatmul.mubr.f32.gmra.mrb[0].mxu0 %v1818
  %v2029 = vpop.f32.mrb[0].mxu0
  %v2030 = vadd.f32 %v1745, %v2029
  %v2031 = vpop.f32.mrb[0].mxu0
  %2032 = vmatprep.mubr.f32.mxu0 0.0
  %2033 = vmatmul.mubr.f32.gmra.mrb[0].mxu0 %v1821
  %v2034 = vpop.f32.mrb[0].mxu0
  %v2035 = vadd.f32 %v1745, %v2034
  %v2036 = vpop.f32.mrb[0].mxu0
  %2037 = vmatprep.mubr.f32.mxu0 0.0
  %2038 = vmatmul.mubr.f32.gmra.mrb[0].mxu0 %v1824
  %v2039 = vpop.f32.mrb[0].mxu0
  %v2040 = vadd.f32 %v1745, %v2039
  %v2041 = vpop.f32.mrb[0].mxu0
  %2042 = vmatprep.mubr.f32.mxu0 0.0
  %2043 = vmatmul.mubr.f32.gmra.mrb[0].mxu0 %v1827
  %v2044 = vpop.f32.mrb[0].mxu0
  %v2045 = vadd.f32 %v1745, %v2044
  %v2046 = vpop.f32.mrb[0].mxu0
  %2047 = vmatprep.mubr.f32.mxu0 0.0
  %2048 = vmatmul.mubr.f32.gmra.mrb[0].mxu0 %v1830
  %v2049 = vpop.f32.mrb[0].mxu0
  %v2050 = vadd.f32 %v1745, %v2049
  %v2051 = vpop.f32.mrb[0].mxu0
  %2052 = vmatprep.mubr.f32.mxu0 0.0
  %2053 = vmatmul.mubr.f32.gmra.mrb[0].mxu0 %v1833
  %v2054 = vpop.f32.mrb[0].mxu0
  %v2055 = vadd.f32 %v1745, %v2054
  %v2056 = vpop.f32.mrb[0].mxu0
  %2057 = vmatprep.mubr.f32.mxu0 0.0
  %2058 = vmatmul.mubr.f32.gmra.mrb[0].mxu0 %v1836
  %v2059 = vpop.f32.mrb[0].mxu0
  %v2060 = vadd.f32 %v1745, %v2059
  %v2061 = vpop.f32.mrb[0].mxu0
  %2062 = vmatprep.mubr.f32.mxu0 0.0
  %2063 = vmatmul.mubr.f32.gmra.mrb[0].mxu0 %v1839
  %v2064 = vpop.f32.mrb[0].mxu0
  %v2065 = vadd.f32 %v1745, %v2064
  %v2066 = vpop.f32.mrb[0].mxu0
  %2067 = vmatprep.mubr.f32.mxu0 0.0
  %2068 = vmatmul.mubr.f32.gmra.mrb[0].mxu0 %v1842
  %v2069 = vpop.f32.mrb[0].mxu0
  %v2070 = vadd.f32 %v1745, %v2069
  %v2071 = vpop.f32.mrb[0].mxu0
  %2072 = vdwg.mxu0
  %v2073 = vmax.f32 %v1915, 0.0
  %v2074 = vmax.f32 %v1920, 0.0
  %v2075 = vmax.f32 %v1925, 0.0
  %v2076 = vmax.f32 %v1930, 0.0
  %v2077 = vmax.f32 %v1935, 0.0
  %v2078 = vmax.f32 %v1940, 0.0
  %v2079 = vmax.f32 %v1945, 0.0
  %v2080 = vmax.f32 %v1950, 0.0
  %v2081 = vmax.f32 %v1955, 0.0
  %v2082 = vmax.f32 %v1960, 0.0
  %v2083 = vmax.f32 %v1965, 0.0
  %v2084 = vmax.f32 %v1970, 0.0
  %v2085 = vmax.f32 %v1975, 0.0
  %v2086 = vmax.f32 %v1980, 0.0
  %v2087 = vmax.f32 %v1985, 0.0
  %v2088 = vmax.f32 %v1990, 0.0
  %v2089 = vmax.f32 %v1995, 0.0
  %v2090 = vmax.f32 %v2000, 0.0
  %v2091 = vmax.f32 %v2005, 0.0
  %v2092 = vmax.f32 %v2010, 0.0
  %v2093 = vmax.f32 %v2015, 0.0
  %v2094 = vmax.f32 %v2020, 0.0
  %v2095 = vmax.f32 %v2025, 0.0
  %v2096 = vmax.f32 %v2030, 0.0
  %v2097 = vmax.f32 %v2035, 0.0
  %v2098 = vmax.f32 %v2040, 0.0
  %v2099 = vmax.f32 %v2045, 0.0
  %v2100 = vmax.f32 %v2050, 0.0
  %v2101 = vmax.f32 %v2055, 0.0
  %v2102 = vmax.f32 %v2060, 0.0
  %v2103 = vmax.f32 %v2065, 0.0
  %v2104 = vmax.f32 %v2070, 0.0
  %v2105 = vpack.c.bf16 %v2074, %v2073
  %v2106 = vpack.c.bf16 %v2076, %v2075
  %v2107 = vpack.c.bf16 %v2078, %v2077
  %v2108 = vpack.c.bf16 %v2080, %v2079
  %v2109 = vpack.c.bf16 %v2082, %v2081
  %v2110 = vpack.c.bf16 %v2084, %v2083
  %v2111 = vpack.c.bf16 %v2086, %v2085
  %v2112 = vpack.c.bf16 %v2088, %v2087
  %v2113 = vpack.c.bf16 %v2090, %v2089
  %v2114 = vpack.c.bf16 %v2092, %v2091
  %v2115 = vpack.c.bf16 %v2094, %v2093
  %v2116 = vpack.c.bf16 %v2096, %v2095
  %v2117 = vpack.c.bf16 %v2098, %v2097
  %v2118 = vpack.c.bf16 %v2100, %v2099
  %v2119 = vpack.c.bf16 %v2102, %v2101
  %v2120 = vpack.c.bf16 %v2104, %v2103
  %v2138 = vrot.slane 0, 7
  %v2139 = vrot.slane %v2105, 7
  %v2140 = vrot.slane %v2106, 7
  %v2141 = vrot.slane %v2107, 7
  %v2142 = vrot.slane %v2108, 7
  %v2143 = vrot.slane %v2109, 7
  %v2144 = vrot.slane %v2110, 7
  %v2145 = vrot.slane %v2111, 7
  %v2146 = vrot.slane %v2112, 7
  %v2147 = vrot.slane %v2113, 7
  %v2148 = vrot.slane %v2114, 7
  %v2149 = vrot.slane %v2115, 7
  %v2150 = vrot.slane %v2116, 7
  %v2151 = vrot.slane %v2117, 7
  %v2152 = vrot.slane %v2118, 7
  %v2153 = vrot.slane %v2119, 7
  %v2154 = vrot.slane %v2120, 7
  %vm2155 = vcmask 1040384
  %v2158 = vsel %vm2155, 0, %v2138
  %v2160 = vsel %vm2155, 0, %v2139
  %v2162 = vsel %vm2155, 0, %v2140
  %v2164 = vsel %vm2155, 0, %v2141
  %v2166 = vsel %vm2155, 0, %v2142
  %v2168 = vsel %vm2155, 0, %v2143
  %v2170 = vsel %vm2155, 0, %v2144
  %v2172 = vsel %vm2155, 0, %v2145
  %v2174 = vsel %vm2155, 0, %v2146
  %v2176 = vsel %vm2155, 0, %v2147
  %v2178 = vsel %vm2155, 0, %v2148
  %v2180 = vsel %vm2155, 0, %v2149
  %v2182 = vsel %vm2155, 0, %v2150
  %v2184 = vsel %vm2155, 0, %v2151
  %v2186 = vsel %vm2155, 0, %v2152
  %v2188 = vsel %vm2155, 0, %v2153
  %v2190 = vsel %vm2155, 0, %v2154
  %v2191 = vsel %vm2155, %v2138, 0
  %v2192 = vsel %vm2155, %v2139, 0
  %v2193 = vsel %vm2155, %v2140, 0
  %v2194 = vsel %vm2155, %v2141, 0
  %v2195 = vsel %vm2155, %v2142, 0
  %v2196 = vsel %vm2155, %v2143, 0
  %v2197 = vsel %vm2155, %v2144, 0
  %v2198 = vsel %vm2155, %v2145, 0
  %v2199 = vsel %vm2155, %v2146, 0
  %v2200 = vsel %vm2155, %v2147, 0
  %v2201 = vsel %vm2155, %v2148, 0
  %v2202 = vsel %vm2155, %v2149, 0
  %v2203 = vsel %vm2155, %v2150, 0
  %v2204 = vsel %vm2155, %v2151, 0
  %v2205 = vsel %vm2155, %v2152, 0
  %v2206 = vsel %vm2155, %v2153, 0
  %v2207 = vsel %vm2155, %v2154, 0
  %vm2208 = vsmask.f32 7424
  %v2209 = vshrl.u32 %v2158, 16
  %v2211 = vshll.u32 %v2158, 16
  %v2213 = vrot.slane %v2211, 1
  %v2214 = vor.u32 %v2209, %v2213
  %v2215 = vshll.u32 %v2191, 16
  %v2217 = vrot.slane %v2215, 1
  %v2218 = vsel %vm2208, %v2214, %v2217
  %v2219 = vshrl.u32 %v2160, 16
  %v2221 = vshll.u32 %v2160, 16
  %v2223 = vrot.slane %v2221, 1
  %v2224 = vor.u32 %v2219, %v2223
  %v2225 = vshll.u32 %v2192, 16
  %v2227 = vrot.slane %v2225, 1
  %v2228 = vsel %vm2208, %v2224, %v2227
  %v2229 = vshrl.u32 %v2162, 16
  %v2231 = vshll.u32 %v2162, 16
  %v2233 = vrot.slane %v2231, 1
  %v2234 = vor.u32 %v2229, %v2233
  %v2235 = vshll.u32 %v2193, 16
  %v2237 = vrot.slane %v2235, 1
  %v2238 = vsel %vm2208, %v2234, %v2237
  %v2239 = vshrl.u32 %v2164, 16
  %v2241 = vshll.u32 %v2164, 16
  %v2243 = vrot.slane %v2241, 1
  %v2244 = vor.u32 %v2239, %v2243
  %v2245 = vshll.u32 %v2194, 16
  %v2247 = vrot.slane %v2245, 1
  %v2248 = vsel %vm2208, %v2244, %v2247
  %v2249 = vshrl.u32 %v2166, 16
  %v2251 = vshll.u32 %v2166, 16
  %v2253 = vrot.slane %v2251, 1
  %v2254 = vor.u32 %v2249, %v2253
  %v2255 = vshll.u32 %v2195, 16
  %v2257 = vrot.slane %v2255, 1
  %v2258 = vsel %vm2208, %v2254, %v2257
  %v2259 = vshrl.u32 %v2168, 16
  %v2261 = vshll.u32 %v2168, 16
  %v2263 = vrot.slane %v2261, 1
  %v2264 = vor.u32 %v2259, %v2263
  %v2265 = vshll.u32 %v2196, 16
  %v2267 = vrot.slane %v2265, 1
  %v2268 = vsel %vm2208, %v2264, %v2267
  %v2269 = vshrl.u32 %v2170, 16
  %v2271 = vshll.u32 %v2170, 16
  %v2273 = vrot.slane %v2271, 1
  %v2274 = vor.u32 %v2269, %v2273
  %v2275 = vshll.u32 %v2197, 16
  %v2277 = vrot.slane %v2275, 1
  %v2278 = vsel %vm2208, %v2274, %v2277
  %v2279 = vshrl.u32 %v2172, 16
  %v2281 = vshll.u32 %v2172, 16
  %v2283 = vrot.slane %v2281, 1
  %v2284 = vor.u32 %v2279, %v2283
  %v2285 = vshll.u32 %v2198, 16
  %v2287 = vrot.slane %v2285, 1
  %v2288 = vsel %vm2208, %v2284, %v2287
  %v2289 = vshrl.u32 %v2174, 16
  %v2291 = vshll.u32 %v2174, 16
  %v2293 = vrot.slane %v2291, 1
  %v2294 = vor.u32 %v2289, %v2293
  %v2295 = vshll.u32 %v2199, 16
  %v2297 = vrot.slane %v2295, 1
  %v2298 = vsel %vm2208, %v2294, %v2297
  %v2299 = vshrl.u32 %v2176, 16
  %v2301 = vshll.u32 %v2176, 16
  %v2303 = vrot.slane %v2301, 1
  %v2304 = vor.u32 %v2299, %v2303
  %v2305 = vshll.u32 %v2200, 16
  %v2307 = vrot.slane %v2305, 1
  %v2308 = vsel %vm2208, %v2304, %v2307
  %v2309 = vshrl.u32 %v2178, 16
  %v2311 = vshll.u32 %v2178, 16
  %v2313 = vrot.slane %v2311, 1
  %v2314 = vor.u32 %v2309, %v2313
  %v2315 = vshll.u32 %v2201, 16
  %v2317 = vrot.slane %v2315, 1
  %v2318 = vsel %vm2208, %v2314, %v2317
  %v2319 = vshrl.u32 %v2180, 16
  %v2321 = vshll.u32 %v2180, 16
  %v2323 = vrot.slane %v2321, 1
  %v2324 = vor.u32 %v2319, %v2323
  %v2325 = vshll.u32 %v2202, 16
  %v2327 = vrot.slane %v2325, 1
  %v2328 = vsel %vm2208, %v2324, %v2327
  %v2329 = vshrl.u32 %v2182, 16
  %v2331 = vshll.u32 %v2182, 16
  %v2333 = vrot.slane %v2331, 1
  %v2334 = vor.u32 %v2329, %v2333
  %v2335 = vshll.u32 %v2203, 16
  %v2337 = vrot.slane %v2335, 1
  %v2338 = vsel %vm2208, %v2334, %v2337
  %v2339 = vshrl.u32 %v2184, 16
  %v2341 = vshll.u32 %v2184, 16
  %v2343 = vrot.slane %v2341, 1
  %v2344 = vor.u32 %v2339, %v2343
  %v2345 = vshll.u32 %v2204, 16
  %v2347 = vrot.slane %v2345, 1
  %v2348 = vsel %vm2208, %v2344, %v2347
  %v2349 = vshrl.u32 %v2186, 16
  %v2351 = vshll.u32 %v2186, 16
  %v2353 = vrot.slane %v2351, 1
  %v2354 = vor.u32 %v2349, %v2353
  %v2355 = vshll.u32 %v2205, 16
  %v2357 = vrot.slane %v2355, 1
  %v2358 = vsel %vm2208, %v2354, %v2357
  %v2359 = vshrl.u32 %v2188, 16
  %v2361 = vshll.u32 %v2188, 16
  %v2363 = vrot.slane %v2361, 1
  %v2364 = vor.u32 %v2359, %v2363
  %v2365 = vshll.u32 %v2206, 16
  %v2367 = vrot.slane %v2365, 1
  %v2368 = vsel %vm2208, %v2364, %v2367
  %v2369 = vshrl.u32 %v2190, 16
  %v2371 = vshll.u32 %v2190, 16
  %v2373 = vrot.slane %v2371, 1
  %v2374 = vor.u32 %v2369, %v2373
  %v2375 = vshll.u32 %v2207, 16
  %v2377 = vrot.slane %v2375, 1
  %v2378 = vsel %vm2208, %v2374, %v2377
  %2379 = vrot.lane.b32.xlu0 %v2218, 64
  %v2380 = vpop.permute.xlu0 %2379
  %2381 = vrot.lane.b32.xlu0 %v2228, 64
  %v2382 = vpop.permute.xlu0 %2381
  %2383 = vrot.lane.b32.xlu0 %v2238, 64
  %v2384 = vpop.permute.xlu0 %2383
  %2385 = vrot.lane.b32.xlu0 %v2248, 64
  %v2386 = vpop.permute.xlu0 %2385
  %2387 = vrot.lane.b32.xlu0 %v2258, 64
  %v2388 = vpop.permute.xlu0 %2387
  %2389 = vrot.lane.b32.xlu0 %v2268, 64
  %v2390 = vpop.permute.xlu0 %2389
  %2391 = vrot.lane.b32.xlu0 %v2278, 64
  %v2392 = vpop.permute.xlu0 %2391
  %2393 = vrot.lane.b32.xlu0 %v2288, 64
  %v2394 = vpop.permute.xlu0 %2393
  %2395 = vrot.lane.b32.xlu0 %v2298, 64
  %v2396 = vpop.permute.xlu0 %2395
  %2397 = vrot.lane.b32.xlu0 %v2308, 64
  %v2398 = vpop.permute.xlu0 %2397
  %2399 = vrot.lane.b32.xlu0 %v2318, 64
  %v2400 = vpop.permute.xlu0 %2399
  %2401 = vrot.lane.b32.xlu0 %v2328, 64
  %v2402 = vpop.permute.xlu0 %2401
  %2403 = vrot.lane.b32.xlu0 %v2338, 64
  %v2404 = vpop.permute.xlu0 %2403
  %2405 = vrot.lane.b32.xlu0 %v2348, 64
  %v2406 = vpop.permute.xlu0 %2405
  %2407 = vrot.lane.b32.xlu0 %v2358, 64
  %v2408 = vpop.permute.xlu0 %2407
  %2409 = vrot.lane.b32.xlu0 %v2368, 64
  %v2410 = vpop.permute.xlu0 %2409
  %2411 = vrot.lane.b32.xlu0 %v2378, 64
  %v2412 = vpop.permute.xlu0 %2411
  %vm2447 = vcmask 1046528
  %v2448 = vrot.slane %v2158, 1
  %v2449 = vrot.slane %v2191, 1
  %v2450 = vsel %vm2447, %v2448, %v2449
  %v2451 = vrot.slane %v2160, 1
  %v2452 = vrot.slane %v2192, 1
  %v2453 = vsel %vm2447, %v2451, %v2452
  %v2454 = vrot.slane %v2162, 1
  %v2455 = vrot.slane %v2193, 1
  %v2456 = vsel %vm2447, %v2454, %v2455
  %v2457 = vrot.slane %v2164, 1
  %v2458 = vrot.slane %v2194, 1
  %v2459 = vsel %vm2447, %v2457, %v2458
  %v2460 = vrot.slane %v2166, 1
  %v2461 = vrot.slane %v2195, 1
  %v2462 = vsel %vm2447, %v2460, %v2461
  %v2463 = vrot.slane %v2168, 1
  %v2464 = vrot.slane %v2196, 1
  %v2465 = vsel %vm2447, %v2463, %v2464
  %v2466 = vrot.slane %v2170, 1
  %v2467 = vrot.slane %v2197, 1
  %v2468 = vsel %vm2447, %v2466, %v2467
  %v2469 = vrot.slane %v2172, 1
  %v2470 = vrot.slane %v2198, 1
  %v2471 = vsel %vm2447, %v2469, %v2470
  %v2472 = vrot.slane %v2174, 1
  %v2473 = vrot.slane %v2199, 1
  %v2474 = vsel %vm2447, %v2472, %v2473
  %v2475 = vrot.slane %v2176, 1
  %v2476 = vrot.slane %v2200, 1
  %v2477 = vsel %vm2447, %v2475, %v2476
  %v2478 = vrot.slane %v2178, 1
  %v2479 = vrot.slane %v2201, 1
  %v2480 = vsel %vm2447, %v2478, %v2479
  %v2481 = vrot.slane %v2180, 1
  %v2482 = vrot.slane %v2202, 1
  %v2483 = vsel %vm2447, %v2481, %v2482
  %v2484 = vrot.slane %v2182, 1
  %v2485 = vrot.slane %v2203, 1
  %v2486 = vsel %vm2447, %v2484, %v2485
  %v2487 = vrot.slane %v2184, 1
  %v2488 = vrot.slane %v2204, 1
  %v2489 = vsel %vm2447, %v2487, %v2488
  %v2490 = vrot.slane %v2186, 1
  %v2491 = vrot.slane %v2205, 1
  %v2492 = vsel %vm2447, %v2490, %v2491
  %v2493 = vrot.slane %v2188, 1
  %v2494 = vrot.slane %v2206, 1
  %v2495 = vsel %vm2447, %v2493, %v2494
  %v2496 = vrot.slane %v2190, 1
  %v2497 = vrot.slane %v2207, 1
  %v2498 = vsel %vm2447, %v2496, %v2497
  %vm2499 = vsmask.f32 6400
  %v2500 = vrot.slane %v2209, 1
  %v2501 = vrot.slane %v2211, 2
  %v2502 = vor.u32 %v2500, %v2501
  %v2503 = vshrl.u32 %v2191, 16
  %v2505 = vrot.slane %v2503, 1
  %v2506 = vrot.slane %v2215, 2
  %v2507 = vor.u32 %v2505, %v2506
  %v2508 = vsel %vm2499, %v2502, %v2507
  %v2509 = vrot.slane %v2219, 1
  %v2510 = vrot.slane %v2221, 2
  %v2511 = vor.u32 %v2509, %v2510
  %v2512 = vshrl.u32 %v2192, 16
  %v2514 = vrot.slane %v2512, 1
  %v2515 = vrot.slane %v2225, 2
  %v2516 = vor.u32 %v2514, %v2515
  %v2517 = vsel %vm2499, %v2511, %v2516
  %v2518 = vrot.slane %v2229, 1
  %v2519 = vrot.slane %v2231, 2
  %v2520 = vor.u32 %v2518, %v2519
  %v2521 = vshrl.u32 %v2193, 16
  %v2523 = vrot.slane %v2521, 1
  %v2524 = vrot.slane %v2235, 2
  %v2525 = vor.u32 %v2523, %v2524
  %v2526 = vsel %vm2499, %v2520, %v2525
  %v2527 = vrot.slane %v2239, 1
  %v2528 = vrot.slane %v2241, 2
  %v2529 = vor.u32 %v2527, %v2528
  %v2530 = vshrl.u32 %v2194, 16
  %v2532 = vrot.slane %v2530, 1
  %v2533 = vrot.slane %v2245, 2
  %v2534 = vor.u32 %v2532, %v2533
  %v2535 = vsel %vm2499, %v2529, %v2534
  %v2536 = vrot.slane %v2249, 1
  %v2537 = vrot.slane %v2251, 2
  %v2538 = vor.u32 %v2536, %v2537
  %v2539 = vshrl.u32 %v2195, 16
  %v2541 = vrot.slane %v2539, 1
  %v2542 = vrot.slane %v2255, 2
  %v2543 = vor.u32 %v2541, %v2542
  %v2544 = vsel %vm2499, %v2538, %v2543
  %v2545 = vrot.slane %v2259, 1
  %v2546 = vrot.slane %v2261, 2
  %v2547 = vor.u32 %v2545, %v2546
  %v2548 = vshrl.u32 %v2196, 16
  %v2550 = vrot.slane %v2548, 1
  %v2551 = vrot.slane %v2265, 2
  %v2552 = vor.u32 %v2550, %v2551
  %v2553 = vsel %vm2499, %v2547, %v2552
  %v2554 = vrot.slane %v2269, 1
  %v2555 = vrot.slane %v2271, 2
  %v2556 = vor.u32 %v2554, %v2555
  %v2557 = vshrl.u32 %v2197, 16
  %v2559 = vrot.slane %v2557, 1
  %v2560 = vrot.slane %v2275, 2
  %v2561 = vor.u32 %v2559, %v2560
  %v2562 = vsel %vm2499, %v2556, %v2561
  %v2563 = vrot.slane %v2279, 1
  %v2564 = vrot.slane %v2281, 2
  %v2565 = vor.u32 %v2563, %v2564
  %v2566 = vshrl.u32 %v2198, 16
  %v2568 = vrot.slane %v2566, 1
  %v2569 = vrot.slane %v2285, 2
  %v2570 = vor.u32 %v2568, %v2569
  %v2571 = vsel %vm2499, %v2565, %v2570
  %v2572 = vrot.slane %v2289, 1
  %v2573 = vrot.slane %v2291, 2
  %v2574 = vor.u32 %v2572, %v2573
  %v2575 = vshrl.u32 %v2199, 16
  %v2577 = vrot.slane %v2575, 1
  %v2578 = vrot.slane %v2295, 2
  %v2579 = vor.u32 %v2577, %v2578
  %v2580 = vsel %vm2499, %v2574, %v2579
  %v2581 = vrot.slane %v2299, 1
  %v2582 = vrot.slane %v2301, 2
  %v2583 = vor.u32 %v2581, %v2582
  %v2584 = vshrl.u32 %v2200, 16
  %v2586 = vrot.slane %v2584, 1
  %v2587 = vrot.slane %v2305, 2
  %v2588 = vor.u32 %v2586, %v2587
  %v2589 = vsel %vm2499, %v2583, %v2588
  %v2590 = vrot.slane %v2309, 1
  %v2591 = vrot.slane %v2311, 2
  %v2592 = vor.u32 %v2590, %v2591
  %v2593 = vshrl.u32 %v2201, 16
  %v2595 = vrot.slane %v2593, 1
  %v2596 = vrot.slane %v2315, 2
  %v2597 = vor.u32 %v2595, %v2596
  %v2598 = vsel %vm2499, %v2592, %v2597
  %v2599 = vrot.slane %v2319, 1
  %v2600 = vrot.slane %v2321, 2
  %v2601 = vor.u32 %v2599, %v2600
  %v2602 = vshrl.u32 %v2202, 16
  %v2604 = vrot.slane %v2602, 1
  %v2605 = vrot.slane %v2325, 2
  %v2606 = vor.u32 %v2604, %v2605
  %v2607 = vsel %vm2499, %v2601, %v2606
  %v2608 = vrot.slane %v2329, 1
  %v2609 = vrot.slane %v2331, 2
  %v2610 = vor.u32 %v2608, %v2609
  %v2611 = vshrl.u32 %v2203, 16
  %v2613 = vrot.slane %v2611, 1
  %v2614 = vrot.slane %v2335, 2
  %v2615 = vor.u32 %v2613, %v2614
  %v2616 = vsel %vm2499, %v2610, %v2615
  %v2617 = vrot.slane %v2339, 1
  %v2618 = vrot.slane %v2341, 2
  %v2619 = vor.u32 %v2617, %v2618
  %v2620 = vshrl.u32 %v2204, 16
  %v2622 = vrot.slane %v2620, 1
  %v2623 = vrot.slane %v2345, 2
  %v2624 = vor.u32 %v2622, %v2623
  %v2625 = vsel %vm2499, %v2619, %v2624
  %v2626 = vrot.slane %v2349, 1
  %v2627 = vrot.slane %v2351, 2
  %v2628 = vor.u32 %v2626, %v2627
  %v2629 = vshrl.u32 %v2205, 16
  %v2631 = vrot.slane %v2629, 1
  %v2632 = vrot.slane %v2355, 2
  %v2633 = vor.u32 %v2631, %v2632
  %v2634 = vsel %vm2499, %v2628, %v2633
  %v2635 = vrot.slane %v2359, 1
  %v2636 = vrot.slane %v2361, 2
  %v2637 = vor.u32 %v2635, %v2636
  %v2638 = vshrl.u32 %v2206, 16
  %v2640 = vrot.slane %v2638, 1
  %v2641 = vrot.slane %v2365, 2
  %v2642 = vor.u32 %v2640, %v2641
  %v2643 = vsel %vm2499, %v2637, %v2642
  %v2644 = vrot.slane %v2369, 1
  %v2645 = vrot.slane %v2371, 2
  %v2646 = vor.u32 %v2644, %v2645
  %v2647 = vshrl.u32 %v2207, 16
  %v2649 = vrot.slane %v2647, 1
  %v2650 = vrot.slane %v2375, 2
  %v2651 = vor.u32 %v2649, %v2650
  %v2652 = vsel %vm2499, %v2646, %v2651
  %2653 = vrot.lane.b32.xlu0 %v2508, 64
  %v2654 = vpop.permute.xlu0 %2653
  %2655 = vrot.lane.b32.xlu0 %v2517, 64
  %v2656 = vpop.permute.xlu0 %2655
  %2657 = vrot.lane.b32.xlu0 %v2526, 64
  %v2658 = vpop.permute.xlu0 %2657
  %2659 = vrot.lane.b32.xlu0 %v2535, 64
  %v2660 = vpop.permute.xlu0 %2659
  %2661 = vrot.lane.b32.xlu0 %v2544, 64
  %v2662 = vpop.permute.xlu0 %2661
  %2663 = vrot.lane.b32.xlu0 %v2553, 64
  %v2664 = vpop.permute.xlu0 %2663
  %2665 = vrot.lane.b32.xlu0 %v2562, 64
  %v2666 = vpop.permute.xlu0 %2665
  %2667 = vrot.lane.b32.xlu0 %v2571, 64
  %v2668 = vpop.permute.xlu0 %2667
  %2669 = vrot.lane.b32.xlu0 %v2580, 64
  %v2670 = vpop.permute.xlu0 %2669
  %2671 = vrot.lane.b32.xlu0 %v2589, 64
  %v2672 = vpop.permute.xlu0 %2671
  %2673 = vrot.lane.b32.xlu0 %v2598, 64
  %v2674 = vpop.permute.xlu0 %2673
  %2675 = vrot.lane.b32.xlu0 %v2607, 64
  %v2676 = vpop.permute.xlu0 %2675
  %2677 = vrot.lane.b32.xlu0 %v2616, 64
  %v2678 = vpop.permute.xlu0 %2677
  %2679 = vrot.lane.b32.xlu0 %v2625, 64
  %v2680 = vpop.permute.xlu0 %2679
  %2681 = vrot.lane.b32.xlu0 %v2634, 64
  %v2682 = vpop.permute.xlu0 %2681
  %2683 = vrot.lane.b32.xlu0 %v2643, 64
  %v2684 = vpop.permute.xlu0 %2683
  %2685 = vrot.lane.b32.xlu0 %v2652, 64
  %v2686 = vpop.permute.xlu0 %2685
  %vm2687 = vcmask 1045504
  %v2688 = vrot.slane %v2158, 2
  %v2689 = vrot.slane %v2191, 2
  %v2690 = vsel %vm2687, %v2688, %v2689
  %v2691 = vrot.slane %v2160, 2
  %v2692 = vrot.slane %v2192, 2
  %v2693 = vsel %vm2687, %v2691, %v2692
  %v2694 = vrot.slane %v2162, 2
  %v2695 = vrot.slane %v2193, 2
  %v2696 = vsel %vm2687, %v2694, %v2695
  %v2697 = vrot.slane %v2164, 2
  %v2698 = vrot.slane %v2194, 2
  %v2699 = vsel %vm2687, %v2697, %v2698
  %v2700 = vrot.slane %v2166, 2
  %v2701 = vrot.slane %v2195, 2
  %v2702 = vsel %vm2687, %v2700, %v2701
  %v2703 = vrot.slane %v2168, 2
  %v2704 = vrot.slane %v2196, 2
  %v2705 = vsel %vm2687, %v2703, %v2704
  %v2706 = vrot.slane %v2170, 2
  %v2707 = vrot.slane %v2197, 2
  %v2708 = vsel %vm2687, %v2706, %v2707
  %v2709 = vrot.slane %v2172, 2
  %v2710 = vrot.slane %v2198, 2
  %v2711 = vsel %vm2687, %v2709, %v2710
  %v2712 = vrot.slane %v2174, 2
  %v2713 = vrot.slane %v2199, 2
  %v2714 = vsel %vm2687, %v2712, %v2713
  %v2715 = vrot.slane %v2176, 2
  %v2716 = vrot.slane %v2200, 2
  %v2717 = vsel %vm2687, %v2715, %v2716
  %v2718 = vrot.slane %v2178, 2
  %v2719 = vrot.slane %v2201, 2
  %v2720 = vsel %vm2687, %v2718, %v2719
  %v2721 = vrot.slane %v2180, 2
  %v2722 = vrot.slane %v2202, 2
  %v2723 = vsel %vm2687, %v2721, %v2722
  %v2724 = vrot.slane %v2182, 2
  %v2725 = vrot.slane %v2203, 2
  %v2726 = vsel %vm2687, %v2724, %v2725
  %v2727 = vrot.slane %v2184, 2
  %v2728 = vrot.slane %v2204, 2
  %v2729 = vsel %vm2687, %v2727, %v2728
  %v2730 = vrot.slane %v2186, 2
  %v2731 = vrot.slane %v2205, 2
  %v2732 = vsel %vm2687, %v2730, %v2731
  %v2733 = vrot.slane %v2188, 2
  %v2734 = vrot.slane %v2206, 2
  %v2735 = vsel %vm2687, %v2733, %v2734
  %v2736 = vrot.slane %v2190, 2
  %v2737 = vrot.slane %v2207, 2
  %v2738 = vsel %vm2687, %v2736, %v2737
  %vm2739 = vcmask 523264
  %v2741 = vsel %vm2739, %v2158, %v2380
  %v2744 = vsel %vm2739, %v2160, %v2382
  %v2747 = vsel %vm2739, %v2162, %v2384
  %v2750 = vsel %vm2739, %v2164, %v2386
  %v2753 = vsel %vm2739, %v2166, %v2388
  %v2756 = vsel %vm2739, %v2168, %v2390
  %v2759 = vsel %vm2739, %v2170, %v2392
  %v2762 = vsel %vm2739, %v2172, %v2394
  %v2765 = vsel %vm2739, %v2174, %v2396
  %v2768 = vsel %vm2739, %v2176, %v2398
  %v2771 = vsel %vm2739, %v2178, %v2400
  %v2774 = vsel %vm2739, %v2180, %v2402
  %v2777 = vsel %vm2739, %v2182, %v2404
  %v2780 = vsel %vm2739, %v2184, %v2406
  %v2783 = vsel %vm2739, %v2186, %v2408
  %v2786 = vsel %vm2739, %v2188, %v2410
  %v2789 = vsel %vm2739, %v2190, %v2412
  %v2793 = vsel %vm2739, %v2450, %v2654
  %v2797 = vsel %vm2739, %v2453, %v2656
  %v2801 = vsel %vm2739, %v2456, %v2658
  %v2805 = vsel %vm2739, %v2459, %v2660
  %v2809 = vsel %vm2739, %v2462, %v2662
  %v2813 = vsel %vm2739, %v2465, %v2664
  %v2817 = vsel %vm2739, %v2468, %v2666
  %v2821 = vsel %vm2739, %v2471, %v2668
  %v2825 = vsel %vm2739, %v2474, %v2670
  %v2829 = vsel %vm2739, %v2477, %v2672
  %v2833 = vsel %vm2739, %v2480, %v2674
  %v2837 = vsel %vm2739, %v2483, %v2676
  %v2841 = vsel %vm2739, %v2486, %v2678
  %v2845 = vsel %vm2739, %v2489, %v2680
  %v2849 = vsel %vm2739, %v2492, %v2682
  %v2853 = vsel %vm2739, %v2495, %v2684
  %v2857 = vsel %vm2739, %v2498, %v2686
  %v2859 = vld [vmem:[%s3] sm:$0x1]
  %v2861 = vlaneseq
  %v2862 = vshrl.u32 %v2861, 7
  %v2863 = vsub.s32 0, %v2862
  %v2864 = vrot.slane %v2859, %v2863
  %v2866 = vadd.f32 %v2864, 0.0
  %v2867 = vld [vmem:[%s2] sm:$0xf]
  %v2868 = vld [vmem:[%s2 + $0x4] sm:$0xf]
  %v2869 = vld [vmem:[%s2 + $0x8] sm:$0xf]
  %v2870 = vld [vmem:[%s2 + $0xc] sm:$0xf]
  %v2871 = vld [vmem:[%s2 + $0x10] sm:$0xf]
  %v2872 = vld [vmem:[%s2 + $0x14] sm:$0xf]
  %v2873 = vld [vmem:[%s2 + $0x18] sm:$0xf]
  %v2874 = vld [vmem:[%s2 + $0x1c] sm:$0xf]
  %v2875 = vld [vmem:[%s2 + $0x20] sm:$0xf]
  %v2876 = vld [vmem:[%s2 + $0x24] sm:$0xf]
  %v2877 = vld [vmem:[%s2 + $0x28] sm:$0xf]
  %v2878 = vld [vmem:[%s2 + $0x2c] sm:$0xf]
  %v2879 = vld [vmem:[%s2 + $0x30] sm:$0xf]
  %v2880 = vld [vmem:[%s2 + $0x34] sm:$0xf]
  %v2881 = vld [vmem:[%s2 + $0x38] sm:$0xf]
  %v2882 = vld [vmem:[%s2 + $0x3c] sm:$0xf]
  %v2883 = vld [vmem:[%s2 + $0x40] sm:$0xf]
  %v2884 = vld [vmem:[%s2 + $0x44] sm:$0xf]
  %v2885 = vld [vmem:[%s2 + $0x48] sm:$0xf]
  %v2886 = vld [vmem:[%s2 + $0x4c] sm:$0xf]
  %v2887 = vld [vmem:[%s2 + $0x50] sm:$0xf]
  %v2888 = vld [vmem:[%s2 + $0x54] sm:$0xf]
  %v2889 = vld [vmem:[%s2 + $0x58] sm:$0xf]
  %v2890 = vld [vmem:[%s2 + $0x5c] sm:$0xf]
  %v2891 = vld [vmem:[%s2 + $0x60] sm:$0xf]
  %v2892 = vld [vmem:[%s2 + $0x64] sm:$0xf]
  %v2893 = vld [vmem:[%s2 + $0x68] sm:$0xf]
  %v2894 = vld [vmem:[%s2 + $0x6c] sm:$0xf]
  %v2895 = vld [vmem:[%s2 + $0x70] sm:$0xf]
  %v2896 = vld [vmem:[%s2 + $0x74] sm:$0xf]
  %v2897 = vld [vmem:[%s2 + $0x78] sm:$0xf]
  %v2898 = vld [vmem:[%s2 + $0x7c] sm:$0xf]
  %v2899 = vld [vmem:[%s2 + $0x80] sm:$0xf]
  %v2900 = vld [vmem:[%s2 + $0x84] sm:$0xf]
  %v2901 = vld [vmem:[%s2 + $0x88] sm:$0xf]
  %v2902 = vld [vmem:[%s2 + $0x8c] sm:$0xf]
  %v2903 = vld [vmem:[%s2 + $0x90] sm:$0xf]
  %v2904 = vld [vmem:[%s2 + $0x94] sm:$0xf]
  %v2905 = vld [vmem:[%s2 + $0x98] sm:$0xf]
  %v2906 = vld [vmem:[%s2 + $0x9c] sm:$0xf]
  %v2947 = vunpack.c.l.b16 %v2867
  %v2948 = vunpack.c.l.b16 %v2868
  %v2949 = vunpack.c.l.b16 %v2869
  %v2950 = vunpack.c.l.b16 %v2870
  %v2951 = vunpack.c.l.b16 %v2871
  %v2952 = vunpack.c.l.b16 %v2872
  %v2953 = vunpack.c.l.b16 %v2873
  %v2954 = vunpack.c.l.b16 %v2874
  %v2955 = vunpack.c.l.b16 %v2875
  %v2956 = vunpack.c.l.b16 %v2876
  %v2957 = vunpack.c.l.b16 %v2877
  %v2958 = vunpack.c.l.b16 %v2878
  %v2959 = vunpack.c.l.b16 %v2879
  %v2960 = vunpack.c.l.b16 %v2880
  %v2961 = vunpack.c.l.b16 %v2881
  %v2962 = vunpack.c.l.b16 %v2882
  %v2963 = vunpack.c.l.b16 %v2883
  %v2964 = vunpack.c.l.b16 %v2884
  %v2965 = vunpack.c.l.b16 %v2885
  %v2966 = vunpack.c.l.b16 %v2886
  %v2967 = vunpack.c.l.b16 %v2887
  %v2968 = vunpack.c.l.b16 %v2888
  %v2969 = vunpack.c.l.b16 %v2889
  %v2970 = vunpack.c.l.b16 %v2890
  %v2971 = vunpack.c.l.b16 %v2891
  %v2972 = vunpack.c.l.b16 %v2892
  %v2973 = vunpack.c.l.b16 %v2893
  %v2974 = vunpack.c.l.b16 %v2894
  %v2975 = vunpack.c.l.b16 %v2895
  %v2976 = vunpack.c.l.b16 %v2896
  %v2977 = vunpack.c.l.b16 %v2897
  %v2978 = vunpack.c.l.b16 %v2898
  %v2979 = vunpack.c.l.b16 %v2899
  %v2980 = vunpack.c.l.b16 %v2900
  %v2981 = vunpack.c.l.b16 %v2901
  %v2982 = vunpack.c.l.b16 %v2902
  %v2983 = vunpack.c.l.b16 %v2903
  %v2984 = vunpack.c.l.b16 %v2904
  %v2985 = vunpack.c.l.b16 %v2905
  %v2986 = vunpack.c.l.b16 %v2906
  %v2987 = vpack.c.b16 %v2948, %v2947
  %v2988 = vpack.c.b16 %v2950, %v2949
  %v2989 = vpack.c.b16 %v2952, %v2951
  %v2990 = vpack.c.b16 %v2954, %v2953
  %v2991 = vpack.c.b16 %v2956, %v2955
  %v2992 = vpack.c.b16 %v2958, %v2957
  %v2993 = vpack.c.b16 %v2960, %v2959
  %v2994 = vpack.c.b16 %v2962, %v2961
  %v2995 = vpack.c.b16 %v2964, %v2963
  %v2996 = vpack.c.b16 %v2966, %v2965
  %v2997 = vpack.c.b16 %v2968, %v2967
  %v2998 = vpack.c.b16 %v2970, %v2969
  %v2999 = vpack.c.b16 %v2972, %v2971
  %v3000 = vpack.c.b16 %v2974, %v2973
  %v3001 = vpack.c.b16 %v2976, %v2975
  %v3002 = vpack.c.b16 %v2978, %v2977
  %v3003 = vpack.c.b16 %v2980, %v2979
  %v3004 = vpack.c.b16 %v2982, %v2981
  %v3005 = vpack.c.b16 %v2984, %v2983
  %v3006 = vpack.c.b16 %v2986, %v2985
  %v3028 = vsel %vm2739, %v2690, 0
  %v3031 = vsel %vm2739, %v2693, 0
  %v3034 = vsel %vm2739, %v2696, 0
  %v3037 = vsel %vm2739, %v2699, 0
  %v3040 = vsel %vm2739, %v2702, 0
  %v3043 = vsel %vm2739, %v2705, 0
  %v3046 = vsel %vm2739, %v2708, 0
  %v3049 = vsel %vm2739, %v2711, 0
  %v3052 = vsel %vm2739, %v2714, 0
  %v3055 = vsel %vm2739, %v2717, 0
  %v3058 = vsel %vm2739, %v2720, 0
  %v3061 = vsel %vm2739, %v2723, 0
  %v3064 = vsel %vm2739, %v2726, 0
  %v3067 = vsel %vm2739, %v2729, 0
  %v3070 = vsel %vm2739, %v2732, 0
  %3072 = vmatprep.subr.bf16.mxu0 0
  %3073 = vmatpush1.bf16.msra.mxu0 %v2987
  %3074 = vmatprep.subr.bf16.mxu0 0
  %3075 = vmatpush1.bf16.msra.mxu0 %v2988
  %3076 = vmatprep.subr.bf16.mxu0 0
  %3077 = vmatpush1.bf16.msra.mxu0 %v2989
  %3078 = vmatprep.subr.bf16.mxu0 0
  %3079 = vmatpush1.bf16.msra.mxu0 %v2990
  %3080 = vmatprep.subr.bf16.mxu0 0
  %3081 = vmatpush1.bf16.msra.mxu0 %v2991
  %3082 = vmatprep.subr.bf16.mxu0 0
  %3083 = vmatpush1.bf16.msra.mxu0 %v2992
  %3084 = vmatprep.subr.bf16.mxu0 0
  %3085 = vmatpush1.bf16.msra.mxu0 %v2993
  %3086 = vmatprep.subr.bf16.mxu0 0
  %3087 = vmatpush1.bf16.msra.mxu0 %v2994
  %3088 = vmatprep.subr.bf16.mxu0 0
  %3089 = vmatpush1.bf16.msra.mxu0 %v2995
  %3090 = vmatprep.subr.bf16.mxu0 0
  %3091 = vmatpush1.bf16.msra.mxu0 %v2996
  %3092 = vmatprep.subr.bf16.mxu0 0
  %3093 = vmatpush1.bf16.msra.mxu0 %v2997
  %3094 = vmatprep.subr.bf16.mxu0 0
  %3095 = vmatpush1.bf16.msra.mxu0 %v2998
  %3096 = vmatprep.subr.bf16.mxu0 0
  %3097 = vmatpush1.bf16.msra.mxu0 %v2999
  %3098 = vmatprep.subr.bf16.mxu0 0
  %3099 = vmatpush1.bf16.msra.mxu0 %v3000
  %3100 = vmatprep.subr.bf16.mxu0 0
  %3101 = vmatpush1.bf16.msra.mxu0 %v3001
  %3102 = vmatprep.subr.bf16.mxu0 0
  %3103 = vmatpush1.bf16.msra.mxu0 %v3002
  %3104 = vmatprep.mubr.bf16.mxu0 %v2793
  %3105 = vmatmul.mubr.bf16.gmra.mrb[0].mxu0 %v2741
  %v3106 = vpop.f32.mrb[0].mxu0
  %v3107 = vadd.f32 0.0, %v3106
  %v3108 = vpop.f32.mrb[0].mxu0
  %v3109 = vpop.f32.mrb[0].mxu0
  %v3110 = vadd.f32 0.0, %v3109
  %v3111 = vpop.f32.mrb[0].mxu0
  %3112 = vmatprep.mubr.bf16.mxu0 %v2793
  %3113 = vmatmul.mubr.bf16.gmra.mrb[0].mxu0 %v2741
  %v3114 = vpop.f32.mrb[0].mxu0
  %v3115 = vadd.f32 0.0, %v3114
  %v3116 = vpop.f32.mrb[0].mxu0
  %v3117 = vpop.f32.mrb[0].mxu0
  %v3118 = vadd.f32 0.0, %v3117
  %v3119 = vpop.f32.mrb[0].mxu0
  %3120 = vmatprep.mubr.bf16.mxu0 %v2797
  %3121 = vmatmul.mubr.bf16.gmra.mrb[0].mxu0 %v2744
  %v3122 = vpop.f32.mrb[0].mxu0
  %v3123 = vadd.f32 0.0, %v3122
  %v3124 = vpop.f32.mrb[0].mxu0
  %v3125 = vpop.f32.mrb[0].mxu0
  %v3126 = vadd.f32 0.0, %v3125
  %v3127 = vpop.f32.mrb[0].mxu0
  %3128 = vmatprep.mubr.bf16.mxu0 %v2801
  %3129 = vmatmul.mubr.bf16.gmra.mrb[0].mxu0 %v2747
  %v3130 = vpop.f32.mrb[0].mxu0
  %v3131 = vadd.f32 0.0, %v3130
  %v3132 = vpop.f32.mrb[0].mxu0
  %v3133 = vpop.f32.mrb[0].mxu0
  %v3134 = vadd.f32 0.0, %v3133
  %v3135 = vpop.f32.mrb[0].mxu0
  %3136 = vmatprep.mubr.bf16.mxu0 %v2805
  %3137 = vmatmul.mubr.bf16.gmra.mrb[0].mxu0 %v2750
  %v3138 = vpop.f32.mrb[0].mxu0
  %v3139 = vadd.f32 0.0, %v3138
  %v3140 = vpop.f32.mrb[0].mxu0
  %v3141 = vpop.f32.mrb[0].mxu0
  %v3142 = vadd.f32 0.0, %v3141
  %v3143 = vpop.f32.mrb[0].mxu0
  %3144 = vmatprep.mubr.bf16.mxu0 %v2809
  %3145 = vmatmul.mubr.bf16.gmra.mrb[0].mxu0 %v2753
  %v3146 = vpop.f32.mrb[0].mxu0
  %v3147 = vadd.f32 0.0, %v3146
  %v3148 = vpop.f32.mrb[0].mxu0
  %v3149 = vpop.f32.mrb[0].mxu0
  %v3150 = vadd.f32 0.0, %v3149
  %v3151 = vpop.f32.mrb[0].mxu0
  %3152 = vmatprep.mubr.bf16.mxu0 %v2813
  %3153 = vmatmul.mubr.bf16.gmra.mrb[0].mxu0 %v2756
  %v3154 = vpop.f32.mrb[0].mxu0
  %v3155 = vadd.f32 0.0, %v3154
  %v3156 = vpop.f32.mrb[0].mxu0
  %v3157 = vpop.f32.mrb[0].mxu0
  %v3158 = vadd.f32 0.0, %v3157
  %v3159 = vpop.f32.mrb[0].mxu0
  %3160 = vmatprep.mubr.bf16.mxu0 %v2817
  %3161 = vmatmul.mubr.bf16.gmra.mrb[0].mxu0 %v2759
  %v3162 = vpop.f32.mrb[0].mxu0
  %v3163 = vadd.f32 0.0, %v3162
  %v3164 = vpop.f32.mrb[0].mxu0
  %v3165 = vpop.f32.mrb[0].mxu0
  %v3166 = vadd.f32 0.0, %v3165
  %v3167 = vpop.f32.mrb[0].mxu0
  %3168 = vmatprep.mubr.bf16.mxu0 %v2821
  %3169 = vmatmul.mubr.bf16.gmra.mrb[0].mxu0 %v2762
  %v3170 = vpop.f32.mrb[0].mxu0
  %v3171 = vadd.f32 0.0, %v3170
  %v3172 = vpop.f32.mrb[0].mxu0
  %v3173 = vpop.f32.mrb[0].mxu0
  %v3174 = vadd.f32 0.0, %v3173
  %v3175 = vpop.f32.mrb[0].mxu0
  %3176 = vmatprep.mubr.bf16.mxu0 %v2825
  %3177 = vmatmul.mubr.bf16.gmra.mrb[0].mxu0 %v2765
  %v3178 = vpop.f32.mrb[0].mxu0
  %v3179 = vadd.f32 0.0, %v3178
  %v3180 = vpop.f32.mrb[0].mxu0
  %v3181 = vpop.f32.mrb[0].mxu0
  %v3182 = vadd.f32 0.0, %v3181
  %v3183 = vpop.f32.mrb[0].mxu0
  %3184 = vmatprep.mubr.bf16.mxu0 %v2829
  %3185 = vmatmul.mubr.bf16.gmra.mrb[0].mxu0 %v2768
  %v3186 = vpop.f32.mrb[0].mxu0
  %v3187 = vadd.f32 0.0, %v3186
  %v3188 = vpop.f32.mrb[0].mxu0
  %v3189 = vpop.f32.mrb[0].mxu0
  %v3190 = vadd.f32 0.0, %v3189
  %v3191 = vpop.f32.mrb[0].mxu0
  %3192 = vmatprep.mubr.bf16.mxu0 %v2833
  %3193 = vmatmul.mubr.bf16.gmra.mrb[0].mxu0 %v2771
  %v3194 = vpop.f32.mrb[0].mxu0
  %v3195 = vadd.f32 0.0, %v3194
  %v3196 = vpop.f32.mrb[0].mxu0
  %v3197 = vpop.f32.mrb[0].mxu0
  %v3198 = vadd.f32 0.0, %v3197
  %v3199 = vpop.f32.mrb[0].mxu0
  %3200 = vmatprep.mubr.bf16.mxu0 %v2837
  %3201 = vmatmul.mubr.bf16.gmra.mrb[0].mxu0 %v2774
  %v3202 = vpop.f32.mrb[0].mxu0
  %v3203 = vadd.f32 0.0, %v3202
  %v3204 = vpop.f32.mrb[0].mxu0
  %v3205 = vpop.f32.mrb[0].mxu0
  %v3206 = vadd.f32 0.0, %v3205
  %v3207 = vpop.f32.mrb[0].mxu0
  %3208 = vmatprep.mubr.bf16.mxu0 %v2841
  %3209 = vmatmul.mubr.bf16.gmra.mrb[0].mxu0 %v2777
  %v3210 = vpop.f32.mrb[0].mxu0
  %v3211 = vadd.f32 0.0, %v3210
  %v3212 = vpop.f32.mrb[0].mxu0
  %v3213 = vpop.f32.mrb[0].mxu0
  %v3214 = vadd.f32 0.0, %v3213
  %v3215 = vpop.f32.mrb[0].mxu0
  %3216 = vmatprep.mubr.bf16.mxu0 %v2845
  %3217 = vmatmul.mubr.bf16.gmra.mrb[0].mxu0 %v2780
  %v3218 = vpop.f32.mrb[0].mxu0
  %v3219 = vadd.f32 0.0, %v3218
  %v3220 = vpop.f32.mrb[0].mxu0
  %v3221 = vpop.f32.mrb[0].mxu0
  %v3222 = vadd.f32 0.0, %v3221
  %v3223 = vpop.f32.mrb[0].mxu0
  %3224 = vmatprep.mubr.bf16.mxu0 %v2849
  %3225 = vmatmul.mubr.bf16.gmra.mrb[0].mxu0 %v2783
  %v3226 = vpop.f32.mrb[0].mxu0
  %v3227 = vadd.f32 0.0, %v3226
  %v3228 = vpop.f32.mrb[0].mxu0
  %v3229 = vpop.f32.mrb[0].mxu0
  %v3230 = vadd.f32 0.0, %v3229
  %v3231 = vpop.f32.mrb[0].mxu0
  %3232 = vdwg.mxu0
  %3233 = vmatprep.subr.bf16.mxu0 0
  %3234 = vmatpush1.bf16.msra.mxu0 %v3003
  %3235 = vmatprep.subr.bf16.mxu0 0
  %3236 = vmatpush1.bf16.msra.mxu0 %v3004
  %3237 = vmatprep.subr.bf16.mxu0 0
  %3238 = vmatpush1.bf16.msra.mxu0 %v3005
  %3239 = vmatprep.subr.bf16.mxu0 0
  %3240 = vmatpush1.bf16.msra.mxu0 %v3006
  %3241 = vmatprep.subr.bf16.mxu0 0
  %3242 = vmatpush1.bf16.msra.mxu0 0
  %3243 = vmatprep.subr.bf16.mxu0 0
  %3244 = vmatpush1.bf16.msra.mxu0 0
  %3245 = vmatprep.subr.bf16.mxu0 0
  %3246 = vmatpush1.bf16.msra.mxu0 0
  %3247 = vmatprep.subr.bf16.mxu0 0
  %3248 = vmatpush1.bf16.msra.mxu0 0
  %3249 = vmatprep.subr.bf16.mxu0 0
  %3250 = vmatpush1.bf16.msra.mxu0 0
  %3251 = vmatprep.subr.bf16.mxu0 0
  %3252 = vmatpush1.bf16.msra.mxu0 0
  %3253 = vmatprep.subr.bf16.mxu0 0
  %3254 = vmatpush1.bf16.msra.mxu0 0
  %3255 = vmatprep.subr.bf16.mxu0 0
  %3256 = vmatpush1.bf16.msra.mxu0 0
  %3257 = vmatprep.subr.bf16.mxu0 0
  %3258 = vmatpush1.bf16.msra.mxu0 0
  %3259 = vmatprep.subr.bf16.mxu0 0
  %3260 = vmatpush1.bf16.msra.mxu0 0
  %3261 = vmatprep.subr.bf16.mxu0 0
  %3262 = vmatpush1.bf16.msra.mxu0 0
  %3263 = vmatprep.subr.bf16.mxu0 0
  %3264 = vmatpush1.bf16.msra.mxu0 0
  %3265 = vmatprep.mubr.bf16.mxu0 0
  %3266 = vmatmul.mubr.bf16.gmra.mrb[0].mxu0 %v3028
  %v3267 = vpop.f32.mrb[0].mxu0
  %v3268 = vadd.f32 %v3107, %v3267
  %v3269 = vpop.f32.mrb[0].mxu0
  %v3270 = vpop.f32.mrb[0].mxu0
  %v3271 = vadd.f32 %v3110, %v3270
  %v3272 = vpop.f32.mrb[0].mxu0
  %3273 = vmatprep.mubr.bf16.mxu0 0
  %3274 = vmatmul.mubr.bf16.gmra.mrb[0].mxu0 %v3028
  %v3275 = vpop.f32.mrb[0].mxu0
  %v3276 = vadd.f32 %v3115, %v3275
  %v3277 = vpop.f32.mrb[0].mxu0
  %v3278 = vpop.f32.mrb[0].mxu0
  %v3279 = vadd.f32 %v3118, %v3278
  %v3280 = vpop.f32.mrb[0].mxu0
  %3281 = vmatprep.mubr.bf16.mxu0 0
  %3282 = vmatmul.mubr.bf16.gmra.mrb[0].mxu0 %v3031
  %v3283 = vpop.f32.mrb[0].mxu0
  %v3284 = vadd.f32 %v3123, %v3283
  %v3285 = vpop.f32.mrb[0].mxu0
  %v3286 = vpop.f32.mrb[0].mxu0
  %v3287 = vadd.f32 %v3126, %v3286
  %v3288 = vpop.f32.mrb[0].mxu0
  %3289 = vmatprep.mubr.bf16.mxu0 0
  %3290 = vmatmul.mubr.bf16.gmra.mrb[0].mxu0 %v3034
  %v3291 = vpop.f32.mrb[0].mxu0
  %v3292 = vadd.f32 %v3131, %v3291
  %v3293 = vpop.f32.mrb[0].mxu0
  %v3294 = vpop.f32.mrb[0].mxu0
  %v3295 = vadd.f32 %v3134, %v3294
  %v3296 = vpop.f32.mrb[0].mxu0
  %3297 = vmatprep.mubr.bf16.mxu0 0
  %3298 = vmatmul.mubr.bf16.gmra.mrb[0].mxu0 %v3037
  %v3299 = vpop.f32.mrb[0].mxu0
  %v3300 = vadd.f32 %v3139, %v3299
  %v3301 = vpop.f32.mrb[0].mxu0
  %v3302 = vpop.f32.mrb[0].mxu0
  %v3303 = vadd.f32 %v3142, %v3302
  %v3304 = vpop.f32.mrb[0].mxu0
  %3305 = vmatprep.mubr.bf16.mxu0 0
  %3306 = vmatmul.mubr.bf16.gmra.mrb[0].mxu0 %v3040
  %v3307 = vpop.f32.mrb[0].mxu0
  %v3308 = vadd.f32 %v3147, %v3307
  %v3309 = vpop.f32.mrb[0].mxu0
  %v3310 = vpop.f32.mrb[0].mxu0
  %v3311 = vadd.f32 %v3150, %v3310
  %v3312 = vpop.f32.mrb[0].mxu0
  %3313 = vmatprep.mubr.bf16.mxu0 0
  %3314 = vmatmul.mubr.bf16.gmra.mrb[0].mxu0 %v3043
  %v3315 = vpop.f32.mrb[0].mxu0
  %v3316 = vadd.f32 %v3155, %v3315
  %v3317 = vpop.f32.mrb[0].mxu0
  %v3318 = vpop.f32.mrb[0].mxu0
  %v3319 = vadd.f32 %v3158, %v3318
  %v3320 = vpop.f32.mrb[0].mxu0
  %3321 = vmatprep.mubr.bf16.mxu0 0
  %3322 = vmatmul.mubr.bf16.gmra.mrb[0].mxu0 %v3046
  %v3323 = vpop.f32.mrb[0].mxu0
  %v3324 = vadd.f32 %v3163, %v3323
  %v3325 = vpop.f32.mrb[0].mxu0
  %v3326 = vpop.f32.mrb[0].mxu0
  %v3327 = vadd.f32 %v3166, %v3326
  %v3328 = vpop.f32.mrb[0].mxu0
  %3329 = vmatprep.mubr.bf16.mxu0 0
  %3330 = vmatmul.mubr.bf16.gmra.mrb[0].mxu0 %v3049
  %v3331 = vpop.f32.mrb[0].mxu0
  %v3332 = vadd.f32 %v3171, %v3331
  %v3333 = vpop.f32.mrb[0].mxu0
  %v3334 = vpop.f32.mrb[0].mxu0
  %v3335 = vadd.f32 %v3174, %v3334
  %v3336 = vpop.f32.mrb[0].mxu0
  %3337 = vmatprep.mubr.bf16.mxu0 0
  %3338 = vmatmul.mubr.bf16.gmra.mrb[0].mxu0 %v3052
  %v3339 = vpop.f32.mrb[0].mxu0
  %v3340 = vadd.f32 %v3179, %v3339
  %v3341 = vpop.f32.mrb[0].mxu0
  %v3342 = vpop.f32.mrb[0].mxu0
  %v3343 = vadd.f32 %v3182, %v3342
  %v3344 = vpop.f32.mrb[0].mxu0
  %3345 = vmatprep.mubr.bf16.mxu0 0
  %3346 = vmatmul.mubr.bf16.gmra.mrb[0].mxu0 %v3055
  %v3347 = vpop.f32.mrb[0].mxu0
  %v3348 = vadd.f32 %v3187, %v3347
  %v3349 = vpop.f32.mrb[0].mxu0
  %v3350 = vpop.f32.mrb[0].mxu0
  %v3351 = vadd.f32 %v3190, %v3350
  %v3352 = vpop.f32.mrb[0].mxu0
  %3353 = vmatprep.mubr.bf16.mxu0 0
  %3354 = vmatmul.mubr.bf16.gmra.mrb[0].mxu0 %v3058
  %v3355 = vpop.f32.mrb[0].mxu0
  %v3356 = vadd.f32 %v3195, %v3355
  %v3357 = vpop.f32.mrb[0].mxu0
  %v3358 = vpop.f32.mrb[0].mxu0
  %v3359 = vadd.f32 %v3198, %v3358
  %v3360 = vpop.f32.mrb[0].mxu0
  %3361 = vmatprep.mubr.bf16.mxu0 0
  %3362 = vmatmul.mubr.bf16.gmra.mrb[0].mxu0 %v3061
  %v3363 = vpop.f32.mrb[0].mxu0
  %v3364 = vadd.f32 %v3203, %v3363
  %v3365 = vpop.f32.mrb[0].mxu0
  %v3366 = vpop.f32.mrb[0].mxu0
  %v3367 = vadd.f32 %v3206, %v3366
  %v3368 = vpop.f32.mrb[0].mxu0
  %3369 = vmatprep.mubr.bf16.mxu0 0
  %3370 = vmatmul.mubr.bf16.gmra.mrb[0].mxu0 %v3064
  %v3371 = vpop.f32.mrb[0].mxu0
  %v3372 = vadd.f32 %v3211, %v3371
  %v3373 = vpop.f32.mrb[0].mxu0
  %v3374 = vpop.f32.mrb[0].mxu0
  %v3375 = vadd.f32 %v3214, %v3374
  %v3376 = vpop.f32.mrb[0].mxu0
  %3377 = vmatprep.mubr.bf16.mxu0 0
  %3378 = vmatmul.mubr.bf16.gmra.mrb[0].mxu0 %v3067
  %v3379 = vpop.f32.mrb[0].mxu0
  %v3380 = vadd.f32 %v3219, %v3379
  %v3381 = vpop.f32.mrb[0].mxu0
  %v3382 = vpop.f32.mrb[0].mxu0
  %v3383 = vadd.f32 %v3222, %v3382
  %v3384 = vpop.f32.mrb[0].mxu0
  %3385 = vmatprep.mubr.bf16.mxu0 0
  %3386 = vmatmul.mubr.bf16.gmra.mrb[0].mxu0 %v3070
  %v3387 = vpop.f32.mrb[0].mxu0
  %v3388 = vadd.f32 %v3227, %v3387
  %v3389 = vpop.f32.mrb[0].mxu0
  %v3390 = vpop.f32.mrb[0].mxu0
  %v3391 = vadd.f32 %v3230, %v3390
  %v3392 = vpop.f32.mrb[0].mxu0
  %3393 = vdwg.mxu0
  %v3394 = vadd.f32 %v2866, %v3268
  %v3395 = vadd.f32 %v2866, %v3271
  %v3396 = vadd.f32 %v2866, %v3276
  %v3397 = vadd.f32 %v2866, %v3279
  %v3398 = vadd.f32 %v2866, %v3284
  %v3399 = vadd.f32 %v2866, %v3287
  %v3400 = vadd.f32 %v2866, %v3292
  %v3401 = vadd.f32 %v2866, %v3295
  %v3402 = vadd.f32 %v2866, %v3300
  %v3403 = vadd.f32 %v2866, %v3303
  %v3404 = vadd.f32 %v2866, %v3308
  %v3405 = vadd.f32 %v2866, %v3311
  %v3406 = vadd.f32 %v2866, %v3316
  %v3407 = vadd.f32 %v2866, %v3319
  %v3408 = vadd.f32 %v2866, %v3324
  %v3409 = vadd.f32 %v2866, %v3327
  %v3410 = vadd.f32 %v2866, %v3332
  %v3411 = vadd.f32 %v2866, %v3335
  %v3412 = vadd.f32 %v2866, %v3340
  %v3413 = vadd.f32 %v2866, %v3343
  %v3414 = vadd.f32 %v2866, %v3348
  %v3415 = vadd.f32 %v2866, %v3351
  %v3416 = vadd.f32 %v2866, %v3356
  %v3417 = vadd.f32 %v2866, %v3359
  %v3418 = vadd.f32 %v2866, %v3364
  %v3419 = vadd.f32 %v2866, %v3367
  %v3420 = vadd.f32 %v2866, %v3372
  %v3421 = vadd.f32 %v2866, %v3375
  %v3422 = vadd.f32 %v2866, %v3380
  %v3423 = vadd.f32 %v2866, %v3383
  %v3424 = vadd.f32 %v2866, %v3388
  %v3425 = vadd.f32 %v2866, %v3391
  %s3426 = scalar_lea.vmem %s2, 160
  %v3427 = vld [vmem:[%s3426] sm:$0xf]
  %v3428 = vld [vmem:[%s3426 + $0x4] sm:$0xf]
  %v3429 = vld [vmem:[%s3426 + $0x8] sm:$0xf]
  %v3430 = vld [vmem:[%s3426 + $0xc] sm:$0xf]
  %v3431 = vld [vmem:[%s3426 + $0x10] sm:$0xf]
  %v3432 = vld [vmem:[%s3426 + $0x14] sm:$0xf]
  %v3433 = vld [vmem:[%s3426 + $0x18] sm:$0xf]
  %v3434 = vld [vmem:[%s3426 + $0x1c] sm:$0xf]
  %v3435 = vld [vmem:[%s3426 + $0x20] sm:$0xf]
  %v3436 = vld [vmem:[%s3426 + $0x24] sm:$0xf]
  %v3437 = vld [vmem:[%s3426 + $0x28] sm:$0xf]
  %v3438 = vld [vmem:[%s3426 + $0x2c] sm:$0xf]
  %v3439 = vld [vmem:[%s3426 + $0x30] sm:$0xf]
  %v3440 = vld [vmem:[%s3426 + $0x34] sm:$0xf]
  %v3441 = vld [vmem:[%s3426 + $0x38] sm:$0xf]
  %v3442 = vld [vmem:[%s3426 + $0x3c] sm:$0xf]
  %v3443 = vld [vmem:[%s3426 + $0x40] sm:$0xf]
  %v3444 = vld [vmem:[%s3426 + $0x44] sm:$0xf]
  %v3445 = vld [vmem:[%s3426 + $0x48] sm:$0xf]
  %v3446 = vld [vmem:[%s3426 + $0x4c] sm:$0xf]
  %v3447 = vld [vmem:[%s3426 + $0x50] sm:$0xf]
  %v3448 = vld [vmem:[%s3426 + $0x54] sm:$0xf]
  %v3449 = vld [vmem:[%s3426 + $0x58] sm:$0xf]
  %v3450 = vld [vmem:[%s3426 + $0x5c] sm:$0xf]
  %v3451 = vld [vmem:[%s3426 + $0x60] sm:$0xf]
  %v3452 = vld [vmem:[%s3426 + $0x64] sm:$0xf]
  %v3453 = vld [vmem:[%s3426 + $0x68] sm:$0xf]
  %v3454 = vld [vmem:[%s3426 + $0x6c] sm:$0xf]
  %v3455 = vld [vmem:[%s3426 + $0x70] sm:$0xf]
  %v3456 = vld [vmem:[%s3426 + $0x74] sm:$0xf]
  %v3457 = vld [vmem:[%s3426 + $0x78] sm:$0xf]
  %v3458 = vld [vmem:[%s3426 + $0x7c] sm:$0xf]
  %v3459 = vld [vmem:[%s3426 + $0x80] sm:$0xf]
  %v3460 = vld [vmem:[%s3426 + $0x84] sm:$0xf]
  %v3461 = vld [vmem:[%s3426 + $0x88] sm:$0xf]
  %v3462 = vld [vmem:[%s3426 + $0x8c] sm:$0xf]
  %v3463 = vld [vmem:[%s3426 + $0x90] sm:$0xf]
  %v3464 = vld [vmem:[%s3426 + $0x94] sm:$0xf]
  %v3465 = vld [vmem:[%s3426 + $0x98] sm:$0xf]
  %v3466 = vld [vmem:[%s3426 + $0x9c] sm:$0xf]
  %v3507 = vunpack.c.l.b16 %v3427
  %v3508 = vunpack.c.l.b16 %v3428
  %v3509 = vunpack.c.l.b16 %v3429
  %v3510 = vunpack.c.l.b16 %v3430
  %v3511 = vunpack.c.l.b16 %v3431
  %v3512 = vunpack.c.l.b16 %v3432
  %v3513 = vunpack.c.l.b16 %v3433
  %v3514 = vunpack.c.l.b16 %v3434
  %v3515 = vunpack.c.l.b16 %v3435
  %v3516 = vunpack.c.l.b16 %v3436
  %v3517 = vunpack.c.l.b16 %v3437
  %v3518 = vunpack.c.l.b16 %v3438
  %v3519 = vunpack.c.l.b16 %v3439
  %v3520 = vunpack.c.l.b16 %v3440
  %v3521 = vunpack.c.l.b16 %v3441
  %v3522 = vunpack.c.l.b16 %v3442
  %v3523 = vunpack.c.l.b16 %v3443
  %v3524 = vunpack.c.l.b16 %v3444
  %v3525 = vunpack.c.l.b16 %v3445
  %v3526 = vunpack.c.l.b16 %v3446
  %v3527 = vunpack.c.l.b16 %v3447
  %v3528 = vunpack.c.l.b16 %v3448
  %v3529 = vunpack.c.l.b16 %v3449
  %v3530 = vunpack.c.l.b16 %v3450
  %v3531 = vunpack.c.l.b16 %v3451
  %v3532 = vunpack.c.l.b16 %v3452
  %v3533 = vunpack.c.l.b16 %v3453
  %v3534 = vunpack.c.l.b16 %v3454
  %v3535 = vunpack.c.l.b16 %v3455
  %v3536 = vunpack.c.l.b16 %v3456
  %v3537 = vunpack.c.l.b16 %v3457
  %v3538 = vunpack.c.l.b16 %v3458
  %v3539 = vunpack.c.l.b16 %v3459
  %v3540 = vunpack.c.l.b16 %v3460
  %v3541 = vunpack.c.l.b16 %v3461
  %v3542 = vunpack.c.l.b16 %v3462
  %v3543 = vunpack.c.l.b16 %v3463
  %v3544 = vunpack.c.l.b16 %v3464
  %v3545 = vunpack.c.l.b16 %v3465
  %v3546 = vunpack.c.l.b16 %v3466
  %v3547 = vpack.c.b16 %v3508, %v3507
  %v3548 = vpack.c.b16 %v3510, %v3509
  %v3549 = vpack.c.b16 %v3512, %v3511
  %v3550 = vpack.c.b16 %v3514, %v3513
  %v3551 = vpack.c.b16 %v3516, %v3515
  %v3552 = vpack.c.b16 %v3518, %v3517
  %v3553 = vpack.c.b16 %v3520, %v3519
  %v3554 = vpack.c.b16 %v3522, %v3521
  %v3555 = vpack.c.b16 %v3524, %v3523
  %v3556 = vpack.c.b16 %v3526, %v3525
  %v3557 = vpack.c.b16 %v3528, %v3527
  %v3558 = vpack.c.b16 %v3530, %v3529
  %v3559 = vpack.c.b16 %v3532, %v3531
  %v3560 = vpack.c.b16 %v3534, %v3533
  %v3561 = vpack.c.b16 %v3536, %v3535
  %v3562 = vpack.c.b16 %v3538, %v3537
  %v3563 = vpack.c.b16 %v3540, %v3539
  %v3564 = vpack.c.b16 %v3542, %v3541
  %v3565 = vpack.c.b16 %v3544, %v3543
  %v3566 = vpack.c.b16 %v3546, %v3545
  %v3588 = vsel %vm2739, %v2735, 0
  %3590 = vmatprep.subr.bf16.mxu0 0
  %3591 = vmatpush1.bf16.msra.mxu0 %v3547
  %3592 = vmatprep.subr.bf16.mxu0 0
  %3593 = vmatpush1.bf16.msra.mxu0 %v3548
  %3594 = vmatprep.subr.bf16.mxu0 0
  %3595 = vmatpush1.bf16.msra.mxu0 %v3549
  %3596 = vmatprep.subr.bf16.mxu0 0
  %3597 = vmatpush1.bf16.msra.mxu0 %v3550
  %3598 = vmatprep.subr.bf16.mxu0 0
  %3599 = vmatpush1.bf16.msra.mxu0 %v3551
  %3600 = vmatprep.subr.bf16.mxu0 0
  %3601 = vmatpush1.bf16.msra.mxu0 %v3552
  %3602 = vmatprep.subr.bf16.mxu0 0
  %3603 = vmatpush1.bf16.msra.mxu0 %v3553
  %3604 = vmatprep.subr.bf16.mxu0 0
  %3605 = vmatpush1.bf16.msra.mxu0 %v3554
  %3606 = vmatprep.subr.bf16.mxu0 0
  %3607 = vmatpush1.bf16.msra.mxu0 %v3555
  %3608 = vmatprep.subr.bf16.mxu0 0
  %3609 = vmatpush1.bf16.msra.mxu0 %v3556
  %3610 = vmatprep.subr.bf16.mxu0 0
  %3611 = vmatpush1.bf16.msra.mxu0 %v3557
  %3612 = vmatprep.subr.bf16.mxu0 0
  %3613 = vmatpush1.bf16.msra.mxu0 %v3558
  %3614 = vmatprep.subr.bf16.mxu0 0
  %3615 = vmatpush1.bf16.msra.mxu0 %v3559
  %3616 = vmatprep.subr.bf16.mxu0 0
  %3617 = vmatpush1.bf16.msra.mxu0 %v3560
  %3618 = vmatprep.subr.bf16.mxu0 0
  %3619 = vmatpush1.bf16.msra.mxu0 %v3561
  %3620 = vmatprep.subr.bf16.mxu0 0
  %3621 = vmatpush1.bf16.msra.mxu0 %v3562
  %3622 = vmatprep.mubr.bf16.mxu0 %v2793
  %3623 = vmatmul.mubr.bf16.gmra.mrb[0].mxu0 %v2741
  %v3624 = vpop.f32.mrb[0].mxu0
  %v3625 = vadd.f32 0.0, %v3624
  %v3626 = vpop.f32.mrb[0].mxu0
  %v3627 = vpop.f32.mrb[0].mxu0
  %v3628 = vadd.f32 0.0, %v3627
  %v3629 = vpop.f32.mrb[0].mxu0
  %3630 = vmatprep.mubr.bf16.mxu0 %v2797
  %3631 = vmatmul.mubr.bf16.gmra.mrb[0].mxu0 %v2744
  %v3632 = vpop.f32.mrb[0].mxu0
  %v3633 = vadd.f32 0.0, %v3632
  %v3634 = vpop.f32.mrb[0].mxu0
  %v3635 = vpop.f32.mrb[0].mxu0
  %v3636 = vadd.f32 0.0, %v3635
  %v3637 = vpop.f32.mrb[0].mxu0
  %3638 = vmatprep.mubr.bf16.mxu0 %v2801
  %3639 = vmatmul.mubr.bf16.gmra.mrb[0].mxu0 %v2747
  %v3640 = vpop.f32.mrb[0].mxu0
  %v3641 = vadd.f32 0.0, %v3640
  %v3642 = vpop.f32.mrb[0].mxu0
  %v3643 = vpop.f32.mrb[0].mxu0
  %v3644 = vadd.f32 0.0, %v3643
  %v3645 = vpop.f32.mrb[0].mxu0
  %3646 = vmatprep.mubr.bf16.mxu0 %v2805
  %3647 = vmatmul.mubr.bf16.gmra.mrb[0].mxu0 %v2750
  %v3648 = vpop.f32.mrb[0].mxu0
  %v3649 = vadd.f32 0.0, %v3648
  %v3650 = vpop.f32.mrb[0].mxu0
  %v3651 = vpop.f32.mrb[0].mxu0
  %v3652 = vadd.f32 0.0, %v3651
  %v3653 = vpop.f32.mrb[0].mxu0
  %3654 = vmatprep.mubr.bf16.mxu0 %v2809
  %3655 = vmatmul.mubr.bf16.gmra.mrb[0].mxu0 %v2753
  %v3656 = vpop.f32.mrb[0].mxu0
  %v3657 = vadd.f32 0.0, %v3656
  %v3658 = vpop.f32.mrb[0].mxu0
  %v3659 = vpop.f32.mrb[0].mxu0
  %v3660 = vadd.f32 0.0, %v3659
  %v3661 = vpop.f32.mrb[0].mxu0
  %3662 = vmatprep.mubr.bf16.mxu0 %v2813
  %3663 = vmatmul.mubr.bf16.gmra.mrb[0].mxu0 %v2756
  %v3664 = vpop.f32.mrb[0].mxu0
  %v3665 = vadd.f32 0.0, %v3664
  %v3666 = vpop.f32.mrb[0].mxu0
  %v3667 = vpop.f32.mrb[0].mxu0
  %v3668 = vadd.f32 0.0, %v3667
  %v3669 = vpop.f32.mrb[0].mxu0
  %3670 = vmatprep.mubr.bf16.mxu0 %v2817
  %3671 = vmatmul.mubr.bf16.gmra.mrb[0].mxu0 %v2759
  %v3672 = vpop.f32.mrb[0].mxu0
  %v3673 = vadd.f32 0.0, %v3672
  %v3674 = vpop.f32.mrb[0].mxu0
  %v3675 = vpop.f32.mrb[0].mxu0
  %v3676 = vadd.f32 0.0, %v3675
  %v3677 = vpop.f32.mrb[0].mxu0
  %3678 = vmatprep.mubr.bf16.mxu0 %v2821
  %3679 = vmatmul.mubr.bf16.gmra.mrb[0].mxu0 %v2762
  %v3680 = vpop.f32.mrb[0].mxu0
  %v3681 = vadd.f32 0.0, %v3680
  %v3682 = vpop.f32.mrb[0].mxu0
  %v3683 = vpop.f32.mrb[0].mxu0
  %v3684 = vadd.f32 0.0, %v3683
  %v3685 = vpop.f32.mrb[0].mxu0
  %3686 = vmatprep.mubr.bf16.mxu0 %v2825
  %3687 = vmatmul.mubr.bf16.gmra.mrb[0].mxu0 %v2765
  %v3688 = vpop.f32.mrb[0].mxu0
  %v3689 = vadd.f32 0.0, %v3688
  %v3690 = vpop.f32.mrb[0].mxu0
  %v3691 = vpop.f32.mrb[0].mxu0
  %v3692 = vadd.f32 0.0, %v3691
  %v3693 = vpop.f32.mrb[0].mxu0
  %3694 = vmatprep.mubr.bf16.mxu0 %v2829
  %3695 = vmatmul.mubr.bf16.gmra.mrb[0].mxu0 %v2768
  %v3696 = vpop.f32.mrb[0].mxu0
  %v3697 = vadd.f32 0.0, %v3696
  %v3698 = vpop.f32.mrb[0].mxu0
  %v3699 = vpop.f32.mrb[0].mxu0
  %v3700 = vadd.f32 0.0, %v3699
  %v3701 = vpop.f32.mrb[0].mxu0
  %3702 = vmatprep.mubr.bf16.mxu0 %v2833
  %3703 = vmatmul.mubr.bf16.gmra.mrb[0].mxu0 %v2771
  %v3704 = vpop.f32.mrb[0].mxu0
  %v3705 = vadd.f32 0.0, %v3704
  %v3706 = vpop.f32.mrb[0].mxu0
  %v3707 = vpop.f32.mrb[0].mxu0
  %v3708 = vadd.f32 0.0, %v3707
  %v3709 = vpop.f32.mrb[0].mxu0
  %3710 = vmatprep.mubr.bf16.mxu0 %v2837
  %3711 = vmatmul.mubr.bf16.gmra.mrb[0].mxu0 %v2774
  %v3712 = vpop.f32.mrb[0].mxu0
  %v3713 = vadd.f32 0.0, %v3712
  %v3714 = vpop.f32.mrb[0].mxu0
  %v3715 = vpop.f32.mrb[0].mxu0
  %v3716 = vadd.f32 0.0, %v3715
  %v3717 = vpop.f32.mrb[0].mxu0
  %3718 = vmatprep.mubr.bf16.mxu0 %v2841
  %3719 = vmatmul.mubr.bf16.gmra.mrb[0].mxu0 %v2777
  %v3720 = vpop.f32.mrb[0].mxu0
  %v3721 = vadd.f32 0.0, %v3720
  %v3722 = vpop.f32.mrb[0].mxu0
  %v3723 = vpop.f32.mrb[0].mxu0
  %v3724 = vadd.f32 0.0, %v3723
  %v3725 = vpop.f32.mrb[0].mxu0
  %3726 = vmatprep.mubr.bf16.mxu0 %v2845
  %3727 = vmatmul.mubr.bf16.gmra.mrb[0].mxu0 %v2780
  %v3728 = vpop.f32.mrb[0].mxu0
  %v3729 = vadd.f32 0.0, %v3728
  %v3730 = vpop.f32.mrb[0].mxu0
  %v3731 = vpop.f32.mrb[0].mxu0
  %v3732 = vadd.f32 0.0, %v3731
  %v3733 = vpop.f32.mrb[0].mxu0
  %3734 = vmatprep.mubr.bf16.mxu0 %v2849
  %3735 = vmatmul.mubr.bf16.gmra.mrb[0].mxu0 %v2783
  %v3736 = vpop.f32.mrb[0].mxu0
  %v3737 = vadd.f32 0.0, %v3736
  %v3738 = vpop.f32.mrb[0].mxu0
  %v3739 = vpop.f32.mrb[0].mxu0
  %v3740 = vadd.f32 0.0, %v3739
  %v3741 = vpop.f32.mrb[0].mxu0
  %3742 = vmatprep.mubr.bf16.mxu0 %v2853
  %3743 = vmatmul.mubr.bf16.gmra.mrb[0].mxu0 %v2786
  %v3744 = vpop.f32.mrb[0].mxu0
  %v3745 = vadd.f32 0.0, %v3744
  %v3746 = vpop.f32.mrb[0].mxu0
  %v3747 = vpop.f32.mrb[0].mxu0
  %v3748 = vadd.f32 0.0, %v3747
  %v3749 = vpop.f32.mrb[0].mxu0
  %3750 = vdwg.mxu0
  %3751 = vmatprep.subr.bf16.mxu0 0
  %3752 = vmatpush1.bf16.msra.mxu0 %v3563
  %3753 = vmatprep.subr.bf16.mxu0 0
  %3754 = vmatpush1.bf16.msra.mxu0 %v3564
  %3755 = vmatprep.subr.bf16.mxu0 0
  %3756 = vmatpush1.bf16.msra.mxu0 %v3565
  %3757 = vmatprep.subr.bf16.mxu0 0
  %3758 = vmatpush1.bf16.msra.mxu0 %v3566
  %3759 = vmatprep.subr.bf16.mxu0 0
  %3760 = vmatpush1.bf16.msra.mxu0 0
  %3761 = vmatprep.subr.bf16.mxu0 0
  %3762 = vmatpush1.bf16.msra.mxu0 0
  %3763 = vmatprep.subr.bf16.mxu0 0
  %3764 = vmatpush1.bf16.msra.mxu0 0
  %3765 = vmatprep.subr.bf16.mxu0 0
  %3766 = vmatpush1.bf16.msra.mxu0 0
  %3767 = vmatprep.subr.bf16.mxu0 0
  %3768 = vmatpush1.bf16.msra.mxu0 0
  %3769 = vmatprep.subr.bf16.mxu0 0
  %3770 = vmatpush1.bf16.msra.mxu0 0
  %3771 = vmatprep.subr.bf16.mxu0 0
  %3772 = vmatpush1.bf16.msra.mxu0 0
  %3773 = vmatprep.subr.bf16.mxu0 0
  %3774 = vmatpush1.bf16.msra.mxu0 0
  %3775 = vmatprep.subr.bf16.mxu0 0
  %3776 = vmatpush1.bf16.msra.mxu0 0
  %3777 = vmatprep.subr.bf16.mxu0 0
  %3778 = vmatpush1.bf16.msra.mxu0 0
  %3779 = vmatprep.subr.bf16.mxu0 0
  %3780 = vmatpush1.bf16.msra.mxu0 0
  %3781 = vmatprep.subr.bf16.mxu0 0
  %3782 = vmatpush1.bf16.msra.mxu0 0
  %3783 = vmatprep.mubr.bf16.mxu0 0
  %3784 = vmatmul.mubr.bf16.gmra.mrb[0].mxu0 %v3028
  %v3785 = vpop.f32.mrb[0].mxu0
  %v3786 = vadd.f32 %v3625, %v3785
  %v3787 = vpop.f32.mrb[0].mxu0
  %v3788 = vpop.f32.mrb[0].mxu0
  %v3789 = vadd.f32 %v3628, %v3788
  %v3790 = vpop.f32.mrb[0].mxu0
  %3791 = vmatprep.mubr.bf16.mxu0 0
  %3792 = vmatmul.mubr.bf16.gmra.mrb[0].mxu0 %v3031
  %v3793 = vpop.f32.mrb[0].mxu0
  %v3794 = vadd.f32 %v3633, %v3793
  %v3795 = vpop.f32.mrb[0].mxu0
  %v3796 = vpop.f32.mrb[0].mxu0
  %v3797 = vadd.f32 %v3636, %v3796
  %v3798 = vpop.f32.mrb[0].mxu0
  %3799 = vmatprep.mubr.bf16.mxu0 0
  %3800 = vmatmul.mubr.bf16.gmra.mrb[0].mxu0 %v3034
  %v3801 = vpop.f32.mrb[0].mxu0
  %v3802 = vadd.f32 %v3641, %v3801
  %v3803 = vpop.f32.mrb[0].mxu0
  %v3804 = vpop.f32.mrb[0].mxu0
  %v3805 = vadd.f32 %v3644, %v3804
  %v3806 = vpop.f32.mrb[0].mxu0
  %3807 = vmatprep.mubr.bf16.mxu0 0
  %3808 = vmatmul.mubr.bf16.gmra.mrb[0].mxu0 %v3037
  %v3809 = vpop.f32.mrb[0].mxu0
  %v3810 = vadd.f32 %v3649, %v3809
  %v3811 = vpop.f32.mrb[0].mxu0
  %v3812 = vpop.f32.mrb[0].mxu0
  %v3813 = vadd.f32 %v3652, %v3812
  %v3814 = vpop.f32.mrb[0].mxu0
  %3815 = vmatprep.mubr.bf16.mxu0 0
  %3816 = vmatmul.mubr.bf16.gmra.mrb[0].mxu0 %v3040
  %v3817 = vpop.f32.mrb[0].mxu0
  %v3818 = vadd.f32 %v3657, %v3817
  %v3819 = vpop.f32.mrb[0].mxu0
  %v3820 = vpop.f32.mrb[0].mxu0
  %v3821 = vadd.f32 %v3660, %v3820
  %v3822 = vpop.f32.mrb[0].mxu0
  %3823 = vmatprep.mubr.bf16.mxu0 0
  %3824 = vmatmul.mubr.bf16.gmra.mrb[0].mxu0 %v3043
  %v3825 = vpop.f32.mrb[0].mxu0
  %v3826 = vadd.f32 %v3665, %v3825
  %v3827 = vpop.f32.mrb[0].mxu0
  %v3828 = vpop.f32.mrb[0].mxu0
  %v3829 = vadd.f32 %v3668, %v3828
  %v3830 = vpop.f32.mrb[0].mxu0
  %3831 = vmatprep.mubr.bf16.mxu0 0
  %3832 = vmatmul.mubr.bf16.gmra.mrb[0].mxu0 %v3046
  %v3833 = vpop.f32.mrb[0].mxu0
  %v3834 = vadd.f32 %v3673, %v3833
  %v3835 = vpop.f32.mrb[0].mxu0
  %v3836 = vpop.f32.mrb[0].mxu0
  %v3837 = vadd.f32 %v3676, %v3836
  %v3838 = vpop.f32.mrb[0].mxu0
  %3839 = vmatprep.mubr.bf16.mxu0 0
  %3840 = vmatmul.mubr.bf16.gmra.mrb[0].mxu0 %v3049
  %v3841 = vpop.f32.mrb[0].mxu0
  %v3842 = vadd.f32 %v3681, %v3841
  %v3843 = vpop.f32.mrb[0].mxu0
  %v3844 = vpop.f32.mrb[0].mxu0
  %v3845 = vadd.f32 %v3684, %v3844
  %v3846 = vpop.f32.mrb[0].mxu0
  %3847 = vmatprep.mubr.bf16.mxu0 0
  %3848 = vmatmul.mubr.bf16.gmra.mrb[0].mxu0 %v3052
  %v3849 = vpop.f32.mrb[0].mxu0
  %v3850 = vadd.f32 %v3689, %v3849
  %v3851 = vpop.f32.mrb[0].mxu0
  %v3852 = vpop.f32.mrb[0].mxu0
  %v3853 = vadd.f32 %v3692, %v3852
  %v3854 = vpop.f32.mrb[0].mxu0
  %3855 = vmatprep.mubr.bf16.mxu0 0
  %3856 = vmatmul.mubr.bf16.gmra.mrb[0].mxu0 %v3055
  %v3857 = vpop.f32.mrb[0].mxu0
  %v3858 = vadd.f32 %v3697, %v3857
  %v3859 = vpop.f32.mrb[0].mxu0
  %v3860 = vpop.f32.mrb[0].mxu0
  %v3861 = vadd.f32 %v3700, %v3860
  %v3862 = vpop.f32.mrb[0].mxu0
  %3863 = vmatprep.mubr.bf16.mxu0 0
  %3864 = vmatmul.mubr.bf16.gmra.mrb[0].mxu0 %v3058
  %v3865 = vpop.f32.mrb[0].mxu0
  %v3866 = vadd.f32 %v3705, %v3865
  %v3867 = vpop.f32.mrb[0].mxu0
  %v3868 = vpop.f32.mrb[0].mxu0
  %v3869 = vadd.f32 %v3708, %v3868
  %v3870 = vpop.f32.mrb[0].mxu0
  %3871 = vmatprep.mubr.bf16.mxu0 0
  %3872 = vmatmul.mubr.bf16.gmra.mrb[0].mxu0 %v3061
  %v3873 = vpop.f32.mrb[0].mxu0
  %v3874 = vadd.f32 %v3713, %v3873
  %v3875 = vpop.f32.mrb[0].mxu0
  %v3876 = vpop.f32.mrb[0].mxu0
  %v3877 = vadd.f32 %v3716, %v3876
  %v3878 = vpop.f32.mrb[0].mxu0
  %3879 = vmatprep.mubr.bf16.mxu0 0
  %3880 = vmatmul.mubr.bf16.gmra.mrb[0].mxu0 %v3064
  %v3881 = vpop.f32.mrb[0].mxu0
  %v3882 = vadd.f32 %v3721, %v3881
  %v3883 = vpop.f32.mrb[0].mxu0
  %v3884 = vpop.f32.mrb[0].mxu0
  %v3885 = vadd.f32 %v3724, %v3884
  %v3886 = vpop.f32.mrb[0].mxu0
  %3887 = vmatprep.mubr.bf16.mxu0 0
  %3888 = vmatmul.mubr.bf16.gmra.mrb[0].mxu0 %v3067
  %v3889 = vpop.f32.mrb[0].mxu0
  %v3890 = vadd.f32 %v3729, %v3889
  %v3891 = vpop.f32.mrb[0].mxu0
  %v3892 = vpop.f32.mrb[0].mxu0
  %v3893 = vadd.f32 %v3732, %v3892
  %v3894 = vpop.f32.mrb[0].mxu0
  %3895 = vmatprep.mubr.bf16.mxu0 0
  %3896 = vmatmul.mubr.bf16.gmra.mrb[0].mxu0 %v3070
  %v3897 = vpop.f32.mrb[0].mxu0
  %v3898 = vadd.f32 %v3737, %v3897
  %v3899 = vpop.f32.mrb[0].mxu0
  %v3900 = vpop.f32.mrb[0].mxu0
  %v3901 = vadd.f32 %v3740, %v3900
  %v3902 = vpop.f32.mrb[0].mxu0
  %3903 = vmatprep.mubr.bf16.mxu0 0
  %3904 = vmatmul.mubr.bf16.gmra.mrb[0].mxu0 %v3588
  %v3905 = vpop.f32.mrb[0].mxu0
  %v3906 = vadd.f32 %v3745, %v3905
  %v3907 = vpop.f32.mrb[0].mxu0
  %v3908 = vpop.f32.mrb[0].mxu0
  %v3909 = vadd.f32 %v3748, %v3908
  %v3910 = vpop.f32.mrb[0].mxu0
  %3911 = vdwg.mxu0
  %v3912 = vadd.f32 %v3394, %v3786
  %v3913 = vadd.f32 %v3395, %v3789
  %v3914 = vadd.f32 %v3396, %v3794
  %v3915 = vadd.f32 %v3397, %v3797
  %v3916 = vadd.f32 %v3398, %v3802
  %v3917 = vadd.f32 %v3399, %v3805
  %v3918 = vadd.f32 %v3400, %v3810
  %v3919 = vadd.f32 %v3401, %v3813
  %v3920 = vadd.f32 %v3402, %v3818
  %v3921 = vadd.f32 %v3403, %v3821
  %v3922 = vadd.f32 %v3404, %v3826
  %v3923 = vadd.f32 %v3405, %v3829
  %v3924 = vadd.f32 %v3406, %v3834
  %v3925 = vadd.f32 %v3407, %v3837
  %v3926 = vadd.f32 %v3408, %v3842
  %v3927 = vadd.f32 %v3409, %v3845
  %v3928 = vadd.f32 %v3410, %v3850
  %v3929 = vadd.f32 %v3411, %v3853
  %v3930 = vadd.f32 %v3412, %v3858
  %v3931 = vadd.f32 %v3413, %v3861
  %v3932 = vadd.f32 %v3414, %v3866
  %v3933 = vadd.f32 %v3415, %v3869
  %v3934 = vadd.f32 %v3416, %v3874
  %v3935 = vadd.f32 %v3417, %v3877
  %v3936 = vadd.f32 %v3418, %v3882
  %v3937 = vadd.f32 %v3419, %v3885
  %v3938 = vadd.f32 %v3420, %v3890
  %v3939 = vadd.f32 %v3421, %v3893
  %v3940 = vadd.f32 %v3422, %v3898
  %v3941 = vadd.f32 %v3423, %v3901
  %v3942 = vadd.f32 %v3424, %v3906
  %v3943 = vadd.f32 %v3425, %v3909
  %s3944 = scalar_lea.vmem %s2, 320
  %v3945 = vld [vmem:[%s3944] sm:$0xf]
  %v3946 = vld [vmem:[%s3944 + $0x4] sm:$0xf]
  %v3947 = vld [vmem:[%s3944 + $0x8] sm:$0xf]
  %v3948 = vld [vmem:[%s3944 + $0xc] sm:$0xf]
  %v3949 = vld [vmem:[%s3944 + $0x10] sm:$0xf]
  %v3950 = vld [vmem:[%s3944 + $0x14] sm:$0xf]
  %v3951 = vld [vmem:[%s3944 + $0x18] sm:$0xf]
  %v3952 = vld [vmem:[%s3944 + $0x1c] sm:$0xf]
  %v3953 = vld [vmem:[%s3944 + $0x20] sm:$0xf]
  %v3954 = vld [vmem:[%s3944 + $0x24] sm:$0xf]
  %v3955 = vld [vmem:[%s3944 + $0x28] sm:$0xf]
  %v3956 = vld [vmem:[%s3944 + $0x2c] sm:$0xf]
  %v3957 = vld [vmem:[%s3944 + $0x30] sm:$0xf]
  %v3958 = vld [vmem:[%s3944 + $0x34] sm:$0xf]
  %v3959 = vld [vmem:[%s3944 + $0x38] sm:$0xf]
  %v3960 = vld [vmem:[%s3944 + $0x3c] sm:$0xf]
  %v3961 = vld [vmem:[%s3944 + $0x40] sm:$0xf]
  %v3962 = vld [vmem:[%s3944 + $0x44] sm:$0xf]
  %v3963 = vld [vmem:[%s3944 + $0x48] sm:$0xf]
  %v3964 = vld [vmem:[%s3944 + $0x4c] sm:$0xf]
  %v3965 = vld [vmem:[%s3944 + $0x50] sm:$0xf]
  %v3966 = vld [vmem:[%s3944 + $0x54] sm:$0xf]
  %v3967 = vld [vmem:[%s3944 + $0x58] sm:$0xf]
  %v3968 = vld [vmem:[%s3944 + $0x5c] sm:$0xf]
  %v3969 = vld [vmem:[%s3944 + $0x60] sm:$0xf]
  %v3970 = vld [vmem:[%s3944 + $0x64] sm:$0xf]
  %v3971 = vld [vmem:[%s3944 + $0x68] sm:$0xf]
  %v3972 = vld [vmem:[%s3944 + $0x6c] sm:$0xf]
  %v3973 = vld [vmem:[%s3944 + $0x70] sm:$0xf]
  %v3974 = vld [vmem:[%s3944 + $0x74] sm:$0xf]
  %v3975 = vld [vmem:[%s3944 + $0x78] sm:$0xf]
  %v3976 = vld [vmem:[%s3944 + $0x7c] sm:$0xf]
  %v3977 = vld [vmem:[%s3944 + $0x80] sm:$0xf]
  %v3978 = vld [vmem:[%s3944 + $0x84] sm:$0xf]
  %v3979 = vld [vmem:[%s3944 + $0x88] sm:$0xf]
  %v3980 = vld [vmem:[%s3944 + $0x8c] sm:$0xf]
  %v3981 = vld [vmem:[%s3944 + $0x90] sm:$0xf]
  %v3982 = vld [vmem:[%s3944 + $0x94] sm:$0xf]
  %v3983 = vld [vmem:[%s3944 + $0x98] sm:$0xf]
  %v3984 = vld [vmem:[%s3944 + $0x9c] sm:$0xf]
  %v4025 = vunpack.c.l.b16 %v3945
  %v4026 = vunpack.c.l.b16 %v3946
  %v4027 = vunpack.c.l.b16 %v3947
  %v4028 = vunpack.c.l.b16 %v3948
  %v4029 = vunpack.c.l.b16 %v3949
  %v4030 = vunpack.c.l.b16 %v3950
  %v4031 = vunpack.c.l.b16 %v3951
  %v4032 = vunpack.c.l.b16 %v3952
  %v4033 = vunpack.c.l.b16 %v3953
  %v4034 = vunpack.c.l.b16 %v3954
  %v4035 = vunpack.c.l.b16 %v3955
  %v4036 = vunpack.c.l.b16 %v3956
  %v4037 = vunpack.c.l.b16 %v3957
  %v4038 = vunpack.c.l.b16 %v3958
  %v4039 = vunpack.c.l.b16 %v3959
  %v4040 = vunpack.c.l.b16 %v3960
  %v4041 = vunpack.c.l.b16 %v3961
  %v4042 = vunpack.c.l.b16 %v3962
  %v4043 = vunpack.c.l.b16 %v3963
  %v4044 = vunpack.c.l.b16 %v3964
  %v4045 = vunpack.c.l.b16 %v3965
  %v4046 = vunpack.c.l.b16 %v3966
  %v4047 = vunpack.c.l.b16 %v3967
  %v4048 = vunpack.c.l.b16 %v3968
  %v4049 = vunpack.c.l.b16 %v3969
  %v4050 = vunpack.c.l.b16 %v3970
  %v4051 = vunpack.c.l.b16 %v3971
  %v4052 = vunpack.c.l.b16 %v3972
  %v4053 = vunpack.c.l.b16 %v3973
  %v4054 = vunpack.c.l.b16 %v3974
  %v4055 = vunpack.c.l.b16 %v3975
  %v4056 = vunpack.c.l.b16 %v3976
  %v4057 = vunpack.c.l.b16 %v3977
  %v4058 = vunpack.c.l.b16 %v3978
  %v4059 = vunpack.c.l.b16 %v3979
  %v4060 = vunpack.c.l.b16 %v3980
  %v4061 = vunpack.c.l.b16 %v3981
  %v4062 = vunpack.c.l.b16 %v3982
  %v4063 = vunpack.c.l.b16 %v3983
  %v4064 = vunpack.c.l.b16 %v3984
  %v4065 = vpack.c.b16 %v4026, %v4025
  %v4066 = vpack.c.b16 %v4028, %v4027
  %v4067 = vpack.c.b16 %v4030, %v4029
  %v4068 = vpack.c.b16 %v4032, %v4031
  %v4069 = vpack.c.b16 %v4034, %v4033
  %v4070 = vpack.c.b16 %v4036, %v4035
  %v4071 = vpack.c.b16 %v4038, %v4037
  %v4072 = vpack.c.b16 %v4040, %v4039
  %v4073 = vpack.c.b16 %v4042, %v4041
  %v4074 = vpack.c.b16 %v4044, %v4043
  %v4075 = vpack.c.b16 %v4046, %v4045
  %v4076 = vpack.c.b16 %v4048, %v4047
  %v4077 = vpack.c.b16 %v4050, %v4049
  %v4078 = vpack.c.b16 %v4052, %v4051
  %v4079 = vpack.c.b16 %v4054, %v4053
  %v4080 = vpack.c.b16 %v4056, %v4055
  %v4081 = vpack.c.b16 %v4058, %v4057
  %v4082 = vpack.c.b16 %v4060, %v4059
  %v4083 = vpack.c.b16 %v4062, %v4061
  %v4084 = vpack.c.b16 %v4064, %v4063
  %v4106 = vsel %vm2739, %v2738, 0
  %4108 = vmatprep.subr.bf16.mxu0 0
  %4109 = vmatpush1.bf16.msra.mxu0 %v4065
  %4110 = vmatprep.subr.bf16.mxu0 0
  %4111 = vmatpush1.bf16.msra.mxu0 %v4066
  %4112 = vmatprep.subr.bf16.mxu0 0
  %4113 = vmatpush1.bf16.msra.mxu0 %v4067
  %4114 = vmatprep.subr.bf16.mxu0 0
  %4115 = vmatpush1.bf16.msra.mxu0 %v4068
  %4116 = vmatprep.subr.bf16.mxu0 0
  %4117 = vmatpush1.bf16.msra.mxu0 %v4069
  %4118 = vmatprep.subr.bf16.mxu0 0
  %4119 = vmatpush1.bf16.msra.mxu0 %v4070
  %4120 = vmatprep.subr.bf16.mxu0 0
  %4121 = vmatpush1.bf16.msra.mxu0 %v4071
  %4122 = vmatprep.subr.bf16.mxu0 0
  %4123 = vmatpush1.bf16.msra.mxu0 %v4072
  %4124 = vmatprep.subr.bf16.mxu0 0
  %4125 = vmatpush1.bf16.msra.mxu0 %v4073
  %4126 = vmatprep.subr.bf16.mxu0 0
  %4127 = vmatpush1.bf16.msra.mxu0 %v4074
  %4128 = vmatprep.subr.bf16.mxu0 0
  %4129 = vmatpush1.bf16.msra.mxu0 %v4075
  %4130 = vmatprep.subr.bf16.mxu0 0
  %4131 = vmatpush1.bf16.msra.mxu0 %v4076
  %4132 = vmatprep.subr.bf16.mxu0 0
  %4133 = vmatpush1.bf16.msra.mxu0 %v4077
  %4134 = vmatprep.subr.bf16.mxu0 0
  %4135 = vmatpush1.bf16.msra.mxu0 %v4078
  %4136 = vmatprep.subr.bf16.mxu0 0
  %4137 = vmatpush1.bf16.msra.mxu0 %v4079
  %4138 = vmatprep.subr.bf16.mxu0 0
  %4139 = vmatpush1.bf16.msra.mxu0 %v4080
  %4140 = vmatprep.mubr.bf16.mxu0 %v2797
  %4141 = vmatmul.mubr.bf16.gmra.mrb[0].mxu0 %v2744
  %v4142 = vpop.f32.mrb[0].mxu0
  %v4143 = vadd.f32 0.0, %v4142
  %v4144 = vpop.f32.mrb[0].mxu0
  %v4145 = vpop.f32.mrb[0].mxu0
  %v4146 = vadd.f32 0.0, %v4145
  %v4147 = vpop.f32.mrb[0].mxu0
  %4148 = vmatprep.mubr.bf16.mxu0 %v2801
  %4149 = vmatmul.mubr.bf16.gmra.mrb[0].mxu0 %v2747
  %v4150 = vpop.f32.mrb[0].mxu0
  %v4151 = vadd.f32 0.0, %v4150
  %v4152 = vpop.f32.mrb[0].mxu0
  %v4153 = vpop.f32.mrb[0].mxu0
  %v4154 = vadd.f32 0.0, %v4153
  %v4155 = vpop.f32.mrb[0].mxu0
  %4156 = vmatprep.mubr.bf16.mxu0 %v2805
  %4157 = vmatmul.mubr.bf16.gmra.mrb[0].mxu0 %v2750
  %v4158 = vpop.f32.mrb[0].mxu0
  %v4159 = vadd.f32 0.0, %v4158
  %v4160 = vpop.f32.mrb[0].mxu0
  %v4161 = vpop.f32.mrb[0].mxu0
  %v4162 = vadd.f32 0.0, %v4161
  %v4163 = vpop.f32.mrb[0].mxu0
  %4164 = vmatprep.mubr.bf16.mxu0 %v2809
  %4165 = vmatmul.mubr.bf16.gmra.mrb[0].mxu0 %v2753
  %v4166 = vpop.f32.mrb[0].mxu0
  %v4167 = vadd.f32 0.0, %v4166
  %v4168 = vpop.f32.mrb[0].mxu0
  %v4169 = vpop.f32.mrb[0].mxu0
  %v4170 = vadd.f32 0.0, %v4169
  %v4171 = vpop.f32.mrb[0].mxu0
  %4172 = vmatprep.mubr.bf16.mxu0 %v2813
  %4173 = vmatmul.mubr.bf16.gmra.mrb[0].mxu0 %v2756
  %v4174 = vpop.f32.mrb[0].mxu0
  %v4175 = vadd.f32 0.0, %v4174
  %v4176 = vpop.f32.mrb[0].mxu0
  %v4177 = vpop.f32.mrb[0].mxu0
  %v4178 = vadd.f32 0.0, %v4177
  %v4179 = vpop.f32.mrb[0].mxu0
  %4180 = vmatprep.mubr.bf16.mxu0 %v2817
  %4181 = vmatmul.mubr.bf16.gmra.mrb[0].mxu0 %v2759
  %v4182 = vpop.f32.mrb[0].mxu0
  %v4183 = vadd.f32 0.0, %v4182
  %v4184 = vpop.f32.mrb[0].mxu0
  %v4185 = vpop.f32.mrb[0].mxu0
  %v4186 = vadd.f32 0.0, %v4185
  %v4187 = vpop.f32.mrb[0].mxu0
  %4188 = vmatprep.mubr.bf16.mxu0 %v2821
  %4189 = vmatmul.mubr.bf16.gmra.mrb[0].mxu0 %v2762
  %v4190 = vpop.f32.mrb[0].mxu0
  %v4191 = vadd.f32 0.0, %v4190
  %v4192 = vpop.f32.mrb[0].mxu0
  %v4193 = vpop.f32.mrb[0].mxu0
  %v4194 = vadd.f32 0.0, %v4193
  %v4195 = vpop.f32.mrb[0].mxu0
  %4196 = vmatprep.mubr.bf16.mxu0 %v2825
  %4197 = vmatmul.mubr.bf16.gmra.mrb[0].mxu0 %v2765
  %v4198 = vpop.f32.mrb[0].mxu0
  %v4199 = vadd.f32 0.0, %v4198
  %v4200 = vpop.f32.mrb[0].mxu0
  %v4201 = vpop.f32.mrb[0].mxu0
  %v4202 = vadd.f32 0.0, %v4201
  %v4203 = vpop.f32.mrb[0].mxu0
  %4204 = vmatprep.mubr.bf16.mxu0 %v2829
  %4205 = vmatmul.mubr.bf16.gmra.mrb[0].mxu0 %v2768
  %v4206 = vpop.f32.mrb[0].mxu0
  %v4207 = vadd.f32 0.0, %v4206
  %v4208 = vpop.f32.mrb[0].mxu0
  %v4209 = vpop.f32.mrb[0].mxu0
  %v4210 = vadd.f32 0.0, %v4209
  %v4211 = vpop.f32.mrb[0].mxu0
  %4212 = vmatprep.mubr.bf16.mxu0 %v2833
  %4213 = vmatmul.mubr.bf16.gmra.mrb[0].mxu0 %v2771
  %v4214 = vpop.f32.mrb[0].mxu0
  %v4215 = vadd.f32 0.0, %v4214
  %v4216 = vpop.f32.mrb[0].mxu0
  %v4217 = vpop.f32.mrb[0].mxu0
  %v4218 = vadd.f32 0.0, %v4217
  %v4219 = vpop.f32.mrb[0].mxu0
  %4220 = vmatprep.mubr.bf16.mxu0 %v2837
  %4221 = vmatmul.mubr.bf16.gmra.mrb[0].mxu0 %v2774
  %v4222 = vpop.f32.mrb[0].mxu0
  %v4223 = vadd.f32 0.0, %v4222
  %v4224 = vpop.f32.mrb[0].mxu0
  %v4225 = vpop.f32.mrb[0].mxu0
  %v4226 = vadd.f32 0.0, %v4225
  %v4227 = vpop.f32.mrb[0].mxu0
  %4228 = vmatprep.mubr.bf16.mxu0 %v2841
  %4229 = vmatmul.mubr.bf16.gmra.mrb[0].mxu0 %v2777
  %v4230 = vpop.f32.mrb[0].mxu0
  %v4231 = vadd.f32 0.0, %v4230
  %v4232 = vpop.f32.mrb[0].mxu0
  %v4233 = vpop.f32.mrb[0].mxu0
  %v4234 = vadd.f32 0.0, %v4233
  %v4235 = vpop.f32.mrb[0].mxu0
  %4236 = vmatprep.mubr.bf16.mxu0 %v2845
  %4237 = vmatmul.mubr.bf16.gmra.mrb[0].mxu0 %v2780
  %v4238 = vpop.f32.mrb[0].mxu0
  %v4239 = vadd.f32 0.0, %v4238
  %v4240 = vpop.f32.mrb[0].mxu0
  %v4241 = vpop.f32.mrb[0].mxu0
  %v4242 = vadd.f32 0.0, %v4241
  %v4243 = vpop.f32.mrb[0].mxu0
  %4244 = vmatprep.mubr.bf16.mxu0 %v2849
  %4245 = vmatmul.mubr.bf16.gmra.mrb[0].mxu0 %v2783
  %v4246 = vpop.f32.mrb[0].mxu0
  %v4247 = vadd.f32 0.0, %v4246
  %v4248 = vpop.f32.mrb[0].mxu0
  %v4249 = vpop.f32.mrb[0].mxu0
  %v4250 = vadd.f32 0.0, %v4249
  %v4251 = vpop.f32.mrb[0].mxu0
  %4252 = vmatprep.mubr.bf16.mxu0 %v2853
  %4253 = vmatmul.mubr.bf16.gmra.mrb[0].mxu0 %v2786
  %v4254 = vpop.f32.mrb[0].mxu0
  %v4255 = vadd.f32 0.0, %v4254
  %v4256 = vpop.f32.mrb[0].mxu0
  %v4257 = vpop.f32.mrb[0].mxu0
  %v4258 = vadd.f32 0.0, %v4257
  %v4259 = vpop.f32.mrb[0].mxu0
  %4260 = vmatprep.mubr.bf16.mxu0 %v2857
  %4261 = vmatmul.mubr.bf16.gmra.mrb[0].mxu0 %v2789
  %v4262 = vpop.f32.mrb[0].mxu0
  %v4263 = vadd.f32 0.0, %v4262
  %v4264 = vpop.f32.mrb[0].mxu0
  %v4265 = vpop.f32.mrb[0].mxu0
  %v4266 = vadd.f32 0.0, %v4265
  %v4267 = vpop.f32.mrb[0].mxu0
  %4268 = vdwg.mxu0
  %4269 = vmatprep.subr.bf16.mxu0 0
  %4270 = vmatpush1.bf16.msra.mxu0 %v4081
  %4271 = vmatprep.subr.bf16.mxu0 0
  %4272 = vmatpush1.bf16.msra.mxu0 %v4082
  %4273 = vmatprep.subr.bf16.mxu0 0
  %4274 = vmatpush1.bf16.msra.mxu0 %v4083
  %4275 = vmatprep.subr.bf16.mxu0 0
  %4276 = vmatpush1.bf16.msra.mxu0 %v4084
  %4277 = vmatprep.subr.bf16.mxu0 0
  %4278 = vmatpush1.bf16.msra.mxu0 0
  %4279 = vmatprep.subr.bf16.mxu0 0
  %4280 = vmatpush1.bf16.msra.mxu0 0
  %4281 = vmatprep.subr.bf16.mxu0 0
  %4282 = vmatpush1.bf16.msra.mxu0 0
  %4283 = vmatprep.subr.bf16.mxu0 0
  %4284 = vmatpush1.bf16.msra.mxu0 0
  %4285 = vmatprep.subr.bf16.mxu0 0
  %4286 = vmatpush1.bf16.msra.mxu0 0
  %4287 = vmatprep.subr.bf16.mxu0 0
  %4288 = vmatpush1.bf16.msra.mxu0 0
  %4289 = vmatprep.subr.bf16.mxu0 0
  %4290 = vmatpush1.bf16.msra.mxu0 0
  %4291 = vmatprep.subr.bf16.mxu0 0
  %4292 = vmatpush1.bf16.msra.mxu0 0
  %4293 = vmatprep.subr.bf16.mxu0 0
  %4294 = vmatpush1.bf16.msra.mxu0 0
  %4295 = vmatprep.subr.bf16.mxu0 0
  %4296 = vmatpush1.bf16.msra.mxu0 0
  %4297 = vmatprep.subr.bf16.mxu0 0
  %4298 = vmatpush1.bf16.msra.mxu0 0
  %4299 = vmatprep.subr.bf16.mxu0 0
  %4300 = vmatpush1.bf16.msra.mxu0 0
  %4301 = vmatprep.mubr.bf16.mxu0 0
  %4302 = vmatmul.mubr.bf16.gmra.mrb[0].mxu0 %v3031
  %v4303 = vpop.f32.mrb[0].mxu0
  %v4304 = vadd.f32 %v4143, %v4303
  %v4305 = vpop.f32.mrb[0].mxu0
  %v4306 = vpop.f32.mrb[0].mxu0
  %v4307 = vadd.f32 %v4146, %v4306
  %v4308 = vpop.f32.mrb[0].mxu0
  %4309 = vmatprep.mubr.bf16.mxu0 0
  %4310 = vmatmul.mubr.bf16.gmra.mrb[0].mxu0 %v3034
  %v4311 = vpop.f32.mrb[0].mxu0
  %v4312 = vadd.f32 %v4151, %v4311
  %v4313 = vpop.f32.mrb[0].mxu0
  %v4314 = vpop.f32.mrb[0].mxu0
  %v4315 = vadd.f32 %v4154, %v4314
  %v4316 = vpop.f32.mrb[0].mxu0
  %4317 = vmatprep.mubr.bf16.mxu0 0
  %4318 = vmatmul.mubr.bf16.gmra.mrb[0].mxu0 %v3037
  %v4319 = vpop.f32.mrb[0].mxu0
  %v4320 = vadd.f32 %v4159, %v4319
  %v4321 = vpop.f32.mrb[0].mxu0
  %v4322 = vpop.f32.mrb[0].mxu0
  %v4323 = vadd.f32 %v4162, %v4322
  %v4324 = vpop.f32.mrb[0].mxu0
  %4325 = vmatprep.mubr.bf16.mxu0 0
  %4326 = vmatmul.mubr.bf16.gmra.mrb[0].mxu0 %v3040
  %v4327 = vpop.f32.mrb[0].mxu0
  %v4328 = vadd.f32 %v4167, %v4327
  %v4329 = vpop.f32.mrb[0].mxu0
  %v4330 = vpop.f32.mrb[0].mxu0
  %v4331 = vadd.f32 %v4170, %v4330
  %v4332 = vpop.f32.mrb[0].mxu0
  %4333 = vmatprep.mubr.bf16.mxu0 0
  %4334 = vmatmul.mubr.bf16.gmra.mrb[0].mxu0 %v3043
  %v4335 = vpop.f32.mrb[0].mxu0
  %v4336 = vadd.f32 %v4175, %v4335
  %v4337 = vpop.f32.mrb[0].mxu0
  %v4338 = vpop.f32.mrb[0].mxu0
  %v4339 = vadd.f32 %v4178, %v4338
  %v4340 = vpop.f32.mrb[0].mxu0
  %4341 = vmatprep.mubr.bf16.mxu0 0
  %4342 = vmatmul.mubr.bf16.gmra.mrb[0].mxu0 %v3046
  %v4343 = vpop.f32.mrb[0].mxu0
  %v4344 = vadd.f32 %v4183, %v4343
  %v4345 = vpop.f32.mrb[0].mxu0
  %v4346 = vpop.f32.mrb[0].mxu0
  %v4347 = vadd.f32 %v4186, %v4346
  %v4348 = vpop.f32.mrb[0].mxu0
  %4349 = vmatprep.mubr.bf16.mxu0 0
  %4350 = vmatmul.mubr.bf16.gmra.mrb[0].mxu0 %v3049
  %v4351 = vpop.f32.mrb[0].mxu0
  %v4352 = vadd.f32 %v4191, %v4351
  %v4353 = vpop.f32.mrb[0].mxu0
  %v4354 = vpop.f32.mrb[0].mxu0
  %v4355 = vadd.f32 %v4194, %v4354
  %v4356 = vpop.f32.mrb[0].mxu0
  %4357 = vmatprep.mubr.bf16.mxu0 0
  %4358 = vmatmul.mubr.bf16.gmra.mrb[0].mxu0 %v3052
  %v4359 = vpop.f32.mrb[0].mxu0
  %v4360 = vadd.f32 %v4199, %v4359
  %v4361 = vpop.f32.mrb[0].mxu0
  %v4362 = vpop.f32.mrb[0].mxu0
  %v4363 = vadd.f32 %v4202, %v4362
  %v4364 = vpop.f32.mrb[0].mxu0
  %4365 = vmatprep.mubr.bf16.mxu0 0
  %4366 = vmatmul.mubr.bf16.gmra.mrb[0].mxu0 %v3055
  %v4367 = vpop.f32.mrb[0].mxu0
  %v4368 = vadd.f32 %v4207, %v4367
  %v4369 = vpop.f32.mrb[0].mxu0
  %v4370 = vpop.f32.mrb[0].mxu0
  %v4371 = vadd.f32 %v4210, %v4370
  %v4372 = vpop.f32.mrb[0].mxu0
  %4373 = vmatprep.mubr.bf16.mxu0 0
  %4374 = vmatmul.mubr.bf16.gmra.mrb[0].mxu0 %v3058
  %v4375 = vpop.f32.mrb[0].mxu0
  %v4376 = vadd.f32 %v4215, %v4375
  %v4377 = vpop.f32.mrb[0].mxu0
  %v4378 = vpop.f32.mrb[0].mxu0
  %v4379 = vadd.f32 %v4218, %v4378
  %v4380 = vpop.f32.mrb[0].mxu0
  %4381 = vmatprep.mubr.bf16.mxu0 0
  %4382 = vmatmul.mubr.bf16.gmra.mrb[0].mxu0 %v3061
  %v4383 = vpop.f32.mrb[0].mxu0
  %v4384 = vadd.f32 %v4223, %v4383
  %v4385 = vpop.f32.mrb[0].mxu0
  %v4386 = vpop.f32.mrb[0].mxu0
  %v4387 = vadd.f32 %v4226, %v4386
  %v4388 = vpop.f32.mrb[0].mxu0
  %4389 = vmatprep.mubr.bf16.mxu0 0
  %4390 = vmatmul.mubr.bf16.gmra.mrb[0].mxu0 %v3064
  %v4391 = vpop.f32.mrb[0].mxu0
  %v4392 = vadd.f32 %v4231, %v4391
  %v4393 = vpop.f32.mrb[0].mxu0
  %v4394 = vpop.f32.mrb[0].mxu0
  %v4395 = vadd.f32 %v4234, %v4394
  %v4396 = vpop.f32.mrb[0].mxu0
  %4397 = vmatprep.mubr.bf16.mxu0 0
  %4398 = vmatmul.mubr.bf16.gmra.mrb[0].mxu0 %v3067
  %v4399 = vpop.f32.mrb[0].mxu0
  %v4400 = vadd.f32 %v4239, %v4399
  %v4401 = vpop.f32.mrb[0].mxu0
  %v4402 = vpop.f32.mrb[0].mxu0
  %v4403 = vadd.f32 %v4242, %v4402
  %v4404 = vpop.f32.mrb[0].mxu0
  %4405 = vmatprep.mubr.bf16.mxu0 0
  %4406 = vmatmul.mubr.bf16.gmra.mrb[0].mxu0 %v3070
  %v4407 = vpop.f32.mrb[0].mxu0
  %v4408 = vadd.f32 %v4247, %v4407
  %v4409 = vpop.f32.mrb[0].mxu0
  %v4410 = vpop.f32.mrb[0].mxu0
  %v4411 = vadd.f32 %v4250, %v4410
  %v4412 = vpop.f32.mrb[0].mxu0
  %4413 = vmatprep.mubr.bf16.mxu0 0
  %4414 = vmatmul.mubr.bf16.gmra.mrb[0].mxu0 %v3588
  %v4415 = vpop.f32.mrb[0].mxu0
  %v4416 = vadd.f32 %v4255, %v4415
  %v4417 = vpop.f32.mrb[0].mxu0
  %v4418 = vpop.f32.mrb[0].mxu0
  %v4419 = vadd.f32 %v4258, %v4418
  %v4420 = vpop.f32.mrb[0].mxu0
  %4421 = vmatprep.mubr.bf16.mxu0 0
  %4422 = vmatmul.mubr.bf16.gmra.mrb[0].mxu0 %v4106
  %v4423 = vpop.f32.mrb[0].mxu0
  %v4424 = vadd.f32 %v4263, %v4423
  %v4425 = vpop.f32.mrb[0].mxu0
  %v4426 = vpop.f32.mrb[0].mxu0
  %v4427 = vadd.f32 %v4266, %v4426
  %v4428 = vpop.f32.mrb[0].mxu0
  %4429 = vdwg.mxu0
  %v4430 = vadd.f32 %v3912, %v4304
  %v4431 = vadd.f32 %v3913, %v4307
  %v4432 = vadd.f32 %v3914, %v4312
  %v4433 = vadd.f32 %v3915, %v4315
  %v4434 = vadd.f32 %v3916, %v4320
  %v4435 = vadd.f32 %v3917, %v4323
  %v4436 = vadd.f32 %v3918, %v4328
  %v4437 = vadd.f32 %v3919, %v4331
  %v4438 = vadd.f32 %v3920, %v4336
  %v4439 = vadd.f32 %v3921, %v4339
  %v4440 = vadd.f32 %v3922, %v4344
  %v4441 = vadd.f32 %v3923, %v4347
  %v4442 = vadd.f32 %v3924, %v4352
  %v4443 = vadd.f32 %v3925, %v4355
  %v4444 = vadd.f32 %v3926, %v4360
  %v4445 = vadd.f32 %v3927, %v4363
  %v4446 = vadd.f32 %v3928, %v4368
  %v4447 = vadd.f32 %v3929, %v4371
  %v4448 = vadd.f32 %v3930, %v4376
  %v4449 = vadd.f32 %v3931, %v4379
  %v4450 = vadd.f32 %v3932, %v4384
  %v4451 = vadd.f32 %v3933, %v4387
  %v4452 = vadd.f32 %v3934, %v4392
  %v4453 = vadd.f32 %v3935, %v4395
  %v4454 = vadd.f32 %v3936, %v4400
  %v4455 = vadd.f32 %v3937, %v4403
  %v4456 = vadd.f32 %v3938, %v4408
  %v4457 = vadd.f32 %v3939, %v4411
  %v4458 = vadd.f32 %v3940, %v4416
  %v4459 = vadd.f32 %v3941, %v4419
  %v4460 = vadd.f32 %v3942, %v4424
  %v4461 = vadd.f32 %v3943, %v4427
  %s4462 = scalar_lea.vmem %s2, 480
  %v4463 = vld [vmem:[%s4462] sm:$0xf]
  %v4464 = vld [vmem:[%s4462 + $0x4] sm:$0xf]
  %v4465 = vld [vmem:[%s4462 + $0x8] sm:$0xf]
  %v4466 = vld [vmem:[%s4462 + $0xc] sm:$0xf]
  %v4467 = vld [vmem:[%s4462 + $0x10] sm:$0xf]
  %v4468 = vld [vmem:[%s4462 + $0x14] sm:$0xf]
  %v4469 = vld [vmem:[%s4462 + $0x18] sm:$0xf]
  %v4470 = vld [vmem:[%s4462 + $0x1c] sm:$0xf]
  %v4471 = vld [vmem:[%s4462 + $0x20] sm:$0xf]
  %v4472 = vld [vmem:[%s4462 + $0x24] sm:$0xf]
  %v4473 = vld [vmem:[%s4462 + $0x28] sm:$0xf]
  %v4474 = vld [vmem:[%s4462 + $0x2c] sm:$0xf]
  %v4475 = vld [vmem:[%s4462 + $0x30] sm:$0xf]
  %v4476 = vld [vmem:[%s4462 + $0x34] sm:$0xf]
  %v4477 = vld [vmem:[%s4462 + $0x38] sm:$0xf]
  %v4478 = vld [vmem:[%s4462 + $0x3c] sm:$0xf]
  %v4479 = vld [vmem:[%s4462 + $0x40] sm:$0xf]
  %v4480 = vld [vmem:[%s4462 + $0x44] sm:$0xf]
  %v4481 = vld [vmem:[%s4462 + $0x48] sm:$0xf]
  %v4482 = vld [vmem:[%s4462 + $0x4c] sm:$0xf]
  %v4483 = vld [vmem:[%s4462 + $0x50] sm:$0xf]
  %v4484 = vld [vmem:[%s4462 + $0x54] sm:$0xf]
  %v4485 = vld [vmem:[%s4462 + $0x58] sm:$0xf]
  %v4486 = vld [vmem:[%s4462 + $0x5c] sm:$0xf]
  %v4487 = vld [vmem:[%s4462 + $0x60] sm:$0xf]
  %v4488 = vld [vmem:[%s4462 + $0x64] sm:$0xf]
  %v4489 = vld [vmem:[%s4462 + $0x68] sm:$0xf]
  %v4490 = vld [vmem:[%s4462 + $0x6c] sm:$0xf]
  %v4491 = vld [vmem:[%s4462 + $0x70] sm:$0xf]
  %v4492 = vld [vmem:[%s4462 + $0x74] sm:$0xf]
  %v4493 = vld [vmem:[%s4462 + $0x78] sm:$0xf]
  %v4494 = vld [vmem:[%s4462 + $0x7c] sm:$0xf]
  %v4495 = vld [vmem:[%s4462 + $0x80] sm:$0xf]
  %v4496 = vld [vmem:[%s4462 + $0x84] sm:$0xf]
  %v4497 = vld [vmem:[%s4462 + $0x88] sm:$0xf]
  %v4498 = vld [vmem:[%s4462 + $0x8c] sm:$0xf]
  %v4499 = vld [vmem:[%s4462 + $0x90] sm:$0xf]
  %v4500 = vld [vmem:[%s4462 + $0x94] sm:$0xf]
  %v4501 = vld [vmem:[%s4462 + $0x98] sm:$0xf]
  %v4502 = vld [vmem:[%s4462 + $0x9c] sm:$0xf]
  %v4543 = vunpack.c.l.b16 %v4463
  %v4544 = vunpack.c.l.b16 %v4464
  %v4545 = vunpack.c.l.b16 %v4465
  %v4546 = vunpack.c.l.b16 %v4466
  %v4547 = vunpack.c.l.b16 %v4467
  %v4548 = vunpack.c.l.b16 %v4468
  %v4549 = vunpack.c.l.b16 %v4469
  %v4550 = vunpack.c.l.b16 %v4470
  %v4551 = vunpack.c.l.b16 %v4471
  %v4552 = vunpack.c.l.b16 %v4472
  %v4553 = vunpack.c.l.b16 %v4473
  %v4554 = vunpack.c.l.b16 %v4474
  %v4555 = vunpack.c.l.b16 %v4475
  %v4556 = vunpack.c.l.b16 %v4476
  %v4557 = vunpack.c.l.b16 %v4477
  %v4558 = vunpack.c.l.b16 %v4478
  %v4559 = vunpack.c.l.b16 %v4479
  %v4560 = vunpack.c.l.b16 %v4480
  %v4561 = vunpack.c.l.b16 %v4481
  %v4562 = vunpack.c.l.b16 %v4482
  %v4563 = vunpack.c.l.b16 %v4483
  %v4564 = vunpack.c.l.b16 %v4484
  %v4565 = vunpack.c.l.b16 %v4485
  %v4566 = vunpack.c.l.b16 %v4486
  %v4567 = vunpack.c.l.b16 %v4487
  %v4568 = vunpack.c.l.b16 %v4488
  %v4569 = vunpack.c.l.b16 %v4489
  %v4570 = vunpack.c.l.b16 %v4490
  %v4571 = vunpack.c.l.b16 %v4491
  %v4572 = vunpack.c.l.b16 %v4492
  %v4573 = vunpack.c.l.b16 %v4493
  %v4574 = vunpack.c.l.b16 %v4494
  %v4575 = vunpack.c.l.b16 %v4495
  %v4576 = vunpack.c.l.b16 %v4496
  %v4577 = vunpack.c.l.b16 %v4497
  %v4578 = vunpack.c.l.b16 %v4498
  %v4579 = vunpack.c.l.b16 %v4499
  %v4580 = vunpack.c.l.b16 %v4500
  %v4581 = vunpack.c.l.b16 %v4501
  %v4582 = vunpack.c.l.b16 %v4502
  %v4583 = vpack.c.b16 %v4544, %v4543
  %v4584 = vpack.c.b16 %v4546, %v4545
  %v4585 = vpack.c.b16 %v4548, %v4547
  %v4586 = vpack.c.b16 %v4550, %v4549
  %v4587 = vpack.c.b16 %v4552, %v4551
  %v4588 = vpack.c.b16 %v4554, %v4553
  %v4589 = vpack.c.b16 %v4556, %v4555
  %v4590 = vpack.c.b16 %v4558, %v4557
  %v4591 = vpack.c.b16 %v4560, %v4559
  %v4592 = vpack.c.b16 %v4562, %v4561
  %v4593 = vpack.c.b16 %v4564, %v4563
  %v4594 = vpack.c.b16 %v4566, %v4565
  %v4595 = vpack.c.b16 %v4568, %v4567
  %v4596 = vpack.c.b16 %v4570, %v4569
  %v4597 = vpack.c.b16 %v4572, %v4571
  %v4598 = vpack.c.b16 %v4574, %v4573
  %v4599 = vpack.c.b16 %v4576, %v4575
  %v4600 = vpack.c.b16 %v4578, %v4577
  %v4601 = vpack.c.b16 %v4580, %v4579
  %v4602 = vpack.c.b16 %v4582, %v4581
  %4623 = vmatprep.subr.bf16.mxu0 0
  %4624 = vmatpush1.bf16.msra.mxu0 %v4583
  %4625 = vmatprep.subr.bf16.mxu0 0
  %4626 = vmatpush1.bf16.msra.mxu0 %v4584
  %4627 = vmatprep.subr.bf16.mxu0 0
  %4628 = vmatpush1.bf16.msra.mxu0 %v4585
  %4629 = vmatprep.subr.bf16.mxu0 0
  %4630 = vmatpush1.bf16.msra.mxu0 %v4586
  %4631 = vmatprep.subr.bf16.mxu0 0
  %4632 = vmatpush1.bf16.msra.mxu0 %v4587
  %4633 = vmatprep.subr.bf16.mxu0 0
  %4634 = vmatpush1.bf16.msra.mxu0 %v4588
  %4635 = vmatprep.subr.bf16.mxu0 0
  %4636 = vmatpush1.bf16.msra.mxu0 %v4589
  %4637 = vmatprep.subr.bf16.mxu0 0
  %4638 = vmatpush1.bf16.msra.mxu0 %v4590
  %4639 = vmatprep.subr.bf16.mxu0 0
  %4640 = vmatpush1.bf16.msra.mxu0 %v4591
  %4641 = vmatprep.subr.bf16.mxu0 0
  %4642 = vmatpush1.bf16.msra.mxu0 %v4592
  %4643 = vmatprep.subr.bf16.mxu0 0
  %4644 = vmatpush1.bf16.msra.mxu0 %v4593
  %4645 = vmatprep.subr.bf16.mxu0 0
  %4646 = vmatpush1.bf16.msra.mxu0 %v4594
  %4647 = vmatprep.subr.bf16.mxu0 0
  %4648 = vmatpush1.bf16.msra.mxu0 %v4595
  %4649 = vmatprep.subr.bf16.mxu0 0
  %4650 = vmatpush1.bf16.msra.mxu0 %v4596
  %4651 = vmatprep.subr.bf16.mxu0 0
  %4652 = vmatpush1.bf16.msra.mxu0 %v4597
  %4653 = vmatprep.subr.bf16.mxu0 0
  %4654 = vmatpush1.bf16.msra.mxu0 %v4598
  %4655 = vmatprep.mubr.bf16.mxu0 %v2801
  %4656 = vmatmul.mubr.bf16.gmra.mrb[0].mxu0 %v2747
  %v4657 = vpop.f32.mrb[0].mxu0
  %v4658 = vadd.f32 0.0, %v4657
  %v4659 = vpop.f32.mrb[0].mxu0
  %v4660 = vpop.f32.mrb[0].mxu0
  %v4661 = vadd.f32 0.0, %v4660
  %v4662 = vpop.f32.mrb[0].mxu0
  %4663 = vmatprep.mubr.bf16.mxu0 %v2805
  %4664 = vmatmul.mubr.bf16.gmra.mrb[0].mxu0 %v2750
  %v4665 = vpop.f32.mrb[0].mxu0
  %v4666 = vadd.f32 0.0, %v4665
  %v4667 = vpop.f32.mrb[0].mxu0
  %v4668 = vpop.f32.mrb[0].mxu0
  %v4669 = vadd.f32 0.0, %v4668
  %v4670 = vpop.f32.mrb[0].mxu0
  %4671 = vmatprep.mubr.bf16.mxu0 %v2809
  %4672 = vmatmul.mubr.bf16.gmra.mrb[0].mxu0 %v2753
  %v4673 = vpop.f32.mrb[0].mxu0
  %v4674 = vadd.f32 0.0, %v4673
  %v4675 = vpop.f32.mrb[0].mxu0
  %v4676 = vpop.f32.mrb[0].mxu0
  %v4677 = vadd.f32 0.0, %v4676
  %v4678 = vpop.f32.mrb[0].mxu0
  %4679 = vmatprep.mubr.bf16.mxu0 %v2813
  %4680 = vmatmul.mubr.bf16.gmra.mrb[0].mxu0 %v2756
  %v4681 = vpop.f32.mrb[0].mxu0
  %v4682 = vadd.f32 0.0, %v4681
  %v4683 = vpop.f32.mrb[0].mxu0
  %v4684 = vpop.f32.mrb[0].mxu0
  %v4685 = vadd.f32 0.0, %v4684
  %v4686 = vpop.f32.mrb[0].mxu0
  %4687 = vmatprep.mubr.bf16.mxu0 %v2817
  %4688 = vmatmul.mubr.bf16.gmra.mrb[0].mxu0 %v2759
  %v4689 = vpop.f32.mrb[0].mxu0
  %v4690 = vadd.f32 0.0, %v4689
  %v4691 = vpop.f32.mrb[0].mxu0
  %v4692 = vpop.f32.mrb[0].mxu0
  %v4693 = vadd.f32 0.0, %v4692
  %v4694 = vpop.f32.mrb[0].mxu0
  %4695 = vmatprep.mubr.bf16.mxu0 %v2821
  %4696 = vmatmul.mubr.bf16.gmra.mrb[0].mxu0 %v2762
  %v4697 = vpop.f32.mrb[0].mxu0
  %v4698 = vadd.f32 0.0, %v4697
  %v4699 = vpop.f32.mrb[0].mxu0
  %v4700 = vpop.f32.mrb[0].mxu0
  %v4701 = vadd.f32 0.0, %v4700
  %v4702 = vpop.f32.mrb[0].mxu0
  %4703 = vmatprep.mubr.bf16.mxu0 %v2825
  %4704 = vmatmul.mubr.bf16.gmra.mrb[0].mxu0 %v2765
  %v4705 = vpop.f32.mrb[0].mxu0
  %v4706 = vadd.f32 0.0, %v4705
  %v4707 = vpop.f32.mrb[0].mxu0
  %v4708 = vpop.f32.mrb[0].mxu0
  %v4709 = vadd.f32 0.0, %v4708
  %v4710 = vpop.f32.mrb[0].mxu0
  %4711 = vmatprep.mubr.bf16.mxu0 %v2829
  %4712 = vmatmul.mubr.bf16.gmra.mrb[0].mxu0 %v2768
  %v4713 = vpop.f32.mrb[0].mxu0
  %v4714 = vadd.f32 0.0, %v4713
  %v4715 = vpop.f32.mrb[0].mxu0
  %v4716 = vpop.f32.mrb[0].mxu0
  %v4717 = vadd.f32 0.0, %v4716
  %v4718 = vpop.f32.mrb[0].mxu0
  %4719 = vmatprep.mubr.bf16.mxu0 %v2833
  %4720 = vmatmul.mubr.bf16.gmra.mrb[0].mxu0 %v2771
  %v4721 = vpop.f32.mrb[0].mxu0
  %v4722 = vadd.f32 0.0, %v4721
  %v4723 = vpop.f32.mrb[0].mxu0
  %v4724 = vpop.f32.mrb[0].mxu0
  %v4725 = vadd.f32 0.0, %v4724
  %v4726 = vpop.f32.mrb[0].mxu0
  %4727 = vmatprep.mubr.bf16.mxu0 %v2837
  %4728 = vmatmul.mubr.bf16.gmra.mrb[0].mxu0 %v2774
  %v4729 = vpop.f32.mrb[0].mxu0
  %v4730 = vadd.f32 0.0, %v4729
  %v4731 = vpop.f32.mrb[0].mxu0
  %v4732 = vpop.f32.mrb[0].mxu0
  %v4733 = vadd.f32 0.0, %v4732
  %v4734 = vpop.f32.mrb[0].mxu0
  %4735 = vmatprep.mubr.bf16.mxu0 %v2841
  %4736 = vmatmul.mubr.bf16.gmra.mrb[0].mxu0 %v2777
  %v4737 = vpop.f32.mrb[0].mxu0
  %v4738 = vadd.f32 0.0, %v4737
  %v4739 = vpop.f32.mrb[0].mxu0
  %v4740 = vpop.f32.mrb[0].mxu0
  %v4741 = vadd.f32 0.0, %v4740
  %v4742 = vpop.f32.mrb[0].mxu0
  %4743 = vmatprep.mubr.bf16.mxu0 %v2845
  %4744 = vmatmul.mubr.bf16.gmra.mrb[0].mxu0 %v2780
  %v4745 = vpop.f32.mrb[0].mxu0
  %v4746 = vadd.f32 0.0, %v4745
  %v4747 = vpop.f32.mrb[0].mxu0
  %v4748 = vpop.f32.mrb[0].mxu0
  %v4749 = vadd.f32 0.0, %v4748
  %v4750 = vpop.f32.mrb[0].mxu0
  %4751 = vmatprep.mubr.bf16.mxu0 %v2849
  %4752 = vmatmul.mubr.bf16.gmra.mrb[0].mxu0 %v2783
  %v4753 = vpop.f32.mrb[0].mxu0
  %v4754 = vadd.f32 0.0, %v4753
  %v4755 = vpop.f32.mrb[0].mxu0
  %v4756 = vpop.f32.mrb[0].mxu0
  %v4757 = vadd.f32 0.0, %v4756
  %v4758 = vpop.f32.mrb[0].mxu0
  %4759 = vmatprep.mubr.bf16.mxu0 %v2853
  %4760 = vmatmul.mubr.bf16.gmra.mrb[0].mxu0 %v2786
  %v4761 = vpop.f32.mrb[0].mxu0
  %v4762 = vadd.f32 0.0, %v4761
  %v4763 = vpop.f32.mrb[0].mxu0
  %v4764 = vpop.f32.mrb[0].mxu0
  %v4765 = vadd.f32 0.0, %v4764
  %v4766 = vpop.f32.mrb[0].mxu0
  %4767 = vmatprep.mubr.bf16.mxu0 %v2857
  %4768 = vmatmul.mubr.bf16.gmra.mrb[0].mxu0 %v2789
  %v4769 = vpop.f32.mrb[0].mxu0
  %v4770 = vadd.f32 0.0, %v4769
  %v4771 = vpop.f32.mrb[0].mxu0
  %v4772 = vpop.f32.mrb[0].mxu0
  %v4773 = vadd.f32 0.0, %v4772
  %v4774 = vpop.f32.mrb[0].mxu0
  %4775 = vmatprep.mubr.bf16.mxu0 %v2793
  %4776 = vmatmul.mubr.bf16.gmra.mrb[0].mxu0 %v2741
  %v4777 = vpop.f32.mrb[0].mxu0
  %v4778 = vadd.f32 0.0, %v4777
  %v4779 = vpop.f32.mrb[0].mxu0
  %v4780 = vpop.f32.mrb[0].mxu0
  %v4781 = vadd.f32 0.0, %v4780
  %v4782 = vpop.f32.mrb[0].mxu0
  %4783 = vdwg.mxu0
  %4784 = vmatprep.subr.bf16.mxu0 0
  %4785 = vmatpush1.bf16.msra.mxu0 %v4599
  %4786 = vmatprep.subr.bf16.mxu0 0
  %4787 = vmatpush1.bf16.msra.mxu0 %v4600
  %4788 = vmatprep.subr.bf16.mxu0 0
  %4789 = vmatpush1.bf16.msra.mxu0 %v4601
  %4790 = vmatprep.subr.bf16.mxu0 0
  %4791 = vmatpush1.bf16.msra.mxu0 %v4602
  %4792 = vmatprep.subr.bf16.mxu0 0
  %4793 = vmatpush1.bf16.msra.mxu0 0
  %4794 = vmatprep.subr.bf16.mxu0 0
  %4795 = vmatpush1.bf16.msra.mxu0 0
  %4796 = vmatprep.subr.bf16.mxu0 0
  %4797 = vmatpush1.bf16.msra.mxu0 0
  %4798 = vmatprep.subr.bf16.mxu0 0
  %4799 = vmatpush1.bf16.msra.mxu0 0
  %4800 = vmatprep.subr.bf16.mxu0 0
  %4801 = vmatpush1.bf16.msra.mxu0 0
  %4802 = vmatprep.subr.bf16.mxu0 0
  %4803 = vmatpush1.bf16.msra.mxu0 0
  %4804 = vmatprep.subr.bf16.mxu0 0
  %4805 = vmatpush1.bf16.msra.mxu0 0
  %4806 = vmatprep.subr.bf16.mxu0 0
  %4807 = vmatpush1.bf16.msra.mxu0 0
  %4808 = vmatprep.subr.bf16.mxu0 0
  %4809 = vmatpush1.bf16.msra.mxu0 0
  %4810 = vmatprep.subr.bf16.mxu0 0
  %4811 = vmatpush1.bf16.msra.mxu0 0
  %4812 = vmatprep.subr.bf16.mxu0 0
  %4813 = vmatpush1.bf16.msra.mxu0 0
  %4814 = vmatprep.subr.bf16.mxu0 0
  %4815 = vmatpush1.bf16.msra.mxu0 0
  %4816 = vmatprep.mubr.bf16.mxu0 0
  %4817 = vmatmul.mubr.bf16.gmra.mrb[0].mxu0 %v3034
  %v4818 = vpop.f32.mrb[0].mxu0
  %v4819 = vadd.f32 %v4658, %v4818
  %v4820 = vpop.f32.mrb[0].mxu0
  %v4821 = vpop.f32.mrb[0].mxu0
  %v4822 = vadd.f32 %v4661, %v4821
  %v4823 = vpop.f32.mrb[0].mxu0
  %4824 = vmatprep.mubr.bf16.mxu0 0
  %4825 = vmatmul.mubr.bf16.gmra.mrb[0].mxu0 %v3037
  %v4826 = vpop.f32.mrb[0].mxu0
  %v4827 = vadd.f32 %v4666, %v4826
  %v4828 = vpop.f32.mrb[0].mxu0
  %v4829 = vpop.f32.mrb[0].mxu0
  %v4830 = vadd.f32 %v4669, %v4829
  %v4831 = vpop.f32.mrb[0].mxu0
  %4832 = vmatprep.mubr.bf16.mxu0 0
  %4833 = vmatmul.mubr.bf16.gmra.mrb[0].mxu0 %v3040
  %v4834 = vpop.f32.mrb[0].mxu0
  %v4835 = vadd.f32 %v4674, %v4834
  %v4836 = vpop.f32.mrb[0].mxu0
  %v4837 = vpop.f32.mrb[0].mxu0
  %v4838 = vadd.f32 %v4677, %v4837
  %v4839 = vpop.f32.mrb[0].mxu0
  %4840 = vmatprep.mubr.bf16.mxu0 0
  %4841 = vmatmul.mubr.bf16.gmra.mrb[0].mxu0 %v3043
  %v4842 = vpop.f32.mrb[0].mxu0
  %v4843 = vadd.f32 %v4682, %v4842
  %v4844 = vpop.f32.mrb[0].mxu0
  %v4845 = vpop.f32.mrb[0].mxu0
  %v4846 = vadd.f32 %v4685, %v4845
  %v4847 = vpop.f32.mrb[0].mxu0
  %4848 = vmatprep.mubr.bf16.mxu0 0
  %4849 = vmatmul.mubr.bf16.gmra.mrb[0].mxu0 %v3046
  %v4850 = vpop.f32.mrb[0].mxu0
  %v4851 = vadd.f32 %v4690, %v4850
  %v4852 = vpop.f32.mrb[0].mxu0
  %v4853 = vpop.f32.mrb[0].mxu0
  %v4854 = vadd.f32 %v4693, %v4853
  %v4855 = vpop.f32.mrb[0].mxu0
  %4856 = vmatprep.mubr.bf16.mxu0 0
  %4857 = vmatmul.mubr.bf16.gmra.mrb[0].mxu0 %v3049
  %v4858 = vpop.f32.mrb[0].mxu0
  %v4859 = vadd.f32 %v4698, %v4858
  %v4860 = vpop.f32.mrb[0].mxu0
  %v4861 = vpop.f32.mrb[0].mxu0
  %v4862 = vadd.f32 %v4701, %v4861
  %v4863 = vpop.f32.mrb[0].mxu0
  %4864 = vmatprep.mubr.bf16.mxu0 0
  %4865 = vmatmul.mubr.bf16.gmra.mrb[0].mxu0 %v3052
  %v4866 = vpop.f32.mrb[0].mxu0
  %v4867 = vadd.f32 %v4706, %v4866
  %v4868 = vpop.f32.mrb[0].mxu0
  %v4869 = vpop.f32.mrb[0].mxu0
  %v4870 = vadd.f32 %v4709, %v4869
  %v4871 = vpop.f32.mrb[0].mxu0
  %4872 = vmatprep.mubr.bf16.mxu0 0
  %4873 = vmatmul.mubr.bf16.gmra.mrb[0].mxu0 %v3055
  %v4874 = vpop.f32.mrb[0].mxu0
  %v4875 = vadd.f32 %v4714, %v4874
  %v4876 = vpop.f32.mrb[0].mxu0
  %v4877 = vpop.f32.mrb[0].mxu0
  %v4878 = vadd.f32 %v4717, %v4877
  %v4879 = vpop.f32.mrb[0].mxu0
  %4880 = vmatprep.mubr.bf16.mxu0 0
  %4881 = vmatmul.mubr.bf16.gmra.mrb[0].mxu0 %v3058
  %v4882 = vpop.f32.mrb[0].mxu0
  %v4883 = vadd.f32 %v4722, %v4882
  %v4884 = vpop.f32.mrb[0].mxu0
  %v4885 = vpop.f32.mrb[0].mxu0
  %v4886 = vadd.f32 %v4725, %v4885
  %v4887 = vpop.f32.mrb[0].mxu0
  %4888 = vmatprep.mubr.bf16.mxu0 0
  %4889 = vmatmul.mubr.bf16.gmra.mrb[0].mxu0 %v3061
  %v4890 = vpop.f32.mrb[0].mxu0
  %v4891 = vadd.f32 %v4730, %v4890
  %v4892 = vpop.f32.mrb[0].mxu0
  %v4893 = vpop.f32.mrb[0].mxu0
  %v4894 = vadd.f32 %v4733, %v4893
  %v4895 = vpop.f32.mrb[0].mxu0
  %4896 = vmatprep.mubr.bf16.mxu0 0
  %4897 = vmatmul.mubr.bf16.gmra.mrb[0].mxu0 %v3064
  %v4898 = vpop.f32.mrb[0].mxu0
  %v4899 = vadd.f32 %v4738, %v4898
  %v4900 = vpop.f32.mrb[0].mxu0
  %v4901 = vpop.f32.mrb[0].mxu0
  %v4902 = vadd.f32 %v4741, %v4901
  %v4903 = vpop.f32.mrb[0].mxu0
  %4904 = vmatprep.mubr.bf16.mxu0 0
  %4905 = vmatmul.mubr.bf16.gmra.mrb[0].mxu0 %v3067
  %v4906 = vpop.f32.mrb[0].mxu0
  %v4907 = vadd.f32 %v4746, %v4906
  %v4908 = vpop.f32.mrb[0].mxu0
  %v4909 = vpop.f32.mrb[0].mxu0
  %v4910 = vadd.f32 %v4749, %v4909
  %v4911 = vpop.f32.mrb[0].mxu0
  %4912 = vmatprep.mubr.bf16.mxu0 0
  %4913 = vmatmul.mubr.bf16.gmra.mrb[0].mxu0 %v3070
  %v4914 = vpop.f32.mrb[0].mxu0
  %v4915 = vadd.f32 %v4754, %v4914
  %v4916 = vpop.f32.mrb[0].mxu0
  %v4917 = vpop.f32.mrb[0].mxu0
  %v4918 = vadd.f32 %v4757, %v4917
  %v4919 = vpop.f32.mrb[0].mxu0
  %4920 = vmatprep.mubr.bf16.mxu0 0
  %4921 = vmatmul.mubr.bf16.gmra.mrb[0].mxu0 %v3588
  %v4922 = vpop.f32.mrb[0].mxu0
  %v4923 = vadd.f32 %v4762, %v4922
  %v4924 = vpop.f32.mrb[0].mxu0
  %v4925 = vpop.f32.mrb[0].mxu0
  %v4926 = vadd.f32 %v4765, %v4925
  %v4927 = vpop.f32.mrb[0].mxu0
  %4928 = vmatprep.mubr.bf16.mxu0 0
  %4929 = vmatmul.mubr.bf16.gmra.mrb[0].mxu0 %v4106
  %v4930 = vpop.f32.mrb[0].mxu0
  %v4931 = vadd.f32 %v4770, %v4930
  %v4932 = vpop.f32.mrb[0].mxu0
  %v4933 = vpop.f32.mrb[0].mxu0
  %v4934 = vadd.f32 %v4773, %v4933
  %v4935 = vpop.f32.mrb[0].mxu0
  %4936 = vmatprep.mubr.bf16.mxu0 0
  %4937 = vmatmul.mubr.bf16.gmra.mrb[0].mxu0 %v3028
  %v4938 = vpop.f32.mrb[0].mxu0
  %v4939 = vadd.f32 %v4778, %v4938
  %v4940 = vpop.f32.mrb[0].mxu0
  %v4941 = vpop.f32.mrb[0].mxu0
  %v4942 = vadd.f32 %v4781, %v4941
  %v4943 = vpop.f32.mrb[0].mxu0
  %4944 = vdwg.mxu0
  %v4945 = vadd.f32 %v4430, %v4819
  %v4946 = vadd.f32 %v4431, %v4822
  %v4947 = vadd.f32 %v4432, %v4827
  %v4948 = vadd.f32 %v4433, %v4830
  %v4949 = vadd.f32 %v4434, %v4835
  %v4950 = vadd.f32 %v4435, %v4838
  %v4951 = vadd.f32 %v4436, %v4843
  %v4952 = vadd.f32 %v4437, %v4846
  %v4953 = vadd.f32 %v4438, %v4851
  %v4954 = vadd.f32 %v4439, %v4854
  %v4955 = vadd.f32 %v4440, %v4859
  %v4956 = vadd.f32 %v4441, %v4862
  %v4957 = vadd.f32 %v4442, %v4867
  %v4958 = vadd.f32 %v4443, %v4870
  %v4959 = vadd.f32 %v4444, %v4875
  %v4960 = vadd.f32 %v4445, %v4878
  %v4961 = vadd.f32 %v4446, %v4883
  %v4962 = vadd.f32 %v4447, %v4886
  %v4963 = vadd.f32 %v4448, %v4891
  %v4964 = vadd.f32 %v4449, %v4894
  %v4965 = vadd.f32 %v4450, %v4899
  %v4966 = vadd.f32 %v4451, %v4902
  %v4967 = vadd.f32 %v4452, %v4907
  %v4968 = vadd.f32 %v4453, %v4910
  %v4969 = vadd.f32 %v4454, %v4915
  %v4970 = vadd.f32 %v4455, %v4918
  %v4971 = vadd.f32 %v4456, %v4923
  %v4972 = vadd.f32 %v4457, %v4926
  %v4973 = vadd.f32 %v4458, %v4931
  %v4974 = vadd.f32 %v4459, %v4934
  %v4975 = vadd.f32 %v4460, %v4939
  %v4976 = vadd.f32 %v4461, %v4942
  %s4977 = scalar_lea.vmem %s2, 640
  %v4978 = vld [vmem:[%s4977] sm:$0xf]
  %v4979 = vld [vmem:[%s4977 + $0x4] sm:$0xf]
  %v4980 = vld [vmem:[%s4977 + $0x8] sm:$0xf]
  %v4981 = vld [vmem:[%s4977 + $0xc] sm:$0xf]
  %v4982 = vld [vmem:[%s4977 + $0x10] sm:$0xf]
  %v4983 = vld [vmem:[%s4977 + $0x14] sm:$0xf]
  %v4984 = vld [vmem:[%s4977 + $0x18] sm:$0xf]
  %v4985 = vld [vmem:[%s4977 + $0x1c] sm:$0xf]
  %v4986 = vld [vmem:[%s4977 + $0x20] sm:$0xf]
  %v4987 = vld [vmem:[%s4977 + $0x24] sm:$0xf]
  %v4988 = vld [vmem:[%s4977 + $0x28] sm:$0xf]
  %v4989 = vld [vmem:[%s4977 + $0x2c] sm:$0xf]
  %v4990 = vld [vmem:[%s4977 + $0x30] sm:$0xf]
  %v4991 = vld [vmem:[%s4977 + $0x34] sm:$0xf]
  %v4992 = vld [vmem:[%s4977 + $0x38] sm:$0xf]
  %v4993 = vld [vmem:[%s4977 + $0x3c] sm:$0xf]
  %v4994 = vld [vmem:[%s4977 + $0x40] sm:$0xf]
  %v4995 = vld [vmem:[%s4977 + $0x44] sm:$0xf]
  %v4996 = vld [vmem:[%s4977 + $0x48] sm:$0xf]
  %v4997 = vld [vmem:[%s4977 + $0x4c] sm:$0xf]
  %v4998 = vld [vmem:[%s4977 + $0x50] sm:$0xf]
  %v4999 = vld [vmem:[%s4977 + $0x54] sm:$0xf]
  %v5000 = vld [vmem:[%s4977 + $0x58] sm:$0xf]
  %v5001 = vld [vmem:[%s4977 + $0x5c] sm:$0xf]
  %v5002 = vld [vmem:[%s4977 + $0x60] sm:$0xf]
  %v5003 = vld [vmem:[%s4977 + $0x64] sm:$0xf]
  %v5004 = vld [vmem:[%s4977 + $0x68] sm:$0xf]
  %v5005 = vld [vmem:[%s4977 + $0x6c] sm:$0xf]
  %v5006 = vld [vmem:[%s4977 + $0x70] sm:$0xf]
  %v5007 = vld [vmem:[%s4977 + $0x74] sm:$0xf]
  %v5008 = vld [vmem:[%s4977 + $0x78] sm:$0xf]
  %v5009 = vld [vmem:[%s4977 + $0x7c] sm:$0xf]
  %v5010 = vld [vmem:[%s4977 + $0x80] sm:$0xf]
  %v5011 = vld [vmem:[%s4977 + $0x84] sm:$0xf]
  %v5012 = vld [vmem:[%s4977 + $0x88] sm:$0xf]
  %v5013 = vld [vmem:[%s4977 + $0x8c] sm:$0xf]
  %v5014 = vld [vmem:[%s4977 + $0x90] sm:$0xf]
  %v5015 = vld [vmem:[%s4977 + $0x94] sm:$0xf]
  %v5016 = vld [vmem:[%s4977 + $0x98] sm:$0xf]
  %v5017 = vld [vmem:[%s4977 + $0x9c] sm:$0xf]
  %v5058 = vunpack.c.l.b16 %v4978
  %v5059 = vunpack.c.l.b16 %v4979
  %v5060 = vunpack.c.l.b16 %v4980
  %v5061 = vunpack.c.l.b16 %v4981
  %v5062 = vunpack.c.l.b16 %v4982
  %v5063 = vunpack.c.l.b16 %v4983
  %v5064 = vunpack.c.l.b16 %v4984
  %v5065 = vunpack.c.l.b16 %v4985
  %v5066 = vunpack.c.l.b16 %v4986
  %v5067 = vunpack.c.l.b16 %v4987
  %v5068 = vunpack.c.l.b16 %v4988
  %v5069 = vunpack.c.l.b16 %v4989
  %v5070 = vunpack.c.l.b16 %v4990
  %v5071 = vunpack.c.l.b16 %v4991
  %v5072 = vunpack.c.l.b16 %v4992
  %v5073 = vunpack.c.l.b16 %v4993
  %v5074 = vunpack.c.l.b16 %v4994
  %v5075 = vunpack.c.l.b16 %v4995
  %v5076 = vunpack.c.l.b16 %v4996
  %v5077 = vunpack.c.l.b16 %v4997
  %v5078 = vunpack.c.l.b16 %v4998
  %v5079 = vunpack.c.l.b16 %v4999
  %v5080 = vunpack.c.l.b16 %v5000
  %v5081 = vunpack.c.l.b16 %v5001
  %v5082 = vunpack.c.l.b16 %v5002
  %v5083 = vunpack.c.l.b16 %v5003
  %v5084 = vunpack.c.l.b16 %v5004
  %v5085 = vunpack.c.l.b16 %v5005
  %v5086 = vunpack.c.l.b16 %v5006
  %v5087 = vunpack.c.l.b16 %v5007
  %v5088 = vunpack.c.l.b16 %v5008
  %v5089 = vunpack.c.l.b16 %v5009
  %v5090 = vunpack.c.l.b16 %v5010
  %v5091 = vunpack.c.l.b16 %v5011
  %v5092 = vunpack.c.l.b16 %v5012
  %v5093 = vunpack.c.l.b16 %v5013
  %v5094 = vunpack.c.l.b16 %v5014
  %v5095 = vunpack.c.l.b16 %v5015
  %v5096 = vunpack.c.l.b16 %v5016
  %v5097 = vunpack.c.l.b16 %v5017
  %v5098 = vpack.c.b16 %v5059, %v5058
  %v5099 = vpack.c.b16 %v5061, %v5060
  %v5100 = vpack.c.b16 %v5063, %v5062
  %v5101 = vpack.c.b16 %v5065, %v5064
  %v5102 = vpack.c.b16 %v5067, %v5066
  %v5103 = vpack.c.b16 %v5069, %v5068
  %v5104 = vpack.c.b16 %v5071, %v5070
  %v5105 = vpack.c.b16 %v5073, %v5072
  %v5106 = vpack.c.b16 %v5075, %v5074
  %v5107 = vpack.c.b16 %v5077, %v5076
  %v5108 = vpack.c.b16 %v5079, %v5078
  %v5109 = vpack.c.b16 %v5081, %v5080
  %v5110 = vpack.c.b16 %v5083, %v5082
  %v5111 = vpack.c.b16 %v5085, %v5084
  %v5112 = vpack.c.b16 %v5087, %v5086
  %v5113 = vpack.c.b16 %v5089, %v5088
  %v5114 = vpack.c.b16 %v5091, %v5090
  %v5115 = vpack.c.b16 %v5093, %v5092
  %v5116 = vpack.c.b16 %v5095, %v5094
  %v5117 = vpack.c.b16 %v5097, %v5096
  %5138 = vmatprep.subr.bf16.mxu0 0
  %5139 = vmatpush1.bf16.msra.mxu0 %v5098
  %5140 = vmatprep.subr.bf16.mxu0 0
  %5141 = vmatpush1.bf16.msra.mxu0 %v5099
  %5142 = vmatprep.subr.bf16.mxu0 0
  %5143 = vmatpush1.bf16.msra.mxu0 %v5100
  %5144 = vmatprep.subr.bf16.mxu0 0
  %5145 = vmatpush1.bf16.msra.mxu0 %v5101
  %5146 = vmatprep.subr.bf16.mxu0 0
  %5147 = vmatpush1.bf16.msra.mxu0 %v5102
  %5148 = vmatprep.subr.bf16.mxu0 0
  %5149 = vmatpush1.bf16.msra.mxu0 %v5103
  %5150 = vmatprep.subr.bf16.mxu0 0
  %5151 = vmatpush1.bf16.msra.mxu0 %v5104
  %5152 = vmatprep.subr.bf16.mxu0 0
  %5153 = vmatpush1.bf16.msra.mxu0 %v5105
  %5154 = vmatprep.subr.bf16.mxu0 0
  %5155 = vmatpush1.bf16.msra.mxu0 %v5106
  %5156 = vmatprep.subr.bf16.mxu0 0
  %5157 = vmatpush1.bf16.msra.mxu0 %v5107
  %5158 = vmatprep.subr.bf16.mxu0 0
  %5159 = vmatpush1.bf16.msra.mxu0 %v5108
  %5160 = vmatprep.subr.bf16.mxu0 0
  %5161 = vmatpush1.bf16.msra.mxu0 %v5109
  %5162 = vmatprep.subr.bf16.mxu0 0
  %5163 = vmatpush1.bf16.msra.mxu0 %v5110
  %5164 = vmatprep.subr.bf16.mxu0 0
  %5165 = vmatpush1.bf16.msra.mxu0 %v5111
  %5166 = vmatprep.subr.bf16.mxu0 0
  %5167 = vmatpush1.bf16.msra.mxu0 %v5112
  %5168 = vmatprep.subr.bf16.mxu0 0
  %5169 = vmatpush1.bf16.msra.mxu0 %v5113
  %5170 = vmatprep.mubr.bf16.mxu0 %v2805
  %5171 = vmatmul.mubr.bf16.gmra.mrb[0].mxu0 %v2750
  %v5172 = vpop.f32.mrb[0].mxu0
  %v5173 = vadd.f32 0.0, %v5172
  %v5174 = vpop.f32.mrb[0].mxu0
  %v5175 = vpop.f32.mrb[0].mxu0
  %v5176 = vadd.f32 0.0, %v5175
  %v5177 = vpop.f32.mrb[0].mxu0
  %5178 = vmatprep.mubr.bf16.mxu0 %v2809
  %5179 = vmatmul.mubr.bf16.gmra.mrb[0].mxu0 %v2753
  %v5180 = vpop.f32.mrb[0].mxu0
  %v5181 = vadd.f32 0.0, %v5180
  %v5182 = vpop.f32.mrb[0].mxu0
  %v5183 = vpop.f32.mrb[0].mxu0
  %v5184 = vadd.f32 0.0, %v5183
  %v5185 = vpop.f32.mrb[0].mxu0
  %5186 = vmatprep.mubr.bf16.mxu0 %v2813
  %5187 = vmatmul.mubr.bf16.gmra.mrb[0].mxu0 %v2756
  %v5188 = vpop.f32.mrb[0].mxu0
  %v5189 = vadd.f32 0.0, %v5188
  %v5190 = vpop.f32.mrb[0].mxu0
  %v5191 = vpop.f32.mrb[0].mxu0
  %v5192 = vadd.f32 0.0, %v5191
  %v5193 = vpop.f32.mrb[0].mxu0
  %5194 = vmatprep.mubr.bf16.mxu0 %v2817
  %5195 = vmatmul.mubr.bf16.gmra.mrb[0].mxu0 %v2759
  %v5196 = vpop.f32.mrb[0].mxu0
  %v5197 = vadd.f32 0.0, %v5196
  %v5198 = vpop.f32.mrb[0].mxu0
  %v5199 = vpop.f32.mrb[0].mxu0
  %v5200 = vadd.f32 0.0, %v5199
  %v5201 = vpop.f32.mrb[0].mxu0
  %5202 = vmatprep.mubr.bf16.mxu0 %v2821
  %5203 = vmatmul.mubr.bf16.gmra.mrb[0].mxu0 %v2762
  %v5204 = vpop.f32.mrb[0].mxu0
  %v5205 = vadd.f32 0.0, %v5204
  %v5206 = vpop.f32.mrb[0].mxu0
  %v5207 = vpop.f32.mrb[0].mxu0
  %v5208 = vadd.f32 0.0, %v5207
  %v5209 = vpop.f32.mrb[0].mxu0
  %5210 = vmatprep.mubr.bf16.mxu0 %v2825
  %5211 = vmatmul.mubr.bf16.gmra.mrb[0].mxu0 %v2765
  %v5212 = vpop.f32.mrb[0].mxu0
  %v5213 = vadd.f32 0.0, %v5212
  %v5214 = vpop.f32.mrb[0].mxu0
  %v5215 = vpop.f32.mrb[0].mxu0
  %v5216 = vadd.f32 0.0, %v5215
  %v5217 = vpop.f32.mrb[0].mxu0
  %5218 = vmatprep.mubr.bf16.mxu0 %v2829
  %5219 = vmatmul.mubr.bf16.gmra.mrb[0].mxu0 %v2768
  %v5220 = vpop.f32.mrb[0].mxu0
  %v5221 = vadd.f32 0.0, %v5220
  %v5222 = vpop.f32.mrb[0].mxu0
  %v5223 = vpop.f32.mrb[0].mxu0
  %v5224 = vadd.f32 0.0, %v5223
  %v5225 = vpop.f32.mrb[0].mxu0
  %5226 = vmatprep.mubr.bf16.mxu0 %v2833
  %5227 = vmatmul.mubr.bf16.gmra.mrb[0].mxu0 %v2771
  %v5228 = vpop.f32.mrb[0].mxu0
  %v5229 = vadd.f32 0.0, %v5228
  %v5230 = vpop.f32.mrb[0].mxu0
  %v5231 = vpop.f32.mrb[0].mxu0
  %v5232 = vadd.f32 0.0, %v5231
  %v5233 = vpop.f32.mrb[0].mxu0
  %5234 = vmatprep.mubr.bf16.mxu0 %v2837
  %5235 = vmatmul.mubr.bf16.gmra.mrb[0].mxu0 %v2774
  %v5236 = vpop.f32.mrb[0].mxu0
  %v5237 = vadd.f32 0.0, %v5236
  %v5238 = vpop.f32.mrb[0].mxu0
  %v5239 = vpop.f32.mrb[0].mxu0
  %v5240 = vadd.f32 0.0, %v5239
  %v5241 = vpop.f32.mrb[0].mxu0
  %5242 = vmatprep.mubr.bf16.mxu0 %v2841
  %5243 = vmatmul.mubr.bf16.gmra.mrb[0].mxu0 %v2777
  %v5244 = vpop.f32.mrb[0].mxu0
  %v5245 = vadd.f32 0.0, %v5244
  %v5246 = vpop.f32.mrb[0].mxu0
  %v5247 = vpop.f32.mrb[0].mxu0
  %v5248 = vadd.f32 0.0, %v5247
  %v5249 = vpop.f32.mrb[0].mxu0
  %5250 = vmatprep.mubr.bf16.mxu0 %v2845
  %5251 = vmatmul.mubr.bf16.gmra.mrb[0].mxu0 %v2780
  %v5252 = vpop.f32.mrb[0].mxu0
  %v5253 = vadd.f32 0.0, %v5252
  %v5254 = vpop.f32.mrb[0].mxu0
  %v5255 = vpop.f32.mrb[0].mxu0
  %v5256 = vadd.f32 0.0, %v5255
  %v5257 = vpop.f32.mrb[0].mxu0
  %5258 = vmatprep.mubr.bf16.mxu0 %v2849
  %5259 = vmatmul.mubr.bf16.gmra.mrb[0].mxu0 %v2783
  %v5260 = vpop.f32.mrb[0].mxu0
  %v5261 = vadd.f32 0.0, %v5260
  %v5262 = vpop.f32.mrb[0].mxu0
  %v5263 = vpop.f32.mrb[0].mxu0
  %v5264 = vadd.f32 0.0, %v5263
  %v5265 = vpop.f32.mrb[0].mxu0
  %5266 = vmatprep.mubr.bf16.mxu0 %v2853
  %5267 = vmatmul.mubr.bf16.gmra.mrb[0].mxu0 %v2786
  %v5268 = vpop.f32.mrb[0].mxu0
  %v5269 = vadd.f32 0.0, %v5268
  %v5270 = vpop.f32.mrb[0].mxu0
  %v5271 = vpop.f32.mrb[0].mxu0
  %v5272 = vadd.f32 0.0, %v5271
  %v5273 = vpop.f32.mrb[0].mxu0
  %5274 = vmatprep.mubr.bf16.mxu0 %v2857
  %5275 = vmatmul.mubr.bf16.gmra.mrb[0].mxu0 %v2789
  %v5276 = vpop.f32.mrb[0].mxu0
  %v5277 = vadd.f32 0.0, %v5276
  %v5278 = vpop.f32.mrb[0].mxu0
  %v5279 = vpop.f32.mrb[0].mxu0
  %v5280 = vadd.f32 0.0, %v5279
  %v5281 = vpop.f32.mrb[0].mxu0
  %5282 = vmatprep.mubr.bf16.mxu0 %v2793
  %5283 = vmatmul.mubr.bf16.gmra.mrb[0].mxu0 %v2741
  %v5284 = vpop.f32.mrb[0].mxu0
  %v5285 = vadd.f32 0.0, %v5284
  %v5286 = vpop.f32.mrb[0].mxu0
  %v5287 = vpop.f32.mrb[0].mxu0
  %v5288 = vadd.f32 0.0, %v5287
  %v5289 = vpop.f32.mrb[0].mxu0
  %5290 = vmatprep.mubr.bf16.mxu0 %v2793
  %5291 = vmatmul.mubr.bf16.gmra.mrb[0].mxu0 %v2741
  %v5292 = vpop.f32.mrb[0].mxu0
  %v5293 = vadd.f32 0.0, %v5292
  %v5294 = vpop.f32.mrb[0].mxu0
  %v5295 = vpop.f32.mrb[0].mxu0
  %v5296 = vadd.f32 0.0, %v5295
  %v5297 = vpop.f32.mrb[0].mxu0
  %5298 = vdwg.mxu0
  %5299 = vmatprep.subr.bf16.mxu0 0
  %5300 = vmatpush1.bf16.msra.mxu0 %v5114
  %5301 = vmatprep.subr.bf16.mxu0 0
  %5302 = vmatpush1.bf16.msra.mxu0 %v5115
  %5303 = vmatprep.subr.bf16.mxu0 0
  %5304 = vmatpush1.bf16.msra.mxu0 %v5116
  %5305 = vmatprep.subr.bf16.mxu0 0
  %5306 = vmatpush1.bf16.msra.mxu0 %v5117
  %5307 = vmatprep.subr.bf16.mxu0 0
  %5308 = vmatpush1.bf16.msra.mxu0 0
  %5309 = vmatprep.subr.bf16.mxu0 0
  %5310 = vmatpush1.bf16.msra.mxu0 0
  %5311 = vmatprep.subr.bf16.mxu0 0
  %5312 = vmatpush1.bf16.msra.mxu0 0
  %5313 = vmatprep.subr.bf16.mxu0 0
  %5314 = vmatpush1.bf16.msra.mxu0 0
  %5315 = vmatprep.subr.bf16.mxu0 0
  %5316 = vmatpush1.bf16.msra.mxu0 0
  %5317 = vmatprep.subr.bf16.mxu0 0
  %5318 = vmatpush1.bf16.msra.mxu0 0
  %5319 = vmatprep.subr.bf16.mxu0 0
  %5320 = vmatpush1.bf16.msra.mxu0 0
  %5321 = vmatprep.subr.bf16.mxu0 0
  %5322 = vmatpush1.bf16.msra.mxu0 0
  %5323 = vmatprep.subr.bf16.mxu0 0
  %5324 = vmatpush1.bf16.msra.mxu0 0
  %5325 = vmatprep.subr.bf16.mxu0 0
  %5326 = vmatpush1.bf16.msra.mxu0 0
  %5327 = vmatprep.subr.bf16.mxu0 0
  %5328 = vmatpush1.bf16.msra.mxu0 0
  %5329 = vmatprep.subr.bf16.mxu0 0
  %5330 = vmatpush1.bf16.msra.mxu0 0
  %5331 = vmatprep.mubr.bf16.mxu0 0
  %5332 = vmatmul.mubr.bf16.gmra.mrb[0].mxu0 %v3037
  %v5333 = vpop.f32.mrb[0].mxu0
  %v5334 = vadd.f32 %v5173, %v5333
  %v5335 = vpop.f32.mrb[0].mxu0
  %v5336 = vpop.f32.mrb[0].mxu0
  %v5337 = vadd.f32 %v5176, %v5336
  %v5338 = vpop.f32.mrb[0].mxu0
  %5339 = vmatprep.mubr.bf16.mxu0 0
  %5340 = vmatmul.mubr.bf16.gmra.mrb[0].mxu0 %v3040
  %v5341 = vpop.f32.mrb[0].mxu0
  %v5342 = vadd.f32 %v5181, %v5341
  %v5343 = vpop.f32.mrb[0].mxu0
  %v5344 = vpop.f32.mrb[0].mxu0
  %v5345 = vadd.f32 %v5184, %v5344
  %v5346 = vpop.f32.mrb[0].mxu0
  %5347 = vmatprep.mubr.bf16.mxu0 0
  %5348 = vmatmul.mubr.bf16.gmra.mrb[0].mxu0 %v3043
  %v5349 = vpop.f32.mrb[0].mxu0
  %v5350 = vadd.f32 %v5189, %v5349
  %v5351 = vpop.f32.mrb[0].mxu0
  %v5352 = vpop.f32.mrb[0].mxu0
  %v5353 = vadd.f32 %v5192, %v5352
  %v5354 = vpop.f32.mrb[0].mxu0
  %5355 = vmatprep.mubr.bf16.mxu0 0
  %5356 = vmatmul.mubr.bf16.gmra.mrb[0].mxu0 %v3046
  %v5357 = vpop.f32.mrb[0].mxu0
  %v5358 = vadd.f32 %v5197, %v5357
  %v5359 = vpop.f32.mrb[0].mxu0
  %v5360 = vpop.f32.mrb[0].mxu0
  %v5361 = vadd.f32 %v5200, %v5360
  %v5362 = vpop.f32.mrb[0].mxu0
  %5363 = vmatprep.mubr.bf16.mxu0 0
  %5364 = vmatmul.mubr.bf16.gmra.mrb[0].mxu0 %v3049
  %v5365 = vpop.f32.mrb[0].mxu0
  %v5366 = vadd.f32 %v5205, %v5365
  %v5367 = vpop.f32.mrb[0].mxu0
  %v5368 = vpop.f32.mrb[0].mxu0
  %v5369 = vadd.f32 %v5208, %v5368
  %v5370 = vpop.f32.mrb[0].mxu0
  %5371 = vmatprep.mubr.bf16.mxu0 0
  %5372 = vmatmul.mubr.bf16.gmra.mrb[0].mxu0 %v3052
  %v5373 = vpop.f32.mrb[0].mxu0
  %v5374 = vadd.f32 %v5213, %v5373
  %v5375 = vpop.f32.mrb[0].mxu0
  %v5376 = vpop.f32.mrb[0].mxu0
  %v5377 = vadd.f32 %v5216, %v5376
  %v5378 = vpop.f32.mrb[0].mxu0
  %5379 = vmatprep.mubr.bf16.mxu0 0
  %5380 = vmatmul.mubr.bf16.gmra.mrb[0].mxu0 %v3055
  %v5381 = vpop.f32.mrb[0].mxu0
  %v5382 = vadd.f32 %v5221, %v5381
  %v5383 = vpop.f32.mrb[0].mxu0
  %v5384 = vpop.f32.mrb[0].mxu0
  %v5385 = vadd.f32 %v5224, %v5384
  %v5386 = vpop.f32.mrb[0].mxu0
  %5387 = vmatprep.mubr.bf16.mxu0 0
  %5388 = vmatmul.mubr.bf16.gmra.mrb[0].mxu0 %v3058
  %v5389 = vpop.f32.mrb[0].mxu0
  %v5390 = vadd.f32 %v5229, %v5389
  %v5391 = vpop.f32.mrb[0].mxu0
  %v5392 = vpop.f32.mrb[0].mxu0
  %v5393 = vadd.f32 %v5232, %v5392
  %v5394 = vpop.f32.mrb[0].mxu0
  %5395 = vmatprep.mubr.bf16.mxu0 0
  %5396 = vmatmul.mubr.bf16.gmra.mrb[0].mxu0 %v3061
  %v5397 = vpop.f32.mrb[0].mxu0
  %v5398 = vadd.f32 %v5237, %v5397
  %v5399 = vpop.f32.mrb[0].mxu0
  %v5400 = vpop.f32.mrb[0].mxu0
  %v5401 = vadd.f32 %v5240, %v5400
  %v5402 = vpop.f32.mrb[0].mxu0
  %5403 = vmatprep.mubr.bf16.mxu0 0
  %5404 = vmatmul.mubr.bf16.gmra.mrb[0].mxu0 %v3064
  %v5405 = vpop.f32.mrb[0].mxu0
  %v5406 = vadd.f32 %v5245, %v5405
  %v5407 = vpop.f32.mrb[0].mxu0
  %v5408 = vpop.f32.mrb[0].mxu0
  %v5409 = vadd.f32 %v5248, %v5408
  %v5410 = vpop.f32.mrb[0].mxu0
  %5411 = vmatprep.mubr.bf16.mxu0 0
  %5412 = vmatmul.mubr.bf16.gmra.mrb[0].mxu0 %v3067
  %v5413 = vpop.f32.mrb[0].mxu0
  %v5414 = vadd.f32 %v5253, %v5413
  %v5415 = vpop.f32.mrb[0].mxu0
  %v5416 = vpop.f32.mrb[0].mxu0
  %v5417 = vadd.f32 %v5256, %v5416
  %v5418 = vpop.f32.mrb[0].mxu0
  %5419 = vmatprep.mubr.bf16.mxu0 0
  %5420 = vmatmul.mubr.bf16.gmra.mrb[0].mxu0 %v3070
  %v5421 = vpop.f32.mrb[0].mxu0
  %v5422 = vadd.f32 %v5261, %v5421
  %v5423 = vpop.f32.mrb[0].mxu0
  %v5424 = vpop.f32.mrb[0].mxu0
  %v5425 = vadd.f32 %v5264, %v5424
  %v5426 = vpop.f32.mrb[0].mxu0
  %5427 = vmatprep.mubr.bf16.mxu0 0
  %5428 = vmatmul.mubr.bf16.gmra.mrb[0].mxu0 %v3588
  %v5429 = vpop.f32.mrb[0].mxu0
  %v5430 = vadd.f32 %v5269, %v5429
  %v5431 = vpop.f32.mrb[0].mxu0
  %v5432 = vpop.f32.mrb[0].mxu0
  %v5433 = vadd.f32 %v5272, %v5432
  %v5434 = vpop.f32.mrb[0].mxu0
  %5435 = vmatprep.mubr.bf16.mxu0 0
  %5436 = vmatmul.mubr.bf16.gmra.mrb[0].mxu0 %v4106
  %v5437 = vpop.f32.mrb[0].mxu0
  %v5438 = vadd.f32 %v5277, %v5437
  %v5439 = vpop.f32.mrb[0].mxu0
  %v5440 = vpop.f32.mrb[0].mxu0
  %v5441 = vadd.f32 %v5280, %v5440
  %v5442 = vpop.f32.mrb[0].mxu0
  %5443 = vmatprep.mubr.bf16.mxu0 0
  %5444 = vmatmul.mubr.bf16.gmra.mrb[0].mxu0 %v3028
  %v5445 = vpop.f32.mrb[0].mxu0
  %v5446 = vadd.f32 %v5285, %v5445
  %v5447 = vpop.f32.mrb[0].mxu0
  %v5448 = vpop.f32.mrb[0].mxu0
  %v5449 = vadd.f32 %v5288, %v5448
  %v5450 = vpop.f32.mrb[0].mxu0
  %5451 = vmatprep.mubr.bf16.mxu0 0
  %5452 = vmatmul.mubr.bf16.gmra.mrb[0].mxu0 %v3028
  %v5453 = vpop.f32.mrb[0].mxu0
  %v5454 = vadd.f32 %v5293, %v5453
  %v5455 = vpop.f32.mrb[0].mxu0
  %v5456 = vpop.f32.mrb[0].mxu0
  %v5457 = vadd.f32 %v5296, %v5456
  %v5458 = vpop.f32.mrb[0].mxu0
  %5459 = vdwg.mxu0
  %v5460 = vadd.f32 %v4945, %v5334
  %v5461 = vadd.f32 %v4946, %v5337
  %v5462 = vadd.f32 %v4947, %v5342
  %v5463 = vadd.f32 %v4948, %v5345
  %v5464 = vadd.f32 %v4949, %v5350
  %v5465 = vadd.f32 %v4950, %v5353
  %v5466 = vadd.f32 %v4951, %v5358
  %v5467 = vadd.f32 %v4952, %v5361
  %v5468 = vadd.f32 %v4953, %v5366
  %v5469 = vadd.f32 %v4954, %v5369
  %v5470 = vadd.f32 %v4955, %v5374
  %v5471 = vadd.f32 %v4956, %v5377
  %v5472 = vadd.f32 %v4957, %v5382
  %v5473 = vadd.f32 %v4958, %v5385
  %v5474 = vadd.f32 %v4959, %v5390
  %v5475 = vadd.f32 %v4960, %v5393
  %v5476 = vadd.f32 %v4961, %v5398
  %v5477 = vadd.f32 %v4962, %v5401
  %v5478 = vadd.f32 %v4963, %v5406
  %v5479 = vadd.f32 %v4964, %v5409
  %v5480 = vadd.f32 %v4965, %v5414
  %v5481 = vadd.f32 %v4966, %v5417
  %v5482 = vadd.f32 %v4967, %v5422
  %v5483 = vadd.f32 %v4968, %v5425
  %v5484 = vadd.f32 %v4969, %v5430
  %v5485 = vadd.f32 %v4970, %v5433
  %v5486 = vadd.f32 %v4971, %v5438
  %v5487 = vadd.f32 %v4972, %v5441
  %v5488 = vadd.f32 %v4973, %v5446
  %v5489 = vadd.f32 %v4974, %v5449
  %v5490 = vadd.f32 %v4975, %v5454
  %v5491 = vadd.f32 %v4976, %v5457
  %v5492 = vmax.f32 %v5460, 0.0
  %v5493 = vmax.f32 %v5461, 0.0
  %v5494 = vmax.f32 %v5462, 0.0
  %v5495 = vmax.f32 %v5463, 0.0
  %v5496 = vmax.f32 %v5464, 0.0
  %v5497 = vmax.f32 %v5465, 0.0
  %v5498 = vmax.f32 %v5466, 0.0
  %v5499 = vmax.f32 %v5467, 0.0
  %v5500 = vmax.f32 %v5468, 0.0
  %v5501 = vmax.f32 %v5469, 0.0
  %v5502 = vmax.f32 %v5470, 0.0
  %v5503 = vmax.f32 %v5471, 0.0
  %v5504 = vmax.f32 %v5472, 0.0
  %v5505 = vmax.f32 %v5473, 0.0
  %v5506 = vmax.f32 %v5474, 0.0
  %v5507 = vmax.f32 %v5475, 0.0
  %v5508 = vmax.f32 %v5476, 0.0
  %v5509 = vmax.f32 %v5477, 0.0
  %v5510 = vmax.f32 %v5478, 0.0
  %v5511 = vmax.f32 %v5479, 0.0
  %v5512 = vmax.f32 %v5480, 0.0
  %v5513 = vmax.f32 %v5481, 0.0
  %v5514 = vmax.f32 %v5482, 0.0
  %v5515 = vmax.f32 %v5483, 0.0
  %v5516 = vmax.f32 %v5484, 0.0
  %v5517 = vmax.f32 %v5485, 0.0
  %v5518 = vmax.f32 %v5486, 0.0
  %v5519 = vmax.f32 %v5487, 0.0
  %v5520 = vmax.f32 %v5488, 0.0
  %v5521 = vmax.f32 %v5489, 0.0
  %v5522 = vmax.f32 %v5490, 0.0
  %v5523 = vmax.f32 %v5491, 0.0
  %v5524 = vpack.c.bf16 %v5493, %v5492
  %v5525 = vpack.c.bf16 %v5495, %v5494
  %v5526 = vpack.c.bf16 %v5497, %v5496
  %v5527 = vpack.c.bf16 %v5499, %v5498
  %v5528 = vpack.c.bf16 %v5501, %v5500
  %v5529 = vpack.c.bf16 %v5503, %v5502
  %v5530 = vpack.c.bf16 %v5505, %v5504
  %v5531 = vpack.c.bf16 %v5507, %v5506
  %v5532 = vpack.c.bf16 %v5509, %v5508
  %v5533 = vpack.c.bf16 %v5511, %v5510
  %v5534 = vpack.c.bf16 %v5513, %v5512
  %v5535 = vpack.c.bf16 %v5515, %v5514
  %v5536 = vpack.c.bf16 %v5517, %v5516
  %v5537 = vpack.c.bf16 %v5519, %v5518
  %v5538 = vpack.c.bf16 %v5521, %v5520
  %v5539 = vpack.c.bf16 %v5523, %v5522
  %v5540 = vld [vmem:[%s4] sm:$0xf]
  %v5541 = vld [vmem:[%s4 + $0x4] sm:$0xf]
  %v5542 = vld [vmem:[%s4 + $0x8] sm:$0xf]
  %v5543 = vld [vmem:[%s4 + $0xc] sm:$0xf]
  %v5544 = vld [vmem:[%s4 + $0x10] sm:$0xf]
  %v5545 = vld [vmem:[%s4 + $0x14] sm:$0xf]
  %v5546 = vld [vmem:[%s4 + $0x18] sm:$0xf]
  %v5547 = vld [vmem:[%s4 + $0x1c] sm:$0xf]
  %v5556 = vunpack.c.l.b16 %v5540
  %v5557 = vunpack.c.l.b16 %v5541
  %v5558 = vunpack.c.l.b16 %v5542
  %v5559 = vunpack.c.l.b16 %v5543
  %v5560 = vunpack.c.l.b16 %v5544
  %v5561 = vunpack.c.l.b16 %v5545
  %v5562 = vunpack.c.l.b16 %v5546
  %v5563 = vunpack.c.l.b16 %v5547
  %v5564 = vpack.c.b16 %v5557, %v5556
  %v5565 = vpack.c.b16 %v5559, %v5558
  %v5566 = vpack.c.b16 %v5561, %v5560
  %v5567 = vpack.c.b16 %v5563, %v5562
  %v5573 = vsel %vm2739, %v5524, 0
  %v5576 = vsel %vm2739, %v5525, 0
  %v5579 = vsel %vm2739, %v5526, 0
  %v5582 = vsel %vm2739, %v5527, 0
  %v5585 = vsel %vm2739, %v5528, 0
  %v5588 = vsel %vm2739, %v5529, 0
  %v5591 = vsel %vm2739, %v5530, 0
  %v5594 = vsel %vm2739, %v5531, 0
  %v5597 = vsel %vm2739, %v5532, 0
  %v5600 = vsel %vm2739, %v5533, 0
  %v5603 = vsel %vm2739, %v5534, 0
  %v5606 = vsel %vm2739, %v5535, 0
  %v5609 = vsel %vm2739, %v5536, 0
  %v5612 = vsel %vm2739, %v5537, 0
  %v5615 = vsel %vm2739, %v5538, 0
  %v5618 = vsel %vm2739, %v5539, 0
  %5620 = vmatprep.subr.bf16.mxu0 0
  %5621 = vmatpush1.bf16.msra.mxu0 %v5564
  %5622 = vmatprep.subr.bf16.mxu0 0
  %5623 = vmatpush1.bf16.msra.mxu0 %v5565
  %5624 = vmatprep.subr.bf16.mxu0 0
  %5625 = vmatpush1.bf16.msra.mxu0 %v5566
  %5626 = vmatprep.subr.bf16.mxu0 0
  %5627 = vmatpush1.bf16.msra.mxu0 %v5567
  %5628 = vmatprep.subr.bf16.mxu0 0
  %5629 = vmatpush1.bf16.msra.mxu0 0
  %5630 = vmatprep.subr.bf16.mxu0 0
  %5631 = vmatpush1.bf16.msra.mxu0 0
  %5632 = vmatprep.subr.bf16.mxu0 0
  %5633 = vmatpush1.bf16.msra.mxu0 0
  %5634 = vmatprep.subr.bf16.mxu0 0
  %5635 = vmatpush1.bf16.msra.mxu0 0
  %5636 = vmatprep.subr.bf16.mxu0 0
  %5637 = vmatpush1.bf16.msra.mxu0 0
  %5638 = vmatprep.subr.bf16.mxu0 0
  %5639 = vmatpush1.bf16.msra.mxu0 0
  %5640 = vmatprep.subr.bf16.mxu0 0
  %5641 = vmatpush1.bf16.msra.mxu0 0
  %5642 = vmatprep.subr.bf16.mxu0 0
  %5643 = vmatpush1.bf16.msra.mxu0 0
  %5644 = vmatprep.subr.bf16.mxu0 0
  %5645 = vmatpush1.bf16.msra.mxu0 0
  %5646 = vmatprep.subr.bf16.mxu0 0
  %5647 = vmatpush1.bf16.msra.mxu0 0
  %5648 = vmatprep.subr.bf16.mxu0 0
  %5649 = vmatpush1.bf16.msra.mxu0 0
  %5650 = vmatprep.subr.bf16.mxu0 0
  %5651 = vmatpush1.bf16.msra.mxu0 0
  %5652 = vmatprep.mubr.bf16.mxu0 0
  %5653 = vmatmul.mubr.bf16.gmra.mrb[0].mxu0 %v5573
  %v5654 = vpop.f32.mrb[0].mxu0
  %v5655 = vadd.f32 0.0, %v5654
  %v5656 = vpop.f32.mrb[0].mxu0
  %v5657 = vpop.f32.mrb[0].mxu0
  %v5658 = vadd.f32 0.0, %v5657
  %v5659 = vpop.f32.mrb[0].mxu0
  %5660 = vmatprep.mubr.bf16.mxu0 0
  %5661 = vmatmul.mubr.bf16.gmra.mrb[0].mxu0 %v5576
  %v5662 = vpop.f32.mrb[0].mxu0
  %v5663 = vadd.f32 0.0, %v5662
  %v5664 = vpop.f32.mrb[0].mxu0
  %v5665 = vpop.f32.mrb[0].mxu0
  %v5666 = vadd.f32 0.0, %v5665
  %v5667 = vpop.f32.mrb[0].mxu0
  %5668 = vmatprep.mubr.bf16.mxu0 0
  %5669 = vmatmul.mubr.bf16.gmra.mrb[0].mxu0 %v5579
  %v5670 = vpop.f32.mrb[0].mxu0
  %v5671 = vadd.f32 0.0, %v5670
  %v5672 = vpop.f32.mrb[0].mxu0
  %v5673 = vpop.f32.mrb[0].mxu0
  %v5674 = vadd.f32 0.0, %v5673
  %v5675 = vpop.f32.mrb[0].mxu0
  %5676 = vmatprep.mubr.bf16.mxu0 0
  %5677 = vmatmul.mubr.bf16.gmra.mrb[0].mxu0 %v5582
  %v5678 = vpop.f32.mrb[0].mxu0
  %v5679 = vadd.f32 0.0, %v5678
  %v5680 = vpop.f32.mrb[0].mxu0
  %v5681 = vpop.f32.mrb[0].mxu0
  %v5682 = vadd.f32 0.0, %v5681
  %v5683 = vpop.f32.mrb[0].mxu0
  %5684 = vmatprep.mubr.bf16.mxu0 0
  %5685 = vmatmul.mubr.bf16.gmra.mrb[0].mxu0 %v5585
  %v5686 = vpop.f32.mrb[0].mxu0
  %v5687 = vadd.f32 0.0, %v5686
  %v5688 = vpop.f32.mrb[0].mxu0
  %v5689 = vpop.f32.mrb[0].mxu0
  %v5690 = vadd.f32 0.0, %v5689
  %v5691 = vpop.f32.mrb[0].mxu0
  %5692 = vmatprep.mubr.bf16.mxu0 0
  %5693 = vmatmul.mubr.bf16.gmra.mrb[0].mxu0 %v5588
  %v5694 = vpop.f32.mrb[0].mxu0
  %v5695 = vadd.f32 0.0, %v5694
  %v5696 = vpop.f32.mrb[0].mxu0
  %v5697 = vpop.f32.mrb[0].mxu0
  %v5698 = vadd.f32 0.0, %v5697
  %v5699 = vpop.f32.mrb[0].mxu0
  %5700 = vmatprep.mubr.bf16.mxu0 0
  %5701 = vmatmul.mubr.bf16.gmra.mrb[0].mxu0 %v5591
  %v5702 = vpop.f32.mrb[0].mxu0
  %v5703 = vadd.f32 0.0, %v5702
  %v5704 = vpop.f32.mrb[0].mxu0
  %v5705 = vpop.f32.mrb[0].mxu0
  %v5706 = vadd.f32 0.0, %v5705
  %v5707 = vpop.f32.mrb[0].mxu0
  %5708 = vmatprep.mubr.bf16.mxu0 0
  %5709 = vmatmul.mubr.bf16.gmra.mrb[0].mxu0 %v5594
  %v5710 = vpop.f32.mrb[0].mxu0
  %v5711 = vadd.f32 0.0, %v5710
  %v5712 = vpop.f32.mrb[0].mxu0
  %v5713 = vpop.f32.mrb[0].mxu0
  %v5714 = vadd.f32 0.0, %v5713
  %v5715 = vpop.f32.mrb[0].mxu0
  %5716 = vmatprep.mubr.bf16.mxu0 0
  %5717 = vmatmul.mubr.bf16.gmra.mrb[0].mxu0 %v5597
  %v5718 = vpop.f32.mrb[0].mxu0
  %v5719 = vadd.f32 0.0, %v5718
  %v5720 = vpop.f32.mrb[0].mxu0
  %v5721 = vpop.f32.mrb[0].mxu0
  %v5722 = vadd.f32 0.0, %v5721
  %v5723 = vpop.f32.mrb[0].mxu0
  %5724 = vmatprep.mubr.bf16.mxu0 0
  %5725 = vmatmul.mubr.bf16.gmra.mrb[0].mxu0 %v5600
  %v5726 = vpop.f32.mrb[0].mxu0
  %v5727 = vadd.f32 0.0, %v5726
  %v5728 = vpop.f32.mrb[0].mxu0
  %v5729 = vpop.f32.mrb[0].mxu0
  %v5730 = vadd.f32 0.0, %v5729
  %v5731 = vpop.f32.mrb[0].mxu0
  %5732 = vmatprep.mubr.bf16.mxu0 0
  %5733 = vmatmul.mubr.bf16.gmra.mrb[0].mxu0 %v5603
  %v5734 = vpop.f32.mrb[0].mxu0
  %v5735 = vadd.f32 0.0, %v5734
  %v5736 = vpop.f32.mrb[0].mxu0
  %v5737 = vpop.f32.mrb[0].mxu0
  %v5738 = vadd.f32 0.0, %v5737
  %v5739 = vpop.f32.mrb[0].mxu0
  %5740 = vmatprep.mubr.bf16.mxu0 0
  %5741 = vmatmul.mubr.bf16.gmra.mrb[0].mxu0 %v5606
  %v5742 = vpop.f32.mrb[0].mxu0
  %v5743 = vadd.f32 0.0, %v5742
  %v5744 = vpop.f32.mrb[0].mxu0
  %v5745 = vpop.f32.mrb[0].mxu0
  %v5746 = vadd.f32 0.0, %v5745
  %v5747 = vpop.f32.mrb[0].mxu0
  %5748 = vmatprep.mubr.bf16.mxu0 0
  %5749 = vmatmul.mubr.bf16.gmra.mrb[0].mxu0 %v5609
  %v5750 = vpop.f32.mrb[0].mxu0
  %v5751 = vadd.f32 0.0, %v5750
  %v5752 = vpop.f32.mrb[0].mxu0
  %v5753 = vpop.f32.mrb[0].mxu0
  %v5754 = vadd.f32 0.0, %v5753
  %v5755 = vpop.f32.mrb[0].mxu0
  %5756 = vmatprep.mubr.bf16.mxu0 0
  %5757 = vmatmul.mubr.bf16.gmra.mrb[0].mxu0 %v5612
  %v5758 = vpop.f32.mrb[0].mxu0
  %v5759 = vadd.f32 0.0, %v5758
  %v5760 = vpop.f32.mrb[0].mxu0
  %v5761 = vpop.f32.mrb[0].mxu0
  %v5762 = vadd.f32 0.0, %v5761
  %v5763 = vpop.f32.mrb[0].mxu0
  %5764 = vmatprep.mubr.bf16.mxu0 0
  %5765 = vmatmul.mubr.bf16.gmra.mrb[0].mxu0 %v5615
  %v5766 = vpop.f32.mrb[0].mxu0
  %v5767 = vadd.f32 0.0, %v5766
  %v5768 = vpop.f32.mrb[0].mxu0
  %v5769 = vpop.f32.mrb[0].mxu0
  %v5770 = vadd.f32 0.0, %v5769
  %v5771 = vpop.f32.mrb[0].mxu0
  %5772 = vmatprep.mubr.bf16.mxu0 0
  %5773 = vmatmul.mubr.bf16.gmra.mrb[0].mxu0 %v5618
  %v5774 = vpop.f32.mrb[0].mxu0
  %v5775 = vadd.f32 0.0, %v5774
  %v5776 = vpop.f32.mrb[0].mxu0
  %v5777 = vpop.f32.mrb[0].mxu0
  %v5778 = vadd.f32 0.0, %v5777
  %v5779 = vpop.f32.mrb[0].mxu0
  %5780 = vdwg.mxu0
  %v5813 = vrot.slane 0.0, 5
  %v5814 = vsel %vm1844, %v5813, %v5813
  %v5815 = vrot.slane %v5655, 5
  %v5816 = vrot.slane %v5658, 5
  %v5817 = vsel %vm1844, %v5815, %v5816
  %v5818 = vrot.slane %v5663, 5
  %v5819 = vrot.slane %v5666, 5
  %v5820 = vsel %vm1844, %v5818, %v5819
  %v5821 = vrot.slane %v5671, 5
  %v5822 = vrot.slane %v5674, 5
  %v5823 = vsel %vm1844, %v5821, %v5822
  %v5824 = vrot.slane %v5679, 5
  %v5825 = vrot.slane %v5682, 5
  %v5826 = vsel %vm1844, %v5824, %v5825
  %v5827 = vrot.slane %v5687, 5
  %v5828 = vrot.slane %v5690, 5
  %v5829 = vsel %vm1844, %v5827, %v5828
  %v5830 = vrot.slane %v5695, 5
  %v5831 = vrot.slane %v5698, 5
  %v5832 = vsel %vm1844, %v5830, %v5831
  %v5833 = vrot.slane %v5703, 5
  %v5834 = vrot.slane %v5706, 5
  %v5835 = vsel %vm1844, %v5833, %v5834
  %v5836 = vrot.slane %v5711, 5
  %v5837 = vrot.slane %v5714, 5
  %v5838 = vsel %vm1844, %v5836, %v5837
  %v5839 = vrot.slane %v5719, 5
  %v5840 = vrot.slane %v5722, 5
  %v5841 = vsel %vm1844, %v5839, %v5840
  %v5842 = vrot.slane %v5727, 5
  %v5843 = vrot.slane %v5730, 5
  %v5844 = vsel %vm1844, %v5842, %v5843
  %v5845 = vrot.slane %v5735, 5
  %v5846 = vrot.slane %v5738, 5
  %v5847 = vsel %vm1844, %v5845, %v5846
  %v5848 = vrot.slane %v5743, 5
  %v5849 = vrot.slane %v5746, 5
  %v5850 = vsel %vm1844, %v5848, %v5849
  %v5851 = vrot.slane %v5751, 5
  %v5852 = vrot.slane %v5754, 5
  %v5853 = vsel %vm1844, %v5851, %v5852
  %v5854 = vrot.slane %v5759, 5
  %v5855 = vrot.slane %v5762, 5
  %v5856 = vsel %vm1844, %v5854, %v5855
  %v5857 = vrot.slane %v5767, 5
  %v5858 = vrot.slane %v5770, 5
  %v5859 = vsel %vm1844, %v5857, %v5858
  %v5860 = vrot.slane %v5775, 5
  %v5861 = vrot.slane %v5778, 5
  %v5862 = vsel %vm1844, %v5860, %v5861
  %v5910 = vsel %vm1844, 0.0, %v5813
  %v5911 = vsel %vm1844, 0.0, %v5815
  %v5912 = vsel %vm1844, 0.0, %v5818
  %v5913 = vsel %vm1844, 0.0, %v5821
  %v5914 = vsel %vm1844, 0.0, %v5824
  %v5915 = vsel %vm1844, 0.0, %v5827
  %v5916 = vsel %vm1844, 0.0, %v5830
  %v5917 = vsel %vm1844, 0.0, %v5833
  %v5918 = vsel %vm1844, 0.0, %v5836
  %v5919 = vsel %vm1844, 0.0, %v5839
  %v5920 = vsel %vm1844, 0.0, %v5842
  %v5921 = vsel %vm1844, 0.0, %v5845
  %v5922 = vsel %vm1844, 0.0, %v5848
  %v5923 = vsel %vm1844, 0.0, %v5851
  %v5924 = vsel %vm1844, 0.0, %v5854
  %v5925 = vsel %vm1844, 0.0, %v5857
  %v5926 = vsel %vm1844, 0.0, %v5860
  %v5927 = vsel %vm1844, %v5813, 0.0
  %v5928 = vsel %vm1844, %v5816, 0.0
  %v5929 = vsel %vm1844, %v5819, 0.0
  %v5930 = vsel %vm1844, %v5822, 0.0
  %v5931 = vsel %vm1844, %v5825, 0.0
  %v5932 = vsel %vm1844, %v5828, 0.0
  %v5933 = vsel %vm1844, %v5831, 0.0
  %v5934 = vsel %vm1844, %v5834, 0.0
  %v5935 = vsel %vm1844, %v5837, 0.0
  %v5936 = vsel %vm1844, %v5840, 0.0
  %v5937 = vsel %vm1844, %v5843, 0.0
  %v5938 = vsel %vm1844, %v5846, 0.0
  %v5939 = vsel %vm1844, %v5849, 0.0
  %v5940 = vsel %vm1844, %v5852, 0.0
  %v5941 = vsel %vm1844, %v5855, 0.0
  %v5942 = vsel %vm1844, %v5858, 0.0
  %v5943 = vsel %vm1844, %v5861, 0.0
  %v5944 = vld [vmem:[%s5] sm:$0x1]
  %v5946 = vlaneseq
  %v5947 = vshrl.u32 %v5946, 7
  %v5948 = vsub.s32 0, %v5947
  %v5949 = vrot.slane %v5944, %v5948
  %v5951 = vadd.f32 %v5949, 0.0
  %v5952 = vadd.f32 %v5951, %v5910
  %v5953 = vadd.f32 %v5951, %v5814
  %v5954 = vadd.f32 %v5951, %v5911
  %v5955 = vadd.f32 %v5951, %v5817
  %v5956 = vadd.f32 %v5951, %v5912
  %v5957 = vadd.f32 %v5951, %v5820
  %v5958 = vadd.f32 %v5951, %v5913
  %v5959 = vadd.f32 %v5951, %v5823
  %v5960 = vadd.f32 %v5951, %v5914
  %v5961 = vadd.f32 %v5951, %v5826
  %v5962 = vadd.f32 %v5951, %v5915
  %v5963 = vadd.f32 %v5951, %v5829
  %v5964 = vadd.f32 %v5951, %v5916
  %v5965 = vadd.f32 %v5951, %v5832
  %v5966 = vadd.f32 %v5951, %v5917
  %v5967 = vadd.f32 %v5951, %v5835
  %v5968 = vadd.f32 %v5951, %v5918
  %v5969 = vadd.f32 %v5951, %v5838
  %v5970 = vadd.f32 %v5951, %v5919
  %v5971 = vadd.f32 %v5951, %v5841
  %v5972 = vadd.f32 %v5951, %v5920
  %v5973 = vadd.f32 %v5951, %v5844
  %v5974 = vadd.f32 %v5951, %v5921
  %v5975 = vadd.f32 %v5951, %v5847
  %v5976 = vadd.f32 %v5951, %v5922
  %v5977 = vadd.f32 %v5951, %v5850
  %v5978 = vadd.f32 %v5951, %v5923
  %v5979 = vadd.f32 %v5951, %v5853
  %v6008 = vrot.slane %v5910, 1
  %v6009 = vrot.slane %v5814, 1
  %v6010 = vsel %vm294, %v6008, %v6009
  %v6011 = vrot.slane %v5927, 1
  %v6012 = vsel %vm294, %v6009, %v6011
  %v6013 = vrot.slane %v5911, 1
  %v6014 = vrot.slane %v5817, 1
  %v6015 = vsel %vm294, %v6013, %v6014
  %v6016 = vrot.slane %v5928, 1
  %v6017 = vsel %vm294, %v6014, %v6016
  %v6018 = vrot.slane %v5912, 1
  %v6019 = vrot.slane %v5820, 1
  %v6020 = vsel %vm294, %v6018, %v6019
  %v6021 = vrot.slane %v5929, 1
  %v6022 = vsel %vm294, %v6019, %v6021
  %v6023 = vrot.slane %v5913, 1
  %v6024 = vrot.slane %v5823, 1
  %v6025 = vsel %vm294, %v6023, %v6024
  %v6026 = vrot.slane %v5930, 1
  %v6027 = vsel %vm294, %v6024, %v6026
  %v6028 = vrot.slane %v5914, 1
  %v6029 = vrot.slane %v5826, 1
  %v6030 = vsel %vm294, %v6028, %v6029
  %v6031 = vrot.slane %v5931, 1
  %v6032 = vsel %vm294, %v6029, %v6031
  %v6033 = vrot.slane %v5915, 1
  %v6034 = vrot.slane %v5829, 1
  %v6035 = vsel %vm294, %v6033, %v6034
  %v6036 = vrot.slane %v5932, 1
  %v6037 = vsel %vm294, %v6034, %v6036
  %v6038 = vrot.slane %v5916, 1
  %v6039 = vrot.slane %v5832, 1
  %v6040 = vsel %vm294, %v6038, %v6039
  %v6041 = vrot.slane %v5933, 1
  %v6042 = vsel %vm294, %v6039, %v6041
  %v6043 = vrot.slane %v5917, 1
  %v6044 = vrot.slane %v5835, 1
  %v6045 = vsel %vm294, %v6043, %v6044
  %v6046 = vrot.slane %v5934, 1
  %v6047 = vsel %vm294, %v6044, %v6046
  %v6048 = vrot.slane %v5918, 1
  %v6049 = vrot.slane %v5838, 1
  %v6050 = vsel %vm294, %v6048, %v6049
  %v6051 = vrot.slane %v5935, 1
  %v6052 = vsel %vm294, %v6049, %v6051
  %v6053 = vrot.slane %v5919, 1
  %v6054 = vrot.slane %v5841, 1
  %v6055 = vsel %vm294, %v6053, %v6054
  %v6056 = vrot.slane %v5936, 1
  %v6057 = vsel %vm294, %v6054, %v6056
  %v6058 = vrot.slane %v5920, 1
  %v6059 = vrot.slane %v5844, 1
  %v6060 = vsel %vm294, %v6058, %v6059
  %v6061 = vrot.slane %v5937, 1
  %v6062 = vsel %vm294, %v6059, %v6061
  %v6063 = vrot.slane %v5921, 1
  %v6064 = vrot.slane %v5847, 1
  %v6065 = vsel %vm294, %v6063, %v6064
  %v6066 = vrot.slane %v5938, 1
  %v6067 = vsel %vm294, %v6064, %v6066
  %v6068 = vrot.slane %v5922, 1
  %v6069 = vrot.slane %v5850, 1
  %v6070 = vsel %vm294, %v6068, %v6069
  %v6071 = vrot.slane %v5939, 1
  %v6072 = vsel %vm294, %v6069, %v6071
  %v6073 = vrot.slane %v5923, 1
  %v6074 = vrot.slane %v5853, 1
  %v6075 = vsel %vm294, %v6073, %v6074
  %v6076 = vrot.slane %v5940, 1
  %v6077 = vsel %vm294, %v6074, %v6076
  %6078 = vrot.lane.b32.xlu0 %v6010, 126
  %v6079 = vpop.permute.xlu0 %6078
  %6080 = vrot.lane.b32.xlu0 %v6012, 126
  %v6081 = vpop.permute.xlu0 %6080
  %6082 = vrot.lane.b32.xlu0 %v6015, 126
  %v6083 = vpop.permute.xlu0 %6082
  %6084 = vrot.lane.b32.xlu0 %v6017, 126
  %v6085 = vpop.permute.xlu0 %6084
  %6086 = vrot.lane.b32.xlu0 %v6020, 126
  %v6087 = vpop.permute.xlu0 %6086
  %6088 = vrot.lane.b32.xlu0 %v6022, 126
  %v6089 = vpop.permute.xlu0 %6088
  %6090 = vrot.lane.b32.xlu0 %v6025, 126
  %v6091 = vpop.permute.xlu0 %6090
  %6092 = vrot.lane.b32.xlu0 %v6027, 126
  %v6093 = vpop.permute.xlu0 %6092
  %6094 = vrot.lane.b32.xlu0 %v6030, 126
  %v6095 = vpop.permute.xlu0 %6094
  %6096 = vrot.lane.b32.xlu0 %v6032, 126
  %v6097 = vpop.permute.xlu0 %6096
  %6098 = vrot.lane.b32.xlu0 %v6035, 126
  %v6099 = vpop.permute.xlu0 %6098
  %6100 = vrot.lane.b32.xlu0 %v6037, 126
  %v6101 = vpop.permute.xlu0 %6100
  %6102 = vrot.lane.b32.xlu0 %v6040, 126
  %v6103 = vpop.permute.xlu0 %6102
  %6104 = vrot.lane.b32.xlu0 %v6042, 126
  %v6105 = vpop.permute.xlu0 %6104
  %6106 = vrot.lane.b32.xlu0 %v6045, 126
  %v6107 = vpop.permute.xlu0 %6106
  %6108 = vrot.lane.b32.xlu0 %v6047, 126
  %v6109 = vpop.permute.xlu0 %6108
  %6110 = vrot.lane.b32.xlu0 %v6050, 126
  %v6111 = vpop.permute.xlu0 %6110
  %6112 = vrot.lane.b32.xlu0 %v6052, 126
  %v6113 = vpop.permute.xlu0 %6112
  %6114 = vrot.lane.b32.xlu0 %v6055, 126
  %v6115 = vpop.permute.xlu0 %6114
  %6116 = vrot.lane.b32.xlu0 %v6057, 126
  %v6117 = vpop.permute.xlu0 %6116
  %6118 = vrot.lane.b32.xlu0 %v6060, 126
  %v6119 = vpop.permute.xlu0 %6118
  %6120 = vrot.lane.b32.xlu0 %v6062, 126
  %v6121 = vpop.permute.xlu0 %6120
  %6122 = vrot.lane.b32.xlu0 %v6065, 126
  %v6123 = vpop.permute.xlu0 %6122
  %6124 = vrot.lane.b32.xlu0 %v6067, 126
  %v6125 = vpop.permute.xlu0 %6124
  %6126 = vrot.lane.b32.xlu0 %v6070, 126
  %v6127 = vpop.permute.xlu0 %6126
  %6128 = vrot.lane.b32.xlu0 %v6072, 126
  %v6129 = vpop.permute.xlu0 %6128
  %6130 = vrot.lane.b32.xlu0 %v6075, 126
  %v6131 = vpop.permute.xlu0 %6130
  %6132 = vrot.lane.b32.xlu0 %v6077, 126
  %v6133 = vpop.permute.xlu0 %6132
  %v6162 = vadd.f32 %v5952, %v6079
  %v6163 = vadd.f32 %v5953, %v6081
  %v6164 = vadd.f32 %v5954, %v6083
  %v6165 = vadd.f32 %v5955, %v6085
  %v6166 = vadd.f32 %v5956, %v6087
  %v6167 = vadd.f32 %v5957, %v6089
  %v6168 = vadd.f32 %v5958, %v6091
  %v6169 = vadd.f32 %v5959, %v6093
  %v6170 = vadd.f32 %v5960, %v6095
  %v6171 = vadd.f32 %v5961, %v6097
  %v6172 = vadd.f32 %v5962, %v6099
  %v6173 = vadd.f32 %v5963, %v6101
  %v6174 = vadd.f32 %v5964, %v6103
  %v6175 = vadd.f32 %v5965, %v6105
  %v6176 = vadd.f32 %v5966, %v6107
  %v6177 = vadd.f32 %v5967, %v6109
  %v6178 = vadd.f32 %v5968, %v6111
  %v6179 = vadd.f32 %v5969, %v6113
  %v6180 = vadd.f32 %v5970, %v6115
  %v6181 = vadd.f32 %v5971, %v6117
  %v6182 = vadd.f32 %v5972, %v6119
  %v6183 = vadd.f32 %v5973, %v6121
  %v6184 = vadd.f32 %v5974, %v6123
  %v6185 = vadd.f32 %v5975, %v6125
  %v6186 = vadd.f32 %v5976, %v6127
  %v6187 = vadd.f32 %v5977, %v6129
  %v6188 = vadd.f32 %v5978, %v6131
  %v6189 = vadd.f32 %v5979, %v6133
  %v6190 = vrot.slane %v5910, 2
  %v6191 = vrot.slane %v5814, 2
  %v6192 = vsel %vm482, %v6190, %v6191
  %v6193 = vrot.slane %v5927, 2
  %v6194 = vsel %vm482, %v6191, %v6193
  %v6195 = vrot.slane %v5911, 2
  %v6196 = vrot.slane %v5817, 2
  %v6197 = vsel %vm482, %v6195, %v6196
  %v6198 = vrot.slane %v5928, 2
  %v6199 = vsel %vm482, %v6196, %v6198
  %v6200 = vrot.slane %v5912, 2
  %v6201 = vrot.slane %v5820, 2
  %v6202 = vsel %vm482, %v6200, %v6201
  %v6203 = vrot.slane %v5929, 2
  %v6204 = vsel %vm482, %v6201, %v6203
  %v6205 = vrot.slane %v5913, 2
  %v6206 = vrot.slane %v5823, 2
  %v6207 = vsel %vm482, %v6205, %v6206
  %v6208 = vrot.slane %v5930, 2
  %v6209 = vsel %vm482, %v6206, %v6208
  %v6210 = vrot.slane %v5914, 2
  %v6211 = vrot.slane %v5826, 2
  %v6212 = vsel %vm482, %v6210, %v6211
  %v6213 = vrot.slane %v5931, 2
  %v6214 = vsel %vm482, %v6211, %v6213
  %v6215 = vrot.slane %v5915, 2
  %v6216 = vrot.slane %v5829, 2
  %v6217 = vsel %vm482, %v6215, %v6216
  %v6218 = vrot.slane %v5932, 2
  %v6219 = vsel %vm482, %v6216, %v6218
  %v6220 = vrot.slane %v5916, 2
  %v6221 = vrot.slane %v5832, 2
  %v6222 = vsel %vm482, %v6220, %v6221
  %v6223 = vrot.slane %v5933, 2
  %v6224 = vsel %vm482, %v6221, %v6223
  %v6225 = vrot.slane %v5917, 2
  %v6226 = vrot.slane %v5835, 2
  %v6227 = vsel %vm482, %v6225, %v6226
  %v6228 = vrot.slane %v5934, 2
  %v6229 = vsel %vm482, %v6226, %v6228
  %v6230 = vrot.slane %v5918, 2
  %v6231 = vrot.slane %v5838, 2
  %v6232 = vsel %vm482, %v6230, %v6231
  %v6233 = vrot.slane %v5935, 2
  %v6234 = vsel %vm482, %v6231, %v6233
  %v6235 = vrot.slane %v5919, 2
  %v6236 = vrot.slane %v5841, 2
  %v6237 = vsel %vm482, %v6235, %v6236
  %v6238 = vrot.slane %v5936, 2
  %v6239 = vsel %vm482, %v6236, %v6238
  %v6240 = vrot.slane %v5920, 2
  %v6241 = vrot.slane %v5844, 2
  %v6242 = vsel %vm482, %v6240, %v6241
  %v6243 = vrot.slane %v5937, 2
  %v6244 = vsel %vm482, %v6241, %v6243
  %v6245 = vrot.slane %v5921, 2
  %v6246 = vrot.slane %v5847, 2
  %v6247 = vsel %vm482, %v6245, %v6246
  %v6248 = vrot.slane %v5938, 2
  %v6249 = vsel %vm482, %v6246, %v6248
  %v6250 = vrot.slane %v5922, 2
  %v6251 = vrot.slane %v5850, 2
  %v6252 = vsel %vm482, %v6250, %v6251
  %v6253 = vrot.slane %v5939, 2
  %v6254 = vsel %vm482, %v6251, %v6253
  %v6255 = vrot.slane %v5923, 2
  %v6256 = vrot.slane %v5853, 2
  %v6257 = vsel %vm482, %v6255, %v6256
  %v6258 = vrot.slane %v5940, 2
  %v6259 = vsel %vm482, %v6256, %v6258
  %6260 = vrot.lane.b32.xlu0 %v6192, 124
  %v6261 = vpop.permute.xlu0 %6260
  %6262 = vrot.lane.b32.xlu0 %v6194, 124
  %v6263 = vpop.permute.xlu0 %6262
  %6264 = vrot.lane.b32.xlu0 %v6197, 124
  %v6265 = vpop.permute.xlu0 %6264
  %6266 = vrot.lane.b32.xlu0 %v6199, 124
  %v6267 = vpop.permute.xlu0 %6266
  %6268 = vrot.lane.b32.xlu0 %v6202, 124
  %v6269 = vpop.permute.xlu0 %6268
  %6270 = vrot.lane.b32.xlu0 %v6204, 124
  %v6271 = vpop.permute.xlu0 %6270
  %6272 = vrot.lane.b32.xlu0 %v6207, 124
  %v6273 = vpop.permute.xlu0 %6272
  %6274 = vrot.lane.b32.xlu0 %v6209, 124
  %v6275 = vpop.permute.xlu0 %6274
  %6276 = vrot.lane.b32.xlu0 %v6212, 124
  %v6277 = vpop.permute.xlu0 %6276
  %6278 = vrot.lane.b32.xlu0 %v6214, 124
  %v6279 = vpop.permute.xlu0 %6278
  %6280 = vrot.lane.b32.xlu0 %v6217, 124
  %v6281 = vpop.permute.xlu0 %6280
  %6282 = vrot.lane.b32.xlu0 %v6219, 124
  %v6283 = vpop.permute.xlu0 %6282
  %6284 = vrot.lane.b32.xlu0 %v6222, 124
  %v6285 = vpop.permute.xlu0 %6284
  %6286 = vrot.lane.b32.xlu0 %v6224, 124
  %v6287 = vpop.permute.xlu0 %6286
  %6288 = vrot.lane.b32.xlu0 %v6227, 124
  %v6289 = vpop.permute.xlu0 %6288
  %6290 = vrot.lane.b32.xlu0 %v6229, 124
  %v6291 = vpop.permute.xlu0 %6290
  %6292 = vrot.lane.b32.xlu0 %v6232, 124
  %v6293 = vpop.permute.xlu0 %6292
  %6294 = vrot.lane.b32.xlu0 %v6234, 124
  %v6295 = vpop.permute.xlu0 %6294
  %6296 = vrot.lane.b32.xlu0 %v6237, 124
  %v6297 = vpop.permute.xlu0 %6296
  %6298 = vrot.lane.b32.xlu0 %v6239, 124
  %v6299 = vpop.permute.xlu0 %6298
  %6300 = vrot.lane.b32.xlu0 %v6242, 124
  %v6301 = vpop.permute.xlu0 %6300
  %6302 = vrot.lane.b32.xlu0 %v6244, 124
  %v6303 = vpop.permute.xlu0 %6302
  %6304 = vrot.lane.b32.xlu0 %v6247, 124
  %v6305 = vpop.permute.xlu0 %6304
  %6306 = vrot.lane.b32.xlu0 %v6249, 124
  %v6307 = vpop.permute.xlu0 %6306
  %6308 = vrot.lane.b32.xlu0 %v6252, 124
  %v6309 = vpop.permute.xlu0 %6308
  %6310 = vrot.lane.b32.xlu0 %v6254, 124
  %v6311 = vpop.permute.xlu0 %6310
  %6312 = vrot.lane.b32.xlu0 %v6257, 124
  %v6313 = vpop.permute.xlu0 %6312
  %6314 = vrot.lane.b32.xlu0 %v6259, 124
  %v6315 = vpop.permute.xlu0 %6314
  %v6344 = vadd.f32 %v6162, %v6261
  %v6345 = vadd.f32 %v6163, %v6263
  %v6346 = vadd.f32 %v6164, %v6265
  %v6347 = vadd.f32 %v6165, %v6267
  %v6348 = vadd.f32 %v6166, %v6269
  %v6349 = vadd.f32 %v6167, %v6271
  %v6350 = vadd.f32 %v6168, %v6273
  %v6351 = vadd.f32 %v6169, %v6275
  %v6352 = vadd.f32 %v6170, %v6277
  %v6353 = vadd.f32 %v6171, %v6279
  %v6354 = vadd.f32 %v6172, %v6281
  %v6355 = vadd.f32 %v6173, %v6283
  %v6356 = vadd.f32 %v6174, %v6285
  %v6357 = vadd.f32 %v6175, %v6287
  %v6358 = vadd.f32 %v6176, %v6289
  %v6359 = vadd.f32 %v6177, %v6291
  %v6360 = vadd.f32 %v6178, %v6293
  %v6361 = vadd.f32 %v6179, %v6295
  %v6362 = vadd.f32 %v6180, %v6297
  %v6363 = vadd.f32 %v6181, %v6299
  %v6364 = vadd.f32 %v6182, %v6301
  %v6365 = vadd.f32 %v6183, %v6303
  %v6366 = vadd.f32 %v6184, %v6305
  %v6367 = vadd.f32 %v6185, %v6307
  %v6368 = vadd.f32 %v6186, %v6309
  %v6369 = vadd.f32 %v6187, %v6311
  %v6370 = vadd.f32 %v6188, %v6313
  %v6371 = vadd.f32 %v6189, %v6315
  %v6372 = vrot.slane %v5910, 3
  %v6373 = vrot.slane %v5814, 3
  %v6374 = vsel %vm670, %v6372, %v6373
  %v6375 = vrot.slane %v5927, 3
  %v6376 = vsel %vm670, %v6373, %v6375
  %v6377 = vrot.slane %v5911, 3
  %v6378 = vrot.slane %v5817, 3
  %v6379 = vsel %vm670, %v6377, %v6378
  %v6380 = vrot.slane %v5928, 3
  %v6381 = vsel %vm670, %v6378, %v6380
  %v6382 = vrot.slane %v5912, 3
  %v6383 = vrot.slane %v5820, 3
  %v6384 = vsel %vm670, %v6382, %v6383
  %v6385 = vrot.slane %v5929, 3
  %v6386 = vsel %vm670, %v6383, %v6385
  %v6387 = vrot.slane %v5913, 3
  %v6388 = vrot.slane %v5823, 3
  %v6389 = vsel %vm670, %v6387, %v6388
  %v6390 = vrot.slane %v5930, 3
  %v6391 = vsel %vm670, %v6388, %v6390
  %v6392 = vrot.slane %v5914, 3
  %v6393 = vrot.slane %v5826, 3
  %v6394 = vsel %vm670, %v6392, %v6393
  %v6395 = vrot.slane %v5931, 3
  %v6396 = vsel %vm670, %v6393, %v6395
  %v6397 = vrot.slane %v5915, 3
  %v6398 = vrot.slane %v5829, 3
  %v6399 = vsel %vm670, %v6397, %v6398
  %v6400 = vrot.slane %v5932, 3
  %v6401 = vsel %vm670, %v6398, %v6400
  %v6402 = vrot.slane %v5916, 3
  %v6403 = vrot.slane %v5832, 3
  %v6404 = vsel %vm670, %v6402, %v6403
  %v6405 = vrot.slane %v5933, 3
  %v6406 = vsel %vm670, %v6403, %v6405
  %v6407 = vrot.slane %v5917, 3
  %v6408 = vrot.slane %v5835, 3
  %v6409 = vsel %vm670, %v6407, %v6408
  %v6410 = vrot.slane %v5934, 3
  %v6411 = vsel %vm670, %v6408, %v6410
  %v6412 = vrot.slane %v5918, 3
  %v6413 = vrot.slane %v5838, 3
  %v6414 = vsel %vm670, %v6412, %v6413
  %v6415 = vrot.slane %v5935, 3
  %v6416 = vsel %vm670, %v6413, %v6415
  %v6417 = vrot.slane %v5919, 3
  %v6418 = vrot.slane %v5841, 3
  %v6419 = vsel %vm670, %v6417, %v6418
  %v6420 = vrot.slane %v5936, 3
  %v6421 = vsel %vm670, %v6418, %v6420
  %v6422 = vrot.slane %v5920, 3
  %v6423 = vrot.slane %v5844, 3
  %v6424 = vsel %vm670, %v6422, %v6423
  %v6425 = vrot.slane %v5937, 3
  %v6426 = vsel %vm670, %v6423, %v6425
  %v6427 = vrot.slane %v5921, 3
  %v6428 = vrot.slane %v5847, 3
  %v6429 = vsel %vm670, %v6427, %v6428
  %v6430 = vrot.slane %v5938, 3
  %v6431 = vsel %vm670, %v6428, %v6430
  %v6432 = vrot.slane %v5922, 3
  %v6433 = vrot.slane %v5850, 3
  %v6434 = vsel %vm670, %v6432, %v6433
  %v6435 = vrot.slane %v5939, 3
  %v6436 = vsel %vm670, %v6433, %v6435
  %v6437 = vrot.slane %v5923, 3
  %v6438 = vrot.slane %v5853, 3
  %v6439 = vsel %vm670, %v6437, %v6438
  %v6440 = vrot.slane %v5940, 3
  %v6441 = vsel %vm670, %v6438, %v6440
  %6442 = vrot.lane.b32.xlu0 %v6374, 122
  %v6443 = vpop.permute.xlu0 %6442
  %6444 = vrot.lane.b32.xlu0 %v6376, 122
  %v6445 = vpop.permute.xlu0 %6444
  %6446 = vrot.lane.b32.xlu0 %v6379, 122
  %v6447 = vpop.permute.xlu0 %6446
  %6448 = vrot.lane.b32.xlu0 %v6381, 122
  %v6449 = vpop.permute.xlu0 %6448
  %6450 = vrot.lane.b32.xlu0 %v6384, 122
  %v6451 = vpop.permute.xlu0 %6450
  %6452 = vrot.lane.b32.xlu0 %v6386, 122
  %v6453 = vpop.permute.xlu0 %6452
  %6454 = vrot.lane.b32.xlu0 %v6389, 122
  %v6455 = vpop.permute.xlu0 %6454
  %6456 = vrot.lane.b32.xlu0 %v6391, 122
  %v6457 = vpop.permute.xlu0 %6456
  %6458 = vrot.lane.b32.xlu0 %v6394, 122
  %v6459 = vpop.permute.xlu0 %6458
  %6460 = vrot.lane.b32.xlu0 %v6396, 122
  %v6461 = vpop.permute.xlu0 %6460
  %6462 = vrot.lane.b32.xlu0 %v6399, 122
  %v6463 = vpop.permute.xlu0 %6462
  %6464 = vrot.lane.b32.xlu0 %v6401, 122
  %v6465 = vpop.permute.xlu0 %6464
  %6466 = vrot.lane.b32.xlu0 %v6404, 122
  %v6467 = vpop.permute.xlu0 %6466
  %6468 = vrot.lane.b32.xlu0 %v6406, 122
  %v6469 = vpop.permute.xlu0 %6468
  %6470 = vrot.lane.b32.xlu0 %v6409, 122
  %v6471 = vpop.permute.xlu0 %6470
  %6472 = vrot.lane.b32.xlu0 %v6411, 122
  %v6473 = vpop.permute.xlu0 %6472
  %6474 = vrot.lane.b32.xlu0 %v6414, 122
  %v6475 = vpop.permute.xlu0 %6474
  %6476 = vrot.lane.b32.xlu0 %v6416, 122
  %v6477 = vpop.permute.xlu0 %6476
  %6478 = vrot.lane.b32.xlu0 %v6419, 122
  %v6479 = vpop.permute.xlu0 %6478
  %6480 = vrot.lane.b32.xlu0 %v6421, 122
  %v6481 = vpop.permute.xlu0 %6480
  %6482 = vrot.lane.b32.xlu0 %v6424, 122
  %v6483 = vpop.permute.xlu0 %6482
  %6484 = vrot.lane.b32.xlu0 %v6426, 122
  %v6485 = vpop.permute.xlu0 %6484
  %6486 = vrot.lane.b32.xlu0 %v6429, 122
  %v6487 = vpop.permute.xlu0 %6486
  %6488 = vrot.lane.b32.xlu0 %v6431, 122
  %v6489 = vpop.permute.xlu0 %6488
  %6490 = vrot.lane.b32.xlu0 %v6434, 122
  %v6491 = vpop.permute.xlu0 %6490
  %6492 = vrot.lane.b32.xlu0 %v6436, 122
  %v6493 = vpop.permute.xlu0 %6492
  %6494 = vrot.lane.b32.xlu0 %v6439, 122
  %v6495 = vpop.permute.xlu0 %6494
  %6496 = vrot.lane.b32.xlu0 %v6441, 122
  %v6497 = vpop.permute.xlu0 %6496
  %v6526 = vadd.f32 %v6344, %v6443
  %v6527 = vadd.f32 %v6345, %v6445
  %v6528 = vadd.f32 %v6346, %v6447
  %v6529 = vadd.f32 %v6347, %v6449
  %v6530 = vadd.f32 %v6348, %v6451
  %v6531 = vadd.f32 %v6349, %v6453
  %v6532 = vadd.f32 %v6350, %v6455
  %v6533 = vadd.f32 %v6351, %v6457
  %v6534 = vadd.f32 %v6352, %v6459
  %v6535 = vadd.f32 %v6353, %v6461
  %v6536 = vadd.f32 %v6354, %v6463
  %v6537 = vadd.f32 %v6355, %v6465
  %v6538 = vadd.f32 %v6356, %v6467
  %v6539 = vadd.f32 %v6357, %v6469
  %v6540 = vadd.f32 %v6358, %v6471
  %v6541 = vadd.f32 %v6359, %v6473
  %v6542 = vadd.f32 %v6360, %v6475
  %v6543 = vadd.f32 %v6361, %v6477
  %v6544 = vadd.f32 %v6362, %v6479
  %v6545 = vadd.f32 %v6363, %v6481
  %v6546 = vadd.f32 %v6364, %v6483
  %v6547 = vadd.f32 %v6365, %v6485
  %v6548 = vadd.f32 %v6366, %v6487
  %v6549 = vadd.f32 %v6367, %v6489
  %v6550 = vadd.f32 %v6368, %v6491
  %v6551 = vadd.f32 %v6369, %v6493
  %v6552 = vadd.f32 %v6370, %v6495
  %v6553 = vadd.f32 %v6371, %v6497
  %v6554 = vrot.slane %v5910, 4
  %v6555 = vrot.slane %v5814, 4
  %v6556 = vsel %vm858, %v6554, %v6555
  %v6557 = vrot.slane %v5927, 4
  %v6558 = vsel %vm858, %v6555, %v6557
  %v6559 = vrot.slane %v5911, 4
  %v6560 = vrot.slane %v5817, 4
  %v6561 = vsel %vm858, %v6559, %v6560
  %v6562 = vrot.slane %v5928, 4
  %v6563 = vsel %vm858, %v6560, %v6562
  %v6564 = vrot.slane %v5912, 4
  %v6565 = vrot.slane %v5820, 4
  %v6566 = vsel %vm858, %v6564, %v6565
  %v6567 = vrot.slane %v5929, 4
  %v6568 = vsel %vm858, %v6565, %v6567
  %v6569 = vrot.slane %v5913, 4
  %v6570 = vrot.slane %v5823, 4
  %v6571 = vsel %vm858, %v6569, %v6570
  %v6572 = vrot.slane %v5930, 4
  %v6573 = vsel %vm858, %v6570, %v6572
  %v6574 = vrot.slane %v5914, 4
  %v6575 = vrot.slane %v5826, 4
  %v6576 = vsel %vm858, %v6574, %v6575
  %v6577 = vrot.slane %v5931, 4
  %v6578 = vsel %vm858, %v6575, %v6577
  %v6579 = vrot.slane %v5915, 4
  %v6580 = vrot.slane %v5829, 4
  %v6581 = vsel %vm858, %v6579, %v6580
  %v6582 = vrot.slane %v5932, 4
  %v6583 = vsel %vm858, %v6580, %v6582
  %v6584 = vrot.slane %v5916, 4
  %v6585 = vrot.slane %v5832, 4
  %v6586 = vsel %vm858, %v6584, %v6585
  %v6587 = vrot.slane %v5933, 4
  %v6588 = vsel %vm858, %v6585, %v6587
  %v6589 = vrot.slane %v5917, 4
  %v6590 = vrot.slane %v5835, 4
  %v6591 = vsel %vm858, %v6589, %v6590
  %v6592 = vrot.slane %v5934, 4
  %v6593 = vsel %vm858, %v6590, %v6592
  %v6594 = vrot.slane %v5918, 4
  %v6595 = vrot.slane %v5838, 4
  %v6596 = vsel %vm858, %v6594, %v6595
  %v6597 = vrot.slane %v5935, 4
  %v6598 = vsel %vm858, %v6595, %v6597
  %v6599 = vrot.slane %v5919, 4
  %v6600 = vrot.slane %v5841, 4
  %v6601 = vsel %vm858, %v6599, %v6600
  %v6602 = vrot.slane %v5936, 4
  %v6603 = vsel %vm858, %v6600, %v6602
  %v6604 = vrot.slane %v5920, 4
  %v6605 = vrot.slane %v5844, 4
  %v6606 = vsel %vm858, %v6604, %v6605
  %v6607 = vrot.slane %v5937, 4
  %v6608 = vsel %vm858, %v6605, %v6607
  %v6609 = vrot.slane %v5921, 4
  %v6610 = vrot.slane %v5847, 4
  %v6611 = vsel %vm858, %v6609, %v6610
  %v6612 = vrot.slane %v5938, 4
  %v6613 = vsel %vm858, %v6610, %v6612
  %v6614 = vrot.slane %v5922, 4
  %v6615 = vrot.slane %v5850, 4
  %v6616 = vsel %vm858, %v6614, %v6615
  %v6617 = vrot.slane %v5939, 4
  %v6618 = vsel %vm858, %v6615, %v6617
  %v6619 = vrot.slane %v5923, 4
  %v6620 = vrot.slane %v5853, 4
  %v6621 = vsel %vm858, %v6619, %v6620
  %v6622 = vrot.slane %v5940, 4
  %v6623 = vsel %vm858, %v6620, %v6622
  %6624 = vrot.lane.b32.xlu0 %v6556, 120
  %v6625 = vpop.permute.xlu0 %6624
  %6626 = vrot.lane.b32.xlu0 %v6558, 120
  %v6627 = vpop.permute.xlu0 %6626
  %6628 = vrot.lane.b32.xlu0 %v6561, 120
  %v6629 = vpop.permute.xlu0 %6628
  %6630 = vrot.lane.b32.xlu0 %v6563, 120
  %v6631 = vpop.permute.xlu0 %6630
  %6632 = vrot.lane.b32.xlu0 %v6566, 120
  %v6633 = vpop.permute.xlu0 %6632
  %6634 = vrot.lane.b32.xlu0 %v6568, 120
  %v6635 = vpop.permute.xlu0 %6634
  %6636 = vrot.lane.b32.xlu0 %v6571, 120
  %v6637 = vpop.permute.xlu0 %6636
  %6638 = vrot.lane.b32.xlu0 %v6573, 120
  %v6639 = vpop.permute.xlu0 %6638
  %6640 = vrot.lane.b32.xlu0 %v6576, 120
  %v6641 = vpop.permute.xlu0 %6640
  %6642 = vrot.lane.b32.xlu0 %v6578, 120
  %v6643 = vpop.permute.xlu0 %6642
  %6644 = vrot.lane.b32.xlu0 %v6581, 120
  %v6645 = vpop.permute.xlu0 %6644
  %6646 = vrot.lane.b32.xlu0 %v6583, 120
  %v6647 = vpop.permute.xlu0 %6646
  %6648 = vrot.lane.b32.xlu0 %v6586, 120
  %v6649 = vpop.permute.xlu0 %6648
  %6650 = vrot.lane.b32.xlu0 %v6588, 120
  %v6651 = vpop.permute.xlu0 %6650
  %6652 = vrot.lane.b32.xlu0 %v6591, 120
  %v6653 = vpop.permute.xlu0 %6652
  %6654 = vrot.lane.b32.xlu0 %v6593, 120
  %v6655 = vpop.permute.xlu0 %6654
  %6656 = vrot.lane.b32.xlu0 %v6596, 120
  %v6657 = vpop.permute.xlu0 %6656
  %6658 = vrot.lane.b32.xlu0 %v6598, 120
  %v6659 = vpop.permute.xlu0 %6658
  %6660 = vrot.lane.b32.xlu0 %v6601, 120
  %v6661 = vpop.permute.xlu0 %6660
  %6662 = vrot.lane.b32.xlu0 %v6603, 120
  %v6663 = vpop.permute.xlu0 %6662
  %6664 = vrot.lane.b32.xlu0 %v6606, 120
  %v6665 = vpop.permute.xlu0 %6664
  %6666 = vrot.lane.b32.xlu0 %v6608, 120
  %v6667 = vpop.permute.xlu0 %6666
  %6668 = vrot.lane.b32.xlu0 %v6611, 120
  %v6669 = vpop.permute.xlu0 %6668
  %6670 = vrot.lane.b32.xlu0 %v6613, 120
  %v6671 = vpop.permute.xlu0 %6670
  %6672 = vrot.lane.b32.xlu0 %v6616, 120
  %v6673 = vpop.permute.xlu0 %6672
  %6674 = vrot.lane.b32.xlu0 %v6618, 120
  %v6675 = vpop.permute.xlu0 %6674
  %6676 = vrot.lane.b32.xlu0 %v6621, 120
  %v6677 = vpop.permute.xlu0 %6676
  %6678 = vrot.lane.b32.xlu0 %v6623, 120
  %v6679 = vpop.permute.xlu0 %6678
  %v6708 = vadd.f32 %v6526, %v6625
  %v6709 = vadd.f32 %v6527, %v6627
  %v6710 = vadd.f32 %v6528, %v6629
  %v6711 = vadd.f32 %v6529, %v6631
  %v6712 = vadd.f32 %v6530, %v6633
  %v6713 = vadd.f32 %v6531, %v6635
  %v6714 = vadd.f32 %v6532, %v6637
  %v6715 = vadd.f32 %v6533, %v6639
  %v6716 = vadd.f32 %v6534, %v6641
  %v6717 = vadd.f32 %v6535, %v6643
  %v6718 = vadd.f32 %v6536, %v6645
  %v6719 = vadd.f32 %v6537, %v6647
  %v6720 = vadd.f32 %v6538, %v6649
  %v6721 = vadd.f32 %v6539, %v6651
  %v6722 = vadd.f32 %v6540, %v6653
  %v6723 = vadd.f32 %v6541, %v6655
  %v6724 = vadd.f32 %v6542, %v6657
  %v6725 = vadd.f32 %v6543, %v6659
  %v6726 = vadd.f32 %v6544, %v6661
  %v6727 = vadd.f32 %v6545, %v6663
  %v6728 = vadd.f32 %v6546, %v6665
  %v6729 = vadd.f32 %v6547, %v6667
  %v6730 = vadd.f32 %v6548, %v6669
  %v6731 = vadd.f32 %v6549, %v6671
  %v6732 = vadd.f32 %v6550, %v6673
  %v6733 = vadd.f32 %v6551, %v6675
  %v6734 = vadd.f32 %v6552, %v6677
  %v6735 = vadd.f32 %v6553, %v6679
  %v6736 = vrot.slane %v5910, 5
  %v6737 = vrot.slane %v5814, 5
  %v6738 = vsel %vm1844, %v6736, %v6737
  %v6739 = vrot.slane %v5927, 5
  %v6740 = vsel %vm1844, %v6737, %v6739
  %v6741 = vrot.slane %v5911, 5
  %v6742 = vrot.slane %v5817, 5
  %v6743 = vsel %vm1844, %v6741, %v6742
  %v6744 = vrot.slane %v5928, 5
  %v6745 = vsel %vm1844, %v6742, %v6744
  %v6746 = vrot.slane %v5912, 5
  %v6747 = vrot.slane %v5820, 5
  %v6748 = vsel %vm1844, %v6746, %v6747
  %v6749 = vrot.slane %v5929, 5
  %v6750 = vsel %vm1844, %v6747, %v6749
  %v6751 = vrot.slane %v5913, 5
  %v6752 = vrot.slane %v5823, 5
  %v6753 = vsel %vm1844, %v6751, %v6752
  %v6754 = vrot.slane %v5930, 5
  %v6755 = vsel %vm1844, %v6752, %v6754
  %v6756 = vrot.slane %v5914, 5
  %v6757 = vrot.slane %v5826, 5
  %v6758 = vsel %vm1844, %v6756, %v6757
  %v6759 = vrot.slane %v5931, 5
  %v6760 = vsel %vm1844, %v6757, %v6759
  %v6761 = vrot.slane %v5915, 5
  %v6762 = vrot.slane %v5829, 5
  %v6763 = vsel %vm1844, %v6761, %v6762
  %v6764 = vrot.slane %v5932, 5
  %v6765 = vsel %vm1844, %v6762, %v6764
  %v6766 = vrot.slane %v5916, 5
  %v6767 = vrot.slane %v5832, 5
  %v6768 = vsel %vm1844, %v6766, %v6767
  %v6769 = vrot.slane %v5933, 5
  %v6770 = vsel %vm1844, %v6767, %v6769
  %v6771 = vrot.slane %v5917, 5
  %v6772 = vrot.slane %v5835, 5
  %v6773 = vsel %vm1844, %v6771, %v6772
  %v6774 = vrot.slane %v5934, 5
  %v6775 = vsel %vm1844, %v6772, %v6774
  %v6776 = vrot.slane %v5918, 5
  %v6777 = vrot.slane %v5838, 5
  %v6778 = vsel %vm1844, %v6776, %v6777
  %v6779 = vrot.slane %v5935, 5
  %v6780 = vsel %vm1844, %v6777, %v6779
  %v6781 = vrot.slane %v5919, 5
  %v6782 = vrot.slane %v5841, 5
  %v6783 = vsel %vm1844, %v6781, %v6782
  %v6784 = vrot.slane %v5936, 5
  %v6785 = vsel %vm1844, %v6782, %v6784
  %v6786 = vrot.slane %v5920, 5
  %v6787 = vrot.slane %v5844, 5
  %v6788 = vsel %vm1844, %v6786, %v6787
  %v6789 = vrot.slane %v5937, 5
  %v6790 = vsel %vm1844, %v6787, %v6789
  %v6791 = vrot.slane %v5921, 5
  %v6792 = vrot.slane %v5847, 5
  %v6793 = vsel %vm1844, %v6791, %v6792
  %v6794 = vrot.slane %v5938, 5
  %v6795 = vsel %vm1844, %v6792, %v6794
  %v6796 = vrot.slane %v5922, 5
  %v6797 = vrot.slane %v5850, 5
  %v6798 = vsel %vm1844, %v6796, %v6797
  %v6799 = vrot.slane %v5939, 5
  %v6800 = vsel %vm1844, %v6797, %v6799
  %v6801 = vrot.slane %v5923, 5
  %v6802 = vrot.slane %v5853, 5
  %v6803 = vsel %vm1844, %v6801, %v6802
  %v6804 = vrot.slane %v5940, 5
  %v6805 = vsel %vm1844, %v6802, %v6804
  %6806 = vrot.lane.b32.xlu0 %v6738, 118
  %v6807 = vpop.permute.xlu0 %6806
  %6808 = vrot.lane.b32.xlu0 %v6740, 118
  %v6809 = vpop.permute.xlu0 %6808
  %6810 = vrot.lane.b32.xlu0 %v6743, 118
  %v6811 = vpop.permute.xlu0 %6810
  %6812 = vrot.lane.b32.xlu0 %v6745, 118
  %v6813 = vpop.permute.xlu0 %6812
  %6814 = vrot.lane.b32.xlu0 %v6748, 118
  %v6815 = vpop.permute.xlu0 %6814
  %6816 = vrot.lane.b32.xlu0 %v6750, 118
  %v6817 = vpop.permute.xlu0 %6816
  %6818 = vrot.lane.b32.xlu0 %v6753, 118
  %v6819 = vpop.permute.xlu0 %6818
  %6820 = vrot.lane.b32.xlu0 %v6755, 118
  %v6821 = vpop.permute.xlu0 %6820
  %6822 = vrot.lane.b32.xlu0 %v6758, 118
  %v6823 = vpop.permute.xlu0 %6822
  %6824 = vrot.lane.b32.xlu0 %v6760, 118
  %v6825 = vpop.permute.xlu0 %6824
  %6826 = vrot.lane.b32.xlu0 %v6763, 118
  %v6827 = vpop.permute.xlu0 %6826
  %6828 = vrot.lane.b32.xlu0 %v6765, 118
  %v6829 = vpop.permute.xlu0 %6828
  %6830 = vrot.lane.b32.xlu0 %v6768, 118
  %v6831 = vpop.permute.xlu0 %6830
  %6832 = vrot.lane.b32.xlu0 %v6770, 118
  %v6833 = vpop.permute.xlu0 %6832
  %6834 = vrot.lane.b32.xlu0 %v6773, 118
  %v6835 = vpop.permute.xlu0 %6834
  %6836 = vrot.lane.b32.xlu0 %v6775, 118
  %v6837 = vpop.permute.xlu0 %6836
  %6838 = vrot.lane.b32.xlu0 %v6778, 118
  %v6839 = vpop.permute.xlu0 %6838
  %6840 = vrot.lane.b32.xlu0 %v6780, 118
  %v6841 = vpop.permute.xlu0 %6840
  %6842 = vrot.lane.b32.xlu0 %v6783, 118
  %v6843 = vpop.permute.xlu0 %6842
  %6844 = vrot.lane.b32.xlu0 %v6785, 118
  %v6845 = vpop.permute.xlu0 %6844
  %6846 = vrot.lane.b32.xlu0 %v6788, 118
  %v6847 = vpop.permute.xlu0 %6846
  %6848 = vrot.lane.b32.xlu0 %v6790, 118
  %v6849 = vpop.permute.xlu0 %6848
  %6850 = vrot.lane.b32.xlu0 %v6793, 118
  %v6851 = vpop.permute.xlu0 %6850
  %6852 = vrot.lane.b32.xlu0 %v6795, 118
  %v6853 = vpop.permute.xlu0 %6852
  %6854 = vrot.lane.b32.xlu0 %v6798, 118
  %v6855 = vpop.permute.xlu0 %6854
  %6856 = vrot.lane.b32.xlu0 %v6800, 118
  %v6857 = vpop.permute.xlu0 %6856
  %6858 = vrot.lane.b32.xlu0 %v6803, 118
  %v6859 = vpop.permute.xlu0 %6858
  %6860 = vrot.lane.b32.xlu0 %v6805, 118
  %v6861 = vpop.permute.xlu0 %6860
  %v6890 = vadd.f32 %v6708, %v6807
  %v6891 = vadd.f32 %v6709, %v6809
  %v6892 = vadd.f32 %v6710, %v6811
  %v6893 = vadd.f32 %v6711, %v6813
  %v6894 = vadd.f32 %v6712, %v6815
  %v6895 = vadd.f32 %v6713, %v6817
  %v6896 = vadd.f32 %v6714, %v6819
  %v6897 = vadd.f32 %v6715, %v6821
  %v6898 = vadd.f32 %v6716, %v6823
  %v6899 = vadd.f32 %v6717, %v6825
  %v6900 = vadd.f32 %v6718, %v6827
  %v6901 = vadd.f32 %v6719, %v6829
  %v6902 = vadd.f32 %v6720, %v6831
  %v6903 = vadd.f32 %v6721, %v6833
  %v6904 = vadd.f32 %v6722, %v6835
  %v6905 = vadd.f32 %v6723, %v6837
  %v6906 = vadd.f32 %v6724, %v6839
  %v6907 = vadd.f32 %v6725, %v6841
  %v6908 = vadd.f32 %v6726, %v6843
  %v6909 = vadd.f32 %v6727, %v6845
  %v6910 = vadd.f32 %v6728, %v6847
  %v6911 = vadd.f32 %v6729, %v6849
  %v6912 = vadd.f32 %v6730, %v6851
  %v6913 = vadd.f32 %v6731, %v6853
  %v6914 = vadd.f32 %v6732, %v6855
  %v6915 = vadd.f32 %v6733, %v6857
  %v6916 = vadd.f32 %v6734, %v6859
  %v6917 = vadd.f32 %v6735, %v6861
  %v6918 = vrot.slane %v5910, 6
  %v6919 = vrot.slane %v5814, 6
  %v6920 = vsel %vm125, %v6918, %v6919
  %v6921 = vrot.slane %v5927, 6
  %v6922 = vsel %vm125, %v6919, %v6921
  %v6923 = vrot.slane %v5911, 6
  %v6924 = vrot.slane %v5817, 6
  %v6925 = vsel %vm125, %v6923, %v6924
  %v6926 = vrot.slane %v5928, 6
  %v6927 = vsel %vm125, %v6924, %v6926
  %v6928 = vrot.slane %v5912, 6
  %v6929 = vrot.slane %v5820, 6
  %v6930 = vsel %vm125, %v6928, %v6929
  %v6931 = vrot.slane %v5929, 6
  %v6932 = vsel %vm125, %v6929, %v6931
  %v6933 = vrot.slane %v5913, 6
  %v6934 = vrot.slane %v5823, 6
  %v6935 = vsel %vm125, %v6933, %v6934
  %v6936 = vrot.slane %v5930, 6
  %v6937 = vsel %vm125, %v6934, %v6936
  %v6938 = vrot.slane %v5914, 6
  %v6939 = vrot.slane %v5826, 6
  %v6940 = vsel %vm125, %v6938, %v6939
  %v6941 = vrot.slane %v5931, 6
  %v6942 = vsel %vm125, %v6939, %v6941
  %v6943 = vrot.slane %v5915, 6
  %v6944 = vrot.slane %v5829, 6
  %v6945 = vsel %vm125, %v6943, %v6944
  %v6946 = vrot.slane %v5932, 6
  %v6947 = vsel %vm125, %v6944, %v6946
  %v6948 = vrot.slane %v5916, 6
  %v6949 = vrot.slane %v5832, 6
  %v6950 = vsel %vm125, %v6948, %v6949
  %v6951 = vrot.slane %v5933, 6
  %v6952 = vsel %vm125, %v6949, %v6951
  %v6953 = vrot.slane %v5917, 6
  %v6954 = vrot.slane %v5835, 6
  %v6955 = vsel %vm125, %v6953, %v6954
  %v6956 = vrot.slane %v5934, 6
  %v6957 = vsel %vm125, %v6954, %v6956
  %v6958 = vrot.slane %v5918, 6
  %v6959 = vrot.slane %v5838, 6
  %v6960 = vsel %vm125, %v6958, %v6959
  %v6961 = vrot.slane %v5935, 6
  %v6962 = vsel %vm125, %v6959, %v6961
  %v6963 = vrot.slane %v5919, 6
  %v6964 = vrot.slane %v5841, 6
  %v6965 = vsel %vm125, %v6963, %v6964
  %v6966 = vrot.slane %v5936, 6
  %v6967 = vsel %vm125, %v6964, %v6966
  %v6968 = vrot.slane %v5920, 6
  %v6969 = vrot.slane %v5844, 6
  %v6970 = vsel %vm125, %v6968, %v6969
  %v6971 = vrot.slane %v5937, 6
  %v6972 = vsel %vm125, %v6969, %v6971
  %v6973 = vrot.slane %v5921, 6
  %v6974 = vrot.slane %v5847, 6
  %v6975 = vsel %vm125, %v6973, %v6974
  %v6976 = vrot.slane %v5938, 6
  %v6977 = vsel %vm125, %v6974, %v6976
  %v6978 = vrot.slane %v5922, 6
  %v6979 = vrot.slane %v5850, 6
  %v6980 = vsel %vm125, %v6978, %v6979
  %v6981 = vrot.slane %v5939, 6
  %v6982 = vsel %vm125, %v6979, %v6981
  %v6983 = vrot.slane %v5923, 6
  %v6984 = vrot.slane %v5853, 6
  %v6985 = vsel %vm125, %v6983, %v6984
  %v6986 = vrot.slane %v5940, 6
  %v6987 = vsel %vm125, %v6984, %v6986
  %6988 = vrot.lane.b32.xlu0 %v6920, 116
  %v6989 = vpop.permute.xlu0 %6988
  %6990 = vrot.lane.b32.xlu0 %v6922, 116
  %v6991 = vpop.permute.xlu0 %6990
  %6992 = vrot.lane.b32.xlu0 %v6925, 116
  %v6993 = vpop.permute.xlu0 %6992
  %6994 = vrot.lane.b32.xlu0 %v6927, 116
  %v6995 = vpop.permute.xlu0 %6994
  %6996 = vrot.lane.b32.xlu0 %v6930, 116
  %v6997 = vpop.permute.xlu0 %6996
  %6998 = vrot.lane.b32.xlu0 %v6932, 116
  %v6999 = vpop.permute.xlu0 %6998
  %7000 = vrot.lane.b32.xlu0 %v6935, 116
  %v7001 = vpop.permute.xlu0 %7000
  %7002 = vrot.lane.b32.xlu0 %v6937, 116
  %v7003 = vpop.permute.xlu0 %7002
  %7004 = vrot.lane.b32.xlu0 %v6940, 116
  %v7005 = vpop.permute.xlu0 %7004
  %7006 = vrot.lane.b32.xlu0 %v6942, 116
  %v7007 = vpop.permute.xlu0 %7006
  %7008 = vrot.lane.b32.xlu0 %v6945, 116
  %v7009 = vpop.permute.xlu0 %7008
  %7010 = vrot.lane.b32.xlu0 %v6947, 116
  %v7011 = vpop.permute.xlu0 %7010
  %7012 = vrot.lane.b32.xlu0 %v6950, 116
  %v7013 = vpop.permute.xlu0 %7012
  %7014 = vrot.lane.b32.xlu0 %v6952, 116
  %v7015 = vpop.permute.xlu0 %7014
  %7016 = vrot.lane.b32.xlu0 %v6955, 116
  %v7017 = vpop.permute.xlu0 %7016
  %7018 = vrot.lane.b32.xlu0 %v6957, 116
  %v7019 = vpop.permute.xlu0 %7018
  %7020 = vrot.lane.b32.xlu0 %v6960, 116
  %v7021 = vpop.permute.xlu0 %7020
  %7022 = vrot.lane.b32.xlu0 %v6962, 116
  %v7023 = vpop.permute.xlu0 %7022
  %7024 = vrot.lane.b32.xlu0 %v6965, 116
  %v7025 = vpop.permute.xlu0 %7024
  %7026 = vrot.lane.b32.xlu0 %v6967, 116
  %v7027 = vpop.permute.xlu0 %7026
  %7028 = vrot.lane.b32.xlu0 %v6970, 116
  %v7029 = vpop.permute.xlu0 %7028
  %7030 = vrot.lane.b32.xlu0 %v6972, 116
  %v7031 = vpop.permute.xlu0 %7030
  %7032 = vrot.lane.b32.xlu0 %v6975, 116
  %v7033 = vpop.permute.xlu0 %7032
  %7034 = vrot.lane.b32.xlu0 %v6977, 116
  %v7035 = vpop.permute.xlu0 %7034
  %7036 = vrot.lane.b32.xlu0 %v6980, 116
  %v7037 = vpop.permute.xlu0 %7036
  %7038 = vrot.lane.b32.xlu0 %v6982, 116
  %v7039 = vpop.permute.xlu0 %7038
  %7040 = vrot.lane.b32.xlu0 %v6985, 116
  %v7041 = vpop.permute.xlu0 %7040
  %7042 = vrot.lane.b32.xlu0 %v6987, 116
  %v7043 = vpop.permute.xlu0 %7042
  %v7072 = vadd.f32 %v6890, %v6989
  %v7073 = vadd.f32 %v6891, %v6991
  %v7074 = vadd.f32 %v6892, %v6993
  %v7075 = vadd.f32 %v6893, %v6995
  %v7076 = vadd.f32 %v6894, %v6997
  %v7077 = vadd.f32 %v6895, %v6999
  %v7078 = vadd.f32 %v6896, %v7001
  %v7079 = vadd.f32 %v6897, %v7003
  %v7080 = vadd.f32 %v6898, %v7005
  %v7081 = vadd.f32 %v6899, %v7007
  %v7082 = vadd.f32 %v6900, %v7009
  %v7083 = vadd.f32 %v6901, %v7011
  %v7084 = vadd.f32 %v6902, %v7013
  %v7085 = vadd.f32 %v6903, %v7015
  %v7086 = vadd.f32 %v6904, %v7017
  %v7087 = vadd.f32 %v6905, %v7019
  %v7088 = vadd.f32 %v6906, %v7021
  %v7089 = vadd.f32 %v6907, %v7023
  %v7090 = vadd.f32 %v6908, %v7025
  %v7091 = vadd.f32 %v6909, %v7027
  %v7092 = vadd.f32 %v6910, %v7029
  %v7093 = vadd.f32 %v6911, %v7031
  %v7094 = vadd.f32 %v6912, %v7033
  %v7095 = vadd.f32 %v6913, %v7035
  %v7096 = vadd.f32 %v6914, %v7037
  %v7097 = vadd.f32 %v6915, %v7039
  %v7098 = vadd.f32 %v6916, %v7041
  %v7099 = vadd.f32 %v6917, %v7043
  %7101 = vrot.lane.b32.xlu0 %v5910, 114
  %v7102 = vpop.permute.xlu0 %7101
  %7103 = vrot.lane.b32.xlu0 %v5814, 114
  %v7104 = vpop.permute.xlu0 %7103
  %7105 = vrot.lane.b32.xlu0 %v5911, 114
  %v7106 = vpop.permute.xlu0 %7105
  %7107 = vrot.lane.b32.xlu0 %v5817, 114
  %v7108 = vpop.permute.xlu0 %7107
  %7109 = vrot.lane.b32.xlu0 %v5912, 114
  %v7110 = vpop.permute.xlu0 %7109
  %7111 = vrot.lane.b32.xlu0 %v5820, 114
  %v7112 = vpop.permute.xlu0 %7111
  %7113 = vrot.lane.b32.xlu0 %v5913, 114
  %v7114 = vpop.permute.xlu0 %7113
  %7115 = vrot.lane.b32.xlu0 %v5823, 114
  %v7116 = vpop.permute.xlu0 %7115
  %7117 = vrot.lane.b32.xlu0 %v5914, 114
  %v7118 = vpop.permute.xlu0 %7117
  %7119 = vrot.lane.b32.xlu0 %v5826, 114
  %v7120 = vpop.permute.xlu0 %7119
  %7121 = vrot.lane.b32.xlu0 %v5915, 114
  %v7122 = vpop.permute.xlu0 %7121
  %7123 = vrot.lane.b32.xlu0 %v5829, 114
  %v7124 = vpop.permute.xlu0 %7123
  %7125 = vrot.lane.b32.xlu0 %v5916, 114
  %v7126 = vpop.permute.xlu0 %7125
  %7127 = vrot.lane.b32.xlu0 %v5832, 114
  %v7128 = vpop.permute.xlu0 %7127
  %7129 = vrot.lane.b32.xlu0 %v5917, 114
  %v7130 = vpop.permute.xlu0 %7129
  %7131 = vrot.lane.b32.xlu0 %v5835, 114
  %v7132 = vpop.permute.xlu0 %7131
  %7133 = vrot.lane.b32.xlu0 %v5918, 114
  %v7134 = vpop.permute.xlu0 %7133
  %7135 = vrot.lane.b32.xlu0 %v5838, 114
  %v7136 = vpop.permute.xlu0 %7135
  %7137 = vrot.lane.b32.xlu0 %v5919, 114
  %v7138 = vpop.permute.xlu0 %7137
  %7139 = vrot.lane.b32.xlu0 %v5841, 114
  %v7140 = vpop.permute.xlu0 %7139
  %7141 = vrot.lane.b32.xlu0 %v5920, 114
  %v7142 = vpop.permute.xlu0 %7141
  %7143 = vrot.lane.b32.xlu0 %v5844, 114
  %v7144 = vpop.permute.xlu0 %7143
  %7145 = vrot.lane.b32.xlu0 %v5921, 114
  %v7146 = vpop.permute.xlu0 %7145
  %7147 = vrot.lane.b32.xlu0 %v5847, 114
  %v7148 = vpop.permute.xlu0 %7147
  %7149 = vrot.lane.b32.xlu0 %v5922, 114
  %v7150 = vpop.permute.xlu0 %7149
  %7151 = vrot.lane.b32.xlu0 %v5850, 114
  %v7152 = vpop.permute.xlu0 %7151
  %7153 = vrot.lane.b32.xlu0 %v5923, 114
  %v7154 = vpop.permute.xlu0 %7153
  %7155 = vrot.lane.b32.xlu0 %v5853, 114
  %v7156 = vpop.permute.xlu0 %7155
  %7157 = vrot.lane.b32.xlu0 %v5924, 114
  %v7158 = vpop.permute.xlu0 %7157
  %7159 = vrot.lane.b32.xlu0 %v5856, 114
  %v7160 = vpop.permute.xlu0 %7159
  %v7191 = vadd.f32 %v7072, %v7102
  %v7192 = vadd.f32 %v7073, %v7104
  %v7193 = vadd.f32 %v7072, %v7106
  %v7194 = vadd.f32 %v7073, %v7108
  %v7195 = vadd.f32 %v7074, %v7110
  %v7196 = vadd.f32 %v7075, %v7112
  %v7197 = vadd.f32 %v7076, %v7114
  %v7198 = vadd.f32 %v7077, %v7116
  %v7199 = vadd.f32 %v7078, %v7118
  %v7200 = vadd.f32 %v7079, %v7120
  %v7201 = vadd.f32 %v7080, %v7122
  %v7202 = vadd.f32 %v7081, %v7124
  %v7203 = vadd.f32 %v7082, %v7126
  %v7204 = vadd.f32 %v7083, %v7128
  %v7205 = vadd.f32 %v7084, %v7130
  %v7206 = vadd.f32 %v7085, %v7132
  %v7207 = vadd.f32 %v7086, %v7134
  %v7208 = vadd.f32 %v7087, %v7136
  %v7209 = vadd.f32 %v7088, %v7138
  %v7210 = vadd.f32 %v7089, %v7140
  %v7211 = vadd.f32 %v7090, %v7142
  %v7212 = vadd.f32 %v7091, %v7144
  %v7213 = vadd.f32 %v7092, %v7146
  %v7214 = vadd.f32 %v7093, %v7148
  %v7215 = vadd.f32 %v7094, %v7150
  %v7216 = vadd.f32 %v7095, %v7152
  %v7217 = vadd.f32 %v7096, %v7154
  %v7218 = vadd.f32 %v7097, %v7156
  %v7219 = vadd.f32 %v7098, %v7158
  %v7220 = vadd.f32 %v7099, %v7160
  %v7222 = vrot.slane %v5924, 1
  %v7223 = vrot.slane %v5856, 1
  %v7224 = vsel %vm294, %v7222, %v7223
  %v7225 = vrot.slane %v5941, 1
  %v7226 = vsel %vm294, %v7223, %v7225
  %7227 = vrot.lane.b32.xlu0 %v6010, 112
  %v7228 = vpop.permute.xlu0 %7227
  %7229 = vrot.lane.b32.xlu0 %v6012, 112
  %v7230 = vpop.permute.xlu0 %7229
  %7231 = vrot.lane.b32.xlu0 %v6015, 112
  %v7232 = vpop.permute.xlu0 %7231
  %7233 = vrot.lane.b32.xlu0 %v6017, 112
  %v7234 = vpop.permute.xlu0 %7233
  %7235 = vrot.lane.b32.xlu0 %v6020, 112
  %v7236 = vpop.permute.xlu0 %7235
  %7237 = vrot.lane.b32.xlu0 %v6022, 112
  %v7238 = vpop.permute.xlu0 %7237
  %7239 = vrot.lane.b32.xlu0 %v6025, 112
  %v7240 = vpop.permute.xlu0 %7239
  %7241 = vrot.lane.b32.xlu0 %v6027, 112
  %v7242 = vpop.permute.xlu0 %7241
  %7243 = vrot.lane.b32.xlu0 %v6030, 112
  %v7244 = vpop.permute.xlu0 %7243
  %7245 = vrot.lane.b32.xlu0 %v6032, 112
  %v7246 = vpop.permute.xlu0 %7245
  %7247 = vrot.lane.b32.xlu0 %v6035, 112
  %v7248 = vpop.permute.xlu0 %7247
  %7249 = vrot.lane.b32.xlu0 %v6037, 112
  %v7250 = vpop.permute.xlu0 %7249
  %7251 = vrot.lane.b32.xlu0 %v6040, 112
  %v7252 = vpop.permute.xlu0 %7251
  %7253 = vrot.lane.b32.xlu0 %v6042, 112
  %v7254 = vpop.permute.xlu0 %7253
  %7255 = vrot.lane.b32.xlu0 %v6045, 112
  %v7256 = vpop.permute.xlu0 %7255
  %7257 = vrot.lane.b32.xlu0 %v6047, 112
  %v7258 = vpop.permute.xlu0 %7257
  %7259 = vrot.lane.b32.xlu0 %v6050, 112
  %v7260 = vpop.permute.xlu0 %7259
  %7261 = vrot.lane.b32.xlu0 %v6052, 112
  %v7262 = vpop.permute.xlu0 %7261
  %7263 = vrot.lane.b32.xlu0 %v6055, 112
  %v7264 = vpop.permute.xlu0 %7263
  %7265 = vrot.lane.b32.xlu0 %v6057, 112
  %v7266 = vpop.permute.xlu0 %7265
  %7267 = vrot.lane.b32.xlu0 %v6060, 112
  %v7268 = vpop.permute.xlu0 %7267
  %7269 = vrot.lane.b32.xlu0 %v6062, 112
  %v7270 = vpop.permute.xlu0 %7269
  %7271 = vrot.lane.b32.xlu0 %v6065, 112
  %v7272 = vpop.permute.xlu0 %7271
  %7273 = vrot.lane.b32.xlu0 %v6067, 112
  %v7274 = vpop.permute.xlu0 %7273
  %7275 = vrot.lane.b32.xlu0 %v6070, 112
  %v7276 = vpop.permute.xlu0 %7275
  %7277 = vrot.lane.b32.xlu0 %v6072, 112
  %v7278 = vpop.permute.xlu0 %7277
  %7279 = vrot.lane.b32.xlu0 %v6075, 112
  %v7280 = vpop.permute.xlu0 %7279
  %7281 = vrot.lane.b32.xlu0 %v6077, 112
  %v7282 = vpop.permute.xlu0 %7281
  %7283 = vrot.lane.b32.xlu0 %v7224, 112
  %v7284 = vpop.permute.xlu0 %7283
  %7285 = vrot.lane.b32.xlu0 %v7226, 112
  %v7286 = vpop.permute.xlu0 %7285
  %v7317 = vadd.f32 %v7191, %v7228
  %v7318 = vadd.f32 %v7192, %v7230
  %v7319 = vadd.f32 %v7193, %v7232
  %v7320 = vadd.f32 %v7194, %v7234
  %v7321 = vadd.f32 %v7195, %v7236
  %v7322 = vadd.f32 %v7196, %v7238
  %v7323 = vadd.f32 %v7197, %v7240
  %v7324 = vadd.f32 %v7198, %v7242
  %v7325 = vadd.f32 %v7199, %v7244
  %v7326 = vadd.f32 %v7200, %v7246
  %v7327 = vadd.f32 %v7201, %v7248
  %v7328 = vadd.f32 %v7202, %v7250
  %v7329 = vadd.f32 %v7203, %v7252
  %v7330 = vadd.f32 %v7204, %v7254
  %v7331 = vadd.f32 %v7205, %v7256
  %v7332 = vadd.f32 %v7206, %v7258
  %v7333 = vadd.f32 %v7207, %v7260
  %v7334 = vadd.f32 %v7208, %v7262
  %v7335 = vadd.f32 %v7209, %v7264
  %v7336 = vadd.f32 %v7210, %v7266
  %v7337 = vadd.f32 %v7211, %v7268
  %v7338 = vadd.f32 %v7212, %v7270
  %v7339 = vadd.f32 %v7213, %v7272
  %v7340 = vadd.f32 %v7214, %v7274
  %v7341 = vadd.f32 %v7215, %v7276
  %v7342 = vadd.f32 %v7216, %v7278
  %v7343 = vadd.f32 %v7217, %v7280
  %v7344 = vadd.f32 %v7218, %v7282
  %v7345 = vadd.f32 %v7219, %v7284
  %v7346 = vadd.f32 %v7220, %v7286
  %v7347 = vrot.slane %v5924, 2
  %v7348 = vrot.slane %v5856, 2
  %v7349 = vsel %vm482, %v7347, %v7348
  %v7350 = vrot.slane %v5941, 2
  %v7351 = vsel %vm482, %v7348, %v7350
  %7352 = vrot.lane.b32.xlu0 %v6192, 110
  %v7353 = vpop.permute.xlu0 %7352
  %7354 = vrot.lane.b32.xlu0 %v6194, 110
  %v7355 = vpop.permute.xlu0 %7354
  %7356 = vrot.lane.b32.xlu0 %v6197, 110
  %v7357 = vpop.permute.xlu0 %7356
  %7358 = vrot.lane.b32.xlu0 %v6199, 110
  %v7359 = vpop.permute.xlu0 %7358
  %7360 = vrot.lane.b32.xlu0 %v6202, 110
  %v7361 = vpop.permute.xlu0 %7360
  %7362 = vrot.lane.b32.xlu0 %v6204, 110
  %v7363 = vpop.permute.xlu0 %7362
  %7364 = vrot.lane.b32.xlu0 %v6207, 110
  %v7365 = vpop.permute.xlu0 %7364
  %7366 = vrot.lane.b32.xlu0 %v6209, 110
  %v7367 = vpop.permute.xlu0 %7366
  %7368 = vrot.lane.b32.xlu0 %v6212, 110
  %v7369 = vpop.permute.xlu0 %7368
  %7370 = vrot.lane.b32.xlu0 %v6214, 110
  %v7371 = vpop.permute.xlu0 %7370
  %7372 = vrot.lane.b32.xlu0 %v6217, 110
  %v7373 = vpop.permute.xlu0 %7372
  %7374 = vrot.lane.b32.xlu0 %v6219, 110
  %v7375 = vpop.permute.xlu0 %7374
  %7376 = vrot.lane.b32.xlu0 %v6222, 110
  %v7377 = vpop.permute.xlu0 %7376
  %7378 = vrot.lane.b32.xlu0 %v6224, 110
  %v7379 = vpop.permute.xlu0 %7378
  %7380 = vrot.lane.b32.xlu0 %v6227, 110
  %v7381 = vpop.permute.xlu0 %7380
  %7382 = vrot.lane.b32.xlu0 %v6229, 110
  %v7383 = vpop.permute.xlu0 %7382
  %7384 = vrot.lane.b32.xlu0 %v6232, 110
  %v7385 = vpop.permute.xlu0 %7384
  %7386 = vrot.lane.b32.xlu0 %v6234, 110
  %v7387 = vpop.permute.xlu0 %7386
  %7388 = vrot.lane.b32.xlu0 %v6237, 110
  %v7389 = vpop.permute.xlu0 %7388
  %7390 = vrot.lane.b32.xlu0 %v6239, 110
  %v7391 = vpop.permute.xlu0 %7390
  %7392 = vrot.lane.b32.xlu0 %v6242, 110
  %v7393 = vpop.permute.xlu0 %7392
  %7394 = vrot.lane.b32.xlu0 %v6244, 110
  %v7395 = vpop.permute.xlu0 %7394
  %7396 = vrot.lane.b32.xlu0 %v6247, 110
  %v7397 = vpop.permute.xlu0 %7396
  %7398 = vrot.lane.b32.xlu0 %v6249, 110
  %v7399 = vpop.permute.xlu0 %7398
  %7400 = vrot.lane.b32.xlu0 %v6252, 110
  %v7401 = vpop.permute.xlu0 %7400
  %7402 = vrot.lane.b32.xlu0 %v6254, 110
  %v7403 = vpop.permute.xlu0 %7402
  %7404 = vrot.lane.b32.xlu0 %v6257, 110
  %v7405 = vpop.permute.xlu0 %7404
  %7406 = vrot.lane.b32.xlu0 %v6259, 110
  %v7407 = vpop.permute.xlu0 %7406
  %7408 = vrot.lane.b32.xlu0 %v7349, 110
  %v7409 = vpop.permute.xlu0 %7408
  %7410 = vrot.lane.b32.xlu0 %v7351, 110
  %v7411 = vpop.permute.xlu0 %7410
  %v7442 = vadd.f32 %v7317, %v7353
  %v7443 = vadd.f32 %v7318, %v7355
  %v7444 = vadd.f32 %v7319, %v7357
  %v7445 = vadd.f32 %v7320, %v7359
  %v7446 = vadd.f32 %v7321, %v7361
  %v7447 = vadd.f32 %v7322, %v7363
  %v7448 = vadd.f32 %v7323, %v7365
  %v7449 = vadd.f32 %v7324, %v7367
  %v7450 = vadd.f32 %v7325, %v7369
  %v7451 = vadd.f32 %v7326, %v7371
  %v7452 = vadd.f32 %v7327, %v7373
  %v7453 = vadd.f32 %v7328, %v7375
  %v7454 = vadd.f32 %v7329, %v7377
  %v7455 = vadd.f32 %v7330, %v7379
  %v7456 = vadd.f32 %v7331, %v7381
  %v7457 = vadd.f32 %v7332, %v7383
  %v7458 = vadd.f32 %v7333, %v7385
  %v7459 = vadd.f32 %v7334, %v7387
  %v7460 = vadd.f32 %v7335, %v7389
  %v7461 = vadd.f32 %v7336, %v7391
  %v7462 = vadd.f32 %v7337, %v7393
  %v7463 = vadd.f32 %v7338, %v7395
  %v7464 = vadd.f32 %v7339, %v7397
  %v7465 = vadd.f32 %v7340, %v7399
  %v7466 = vadd.f32 %v7341, %v7401
  %v7467 = vadd.f32 %v7342, %v7403
  %v7468 = vadd.f32 %v7343, %v7405
  %v7469 = vadd.f32 %v7344, %v7407
  %v7470 = vadd.f32 %v7345, %v7409
  %v7471 = vadd.f32 %v7346, %v7411
  %v7472 = vrot.slane %v5924, 3
  %v7473 = vrot.slane %v5856, 3
  %v7474 = vsel %vm670, %v7472, %v7473
  %v7475 = vrot.slane %v5941, 3
  %v7476 = vsel %vm670, %v7473, %v7475
  %7477 = vrot.lane.b32.xlu0 %v6374, 108
  %v7478 = vpop.permute.xlu0 %7477
  %7479 = vrot.lane.b32.xlu0 %v6376, 108
  %v7480 = vpop.permute.xlu0 %7479
  %7481 = vrot.lane.b32.xlu0 %v6379, 108
  %v7482 = vpop.permute.xlu0 %7481
  %7483 = vrot.lane.b32.xlu0 %v6381, 108
  %v7484 = vpop.permute.xlu0 %7483
  %7485 = vrot.lane.b32.xlu0 %v6384, 108
  %v7486 = vpop.permute.xlu0 %7485
  %7487 = vrot.lane.b32.xlu0 %v6386, 108
  %v7488 = vpop.permute.xlu0 %7487
  %7489 = vrot.lane.b32.xlu0 %v6389, 108
  %v7490 = vpop.permute.xlu0 %7489
  %7491 = vrot.lane.b32.xlu0 %v6391, 108
  %v7492 = vpop.permute.xlu0 %7491
  %7493 = vrot.lane.b32.xlu0 %v6394, 108
  %v7494 = vpop.permute.xlu0 %7493
  %7495 = vrot.lane.b32.xlu0 %v6396, 108
  %v7496 = vpop.permute.xlu0 %7495
  %7497 = vrot.lane.b32.xlu0 %v6399, 108
  %v7498 = vpop.permute.xlu0 %7497
  %7499 = vrot.lane.b32.xlu0 %v6401, 108
  %v7500 = vpop.permute.xlu0 %7499
  %7501 = vrot.lane.b32.xlu0 %v6404, 108
  %v7502 = vpop.permute.xlu0 %7501
  %7503 = vrot.lane.b32.xlu0 %v6406, 108
  %v7504 = vpop.permute.xlu0 %7503
  %7505 = vrot.lane.b32.xlu0 %v6409, 108
  %v7506 = vpop.permute.xlu0 %7505
  %7507 = vrot.lane.b32.xlu0 %v6411, 108
  %v7508 = vpop.permute.xlu0 %7507
  %7509 = vrot.lane.b32.xlu0 %v6414, 108
  %v7510 = vpop.permute.xlu0 %7509
  %7511 = vrot.lane.b32.xlu0 %v6416, 108
  %v7512 = vpop.permute.xlu0 %7511
  %7513 = vrot.lane.b32.xlu0 %v6419, 108
  %v7514 = vpop.permute.xlu0 %7513
  %7515 = vrot.lane.b32.xlu0 %v6421, 108
  %v7516 = vpop.permute.xlu0 %7515
  %7517 = vrot.lane.b32.xlu0 %v6424, 108
  %v7518 = vpop.permute.xlu0 %7517
  %7519 = vrot.lane.b32.xlu0 %v6426, 108
  %v7520 = vpop.permute.xlu0 %7519
  %7521 = vrot.lane.b32.xlu0 %v6429, 108
  %v7522 = vpop.permute.xlu0 %7521
  %7523 = vrot.lane.b32.xlu0 %v6431, 108
  %v7524 = vpop.permute.xlu0 %7523
  %7525 = vrot.lane.b32.xlu0 %v6434, 108
  %v7526 = vpop.permute.xlu0 %7525
  %7527 = vrot.lane.b32.xlu0 %v6436, 108
  %v7528 = vpop.permute.xlu0 %7527
  %7529 = vrot.lane.b32.xlu0 %v6439, 108
  %v7530 = vpop.permute.xlu0 %7529
  %7531 = vrot.lane.b32.xlu0 %v6441, 108
  %v7532 = vpop.permute.xlu0 %7531
  %7533 = vrot.lane.b32.xlu0 %v7474, 108
  %v7534 = vpop.permute.xlu0 %7533
  %7535 = vrot.lane.b32.xlu0 %v7476, 108
  %v7536 = vpop.permute.xlu0 %7535
  %v7567 = vadd.f32 %v7442, %v7478
  %v7568 = vadd.f32 %v7443, %v7480
  %v7569 = vadd.f32 %v7444, %v7482
  %v7570 = vadd.f32 %v7445, %v7484
  %v7571 = vadd.f32 %v7446, %v7486
  %v7572 = vadd.f32 %v7447, %v7488
  %v7573 = vadd.f32 %v7448, %v7490
  %v7574 = vadd.f32 %v7449, %v7492
  %v7575 = vadd.f32 %v7450, %v7494
  %v7576 = vadd.f32 %v7451, %v7496
  %v7577 = vadd.f32 %v7452, %v7498
  %v7578 = vadd.f32 %v7453, %v7500
  %v7579 = vadd.f32 %v7454, %v7502
  %v7580 = vadd.f32 %v7455, %v7504
  %v7581 = vadd.f32 %v7456, %v7506
  %v7582 = vadd.f32 %v7457, %v7508
  %v7583 = vadd.f32 %v7458, %v7510
  %v7584 = vadd.f32 %v7459, %v7512
  %v7585 = vadd.f32 %v7460, %v7514
  %v7586 = vadd.f32 %v7461, %v7516
  %v7587 = vadd.f32 %v7462, %v7518
  %v7588 = vadd.f32 %v7463, %v7520
  %v7589 = vadd.f32 %v7464, %v7522
  %v7590 = vadd.f32 %v7465, %v7524
  %v7591 = vadd.f32 %v7466, %v7526
  %v7592 = vadd.f32 %v7467, %v7528
  %v7593 = vadd.f32 %v7468, %v7530
  %v7594 = vadd.f32 %v7469, %v7532
  %v7595 = vadd.f32 %v7470, %v7534
  %v7596 = vadd.f32 %v7471, %v7536
  %v7597 = vrot.slane %v5924, 4
  %v7598 = vrot.slane %v5856, 4
  %v7599 = vsel %vm858, %v7597, %v7598
  %v7600 = vrot.slane %v5941, 4
  %v7601 = vsel %vm858, %v7598, %v7600
  %7602 = vrot.lane.b32.xlu0 %v6556, 106
  %v7603 = vpop.permute.xlu0 %7602
  %7604 = vrot.lane.b32.xlu0 %v6558, 106
  %v7605 = vpop.permute.xlu0 %7604
  %7606 = vrot.lane.b32.xlu0 %v6561, 106
  %v7607 = vpop.permute.xlu0 %7606
  %7608 = vrot.lane.b32.xlu0 %v6563, 106
  %v7609 = vpop.permute.xlu0 %7608
  %7610 = vrot.lane.b32.xlu0 %v6566, 106
  %v7611 = vpop.permute.xlu0 %7610
  %7612 = vrot.lane.b32.xlu0 %v6568, 106
  %v7613 = vpop.permute.xlu0 %7612
  %7614 = vrot.lane.b32.xlu0 %v6571, 106
  %v7615 = vpop.permute.xlu0 %7614
  %7616 = vrot.lane.b32.xlu0 %v6573, 106
  %v7617 = vpop.permute.xlu0 %7616
  %7618 = vrot.lane.b32.xlu0 %v6576, 106
  %v7619 = vpop.permute.xlu0 %7618
  %7620 = vrot.lane.b32.xlu0 %v6578, 106
  %v7621 = vpop.permute.xlu0 %7620
  %7622 = vrot.lane.b32.xlu0 %v6581, 106
  %v7623 = vpop.permute.xlu0 %7622
  %7624 = vrot.lane.b32.xlu0 %v6583, 106
  %v7625 = vpop.permute.xlu0 %7624
  %7626 = vrot.lane.b32.xlu0 %v6586, 106
  %v7627 = vpop.permute.xlu0 %7626
  %7628 = vrot.lane.b32.xlu0 %v6588, 106
  %v7629 = vpop.permute.xlu0 %7628
  %7630 = vrot.lane.b32.xlu0 %v6591, 106
  %v7631 = vpop.permute.xlu0 %7630
  %7632 = vrot.lane.b32.xlu0 %v6593, 106
  %v7633 = vpop.permute.xlu0 %7632
  %7634 = vrot.lane.b32.xlu0 %v6596, 106
  %v7635 = vpop.permute.xlu0 %7634
  %7636 = vrot.lane.b32.xlu0 %v6598, 106
  %v7637 = vpop.permute.xlu0 %7636
  %7638 = vrot.lane.b32.xlu0 %v6601, 106
  %v7639 = vpop.permute.xlu0 %7638
  %7640 = vrot.lane.b32.xlu0 %v6603, 106
  %v7641 = vpop.permute.xlu0 %7640
  %7642 = vrot.lane.b32.xlu0 %v6606, 106
  %v7643 = vpop.permute.xlu0 %7642
  %7644 = vrot.lane.b32.xlu0 %v6608, 106
  %v7645 = vpop.permute.xlu0 %7644
  %7646 = vrot.lane.b32.xlu0 %v6611, 106
  %v7647 = vpop.permute.xlu0 %7646
  %7648 = vrot.lane.b32.xlu0 %v6613, 106
  %v7649 = vpop.permute.xlu0 %7648
  %7650 = vrot.lane.b32.xlu0 %v6616, 106
  %v7651 = vpop.permute.xlu0 %7650
  %7652 = vrot.lane.b32.xlu0 %v6618, 106
  %v7653 = vpop.permute.xlu0 %7652
  %7654 = vrot.lane.b32.xlu0 %v6621, 106
  %v7655 = vpop.permute.xlu0 %7654
  %7656 = vrot.lane.b32.xlu0 %v6623, 106
  %v7657 = vpop.permute.xlu0 %7656
  %7658 = vrot.lane.b32.xlu0 %v7599, 106
  %v7659 = vpop.permute.xlu0 %7658
  %7660 = vrot.lane.b32.xlu0 %v7601, 106
  %v7661 = vpop.permute.xlu0 %7660
  %v7692 = vadd.f32 %v7567, %v7603
  %v7693 = vadd.f32 %v7568, %v7605
  %v7694 = vadd.f32 %v7569, %v7607
  %v7695 = vadd.f32 %v7570, %v7609
  %v7696 = vadd.f32 %v7571, %v7611
  %v7697 = vadd.f32 %v7572, %v7613
  %v7698 = vadd.f32 %v7573, %v7615
  %v7699 = vadd.f32 %v7574, %v7617
  %v7700 = vadd.f32 %v7575, %v7619
  %v7701 = vadd.f32 %v7576, %v7621
  %v7702 = vadd.f32 %v7577, %v7623
  %v7703 = vadd.f32 %v7578, %v7625
  %v7704 = vadd.f32 %v7579, %v7627
  %v7705 = vadd.f32 %v7580, %v7629
  %v7706 = vadd.f32 %v7581, %v7631
  %v7707 = vadd.f32 %v7582, %v7633
  %v7708 = vadd.f32 %v7583, %v7635
  %v7709 = vadd.f32 %v7584, %v7637
  %v7710 = vadd.f32 %v7585, %v7639
  %v7711 = vadd.f32 %v7586, %v7641
  %v7712 = vadd.f32 %v7587, %v7643
  %v7713 = vadd.f32 %v7588, %v7645
  %v7714 = vadd.f32 %v7589, %v7647
  %v7715 = vadd.f32 %v7590, %v7649
  %v7716 = vadd.f32 %v7591, %v7651
  %v7717 = vadd.f32 %v7592, %v7653
  %v7718 = vadd.f32 %v7593, %v7655
  %v7719 = vadd.f32 %v7594, %v7657
  %v7720 = vadd.f32 %v7595, %v7659
  %v7721 = vadd.f32 %v7596, %v7661
  %v7722 = vrot.slane %v5924, 5
  %v7723 = vrot.slane %v5856, 5
  %v7724 = vsel %vm1844, %v7722, %v7723
  %v7725 = vrot.slane %v5941, 5
  %v7726 = vsel %vm1844, %v7723, %v7725
  %7727 = vrot.lane.b32.xlu0 %v6738, 104
  %v7728 = vpop.permute.xlu0 %7727
  %7729 = vrot.lane.b32.xlu0 %v6740, 104
  %v7730 = vpop.permute.xlu0 %7729
  %7731 = vrot.lane.b32.xlu0 %v6743, 104
  %v7732 = vpop.permute.xlu0 %7731
  %7733 = vrot.lane.b32.xlu0 %v6745, 104
  %v7734 = vpop.permute.xlu0 %7733
  %7735 = vrot.lane.b32.xlu0 %v6748, 104
  %v7736 = vpop.permute.xlu0 %7735
  %7737 = vrot.lane.b32.xlu0 %v6750, 104
  %v7738 = vpop.permute.xlu0 %7737
  %7739 = vrot.lane.b32.xlu0 %v6753, 104
  %v7740 = vpop.permute.xlu0 %7739
  %7741 = vrot.lane.b32.xlu0 %v6755, 104
  %v7742 = vpop.permute.xlu0 %7741
  %7743 = vrot.lane.b32.xlu0 %v6758, 104
  %v7744 = vpop.permute.xlu0 %7743
  %7745 = vrot.lane.b32.xlu0 %v6760, 104
  %v7746 = vpop.permute.xlu0 %7745
  %7747 = vrot.lane.b32.xlu0 %v6763, 104
  %v7748 = vpop.permute.xlu0 %7747
  %7749 = vrot.lane.b32.xlu0 %v6765, 104
  %v7750 = vpop.permute.xlu0 %7749
  %7751 = vrot.lane.b32.xlu0 %v6768, 104
  %v7752 = vpop.permute.xlu0 %7751
  %7753 = vrot.lane.b32.xlu0 %v6770, 104
  %v7754 = vpop.permute.xlu0 %7753
  %7755 = vrot.lane.b32.xlu0 %v6773, 104
  %v7756 = vpop.permute.xlu0 %7755
  %7757 = vrot.lane.b32.xlu0 %v6775, 104
  %v7758 = vpop.permute.xlu0 %7757
  %7759 = vrot.lane.b32.xlu0 %v6778, 104
  %v7760 = vpop.permute.xlu0 %7759
  %7761 = vrot.lane.b32.xlu0 %v6780, 104
  %v7762 = vpop.permute.xlu0 %7761
  %7763 = vrot.lane.b32.xlu0 %v6783, 104
  %v7764 = vpop.permute.xlu0 %7763
  %7765 = vrot.lane.b32.xlu0 %v6785, 104
  %v7766 = vpop.permute.xlu0 %7765
  %7767 = vrot.lane.b32.xlu0 %v6788, 104
  %v7768 = vpop.permute.xlu0 %7767
  %7769 = vrot.lane.b32.xlu0 %v6790, 104
  %v7770 = vpop.permute.xlu0 %7769
  %7771 = vrot.lane.b32.xlu0 %v6793, 104
  %v7772 = vpop.permute.xlu0 %7771
  %7773 = vrot.lane.b32.xlu0 %v6795, 104
  %v7774 = vpop.permute.xlu0 %7773
  %7775 = vrot.lane.b32.xlu0 %v6798, 104
  %v7776 = vpop.permute.xlu0 %7775
  %7777 = vrot.lane.b32.xlu0 %v6800, 104
  %v7778 = vpop.permute.xlu0 %7777
  %7779 = vrot.lane.b32.xlu0 %v6803, 104
  %v7780 = vpop.permute.xlu0 %7779
  %7781 = vrot.lane.b32.xlu0 %v6805, 104
  %v7782 = vpop.permute.xlu0 %7781
  %7783 = vrot.lane.b32.xlu0 %v7724, 104
  %v7784 = vpop.permute.xlu0 %7783
  %7785 = vrot.lane.b32.xlu0 %v7726, 104
  %v7786 = vpop.permute.xlu0 %7785
  %v7817 = vadd.f32 %v7692, %v7728
  %v7818 = vadd.f32 %v7693, %v7730
  %v7819 = vadd.f32 %v7694, %v7732
  %v7820 = vadd.f32 %v7695, %v7734
  %v7821 = vadd.f32 %v7696, %v7736
  %v7822 = vadd.f32 %v7697, %v7738
  %v7823 = vadd.f32 %v7698, %v7740
  %v7824 = vadd.f32 %v7699, %v7742
  %v7825 = vadd.f32 %v7700, %v7744
  %v7826 = vadd.f32 %v7701, %v7746
  %v7827 = vadd.f32 %v7702, %v7748
  %v7828 = vadd.f32 %v7703, %v7750
  %v7829 = vadd.f32 %v7704, %v7752
  %v7830 = vadd.f32 %v7705, %v7754
  %v7831 = vadd.f32 %v7706, %v7756
  %v7832 = vadd.f32 %v7707, %v7758
  %v7833 = vadd.f32 %v7708, %v7760
  %v7834 = vadd.f32 %v7709, %v7762
  %v7835 = vadd.f32 %v7710, %v7764
  %v7836 = vadd.f32 %v7711, %v7766
  %v7837 = vadd.f32 %v7712, %v7768
  %v7838 = vadd.f32 %v7713, %v7770
  %v7839 = vadd.f32 %v7714, %v7772
  %v7840 = vadd.f32 %v7715, %v7774
  %v7841 = vadd.f32 %v7716, %v7776
  %v7842 = vadd.f32 %v7717, %v7778
  %v7843 = vadd.f32 %v7718, %v7780
  %v7844 = vadd.f32 %v7719, %v7782
  %v7845 = vadd.f32 %v7720, %v7784
  %v7846 = vadd.f32 %v7721, %v7786
  %v7847 = vrot.slane %v5924, 6
  %v7848 = vrot.slane %v5856, 6
  %v7849 = vsel %vm125, %v7847, %v7848
  %v7850 = vrot.slane %v5941, 6
  %v7851 = vsel %vm125, %v7848, %v7850
  %7852 = vrot.lane.b32.xlu0 %v6920, 102
  %v7853 = vpop.permute.xlu0 %7852
  %7854 = vrot.lane.b32.xlu0 %v6922, 102
  %v7855 = vpop.permute.xlu0 %7854
  %7856 = vrot.lane.b32.xlu0 %v6925, 102
  %v7857 = vpop.permute.xlu0 %7856
  %7858 = vrot.lane.b32.xlu0 %v6927, 102
  %v7859 = vpop.permute.xlu0 %7858
  %7860 = vrot.lane.b32.xlu0 %v6930, 102
  %v7861 = vpop.permute.xlu0 %7860
  %7862 = vrot.lane.b32.xlu0 %v6932, 102
  %v7863 = vpop.permute.xlu0 %7862
  %7864 = vrot.lane.b32.xlu0 %v6935, 102
  %v7865 = vpop.permute.xlu0 %7864
  %7866 = vrot.lane.b32.xlu0 %v6937, 102
  %v7867 = vpop.permute.xlu0 %7866
  %7868 = vrot.lane.b32.xlu0 %v6940, 102
  %v7869 = vpop.permute.xlu0 %7868
  %7870 = vrot.lane.b32.xlu0 %v6942, 102
  %v7871 = vpop.permute.xlu0 %7870
  %7872 = vrot.lane.b32.xlu0 %v6945, 102
  %v7873 = vpop.permute.xlu0 %7872
  %7874 = vrot.lane.b32.xlu0 %v6947, 102
  %v7875 = vpop.permute.xlu0 %7874
  %7876 = vrot.lane.b32.xlu0 %v6950, 102
  %v7877 = vpop.permute.xlu0 %7876
  %7878 = vrot.lane.b32.xlu0 %v6952, 102
  %v7879 = vpop.permute.xlu0 %7878
  %7880 = vrot.lane.b32.xlu0 %v6955, 102
  %v7881 = vpop.permute.xlu0 %7880
  %7882 = vrot.lane.b32.xlu0 %v6957, 102
  %v7883 = vpop.permute.xlu0 %7882
  %7884 = vrot.lane.b32.xlu0 %v6960, 102
  %v7885 = vpop.permute.xlu0 %7884
  %7886 = vrot.lane.b32.xlu0 %v6962, 102
  %v7887 = vpop.permute.xlu0 %7886
  %7888 = vrot.lane.b32.xlu0 %v6965, 102
  %v7889 = vpop.permute.xlu0 %7888
  %7890 = vrot.lane.b32.xlu0 %v6967, 102
  %v7891 = vpop.permute.xlu0 %7890
  %7892 = vrot.lane.b32.xlu0 %v6970, 102
  %v7893 = vpop.permute.xlu0 %7892
  %7894 = vrot.lane.b32.xlu0 %v6972, 102
  %v7895 = vpop.permute.xlu0 %7894
  %7896 = vrot.lane.b32.xlu0 %v6975, 102
  %v7897 = vpop.permute.xlu0 %7896
  %7898 = vrot.lane.b32.xlu0 %v6977, 102
  %v7899 = vpop.permute.xlu0 %7898
  %7900 = vrot.lane.b32.xlu0 %v6980, 102
  %v7901 = vpop.permute.xlu0 %7900
  %7902 = vrot.lane.b32.xlu0 %v6982, 102
  %v7903 = vpop.permute.xlu0 %7902
  %7904 = vrot.lane.b32.xlu0 %v6985, 102
  %v7905 = vpop.permute.xlu0 %7904
  %7906 = vrot.lane.b32.xlu0 %v6987, 102
  %v7907 = vpop.permute.xlu0 %7906
  %7908 = vrot.lane.b32.xlu0 %v7849, 102
  %v7909 = vpop.permute.xlu0 %7908
  %7910 = vrot.lane.b32.xlu0 %v7851, 102
  %v7911 = vpop.permute.xlu0 %7910
  %v7942 = vadd.f32 %v7817, %v7853
  %v7943 = vadd.f32 %v7818, %v7855
  %v7944 = vadd.f32 %v7819, %v7857
  %v7945 = vadd.f32 %v7820, %v7859
  %v7946 = vadd.f32 %v7821, %v7861
  %v7947 = vadd.f32 %v7822, %v7863
  %v7948 = vadd.f32 %v7823, %v7865
  %v7949 = vadd.f32 %v7824, %v7867
  %v7950 = vadd.f32 %v7825, %v7869
  %v7951 = vadd.f32 %v7826, %v7871
  %v7952 = vadd.f32 %v7827, %v7873
  %v7953 = vadd.f32 %v7828, %v7875
  %v7954 = vadd.f32 %v7829, %v7877
  %v7955 = vadd.f32 %v7830, %v7879
  %v7956 = vadd.f32 %v7831, %v7881
  %v7957 = vadd.f32 %v7832, %v7883
  %v7958 = vadd.f32 %v7833, %v7885
  %v7959 = vadd.f32 %v7834, %v7887
  %v7960 = vadd.f32 %v7835, %v7889
  %v7961 = vadd.f32 %v7836, %v7891
  %v7962 = vadd.f32 %v7837, %v7893
  %v7963 = vadd.f32 %v7838, %v7895
  %v7964 = vadd.f32 %v7839, %v7897
  %v7965 = vadd.f32 %v7840, %v7899
  %v7966 = vadd.f32 %v7841, %v7901
  %v7967 = vadd.f32 %v7842, %v7903
  %v7968 = vadd.f32 %v7843, %v7905
  %v7969 = vadd.f32 %v7844, %v7907
  %v7970 = vadd.f32 %v7845, %v7909
  %v7971 = vadd.f32 %v7846, %v7911
  %7973 = vrot.lane.b32.xlu0 %v5910, 100
  %v7974 = vpop.permute.xlu0 %7973
  %7975 = vrot.lane.b32.xlu0 %v5814, 100
  %v7976 = vpop.permute.xlu0 %7975
  %7977 = vrot.lane.b32.xlu0 %v5911, 100
  %v7978 = vpop.permute.xlu0 %7977
  %7979 = vrot.lane.b32.xlu0 %v5817, 100
  %v7980 = vpop.permute.xlu0 %7979
  %7981 = vrot.lane.b32.xlu0 %v5912, 100
  %v7982 = vpop.permute.xlu0 %7981
  %7983 = vrot.lane.b32.xlu0 %v5820, 100
  %v7984 = vpop.permute.xlu0 %7983
  %7985 = vrot.lane.b32.xlu0 %v5913, 100
  %v7986 = vpop.permute.xlu0 %7985
  %7987 = vrot.lane.b32.xlu0 %v5823, 100
  %v7988 = vpop.permute.xlu0 %7987
  %7989 = vrot.lane.b32.xlu0 %v5914, 100
  %v7990 = vpop.permute.xlu0 %7989
  %7991 = vrot.lane.b32.xlu0 %v5826, 100
  %v7992 = vpop.permute.xlu0 %7991
  %7993 = vrot.lane.b32.xlu0 %v5915, 100
  %v7994 = vpop.permute.xlu0 %7993
  %7995 = vrot.lane.b32.xlu0 %v5829, 100
  %v7996 = vpop.permute.xlu0 %7995
  %7997 = vrot.lane.b32.xlu0 %v5916, 100
  %v7998 = vpop.permute.xlu0 %7997
  %7999 = vrot.lane.b32.xlu0 %v5832, 100
  %v8000 = vpop.permute.xlu0 %7999
  %8001 = vrot.lane.b32.xlu0 %v5917, 100
  %v8002 = vpop.permute.xlu0 %8001
  %8003 = vrot.lane.b32.xlu0 %v5835, 100
  %v8004 = vpop.permute.xlu0 %8003
  %8005 = vrot.lane.b32.xlu0 %v5918, 100
  %v8006 = vpop.permute.xlu0 %8005
  %8007 = vrot.lane.b32.xlu0 %v5838, 100
  %v8008 = vpop.permute.xlu0 %8007
  %8009 = vrot.lane.b32.xlu0 %v5919, 100
  %v8010 = vpop.permute.xlu0 %8009
  %8011 = vrot.lane.b32.xlu0 %v5841, 100
  %v8012 = vpop.permute.xlu0 %8011
  %8013 = vrot.lane.b32.xlu0 %v5920, 100
  %v8014 = vpop.permute.xlu0 %8013
  %8015 = vrot.lane.b32.xlu0 %v5844, 100
  %v8016 = vpop.permute.xlu0 %8015
  %8017 = vrot.lane.b32.xlu0 %v5921, 100
  %v8018 = vpop.permute.xlu0 %8017
  %8019 = vrot.lane.b32.xlu0 %v5847, 100
  %v8020 = vpop.permute.xlu0 %8019
  %8021 = vrot.lane.b32.xlu0 %v5922, 100
  %v8022 = vpop.permute.xlu0 %8021
  %8023 = vrot.lane.b32.xlu0 %v5850, 100
  %v8024 = vpop.permute.xlu0 %8023
  %8025 = vrot.lane.b32.xlu0 %v5923, 100
  %v8026 = vpop.permute.xlu0 %8025
  %8027 = vrot.lane.b32.xlu0 %v5853, 100
  %v8028 = vpop.permute.xlu0 %8027
  %8029 = vrot.lane.b32.xlu0 %v5924, 100
  %v8030 = vpop.permute.xlu0 %8029
  %8031 = vrot.lane.b32.xlu0 %v5856, 100
  %v8032 = vpop.permute.xlu0 %8031
  %8033 = vrot.lane.b32.xlu0 %v5925, 100
  %v8034 = vpop.permute.xlu0 %8033
  %8035 = vrot.lane.b32.xlu0 %v5859, 100
  %v8036 = vpop.permute.xlu0 %8035
  %v8069 = vadd.f32 %v7942, %v7974
  %v8070 = vadd.f32 %v7943, %v7976
  %v8071 = vadd.f32 %v7942, %v7978
  %v8072 = vadd.f32 %v7943, %v7980
  %v8073 = vadd.f32 %v7944, %v7982
  %v8074 = vadd.f32 %v7945, %v7984
  %v8075 = vadd.f32 %v7946, %v7986
  %v8076 = vadd.f32 %v7947, %v7988
  %v8077 = vadd.f32 %v7948, %v7990
  %v8078 = vadd.f32 %v7949, %v7992
  %v8079 = vadd.f32 %v7950, %v7994
  %v8080 = vadd.f32 %v7951, %v7996
  %v8081 = vadd.f32 %v7952, %v7998
  %v8082 = vadd.f32 %v7953, %v8000
  %v8083 = vadd.f32 %v7954, %v8002
  %v8084 = vadd.f32 %v7955, %v8004
  %v8085 = vadd.f32 %v7956, %v8006
  %v8086 = vadd.f32 %v7957, %v8008
  %v8087 = vadd.f32 %v7958, %v8010
  %v8088 = vadd.f32 %v7959, %v8012
  %v8089 = vadd.f32 %v7960, %v8014
  %v8090 = vadd.f32 %v7961, %v8016
  %v8091 = vadd.f32 %v7962, %v8018
  %v8092 = vadd.f32 %v7963, %v8020
  %v8093 = vadd.f32 %v7964, %v8022
  %v8094 = vadd.f32 %v7965, %v8024
  %v8095 = vadd.f32 %v7966, %v8026
  %v8096 = vadd.f32 %v7967, %v8028
  %v8097 = vadd.f32 %v7968, %v8030
  %v8098 = vadd.f32 %v7969, %v8032
  %v8099 = vadd.f32 %v7970, %v8034
  %v8100 = vadd.f32 %v7971, %v8036
  %v8102 = vrot.slane %v5925, 1
  %v8103 = vrot.slane %v5859, 1
  %v8104 = vsel %vm294, %v8102, %v8103
  %v8105 = vrot.slane %v5942, 1
  %v8106 = vsel %vm294, %v8103, %v8105
  %8107 = vrot.lane.b32.xlu0 %v6010, 98
  %v8108 = vpop.permute.xlu0 %8107
  %8109 = vrot.lane.b32.xlu0 %v6012, 98
  %v8110 = vpop.permute.xlu0 %8109
  %8111 = vrot.lane.b32.xlu0 %v6015, 98
  %v8112 = vpop.permute.xlu0 %8111
  %8113 = vrot.lane.b32.xlu0 %v6017, 98
  %v8114 = vpop.permute.xlu0 %8113
  %8115 = vrot.lane.b32.xlu0 %v6020, 98
  %v8116 = vpop.permute.xlu0 %8115
  %8117 = vrot.lane.b32.xlu0 %v6022, 98
  %v8118 = vpop.permute.xlu0 %8117
  %8119 = vrot.lane.b32.xlu0 %v6025, 98
  %v8120 = vpop.permute.xlu0 %8119
  %8121 = vrot.lane.b32.xlu0 %v6027, 98
  %v8122 = vpop.permute.xlu0 %8121
  %8123 = vrot.lane.b32.xlu0 %v6030, 98
  %v8124 = vpop.permute.xlu0 %8123
  %8125 = vrot.lane.b32.xlu0 %v6032, 98
  %v8126 = vpop.permute.xlu0 %8125
  %8127 = vrot.lane.b32.xlu0 %v6035, 98
  %v8128 = vpop.permute.xlu0 %8127
  %8129 = vrot.lane.b32.xlu0 %v6037, 98
  %v8130 = vpop.permute.xlu0 %8129
  %8131 = vrot.lane.b32.xlu0 %v6040, 98
  %v8132 = vpop.permute.xlu0 %8131
  %8133 = vrot.lane.b32.xlu0 %v6042, 98
  %v8134 = vpop.permute.xlu0 %8133
  %8135 = vrot.lane.b32.xlu0 %v6045, 98
  %v8136 = vpop.permute.xlu0 %8135
  %8137 = vrot.lane.b32.xlu0 %v6047, 98
  %v8138 = vpop.permute.xlu0 %8137
  %8139 = vrot.lane.b32.xlu0 %v6050, 98
  %v8140 = vpop.permute.xlu0 %8139
  %8141 = vrot.lane.b32.xlu0 %v6052, 98
  %v8142 = vpop.permute.xlu0 %8141
  %8143 = vrot.lane.b32.xlu0 %v6055, 98
  %v8144 = vpop.permute.xlu0 %8143
  %8145 = vrot.lane.b32.xlu0 %v6057, 98
  %v8146 = vpop.permute.xlu0 %8145
  %8147 = vrot.lane.b32.xlu0 %v6060, 98
  %v8148 = vpop.permute.xlu0 %8147
  %8149 = vrot.lane.b32.xlu0 %v6062, 98
  %v8150 = vpop.permute.xlu0 %8149
  %8151 = vrot.lane.b32.xlu0 %v6065, 98
  %v8152 = vpop.permute.xlu0 %8151
  %8153 = vrot.lane.b32.xlu0 %v6067, 98
  %v8154 = vpop.permute.xlu0 %8153
  %8155 = vrot.lane.b32.xlu0 %v6070, 98
  %v8156 = vpop.permute.xlu0 %8155
  %8157 = vrot.lane.b32.xlu0 %v6072, 98
  %v8158 = vpop.permute.xlu0 %8157
  %8159 = vrot.lane.b32.xlu0 %v6075, 98
  %v8160 = vpop.permute.xlu0 %8159
  %8161 = vrot.lane.b32.xlu0 %v6077, 98
  %v8162 = vpop.permute.xlu0 %8161
  %8163 = vrot.lane.b32.xlu0 %v7224, 98
  %v8164 = vpop.permute.xlu0 %8163
  %8165 = vrot.lane.b32.xlu0 %v7226, 98
  %v8166 = vpop.permute.xlu0 %8165
  %8167 = vrot.lane.b32.xlu0 %v8104, 98
  %v8168 = vpop.permute.xlu0 %8167
  %8169 = vrot.lane.b32.xlu0 %v8106, 98
  %v8170 = vpop.permute.xlu0 %8169
  %v8203 = vadd.f32 %v8069, %v8108
  %v8204 = vadd.f32 %v8070, %v8110
  %v8205 = vadd.f32 %v8071, %v8112
  %v8206 = vadd.f32 %v8072, %v8114
  %v8207 = vadd.f32 %v8073, %v8116
  %v8208 = vadd.f32 %v8074, %v8118
  %v8209 = vadd.f32 %v8075, %v8120
  %v8210 = vadd.f32 %v8076, %v8122
  %v8211 = vadd.f32 %v8077, %v8124
  %v8212 = vadd.f32 %v8078, %v8126
  %v8213 = vadd.f32 %v8079, %v8128
  %v8214 = vadd.f32 %v8080, %v8130
  %v8215 = vadd.f32 %v8081, %v8132
  %v8216 = vadd.f32 %v8082, %v8134
  %v8217 = vadd.f32 %v8083, %v8136
  %v8218 = vadd.f32 %v8084, %v8138
  %v8219 = vadd.f32 %v8085, %v8140
  %v8220 = vadd.f32 %v8086, %v8142
  %v8221 = vadd.f32 %v8087, %v8144
  %v8222 = vadd.f32 %v8088, %v8146
  %v8223 = vadd.f32 %v8089, %v8148
  %v8224 = vadd.f32 %v8090, %v8150
  %v8225 = vadd.f32 %v8091, %v8152
  %v8226 = vadd.f32 %v8092, %v8154
  %v8227 = vadd.f32 %v8093, %v8156
  %v8228 = vadd.f32 %v8094, %v8158
  %v8229 = vadd.f32 %v8095, %v8160
  %v8230 = vadd.f32 %v8096, %v8162
  %v8231 = vadd.f32 %v8097, %v8164
  %v8232 = vadd.f32 %v8098, %v8166
  %v8233 = vadd.f32 %v8099, %v8168
  %v8234 = vadd.f32 %v8100, %v8170
  %v8235 = vrot.slane %v5925, 2
  %v8236 = vrot.slane %v5859, 2
  %v8237 = vsel %vm482, %v8235, %v8236
  %v8238 = vrot.slane %v5942, 2
  %v8239 = vsel %vm482, %v8236, %v8238
  %8240 = vrot.lane.b32.xlu0 %v6192, 96
  %v8241 = vpop.permute.xlu0 %8240
  %8242 = vrot.lane.b32.xlu0 %v6194, 96
  %v8243 = vpop.permute.xlu0 %8242
  %8244 = vrot.lane.b32.xlu0 %v6197, 96
  %v8245 = vpop.permute.xlu0 %8244
  %8246 = vrot.lane.b32.xlu0 %v6199, 96
  %v8247 = vpop.permute.xlu0 %8246
  %8248 = vrot.lane.b32.xlu0 %v6202, 96
  %v8249 = vpop.permute.xlu0 %8248
  %8250 = vrot.lane.b32.xlu0 %v6204, 96
  %v8251 = vpop.permute.xlu0 %8250
  %8252 = vrot.lane.b32.xlu0 %v6207, 96
  %v8253 = vpop.permute.xlu0 %8252
  %8254 = vrot.lane.b32.xlu0 %v6209, 96
  %v8255 = vpop.permute.xlu0 %8254
  %8256 = vrot.lane.b32.xlu0 %v6212, 96
  %v8257 = vpop.permute.xlu0 %8256
  %8258 = vrot.lane.b32.xlu0 %v6214, 96
  %v8259 = vpop.permute.xlu0 %8258
  %8260 = vrot.lane.b32.xlu0 %v6217, 96
  %v8261 = vpop.permute.xlu0 %8260
  %8262 = vrot.lane.b32.xlu0 %v6219, 96
  %v8263 = vpop.permute.xlu0 %8262
  %8264 = vrot.lane.b32.xlu0 %v6222, 96
  %v8265 = vpop.permute.xlu0 %8264
  %8266 = vrot.lane.b32.xlu0 %v6224, 96
  %v8267 = vpop.permute.xlu0 %8266
  %8268 = vrot.lane.b32.xlu0 %v6227, 96
  %v8269 = vpop.permute.xlu0 %8268
  %8270 = vrot.lane.b32.xlu0 %v6229, 96
  %v8271 = vpop.permute.xlu0 %8270
  %8272 = vrot.lane.b32.xlu0 %v6232, 96
  %v8273 = vpop.permute.xlu0 %8272
  %8274 = vrot.lane.b32.xlu0 %v6234, 96
  %v8275 = vpop.permute.xlu0 %8274
  %8276 = vrot.lane.b32.xlu0 %v6237, 96
  %v8277 = vpop.permute.xlu0 %8276
  %8278 = vrot.lane.b32.xlu0 %v6239, 96
  %v8279 = vpop.permute.xlu0 %8278
  %8280 = vrot.lane.b32.xlu0 %v6242, 96
  %v8281 = vpop.permute.xlu0 %8280
  %8282 = vrot.lane.b32.xlu0 %v6244, 96
  %v8283 = vpop.permute.xlu0 %8282
  %8284 = vrot.lane.b32.xlu0 %v6247, 96
  %v8285 = vpop.permute.xlu0 %8284
  %8286 = vrot.lane.b32.xlu0 %v6249, 96
  %v8287 = vpop.permute.xlu0 %8286
  %8288 = vrot.lane.b32.xlu0 %v6252, 96
  %v8289 = vpop.permute.xlu0 %8288
  %8290 = vrot.lane.b32.xlu0 %v6254, 96
  %v8291 = vpop.permute.xlu0 %8290
  %8292 = vrot.lane.b32.xlu0 %v6257, 96
  %v8293 = vpop.permute.xlu0 %8292
  %8294 = vrot.lane.b32.xlu0 %v6259, 96
  %v8295 = vpop.permute.xlu0 %8294
  %8296 = vrot.lane.b32.xlu0 %v7349, 96
  %v8297 = vpop.permute.xlu0 %8296
  %8298 = vrot.lane.b32.xlu0 %v7351, 96
  %v8299 = vpop.permute.xlu0 %8298
  %8300 = vrot.lane.b32.xlu0 %v8237, 96
  %v8301 = vpop.permute.xlu0 %8300
  %8302 = vrot.lane.b32.xlu0 %v8239, 96
  %v8303 = vpop.permute.xlu0 %8302
  %v8336 = vadd.f32 %v8203, %v8241
  %v8337 = vadd.f32 %v8204, %v8243
  %v8338 = vadd.f32 %v8205, %v8245
  %v8339 = vadd.f32 %v8206, %v8247
  %v8340 = vadd.f32 %v8207, %v8249
  %v8341 = vadd.f32 %v8208, %v8251
  %v8342 = vadd.f32 %v8209, %v8253
  %v8343 = vadd.f32 %v8210, %v8255
  %v8344 = vadd.f32 %v8211, %v8257
  %v8345 = vadd.f32 %v8212, %v8259
  %v8346 = vadd.f32 %v8213, %v8261
  %v8347 = vadd.f32 %v8214, %v8263
  %v8348 = vadd.f32 %v8215, %v8265
  %v8349 = vadd.f32 %v8216, %v8267
  %v8350 = vadd.f32 %v8217, %v8269
  %v8351 = vadd.f32 %v8218, %v8271
  %v8352 = vadd.f32 %v8219, %v8273
  %v8353 = vadd.f32 %v8220, %v8275
  %v8354 = vadd.f32 %v8221, %v8277
  %v8355 = vadd.f32 %v8222, %v8279
  %v8356 = vadd.f32 %v8223, %v8281
  %v8357 = vadd.f32 %v8224, %v8283
  %v8358 = vadd.f32 %v8225, %v8285
  %v8359 = vadd.f32 %v8226, %v8287
  %v8360 = vadd.f32 %v8227, %v8289
  %v8361 = vadd.f32 %v8228, %v8291
  %v8362 = vadd.f32 %v8229, %v8293
  %v8363 = vadd.f32 %v8230, %v8295
  %v8364 = vadd.f32 %v8231, %v8297
  %v8365 = vadd.f32 %v8232, %v8299
  %v8366 = vadd.f32 %v8233, %v8301
  %v8367 = vadd.f32 %v8234, %v8303
  %v8368 = vrot.slane %v5925, 3
  %v8369 = vrot.slane %v5859, 3
  %v8370 = vsel %vm670, %v8368, %v8369
  %v8371 = vrot.slane %v5942, 3
  %v8372 = vsel %vm670, %v8369, %v8371
  %8373 = vrot.lane.b32.xlu0 %v6374, 94
  %v8374 = vpop.permute.xlu0 %8373
  %8375 = vrot.lane.b32.xlu0 %v6376, 94
  %v8376 = vpop.permute.xlu0 %8375
  %8377 = vrot.lane.b32.xlu0 %v6379, 94
  %v8378 = vpop.permute.xlu0 %8377
  %8379 = vrot.lane.b32.xlu0 %v6381, 94
  %v8380 = vpop.permute.xlu0 %8379
  %8381 = vrot.lane.b32.xlu0 %v6384, 94
  %v8382 = vpop.permute.xlu0 %8381
  %8383 = vrot.lane.b32.xlu0 %v6386, 94
  %v8384 = vpop.permute.xlu0 %8383
  %8385 = vrot.lane.b32.xlu0 %v6389, 94
  %v8386 = vpop.permute.xlu0 %8385
  %8387 = vrot.lane.b32.xlu0 %v6391, 94
  %v8388 = vpop.permute.xlu0 %8387
  %8389 = vrot.lane.b32.xlu0 %v6394, 94
  %v8390 = vpop.permute.xlu0 %8389
  %8391 = vrot.lane.b32.xlu0 %v6396, 94
  %v8392 = vpop.permute.xlu0 %8391
  %8393 = vrot.lane.b32.xlu0 %v6399, 94
  %v8394 = vpop.permute.xlu0 %8393
  %8395 = vrot.lane.b32.xlu0 %v6401, 94
  %v8396 = vpop.permute.xlu0 %8395
  %8397 = vrot.lane.b32.xlu0 %v6404, 94
  %v8398 = vpop.permute.xlu0 %8397
  %8399 = vrot.lane.b32.xlu0 %v6406, 94
  %v8400 = vpop.permute.xlu0 %8399
  %8401 = vrot.lane.b32.xlu0 %v6409, 94
  %v8402 = vpop.permute.xlu0 %8401
  %8403 = vrot.lane.b32.xlu0 %v6411, 94
  %v8404 = vpop.permute.xlu0 %8403
  %8405 = vrot.lane.b32.xlu0 %v6414, 94
  %v8406 = vpop.permute.xlu0 %8405
  %8407 = vrot.lane.b32.xlu0 %v6416, 94
  %v8408 = vpop.permute.xlu0 %8407
  %8409 = vrot.lane.b32.xlu0 %v6419, 94
  %v8410 = vpop.permute.xlu0 %8409
  %8411 = vrot.lane.b32.xlu0 %v6421, 94
  %v8412 = vpop.permute.xlu0 %8411
  %8413 = vrot.lane.b32.xlu0 %v6424, 94
  %v8414 = vpop.permute.xlu0 %8413
  %8415 = vrot.lane.b32.xlu0 %v6426, 94
  %v8416 = vpop.permute.xlu0 %8415
  %8417 = vrot.lane.b32.xlu0 %v6429, 94
  %v8418 = vpop.permute.xlu0 %8417
  %8419 = vrot.lane.b32.xlu0 %v6431, 94
  %v8420 = vpop.permute.xlu0 %8419
  %8421 = vrot.lane.b32.xlu0 %v6434, 94
  %v8422 = vpop.permute.xlu0 %8421
  %8423 = vrot.lane.b32.xlu0 %v6436, 94
  %v8424 = vpop.permute.xlu0 %8423
  %8425 = vrot.lane.b32.xlu0 %v6439, 94
  %v8426 = vpop.permute.xlu0 %8425
  %8427 = vrot.lane.b32.xlu0 %v6441, 94
  %v8428 = vpop.permute.xlu0 %8427
  %8429 = vrot.lane.b32.xlu0 %v7474, 94
  %v8430 = vpop.permute.xlu0 %8429
  %8431 = vrot.lane.b32.xlu0 %v7476, 94
  %v8432 = vpop.permute.xlu0 %8431
  %8433 = vrot.lane.b32.xlu0 %v8370, 94
  %v8434 = vpop.permute.xlu0 %8433
  %8435 = vrot.lane.b32.xlu0 %v8372, 94
  %v8436 = vpop.permute.xlu0 %8435
  %v8469 = vadd.f32 %v8336, %v8374
  %v8470 = vadd.f32 %v8337, %v8376
  %v8471 = vadd.f32 %v8338, %v8378
  %v8472 = vadd.f32 %v8339, %v8380
  %v8473 = vadd.f32 %v8340, %v8382
  %v8474 = vadd.f32 %v8341, %v8384
  %v8475 = vadd.f32 %v8342, %v8386
  %v8476 = vadd.f32 %v8343, %v8388
  %v8477 = vadd.f32 %v8344, %v8390
  %v8478 = vadd.f32 %v8345, %v8392
  %v8479 = vadd.f32 %v8346, %v8394
  %v8480 = vadd.f32 %v8347, %v8396
  %v8481 = vadd.f32 %v8348, %v8398
  %v8482 = vadd.f32 %v8349, %v8400
  %v8483 = vadd.f32 %v8350, %v8402
  %v8484 = vadd.f32 %v8351, %v8404
  %v8485 = vadd.f32 %v8352, %v8406
  %v8486 = vadd.f32 %v8353, %v8408
  %v8487 = vadd.f32 %v8354, %v8410
  %v8488 = vadd.f32 %v8355, %v8412
  %v8489 = vadd.f32 %v8356, %v8414
  %v8490 = vadd.f32 %v8357, %v8416
  %v8491 = vadd.f32 %v8358, %v8418
  %v8492 = vadd.f32 %v8359, %v8420
  %v8493 = vadd.f32 %v8360, %v8422
  %v8494 = vadd.f32 %v8361, %v8424
  %v8495 = vadd.f32 %v8362, %v8426
  %v8496 = vadd.f32 %v8363, %v8428
  %v8497 = vadd.f32 %v8364, %v8430
  %v8498 = vadd.f32 %v8365, %v8432
  %v8499 = vadd.f32 %v8366, %v8434
  %v8500 = vadd.f32 %v8367, %v8436
  %v8501 = vrot.slane %v5925, 4
  %v8502 = vrot.slane %v5859, 4
  %v8503 = vsel %vm858, %v8501, %v8502
  %v8504 = vrot.slane %v5942, 4
  %v8505 = vsel %vm858, %v8502, %v8504
  %8506 = vrot.lane.b32.xlu0 %v6556, 92
  %v8507 = vpop.permute.xlu0 %8506
  %8508 = vrot.lane.b32.xlu0 %v6558, 92
  %v8509 = vpop.permute.xlu0 %8508
  %8510 = vrot.lane.b32.xlu0 %v6561, 92
  %v8511 = vpop.permute.xlu0 %8510
  %8512 = vrot.lane.b32.xlu0 %v6563, 92
  %v8513 = vpop.permute.xlu0 %8512
  %8514 = vrot.lane.b32.xlu0 %v6566, 92
  %v8515 = vpop.permute.xlu0 %8514
  %8516 = vrot.lane.b32.xlu0 %v6568, 92
  %v8517 = vpop.permute.xlu0 %8516
  %8518 = vrot.lane.b32.xlu0 %v6571, 92
  %v8519 = vpop.permute.xlu0 %8518
  %8520 = vrot.lane.b32.xlu0 %v6573, 92
  %v8521 = vpop.permute.xlu0 %8520
  %8522 = vrot.lane.b32.xlu0 %v6576, 92
  %v8523 = vpop.permute.xlu0 %8522
  %8524 = vrot.lane.b32.xlu0 %v6578, 92
  %v8525 = vpop.permute.xlu0 %8524
  %8526 = vrot.lane.b32.xlu0 %v6581, 92
  %v8527 = vpop.permute.xlu0 %8526
  %8528 = vrot.lane.b32.xlu0 %v6583, 92
  %v8529 = vpop.permute.xlu0 %8528
  %8530 = vrot.lane.b32.xlu0 %v6586, 92
  %v8531 = vpop.permute.xlu0 %8530
  %8532 = vrot.lane.b32.xlu0 %v6588, 92
  %v8533 = vpop.permute.xlu0 %8532
  %8534 = vrot.lane.b32.xlu0 %v6591, 92
  %v8535 = vpop.permute.xlu0 %8534
  %8536 = vrot.lane.b32.xlu0 %v6593, 92
  %v8537 = vpop.permute.xlu0 %8536
  %8538 = vrot.lane.b32.xlu0 %v6596, 92
  %v8539 = vpop.permute.xlu0 %8538
  %8540 = vrot.lane.b32.xlu0 %v6598, 92
  %v8541 = vpop.permute.xlu0 %8540
  %8542 = vrot.lane.b32.xlu0 %v6601, 92
  %v8543 = vpop.permute.xlu0 %8542
  %8544 = vrot.lane.b32.xlu0 %v6603, 92
  %v8545 = vpop.permute.xlu0 %8544
  %8546 = vrot.lane.b32.xlu0 %v6606, 92
  %v8547 = vpop.permute.xlu0 %8546
  %8548 = vrot.lane.b32.xlu0 %v6608, 92
  %v8549 = vpop.permute.xlu0 %8548
  %8550 = vrot.lane.b32.xlu0 %v6611, 92
  %v8551 = vpop.permute.xlu0 %8550
  %8552 = vrot.lane.b32.xlu0 %v6613, 92
  %v8553 = vpop.permute.xlu0 %8552
  %8554 = vrot.lane.b32.xlu0 %v6616, 92
  %v8555 = vpop.permute.xlu0 %8554
  %8556 = vrot.lane.b32.xlu0 %v6618, 92
  %v8557 = vpop.permute.xlu0 %8556
  %8558 = vrot.lane.b32.xlu0 %v6621, 92
  %v8559 = vpop.permute.xlu0 %8558
  %8560 = vrot.lane.b32.xlu0 %v6623, 92
  %v8561 = vpop.permute.xlu0 %8560
  %8562 = vrot.lane.b32.xlu0 %v7599, 92
  %v8563 = vpop.permute.xlu0 %8562
  %8564 = vrot.lane.b32.xlu0 %v7601, 92
  %v8565 = vpop.permute.xlu0 %8564
  %8566 = vrot.lane.b32.xlu0 %v8503, 92
  %v8567 = vpop.permute.xlu0 %8566
  %8568 = vrot.lane.b32.xlu0 %v8505, 92
  %v8569 = vpop.permute.xlu0 %8568
  %v8602 = vadd.f32 %v8469, %v8507
  %v8603 = vadd.f32 %v8470, %v8509
  %v8604 = vadd.f32 %v8471, %v8511
  %v8605 = vadd.f32 %v8472, %v8513
  %v8606 = vadd.f32 %v8473, %v8515
  %v8607 = vadd.f32 %v8474, %v8517
  %v8608 = vadd.f32 %v8475, %v8519
  %v8609 = vadd.f32 %v8476, %v8521
  %v8610 = vadd.f32 %v8477, %v8523
  %v8611 = vadd.f32 %v8478, %v8525
  %v8612 = vadd.f32 %v8479, %v8527
  %v8613 = vadd.f32 %v8480, %v8529
  %v8614 = vadd.f32 %v8481, %v8531
  %v8615 = vadd.f32 %v8482, %v8533
  %v8616 = vadd.f32 %v8483, %v8535
  %v8617 = vadd.f32 %v8484, %v8537
  %v8618 = vadd.f32 %v8485, %v8539
  %v8619 = vadd.f32 %v8486, %v8541
  %v8620 = vadd.f32 %v8487, %v8543
  %v8621 = vadd.f32 %v8488, %v8545
  %v8622 = vadd.f32 %v8489, %v8547
  %v8623 = vadd.f32 %v8490, %v8549
  %v8624 = vadd.f32 %v8491, %v8551
  %v8625 = vadd.f32 %v8492, %v8553
  %v8626 = vadd.f32 %v8493, %v8555
  %v8627 = vadd.f32 %v8494, %v8557
  %v8628 = vadd.f32 %v8495, %v8559
  %v8629 = vadd.f32 %v8496, %v8561
  %v8630 = vadd.f32 %v8497, %v8563
  %v8631 = vadd.f32 %v8498, %v8565
  %v8632 = vadd.f32 %v8499, %v8567
  %v8633 = vadd.f32 %v8500, %v8569
  %v8634 = vrot.slane %v5925, 5
  %v8635 = vrot.slane %v5859, 5
  %v8636 = vsel %vm1844, %v8634, %v8635
  %v8637 = vrot.slane %v5942, 5
  %v8638 = vsel %vm1844, %v8635, %v8637
  %8639 = vrot.lane.b32.xlu0 %v6738, 90
  %v8640 = vpop.permute.xlu0 %8639
  %8641 = vrot.lane.b32.xlu0 %v6740, 90
  %v8642 = vpop.permute.xlu0 %8641
  %8643 = vrot.lane.b32.xlu0 %v6743, 90
  %v8644 = vpop.permute.xlu0 %8643
  %8645 = vrot.lane.b32.xlu0 %v6745, 90
  %v8646 = vpop.permute.xlu0 %8645
  %8647 = vrot.lane.b32.xlu0 %v6748, 90
  %v8648 = vpop.permute.xlu0 %8647
  %8649 = vrot.lane.b32.xlu0 %v6750, 90
  %v8650 = vpop.permute.xlu0 %8649
  %8651 = vrot.lane.b32.xlu0 %v6753, 90
  %v8652 = vpop.permute.xlu0 %8651
  %8653 = vrot.lane.b32.xlu0 %v6755, 90
  %v8654 = vpop.permute.xlu0 %8653
  %8655 = vrot.lane.b32.xlu0 %v6758, 90
  %v8656 = vpop.permute.xlu0 %8655
  %8657 = vrot.lane.b32.xlu0 %v6760, 90
  %v8658 = vpop.permute.xlu0 %8657
  %8659 = vrot.lane.b32.xlu0 %v6763, 90
  %v8660 = vpop.permute.xlu0 %8659
  %8661 = vrot.lane.b32.xlu0 %v6765, 90
  %v8662 = vpop.permute.xlu0 %8661
  %8663 = vrot.lane.b32.xlu0 %v6768, 90
  %v8664 = vpop.permute.xlu0 %8663
  %8665 = vrot.lane.b32.xlu0 %v6770, 90
  %v8666 = vpop.permute.xlu0 %8665
  %8667 = vrot.lane.b32.xlu0 %v6773, 90
  %v8668 = vpop.permute.xlu0 %8667
  %8669 = vrot.lane.b32.xlu0 %v6775, 90
  %v8670 = vpop.permute.xlu0 %8669
  %8671 = vrot.lane.b32.xlu0 %v6778, 90
  %v8672 = vpop.permute.xlu0 %8671
  %8673 = vrot.lane.b32.xlu0 %v6780, 90
  %v8674 = vpop.permute.xlu0 %8673
  %8675 = vrot.lane.b32.xlu0 %v6783, 90
  %v8676 = vpop.permute.xlu0 %8675
  %8677 = vrot.lane.b32.xlu0 %v6785, 90
  %v8678 = vpop.permute.xlu0 %8677
  %8679 = vrot.lane.b32.xlu0 %v6788, 90
  %v8680 = vpop.permute.xlu0 %8679
  %8681 = vrot.lane.b32.xlu0 %v6790, 90
  %v8682 = vpop.permute.xlu0 %8681
  %8683 = vrot.lane.b32.xlu0 %v6793, 90
  %v8684 = vpop.permute.xlu0 %8683
  %8685 = vrot.lane.b32.xlu0 %v6795, 90
  %v8686 = vpop.permute.xlu0 %8685
  %8687 = vrot.lane.b32.xlu0 %v6798, 90
  %v8688 = vpop.permute.xlu0 %8687
  %8689 = vrot.lane.b32.xlu0 %v6800, 90
  %v8690 = vpop.permute.xlu0 %8689
  %8691 = vrot.lane.b32.xlu0 %v6803, 90
  %v8692 = vpop.permute.xlu0 %8691
  %8693 = vrot.lane.b32.xlu0 %v6805, 90
  %v8694 = vpop.permute.xlu0 %8693
  %8695 = vrot.lane.b32.xlu0 %v7724, 90
  %v8696 = vpop.permute.xlu0 %8695
  %8697 = vrot.lane.b32.xlu0 %v7726, 90
  %v8698 = vpop.permute.xlu0 %8697
  %8699 = vrot.lane.b32.xlu0 %v8636, 90
  %v8700 = vpop.permute.xlu0 %8699
  %8701 = vrot.lane.b32.xlu0 %v8638, 90
  %v8702 = vpop.permute.xlu0 %8701
  %v8735 = vadd.f32 %v8602, %v8640
  %v8736 = vadd.f32 %v8603, %v8642
  %v8737 = vadd.f32 %v8604, %v8644
  %v8738 = vadd.f32 %v8605, %v8646
  %v8739 = vadd.f32 %v8606, %v8648
  %v8740 = vadd.f32 %v8607, %v8650
  %v8741 = vadd.f32 %v8608, %v8652
  %v8742 = vadd.f32 %v8609, %v8654
  %v8743 = vadd.f32 %v8610, %v8656
  %v8744 = vadd.f32 %v8611, %v8658
  %v8745 = vadd.f32 %v8612, %v8660
  %v8746 = vadd.f32 %v8613, %v8662
  %v8747 = vadd.f32 %v8614, %v8664
  %v8748 = vadd.f32 %v8615, %v8666
  %v8749 = vadd.f32 %v8616, %v8668
  %v8750 = vadd.f32 %v8617, %v8670
  %v8751 = vadd.f32 %v8618, %v8672
  %v8752 = vadd.f32 %v8619, %v8674
  %v8753 = vadd.f32 %v8620, %v8676
  %v8754 = vadd.f32 %v8621, %v8678
  %v8755 = vadd.f32 %v8622, %v8680
  %v8756 = vadd.f32 %v8623, %v8682
  %v8757 = vadd.f32 %v8624, %v8684
  %v8758 = vadd.f32 %v8625, %v8686
  %v8759 = vadd.f32 %v8626, %v8688
  %v8760 = vadd.f32 %v8627, %v8690
  %v8761 = vadd.f32 %v8628, %v8692
  %v8762 = vadd.f32 %v8629, %v8694
  %v8763 = vadd.f32 %v8630, %v8696
  %v8764 = vadd.f32 %v8631, %v8698
  %v8765 = vadd.f32 %v8632, %v8700
  %v8766 = vadd.f32 %v8633, %v8702
  %v8767 = vrot.slane %v5925, 6
  %v8768 = vrot.slane %v5859, 6
  %v8769 = vsel %vm125, %v8767, %v8768
  %v8770 = vrot.slane %v5942, 6
  %v8771 = vsel %vm125, %v8768, %v8770
  %8772 = vrot.lane.b32.xlu0 %v6920, 88
  %v8773 = vpop.permute.xlu0 %8772
  %8774 = vrot.lane.b32.xlu0 %v6922, 88
  %v8775 = vpop.permute.xlu0 %8774
  %8776 = vrot.lane.b32.xlu0 %v6925, 88
  %v8777 = vpop.permute.xlu0 %8776
  %8778 = vrot.lane.b32.xlu0 %v6927, 88
  %v8779 = vpop.permute.xlu0 %8778
  %8780 = vrot.lane.b32.xlu0 %v6930, 88
  %v8781 = vpop.permute.xlu0 %8780
  %8782 = vrot.lane.b32.xlu0 %v6932, 88
  %v8783 = vpop.permute.xlu0 %8782
  %8784 = vrot.lane.b32.xlu0 %v6935, 88
  %v8785 = vpop.permute.xlu0 %8784
  %8786 = vrot.lane.b32.xlu0 %v6937, 88
  %v8787 = vpop.permute.xlu0 %8786
  %8788 = vrot.lane.b32.xlu0 %v6940, 88
  %v8789 = vpop.permute.xlu0 %8788
  %8790 = vrot.lane.b32.xlu0 %v6942, 88
  %v8791 = vpop.permute.xlu0 %8790
  %8792 = vrot.lane.b32.xlu0 %v6945, 88
  %v8793 = vpop.permute.xlu0 %8792
  %8794 = vrot.lane.b32.xlu0 %v6947, 88
  %v8795 = vpop.permute.xlu0 %8794
  %8796 = vrot.lane.b32.xlu0 %v6950, 88
  %v8797 = vpop.permute.xlu0 %8796
  %8798 = vrot.lane.b32.xlu0 %v6952, 88
  %v8799 = vpop.permute.xlu0 %8798
  %8800 = vrot.lane.b32.xlu0 %v6955, 88
  %v8801 = vpop.permute.xlu0 %8800
  %8802 = vrot.lane.b32.xlu0 %v6957, 88
  %v8803 = vpop.permute.xlu0 %8802
  %8804 = vrot.lane.b32.xlu0 %v6960, 88
  %v8805 = vpop.permute.xlu0 %8804
  %8806 = vrot.lane.b32.xlu0 %v6962, 88
  %v8807 = vpop.permute.xlu0 %8806
  %8808 = vrot.lane.b32.xlu0 %v6965, 88
  %v8809 = vpop.permute.xlu0 %8808
  %8810 = vrot.lane.b32.xlu0 %v6967, 88
  %v8811 = vpop.permute.xlu0 %8810
  %8812 = vrot.lane.b32.xlu0 %v6970, 88
  %v8813 = vpop.permute.xlu0 %8812
  %8814 = vrot.lane.b32.xlu0 %v6972, 88
  %v8815 = vpop.permute.xlu0 %8814
  %8816 = vrot.lane.b32.xlu0 %v6975, 88
  %v8817 = vpop.permute.xlu0 %8816
  %8818 = vrot.lane.b32.xlu0 %v6977, 88
  %v8819 = vpop.permute.xlu0 %8818
  %8820 = vrot.lane.b32.xlu0 %v6980, 88
  %v8821 = vpop.permute.xlu0 %8820
  %8822 = vrot.lane.b32.xlu0 %v6982, 88
  %v8823 = vpop.permute.xlu0 %8822
  %8824 = vrot.lane.b32.xlu0 %v6985, 88
  %v8825 = vpop.permute.xlu0 %8824
  %8826 = vrot.lane.b32.xlu0 %v6987, 88
  %v8827 = vpop.permute.xlu0 %8826
  %8828 = vrot.lane.b32.xlu0 %v7849, 88
  %v8829 = vpop.permute.xlu0 %8828
  %8830 = vrot.lane.b32.xlu0 %v7851, 88
  %v8831 = vpop.permute.xlu0 %8830
  %8832 = vrot.lane.b32.xlu0 %v8769, 88
  %v8833 = vpop.permute.xlu0 %8832
  %8834 = vrot.lane.b32.xlu0 %v8771, 88
  %v8835 = vpop.permute.xlu0 %8834
  %v8868 = vadd.f32 %v8735, %v8773
  %v8869 = vadd.f32 %v8736, %v8775
  %v8870 = vadd.f32 %v8737, %v8777
  %v8871 = vadd.f32 %v8738, %v8779
  %v8872 = vadd.f32 %v8739, %v8781
  %v8873 = vadd.f32 %v8740, %v8783
  %v8874 = vadd.f32 %v8741, %v8785
  %v8875 = vadd.f32 %v8742, %v8787
  %v8876 = vadd.f32 %v8743, %v8789
  %v8877 = vadd.f32 %v8744, %v8791
  %v8878 = vadd.f32 %v8745, %v8793
  %v8879 = vadd.f32 %v8746, %v8795
  %v8880 = vadd.f32 %v8747, %v8797
  %v8881 = vadd.f32 %v8748, %v8799
  %v8882 = vadd.f32 %v8749, %v8801
  %v8883 = vadd.f32 %v8750, %v8803
  %v8884 = vadd.f32 %v8751, %v8805
  %v8885 = vadd.f32 %v8752, %v8807
  %v8886 = vadd.f32 %v8753, %v8809
  %v8887 = vadd.f32 %v8754, %v8811
  %v8888 = vadd.f32 %v8755, %v8813
  %v8889 = vadd.f32 %v8756, %v8815
  %v8890 = vadd.f32 %v8757, %v8817
  %v8891 = vadd.f32 %v8758, %v8819
  %v8892 = vadd.f32 %v8759, %v8821
  %v8893 = vadd.f32 %v8760, %v8823
  %v8894 = vadd.f32 %v8761, %v8825
  %v8895 = vadd.f32 %v8762, %v8827
  %v8896 = vadd.f32 %v8763, %v8829
  %v8897 = vadd.f32 %v8764, %v8831
  %v8898 = vadd.f32 %v8765, %v8833
  %v8899 = vadd.f32 %v8766, %v8835
  %8901 = vrot.lane.b32.xlu0 %v5911, 86
  %v8902 = vpop.permute.xlu0 %8901
  %8903 = vrot.lane.b32.xlu0 %v5817, 86
  %v8904 = vpop.permute.xlu0 %8903
  %8905 = vrot.lane.b32.xlu0 %v5912, 86
  %v8906 = vpop.permute.xlu0 %8905
  %8907 = vrot.lane.b32.xlu0 %v5820, 86
  %v8908 = vpop.permute.xlu0 %8907
  %8909 = vrot.lane.b32.xlu0 %v5913, 86
  %v8910 = vpop.permute.xlu0 %8909
  %8911 = vrot.lane.b32.xlu0 %v5823, 86
  %v8912 = vpop.permute.xlu0 %8911
  %8913 = vrot.lane.b32.xlu0 %v5914, 86
  %v8914 = vpop.permute.xlu0 %8913
  %8915 = vrot.lane.b32.xlu0 %v5826, 86
  %v8916 = vpop.permute.xlu0 %8915
  %8917 = vrot.lane.b32.xlu0 %v5915, 86
  %v8918 = vpop.permute.xlu0 %8917
  %8919 = vrot.lane.b32.xlu0 %v5829, 86
  %v8920 = vpop.permute.xlu0 %8919
  %8921 = vrot.lane.b32.xlu0 %v5916, 86
  %v8922 = vpop.permute.xlu0 %8921
  %8923 = vrot.lane.b32.xlu0 %v5832, 86
  %v8924 = vpop.permute.xlu0 %8923
  %8925 = vrot.lane.b32.xlu0 %v5917, 86
  %v8926 = vpop.permute.xlu0 %8925
  %8927 = vrot.lane.b32.xlu0 %v5835, 86
  %v8928 = vpop.permute.xlu0 %8927
  %8929 = vrot.lane.b32.xlu0 %v5918, 86
  %v8930 = vpop.permute.xlu0 %8929
  %8931 = vrot.lane.b32.xlu0 %v5838, 86
  %v8932 = vpop.permute.xlu0 %8931
  %8933 = vrot.lane.b32.xlu0 %v5919, 86
  %v8934 = vpop.permute.xlu0 %8933
  %8935 = vrot.lane.b32.xlu0 %v5841, 86
  %v8936 = vpop.permute.xlu0 %8935
  %8937 = vrot.lane.b32.xlu0 %v5920, 86
  %v8938 = vpop.permute.xlu0 %8937
  %8939 = vrot.lane.b32.xlu0 %v5844, 86
  %v8940 = vpop.permute.xlu0 %8939
  %8941 = vrot.lane.b32.xlu0 %v5921, 86
  %v8942 = vpop.permute.xlu0 %8941
  %8943 = vrot.lane.b32.xlu0 %v5847, 86
  %v8944 = vpop.permute.xlu0 %8943
  %8945 = vrot.lane.b32.xlu0 %v5922, 86
  %v8946 = vpop.permute.xlu0 %8945
  %8947 = vrot.lane.b32.xlu0 %v5850, 86
  %v8948 = vpop.permute.xlu0 %8947
  %8949 = vrot.lane.b32.xlu0 %v5923, 86
  %v8950 = vpop.permute.xlu0 %8949
  %8951 = vrot.lane.b32.xlu0 %v5853, 86
  %v8952 = vpop.permute.xlu0 %8951
  %8953 = vrot.lane.b32.xlu0 %v5924, 86
  %v8954 = vpop.permute.xlu0 %8953
  %8955 = vrot.lane.b32.xlu0 %v5856, 86
  %v8956 = vpop.permute.xlu0 %8955
  %8957 = vrot.lane.b32.xlu0 %v5925, 86
  %v8958 = vpop.permute.xlu0 %8957
  %8959 = vrot.lane.b32.xlu0 %v5859, 86
  %v8960 = vpop.permute.xlu0 %8959
  %8961 = vrot.lane.b32.xlu0 %v5926, 86
  %v8962 = vpop.permute.xlu0 %8961
  %8963 = vrot.lane.b32.xlu0 %v5862, 86
  %v8964 = vpop.permute.xlu0 %8963
  %v8997 = vadd.f32 %v8868, %v8902
  %v8998 = vadd.f32 %v8869, %v8904
  %v8999 = vadd.f32 %v8870, %v8906
  %v9000 = vadd.f32 %v8871, %v8908
  %v9001 = vadd.f32 %v8872, %v8910
  %v9002 = vadd.f32 %v8873, %v8912
  %v9003 = vadd.f32 %v8874, %v8914
  %v9004 = vadd.f32 %v8875, %v8916
  %v9005 = vadd.f32 %v8876, %v8918
  %v9006 = vadd.f32 %v8877, %v8920
  %v9007 = vadd.f32 %v8878, %v8922
  %v9008 = vadd.f32 %v8879, %v8924
  %v9009 = vadd.f32 %v8880, %v8926
  %v9010 = vadd.f32 %v8881, %v8928
  %v9011 = vadd.f32 %v8882, %v8930
  %v9012 = vadd.f32 %v8883, %v8932
  %v9013 = vadd.f32 %v8884, %v8934
  %v9014 = vadd.f32 %v8885, %v8936
  %v9015 = vadd.f32 %v8886, %v8938
  %v9016 = vadd.f32 %v8887, %v8940
  %v9017 = vadd.f32 %v8888, %v8942
  %v9018 = vadd.f32 %v8889, %v8944
  %v9019 = vadd.f32 %v8890, %v8946
  %v9020 = vadd.f32 %v8891, %v8948
  %v9021 = vadd.f32 %v8892, %v8950
  %v9022 = vadd.f32 %v8893, %v8952
  %v9023 = vadd.f32 %v8894, %v8954
  %v9024 = vadd.f32 %v8895, %v8956
  %v9025 = vadd.f32 %v8896, %v8958
  %v9026 = vadd.f32 %v8897, %v8960
  %v9027 = vadd.f32 %v8898, %v8962
  %v9028 = vadd.f32 %v8899, %v8964
  %v9030 = vrot.slane %v5926, 1
  %v9031 = vrot.slane %v5862, 1
  %v9032 = vsel %vm294, %v9030, %v9031
  %v9033 = vrot.slane %v5943, 1
  %v9034 = vsel %vm294, %v9031, %v9033
  %9035 = vrot.lane.b32.xlu0 %v6015, 84
  %v9036 = vpop.permute.xlu0 %9035
  %9037 = vrot.lane.b32.xlu0 %v6017, 84
  %v9038 = vpop.permute.xlu0 %9037
  %9039 = vrot.lane.b32.xlu0 %v6020, 84
  %v9040 = vpop.permute.xlu0 %9039
  %9041 = vrot.lane.b32.xlu0 %v6022, 84
  %v9042 = vpop.permute.xlu0 %9041
  %9043 = vrot.lane.b32.xlu0 %v6025, 84
  %v9044 = vpop.permute.xlu0 %9043
  %9045 = vrot.lane.b32.xlu0 %v6027, 84
  %v9046 = vpop.permute.xlu0 %9045
  %9047 = vrot.lane.b32.xlu0 %v6030, 84
  %v9048 = vpop.permute.xlu0 %9047
  %9049 = vrot.lane.b32.xlu0 %v6032, 84
  %v9050 = vpop.permute.xlu0 %9049
  %9051 = vrot.lane.b32.xlu0 %v6035, 84
  %v9052 = vpop.permute.xlu0 %9051
  %9053 = vrot.lane.b32.xlu0 %v6037, 84
  %v9054 = vpop.permute.xlu0 %9053
  %9055 = vrot.lane.b32.xlu0 %v6040, 84
  %v9056 = vpop.permute.xlu0 %9055
  %9057 = vrot.lane.b32.xlu0 %v6042, 84
  %v9058 = vpop.permute.xlu0 %9057
  %9059 = vrot.lane.b32.xlu0 %v6045, 84
  %v9060 = vpop.permute.xlu0 %9059
  %9061 = vrot.lane.b32.xlu0 %v6047, 84
  %v9062 = vpop.permute.xlu0 %9061
  %9063 = vrot.lane.b32.xlu0 %v6050, 84
  %v9064 = vpop.permute.xlu0 %9063
  %9065 = vrot.lane.b32.xlu0 %v6052, 84
  %v9066 = vpop.permute.xlu0 %9065
  %9067 = vrot.lane.b32.xlu0 %v6055, 84
  %v9068 = vpop.permute.xlu0 %9067
  %9069 = vrot.lane.b32.xlu0 %v6057, 84
  %v9070 = vpop.permute.xlu0 %9069
  %9071 = vrot.lane.b32.xlu0 %v6060, 84
  %v9072 = vpop.permute.xlu0 %9071
  %9073 = vrot.lane.b32.xlu0 %v6062, 84
  %v9074 = vpop.permute.xlu0 %9073
  %9075 = vrot.lane.b32.xlu0 %v6065, 84
  %v9076 = vpop.permute.xlu0 %9075
  %9077 = vrot.lane.b32.xlu0 %v6067, 84
  %v9078 = vpop.permute.xlu0 %9077
  %9079 = vrot.lane.b32.xlu0 %v6070, 84
  %v9080 = vpop.permute.xlu0 %9079
  %9081 = vrot.lane.b32.xlu0 %v6072, 84
  %v9082 = vpop.permute.xlu0 %9081
  %9083 = vrot.lane.b32.xlu0 %v6075, 84
  %v9084 = vpop.permute.xlu0 %9083
  %9085 = vrot.lane.b32.xlu0 %v6077, 84
  %v9086 = vpop.permute.xlu0 %9085
  %9087 = vrot.lane.b32.xlu0 %v7224, 84
  %v9088 = vpop.permute.xlu0 %9087
  %9089 = vrot.lane.b32.xlu0 %v7226, 84
  %v9090 = vpop.permute.xlu0 %9089
  %9091 = vrot.lane.b32.xlu0 %v8104, 84
  %v9092 = vpop.permute.xlu0 %9091
  %9093 = vrot.lane.b32.xlu0 %v8106, 84
  %v9094 = vpop.permute.xlu0 %9093
  %9095 = vrot.lane.b32.xlu0 %v9032, 84
  %v9096 = vpop.permute.xlu0 %9095
  %9097 = vrot.lane.b32.xlu0 %v9034, 84
  %v9098 = vpop.permute.xlu0 %9097
  %v9131 = vadd.f32 %v8997, %v9036
  %v9132 = vadd.f32 %v8998, %v9038
  %v9133 = vadd.f32 %v8999, %v9040
  %v9134 = vadd.f32 %v9000, %v9042
  %v9135 = vadd.f32 %v9001, %v9044
  %v9136 = vadd.f32 %v9002, %v9046
  %v9137 = vadd.f32 %v9003, %v9048
  %v9138 = vadd.f32 %v9004, %v9050
  %v9139 = vadd.f32 %v9005, %v9052
  %v9140 = vadd.f32 %v9006, %v9054
  %v9141 = vadd.f32 %v9007, %v9056
  %v9142 = vadd.f32 %v9008, %v9058
  %v9143 = vadd.f32 %v9009, %v9060
  %v9144 = vadd.f32 %v9010, %v9062
  %v9145 = vadd.f32 %v9011, %v9064
  %v9146 = vadd.f32 %v9012, %v9066
  %v9147 = vadd.f32 %v9013, %v9068
  %v9148 = vadd.f32 %v9014, %v9070
  %v9149 = vadd.f32 %v9015, %v9072
  %v9150 = vadd.f32 %v9016, %v9074
  %v9151 = vadd.f32 %v9017, %v9076
  %v9152 = vadd.f32 %v9018, %v9078
  %v9153 = vadd.f32 %v9019, %v9080
  %v9154 = vadd.f32 %v9020, %v9082
  %v9155 = vadd.f32 %v9021, %v9084
  %v9156 = vadd.f32 %v9022, %v9086
  %v9157 = vadd.f32 %v9023, %v9088
  %v9158 = vadd.f32 %v9024, %v9090
  %v9159 = vadd.f32 %v9025, %v9092
  %v9160 = vadd.f32 %v9026, %v9094
  %v9161 = vadd.f32 %v9027, %v9096
  %v9162 = vadd.f32 %v9028, %v9098
  %v9163 = vrot.slane %v5926, 2
  %v9164 = vrot.slane %v5862, 2
  %v9165 = vsel %vm482, %v9163, %v9164
  %v9166 = vrot.slane %v5943, 2
  %v9167 = vsel %vm482, %v9164, %v9166
  %9168 = vrot.lane.b32.xlu0 %v6197, 82
  %v9169 = vpop.permute.xlu0 %9168
  %9170 = vrot.lane.b32.xlu0 %v6199, 82
  %v9171 = vpop.permute.xlu0 %9170
  %9172 = vrot.lane.b32.xlu0 %v6202, 82
  %v9173 = vpop.permute.xlu0 %9172
  %9174 = vrot.lane.b32.xlu0 %v6204, 82
  %v9175 = vpop.permute.xlu0 %9174
  %9176 = vrot.lane.b32.xlu0 %v6207, 82
  %v9177 = vpop.permute.xlu0 %9176
  %9178 = vrot.lane.b32.xlu0 %v6209, 82
  %v9179 = vpop.permute.xlu0 %9178
  %9180 = vrot.lane.b32.xlu0 %v6212, 82
  %v9181 = vpop.permute.xlu0 %9180
  %9182 = vrot.lane.b32.xlu0 %v6214, 82
  %v9183 = vpop.permute.xlu0 %9182
  %9184 = vrot.lane.b32.xlu0 %v6217, 82
  %v9185 = vpop.permute.xlu0 %9184
  %9186 = vrot.lane.b32.xlu0 %v6219, 82
  %v9187 = vpop.permute.xlu0 %9186
  %9188 = vrot.lane.b32.xlu0 %v6222, 82
  %v9189 = vpop.permute.xlu0 %9188
  %9190 = vrot.lane.b32.xlu0 %v6224, 82
  %v9191 = vpop.permute.xlu0 %9190
  %9192 = vrot.lane.b32.xlu0 %v6227, 82
  %v9193 = vpop.permute.xlu0 %9192
  %9194 = vrot.lane.b32.xlu0 %v6229, 82
  %v9195 = vpop.permute.xlu0 %9194
  %9196 = vrot.lane.b32.xlu0 %v6232, 82
  %v9197 = vpop.permute.xlu0 %9196
  %9198 = vrot.lane.b32.xlu0 %v6234, 82
  %v9199 = vpop.permute.xlu0 %9198
  %9200 = vrot.lane.b32.xlu0 %v6237, 82
  %v9201 = vpop.permute.xlu0 %9200
  %9202 = vrot.lane.b32.xlu0 %v6239, 82
  %v9203 = vpop.permute.xlu0 %9202
  %9204 = vrot.lane.b32.xlu0 %v6242, 82
  %v9205 = vpop.permute.xlu0 %9204
  %9206 = vrot.lane.b32.xlu0 %v6244, 82
  %v9207 = vpop.permute.xlu0 %9206
  %9208 = vrot.lane.b32.xlu0 %v6247, 82
  %v9209 = vpop.permute.xlu0 %9208
  %9210 = vrot.lane.b32.xlu0 %v6249, 82
  %v9211 = vpop.permute.xlu0 %9210
  %9212 = vrot.lane.b32.xlu0 %v6252, 82
  %v9213 = vpop.permute.xlu0 %9212
  %9214 = vrot.lane.b32.xlu0 %v6254, 82
  %v9215 = vpop.permute.xlu0 %9214
  %9216 = vrot.lane.b32.xlu0 %v6257, 82
  %v9217 = vpop.permute.xlu0 %9216
  %9218 = vrot.lane.b32.xlu0 %v6259, 82
  %v9219 = vpop.permute.xlu0 %9218
  %9220 = vrot.lane.b32.xlu0 %v7349, 82
  %v9221 = vpop.permute.xlu0 %9220
  %9222 = vrot.lane.b32.xlu0 %v7351, 82
  %v9223 = vpop.permute.xlu0 %9222
  %9224 = vrot.lane.b32.xlu0 %v8237, 82
  %v9225 = vpop.permute.xlu0 %9224
  %9226 = vrot.lane.b32.xlu0 %v8239, 82
  %v9227 = vpop.permute.xlu0 %9226
  %9228 = vrot.lane.b32.xlu0 %v9165, 82
  %v9229 = vpop.permute.xlu0 %9228
  %9230 = vrot.lane.b32.xlu0 %v9167, 82
  %v9231 = vpop.permute.xlu0 %9230
  %v9264 = vadd.f32 %v9131, %v9169
  %v9265 = vadd.f32 %v9132, %v9171
  %v9266 = vadd.f32 %v9133, %v9173
  %v9267 = vadd.f32 %v9134, %v9175
  %v9268 = vadd.f32 %v9135, %v9177
  %v9269 = vadd.f32 %v9136, %v9179
  %v9270 = vadd.f32 %v9137, %v9181
  %v9271 = vadd.f32 %v9138, %v9183
  %v9272 = vadd.f32 %v9139, %v9185
  %v9273 = vadd.f32 %v9140, %v9187
  %v9274 = vadd.f32 %v9141, %v9189
  %v9275 = vadd.f32 %v9142, %v9191
  %v9276 = vadd.f32 %v9143, %v9193
  %v9277 = vadd.f32 %v9144, %v9195
  %v9278 = vadd.f32 %v9145, %v9197
  %v9279 = vadd.f32 %v9146, %v9199
  %v9280 = vadd.f32 %v9147, %v9201
  %v9281 = vadd.f32 %v9148, %v9203
  %v9282 = vadd.f32 %v9149, %v9205
  %v9283 = vadd.f32 %v9150, %v9207
  %v9284 = vadd.f32 %v9151, %v9209
  %v9285 = vadd.f32 %v9152, %v9211
  %v9286 = vadd.f32 %v9153, %v9213
  %v9287 = vadd.f32 %v9154, %v9215
  %v9288 = vadd.f32 %v9155, %v9217
  %v9289 = vadd.f32 %v9156, %v9219
  %v9290 = vadd.f32 %v9157, %v9221
  %v9291 = vadd.f32 %v9158, %v9223
  %v9292 = vadd.f32 %v9159, %v9225
  %v9293 = vadd.f32 %v9160, %v9227
  %v9294 = vadd.f32 %v9161, %v9229
  %v9295 = vadd.f32 %v9162, %v9231
  %v9296 = vrot.slane %v5926, 3
  %v9297 = vrot.slane %v5862, 3
  %v9298 = vsel %vm670, %v9296, %v9297
  %v9299 = vrot.slane %v5943, 3
  %v9300 = vsel %vm670, %v9297, %v9299
  %9301 = vrot.lane.b32.xlu0 %v6379, 80
  %v9302 = vpop.permute.xlu0 %9301
  %9303 = vrot.lane.b32.xlu0 %v6381, 80
  %v9304 = vpop.permute.xlu0 %9303
  %9305 = vrot.lane.b32.xlu0 %v6384, 80
  %v9306 = vpop.permute.xlu0 %9305
  %9307 = vrot.lane.b32.xlu0 %v6386, 80
  %v9308 = vpop.permute.xlu0 %9307
  %9309 = vrot.lane.b32.xlu0 %v6389, 80
  %v9310 = vpop.permute.xlu0 %9309
  %9311 = vrot.lane.b32.xlu0 %v6391, 80
  %v9312 = vpop.permute.xlu0 %9311
  %9313 = vrot.lane.b32.xlu0 %v6394, 80
  %v9314 = vpop.permute.xlu0 %9313
  %9315 = vrot.lane.b32.xlu0 %v6396, 80
  %v9316 = vpop.permute.xlu0 %9315
  %9317 = vrot.lane.b32.xlu0 %v6399, 80
  %v9318 = vpop.permute.xlu0 %9317
  %9319 = vrot.lane.b32.xlu0 %v6401, 80
  %v9320 = vpop.permute.xlu0 %9319
  %9321 = vrot.lane.b32.xlu0 %v6404, 80
  %v9322 = vpop.permute.xlu0 %9321
  %9323 = vrot.lane.b32.xlu0 %v6406, 80
  %v9324 = vpop.permute.xlu0 %9323
  %9325 = vrot.lane.b32.xlu0 %v6409, 80
  %v9326 = vpop.permute.xlu0 %9325
  %9327 = vrot.lane.b32.xlu0 %v6411, 80
  %v9328 = vpop.permute.xlu0 %9327
  %9329 = vrot.lane.b32.xlu0 %v6414, 80
  %v9330 = vpop.permute.xlu0 %9329
  %9331 = vrot.lane.b32.xlu0 %v6416, 80
  %v9332 = vpop.permute.xlu0 %9331
  %9333 = vrot.lane.b32.xlu0 %v6419, 80
  %v9334 = vpop.permute.xlu0 %9333
  %9335 = vrot.lane.b32.xlu0 %v6421, 80
  %v9336 = vpop.permute.xlu0 %9335
  %9337 = vrot.lane.b32.xlu0 %v6424, 80
  %v9338 = vpop.permute.xlu0 %9337
  %9339 = vrot.lane.b32.xlu0 %v6426, 80
  %v9340 = vpop.permute.xlu0 %9339
  %9341 = vrot.lane.b32.xlu0 %v6429, 80
  %v9342 = vpop.permute.xlu0 %9341
  %9343 = vrot.lane.b32.xlu0 %v6431, 80
  %v9344 = vpop.permute.xlu0 %9343
  %9345 = vrot.lane.b32.xlu0 %v6434, 80
  %v9346 = vpop.permute.xlu0 %9345
  %9347 = vrot.lane.b32.xlu0 %v6436, 80
  %v9348 = vpop.permute.xlu0 %9347
  %9349 = vrot.lane.b32.xlu0 %v6439, 80
  %v9350 = vpop.permute.xlu0 %9349
  %9351 = vrot.lane.b32.xlu0 %v6441, 80
  %v9352 = vpop.permute.xlu0 %9351
  %9353 = vrot.lane.b32.xlu0 %v7474, 80
  %v9354 = vpop.permute.xlu0 %9353
  %9355 = vrot.lane.b32.xlu0 %v7476, 80
  %v9356 = vpop.permute.xlu0 %9355
  %9357 = vrot.lane.b32.xlu0 %v8370, 80
  %v9358 = vpop.permute.xlu0 %9357
  %9359 = vrot.lane.b32.xlu0 %v8372, 80
  %v9360 = vpop.permute.xlu0 %9359
  %9361 = vrot.lane.b32.xlu0 %v9298, 80
  %v9362 = vpop.permute.xlu0 %9361
  %9363 = vrot.lane.b32.xlu0 %v9300, 80
  %v9364 = vpop.permute.xlu0 %9363
  %v9397 = vadd.f32 %v9264, %v9302
  %v9398 = vadd.f32 %v9265, %v9304
  %v9399 = vadd.f32 %v9266, %v9306
  %v9400 = vadd.f32 %v9267, %v9308
  %v9401 = vadd.f32 %v9268, %v9310
  %v9402 = vadd.f32 %v9269, %v9312
  %v9403 = vadd.f32 %v9270, %v9314
  %v9404 = vadd.f32 %v9271, %v9316
  %v9405 = vadd.f32 %v9272, %v9318
  %v9406 = vadd.f32 %v9273, %v9320
  %v9407 = vadd.f32 %v9274, %v9322
  %v9408 = vadd.f32 %v9275, %v9324
  %v9409 = vadd.f32 %v9276, %v9326
  %v9410 = vadd.f32 %v9277, %v9328
  %v9411 = vadd.f32 %v9278, %v9330
  %v9412 = vadd.f32 %v9279, %v9332
  %v9413 = vadd.f32 %v9280, %v9334
  %v9414 = vadd.f32 %v9281, %v9336
  %v9415 = vadd.f32 %v9282, %v9338
  %v9416 = vadd.f32 %v9283, %v9340
  %v9417 = vadd.f32 %v9284, %v9342
  %v9418 = vadd.f32 %v9285, %v9344
  %v9419 = vadd.f32 %v9286, %v9346
  %v9420 = vadd.f32 %v9287, %v9348
  %v9421 = vadd.f32 %v9288, %v9350
  %v9422 = vadd.f32 %v9289, %v9352
  %v9423 = vadd.f32 %v9290, %v9354
  %v9424 = vadd.f32 %v9291, %v9356
  %v9425 = vadd.f32 %v9292, %v9358
  %v9426 = vadd.f32 %v9293, %v9360
  %v9427 = vadd.f32 %v9294, %v9362
  %v9428 = vadd.f32 %v9295, %v9364
  %v9429 = vrot.slane %v5926, 4
  %v9430 = vrot.slane %v5862, 4
  %v9431 = vsel %vm858, %v9429, %v9430
  %v9432 = vrot.slane %v5943, 4
  %v9433 = vsel %vm858, %v9430, %v9432
  %9434 = vrot.lane.b32.xlu0 %v6561, 78
  %v9435 = vpop.permute.xlu0 %9434
  %9436 = vrot.lane.b32.xlu0 %v6563, 78
  %v9437 = vpop.permute.xlu0 %9436
  %9438 = vrot.lane.b32.xlu0 %v6566, 78
  %v9439 = vpop.permute.xlu0 %9438
  %9440 = vrot.lane.b32.xlu0 %v6568, 78
  %v9441 = vpop.permute.xlu0 %9440
  %9442 = vrot.lane.b32.xlu0 %v6571, 78
  %v9443 = vpop.permute.xlu0 %9442
  %9444 = vrot.lane.b32.xlu0 %v6573, 78
  %v9445 = vpop.permute.xlu0 %9444
  %9446 = vrot.lane.b32.xlu0 %v6576, 78
  %v9447 = vpop.permute.xlu0 %9446
  %9448 = vrot.lane.b32.xlu0 %v6578, 78
  %v9449 = vpop.permute.xlu0 %9448
  %9450 = vrot.lane.b32.xlu0 %v6581, 78
  %v9451 = vpop.permute.xlu0 %9450
  %9452 = vrot.lane.b32.xlu0 %v6583, 78
  %v9453 = vpop.permute.xlu0 %9452
  %9454 = vrot.lane.b32.xlu0 %v6586, 78
  %v9455 = vpop.permute.xlu0 %9454
  %9456 = vrot.lane.b32.xlu0 %v6588, 78
  %v9457 = vpop.permute.xlu0 %9456
  %9458 = vrot.lane.b32.xlu0 %v6591, 78
  %v9459 = vpop.permute.xlu0 %9458
  %9460 = vrot.lane.b32.xlu0 %v6593, 78
  %v9461 = vpop.permute.xlu0 %9460
  %9462 = vrot.lane.b32.xlu0 %v6596, 78
  %v9463 = vpop.permute.xlu0 %9462
  %9464 = vrot.lane.b32.xlu0 %v6598, 78
  %v9465 = vpop.permute.xlu0 %9464
  %9466 = vrot.lane.b32.xlu0 %v6601, 78
  %v9467 = vpop.permute.xlu0 %9466
  %9468 = vrot.lane.b32.xlu0 %v6603, 78
  %v9469 = vpop.permute.xlu0 %9468
  %9470 = vrot.lane.b32.xlu0 %v6606, 78
  %v9471 = vpop.permute.xlu0 %9470
  %9472 = vrot.lane.b32.xlu0 %v6608, 78
  %v9473 = vpop.permute.xlu0 %9472
  %9474 = vrot.lane.b32.xlu0 %v6611, 78
  %v9475 = vpop.permute.xlu0 %9474
  %9476 = vrot.lane.b32.xlu0 %v6613, 78
  %v9477 = vpop.permute.xlu0 %9476
  %9478 = vrot.lane.b32.xlu0 %v6616, 78
  %v9479 = vpop.permute.xlu0 %9478
  %9480 = vrot.lane.b32.xlu0 %v6618, 78
  %v9481 = vpop.permute.xlu0 %9480
  %9482 = vrot.lane.b32.xlu0 %v6621, 78
  %v9483 = vpop.permute.xlu0 %9482
  %9484 = vrot.lane.b32.xlu0 %v6623, 78
  %v9485 = vpop.permute.xlu0 %9484
  %9486 = vrot.lane.b32.xlu0 %v7599, 78
  %v9487 = vpop.permute.xlu0 %9486
  %9488 = vrot.lane.b32.xlu0 %v7601, 78
  %v9489 = vpop.permute.xlu0 %9488
  %9490 = vrot.lane.b32.xlu0 %v8503, 78
  %v9491 = vpop.permute.xlu0 %9490
  %9492 = vrot.lane.b32.xlu0 %v8505, 78
  %v9493 = vpop.permute.xlu0 %9492
  %9494 = vrot.lane.b32.xlu0 %v9431, 78
  %v9495 = vpop.permute.xlu0 %9494
  %9496 = vrot.lane.b32.xlu0 %v9433, 78
  %v9497 = vpop.permute.xlu0 %9496
  %v9530 = vadd.f32 %v9397, %v9435
  %v9531 = vadd.f32 %v9398, %v9437
  %v9532 = vadd.f32 %v9399, %v9439
  %v9533 = vadd.f32 %v9400, %v9441
  %v9534 = vadd.f32 %v9401, %v9443
  %v9535 = vadd.f32 %v9402, %v9445
  %v9536 = vadd.f32 %v9403, %v9447
  %v9537 = vadd.f32 %v9404, %v9449
  %v9538 = vadd.f32 %v9405, %v9451
  %v9539 = vadd.f32 %v9406, %v9453
  %v9540 = vadd.f32 %v9407, %v9455
  %v9541 = vadd.f32 %v9408, %v9457
  %v9542 = vadd.f32 %v9409, %v9459
  %v9543 = vadd.f32 %v9410, %v9461
  %v9544 = vadd.f32 %v9411, %v9463
  %v9545 = vadd.f32 %v9412, %v9465
  %v9546 = vadd.f32 %v9413, %v9467
  %v9547 = vadd.f32 %v9414, %v9469
  %v9548 = vadd.f32 %v9415, %v9471
  %v9549 = vadd.f32 %v9416, %v9473
  %v9550 = vadd.f32 %v9417, %v9475
  %v9551 = vadd.f32 %v9418, %v9477
  %v9552 = vadd.f32 %v9419, %v9479
  %v9553 = vadd.f32 %v9420, %v9481
  %v9554 = vadd.f32 %v9421, %v9483
  %v9555 = vadd.f32 %v9422, %v9485
  %v9556 = vadd.f32 %v9423, %v9487
  %v9557 = vadd.f32 %v9424, %v9489
  %v9558 = vadd.f32 %v9425, %v9491
  %v9559 = vadd.f32 %v9426, %v9493
  %v9560 = vadd.f32 %v9427, %v9495
  %v9561 = vadd.f32 %v9428, %v9497
  %v9562 = vrot.slane %v5926, 5
  %v9563 = vrot.slane %v5862, 5
  %v9564 = vsel %vm1844, %v9562, %v9563
  %v9565 = vrot.slane %v5943, 5
  %v9566 = vsel %vm1844, %v9563, %v9565
  %9567 = vrot.lane.b32.xlu0 %v6743, 76
  %v9568 = vpop.permute.xlu0 %9567
  %9569 = vrot.lane.b32.xlu0 %v6745, 76
  %v9570 = vpop.permute.xlu0 %9569
  %9571 = vrot.lane.b32.xlu0 %v6748, 76
  %v9572 = vpop.permute.xlu0 %9571
  %9573 = vrot.lane.b32.xlu0 %v6750, 76
  %v9574 = vpop.permute.xlu0 %9573
  %9575 = vrot.lane.b32.xlu0 %v6753, 76
  %v9576 = vpop.permute.xlu0 %9575
  %9577 = vrot.lane.b32.xlu0 %v6755, 76
  %v9578 = vpop.permute.xlu0 %9577
  %9579 = vrot.lane.b32.xlu0 %v6758, 76
  %v9580 = vpop.permute.xlu0 %9579
  %9581 = vrot.lane.b32.xlu0 %v6760, 76
  %v9582 = vpop.permute.xlu0 %9581
  %9583 = vrot.lane.b32.xlu0 %v6763, 76
  %v9584 = vpop.permute.xlu0 %9583
  %9585 = vrot.lane.b32.xlu0 %v6765, 76
  %v9586 = vpop.permute.xlu0 %9585
  %9587 = vrot.lane.b32.xlu0 %v6768, 76
  %v9588 = vpop.permute.xlu0 %9587
  %9589 = vrot.lane.b32.xlu0 %v6770, 76
  %v9590 = vpop.permute.xlu0 %9589
  %9591 = vrot.lane.b32.xlu0 %v6773, 76
  %v9592 = vpop.permute.xlu0 %9591
  %9593 = vrot.lane.b32.xlu0 %v6775, 76
  %v9594 = vpop.permute.xlu0 %9593
  %9595 = vrot.lane.b32.xlu0 %v6778, 76
  %v9596 = vpop.permute.xlu0 %9595
  %9597 = vrot.lane.b32.xlu0 %v6780, 76
  %v9598 = vpop.permute.xlu0 %9597
  %9599 = vrot.lane.b32.xlu0 %v6783, 76
  %v9600 = vpop.permute.xlu0 %9599
  %9601 = vrot.lane.b32.xlu0 %v6785, 76
  %v9602 = vpop.permute.xlu0 %9601
  %9603 = vrot.lane.b32.xlu0 %v6788, 76
  %v9604 = vpop.permute.xlu0 %9603
  %9605 = vrot.lane.b32.xlu0 %v6790, 76
  %v9606 = vpop.permute.xlu0 %9605
  %9607 = vrot.lane.b32.xlu0 %v6793, 76
  %v9608 = vpop.permute.xlu0 %9607
  %9609 = vrot.lane.b32.xlu0 %v6795, 76
  %v9610 = vpop.permute.xlu0 %9609
  %9611 = vrot.lane.b32.xlu0 %v6798, 76
  %v9612 = vpop.permute.xlu0 %9611
  %9613 = vrot.lane.b32.xlu0 %v6800, 76
  %v9614 = vpop.permute.xlu0 %9613
  %9615 = vrot.lane.b32.xlu0 %v6803, 76
  %v9616 = vpop.permute.xlu0 %9615
  %9617 = vrot.lane.b32.xlu0 %v6805, 76
  %v9618 = vpop.permute.xlu0 %9617
  %9619 = vrot.lane.b32.xlu0 %v7724, 76
  %v9620 = vpop.permute.xlu0 %9619
  %9621 = vrot.lane.b32.xlu0 %v7726, 76
  %v9622 = vpop.permute.xlu0 %9621
  %9623 = vrot.lane.b32.xlu0 %v8636, 76
  %v9624 = vpop.permute.xlu0 %9623
  %9625 = vrot.lane.b32.xlu0 %v8638, 76
  %v9626 = vpop.permute.xlu0 %9625
  %9627 = vrot.lane.b32.xlu0 %v9564, 76
  %v9628 = vpop.permute.xlu0 %9627
  %9629 = vrot.lane.b32.xlu0 %v9566, 76
  %v9630 = vpop.permute.xlu0 %9629
  %v9663 = vadd.f32 %v9530, %v9568
  %v9664 = vadd.f32 %v9531, %v9570
  %v9665 = vadd.f32 %v9532, %v9572
  %v9666 = vadd.f32 %v9533, %v9574
  %v9667 = vadd.f32 %v9534, %v9576
  %v9668 = vadd.f32 %v9535, %v9578
  %v9669 = vadd.f32 %v9536, %v9580
  %v9670 = vadd.f32 %v9537, %v9582
  %v9671 = vadd.f32 %v9538, %v9584
  %v9672 = vadd.f32 %v9539, %v9586
  %v9673 = vadd.f32 %v9540, %v9588
  %v9674 = vadd.f32 %v9541, %v9590
  %v9675 = vadd.f32 %v9542, %v9592
  %v9676 = vadd.f32 %v9543, %v9594
  %v9677 = vadd.f32 %v9544, %v9596
  %v9678 = vadd.f32 %v9545, %v9598
  %v9679 = vadd.f32 %v9546, %v9600
  %v9680 = vadd.f32 %v9547, %v9602
  %v9681 = vadd.f32 %v9548, %v9604
  %v9682 = vadd.f32 %v9549, %v9606
  %v9683 = vadd.f32 %v9550, %v9608
  %v9684 = vadd.f32 %v9551, %v9610
  %v9685 = vadd.f32 %v9552, %v9612
  %v9686 = vadd.f32 %v9553, %v9614
  %v9687 = vadd.f32 %v9554, %v9616
  %v9688 = vadd.f32 %v9555, %v9618
  %v9689 = vadd.f32 %v9556, %v9620
  %v9690 = vadd.f32 %v9557, %v9622
  %v9691 = vadd.f32 %v9558, %v9624
  %v9692 = vadd.f32 %v9559, %v9626
  %v9693 = vadd.f32 %v9560, %v9628
  %v9694 = vadd.f32 %v9561, %v9630
  %v9695 = vrot.slane %v5926, 6
  %v9696 = vrot.slane %v5862, 6
  %v9697 = vsel %vm125, %v9695, %v9696
  %v9698 = vrot.slane %v5943, 6
  %v9699 = vsel %vm125, %v9696, %v9698
  %9700 = vrot.lane.b32.xlu0 %v6925, 74
  %v9701 = vpop.permute.xlu0 %9700
  %9702 = vrot.lane.b32.xlu0 %v6927, 74
  %v9703 = vpop.permute.xlu0 %9702
  %9704 = vrot.lane.b32.xlu0 %v6930, 74
  %v9705 = vpop.permute.xlu0 %9704
  %9706 = vrot.lane.b32.xlu0 %v6932, 74
  %v9707 = vpop.permute.xlu0 %9706
  %9708 = vrot.lane.b32.xlu0 %v6935, 74
  %v9709 = vpop.permute.xlu0 %9708
  %9710 = vrot.lane.b32.xlu0 %v6937, 74
  %v9711 = vpop.permute.xlu0 %9710
  %9712 = vrot.lane.b32.xlu0 %v6940, 74
  %v9713 = vpop.permute.xlu0 %9712
  %9714 = vrot.lane.b32.xlu0 %v6942, 74
  %v9715 = vpop.permute.xlu0 %9714
  %9716 = vrot.lane.b32.xlu0 %v6945, 74
  %v9717 = vpop.permute.xlu0 %9716
  %9718 = vrot.lane.b32.xlu0 %v6947, 74
  %v9719 = vpop.permute.xlu0 %9718
  %9720 = vrot.lane.b32.xlu0 %v6950, 74
  %v9721 = vpop.permute.xlu0 %9720
  %9722 = vrot.lane.b32.xlu0 %v6952, 74
  %v9723 = vpop.permute.xlu0 %9722
  %9724 = vrot.lane.b32.xlu0 %v6955, 74
  %v9725 = vpop.permute.xlu0 %9724
  %9726 = vrot.lane.b32.xlu0 %v6957, 74
  %v9727 = vpop.permute.xlu0 %9726
  %9728 = vrot.lane.b32.xlu0 %v6960, 74
  %v9729 = vpop.permute.xlu0 %9728
  %9730 = vrot.lane.b32.xlu0 %v6962, 74
  %v9731 = vpop.permute.xlu0 %9730
  %9732 = vrot.lane.b32.xlu0 %v6965, 74
  %v9733 = vpop.permute.xlu0 %9732
  %9734 = vrot.lane.b32.xlu0 %v6967, 74
  %v9735 = vpop.permute.xlu0 %9734
  %9736 = vrot.lane.b32.xlu0 %v6970, 74
  %v9737 = vpop.permute.xlu0 %9736
  %9738 = vrot.lane.b32.xlu0 %v6972, 74
  %v9739 = vpop.permute.xlu0 %9738
  %9740 = vrot.lane.b32.xlu0 %v6975, 74
  %v9741 = vpop.permute.xlu0 %9740
  %9742 = vrot.lane.b32.xlu0 %v6977, 74
  %v9743 = vpop.permute.xlu0 %9742
  %9744 = vrot.lane.b32.xlu0 %v6980, 74
  %v9745 = vpop.permute.xlu0 %9744
  %9746 = vrot.lane.b32.xlu0 %v6982, 74
  %v9747 = vpop.permute.xlu0 %9746
  %9748 = vrot.lane.b32.xlu0 %v6985, 74
  %v9749 = vpop.permute.xlu0 %9748
  %9750 = vrot.lane.b32.xlu0 %v6987, 74
  %v9751 = vpop.permute.xlu0 %9750
  %9752 = vrot.lane.b32.xlu0 %v7849, 74
  %v9753 = vpop.permute.xlu0 %9752
  %9754 = vrot.lane.b32.xlu0 %v7851, 74
  %v9755 = vpop.permute.xlu0 %9754
  %9756 = vrot.lane.b32.xlu0 %v8769, 74
  %v9757 = vpop.permute.xlu0 %9756
  %9758 = vrot.lane.b32.xlu0 %v8771, 74
  %v9759 = vpop.permute.xlu0 %9758
  %9760 = vrot.lane.b32.xlu0 %v9697, 74
  %v9761 = vpop.permute.xlu0 %9760
  %9762 = vrot.lane.b32.xlu0 %v9699, 74
  %v9763 = vpop.permute.xlu0 %9762
  %v9796 = vadd.f32 %v9663, %v9701
  %v9797 = vadd.f32 %v9664, %v9703
  %v9798 = vadd.f32 %v9665, %v9705
  %v9799 = vadd.f32 %v9666, %v9707
  %v9800 = vadd.f32 %v9667, %v9709
  %v9801 = vadd.f32 %v9668, %v9711
  %v9802 = vadd.f32 %v9669, %v9713
  %v9803 = vadd.f32 %v9670, %v9715
  %v9804 = vadd.f32 %v9671, %v9717
  %v9805 = vadd.f32 %v9672, %v9719
  %v9806 = vadd.f32 %v9673, %v9721
  %v9807 = vadd.f32 %v9674, %v9723
  %v9808 = vadd.f32 %v9675, %v9725
  %v9809 = vadd.f32 %v9676, %v9727
  %v9810 = vadd.f32 %v9677, %v9729
  %v9811 = vadd.f32 %v9678, %v9731
  %v9812 = vadd.f32 %v9679, %v9733
  %v9813 = vadd.f32 %v9680, %v9735
  %v9814 = vadd.f32 %v9681, %v9737
  %v9815 = vadd.f32 %v9682, %v9739
  %v9816 = vadd.f32 %v9683, %v9741
  %v9817 = vadd.f32 %v9684, %v9743
  %v9818 = vadd.f32 %v9685, %v9745
  %v9819 = vadd.f32 %v9686, %v9747
  %v9820 = vadd.f32 %v9687, %v9749
  %v9821 = vadd.f32 %v9688, %v9751
  %v9822 = vadd.f32 %v9689, %v9753
  %v9823 = vadd.f32 %v9690, %v9755
  %v9824 = vadd.f32 %v9691, %v9757
  %v9825 = vadd.f32 %v9692, %v9759
  %v9826 = vadd.f32 %v9693, %v9761
  %v9827 = vadd.f32 %v9694, %v9763
  %9828 = vrot.lane.b32.xlu0 %v5912, 72
  %v9829 = vpop.permute.xlu0 %9828
  %9830 = vrot.lane.b32.xlu0 %v5820, 72
  %v9831 = vpop.permute.xlu0 %9830
  %9832 = vrot.lane.b32.xlu0 %v5913, 72
  %v9833 = vpop.permute.xlu0 %9832
  %9834 = vrot.lane.b32.xlu0 %v5823, 72
  %v9835 = vpop.permute.xlu0 %9834
  %9836 = vrot.lane.b32.xlu0 %v5914, 72
  %v9837 = vpop.permute.xlu0 %9836
  %9838 = vrot.lane.b32.xlu0 %v5826, 72
  %v9839 = vpop.permute.xlu0 %9838
  %9840 = vrot.lane.b32.xlu0 %v5915, 72
  %v9841 = vpop.permute.xlu0 %9840
  %9842 = vrot.lane.b32.xlu0 %v5829, 72
  %v9843 = vpop.permute.xlu0 %9842
  %9844 = vrot.lane.b32.xlu0 %v5916, 72
  %v9845 = vpop.permute.xlu0 %9844
  %9846 = vrot.lane.b32.xlu0 %v5832, 72
  %v9847 = vpop.permute.xlu0 %9846
  %9848 = vrot.lane.b32.xlu0 %v5917, 72
  %v9849 = vpop.permute.xlu0 %9848
  %9850 = vrot.lane.b32.xlu0 %v5835, 72
  %v9851 = vpop.permute.xlu0 %9850
  %9852 = vrot.lane.b32.xlu0 %v5918, 72
  %v9853 = vpop.permute.xlu0 %9852
  %9854 = vrot.lane.b32.xlu0 %v5838, 72
  %v9855 = vpop.permute.xlu0 %9854
  %9856 = vrot.lane.b32.xlu0 %v5919, 72
  %v9857 = vpop.permute.xlu0 %9856
  %9858 = vrot.lane.b32.xlu0 %v5841, 72
  %v9859 = vpop.permute.xlu0 %9858
  %9860 = vrot.lane.b32.xlu0 %v5920, 72
  %v9861 = vpop.permute.xlu0 %9860
  %9862 = vrot.lane.b32.xlu0 %v5844, 72
  %v9863 = vpop.permute.xlu0 %9862
  %9864 = vrot.lane.b32.xlu0 %v5921, 72
  %v9865 = vpop.permute.xlu0 %9864
  %9866 = vrot.lane.b32.xlu0 %v5847, 72
  %v9867 = vpop.permute.xlu0 %9866
  %9868 = vrot.lane.b32.xlu0 %v5922, 72
  %v9869 = vpop.permute.xlu0 %9868
  %9870 = vrot.lane.b32.xlu0 %v5850, 72
  %v9871 = vpop.permute.xlu0 %9870
  %9872 = vrot.lane.b32.xlu0 %v5923, 72
  %v9873 = vpop.permute.xlu0 %9872
  %9874 = vrot.lane.b32.xlu0 %v5853, 72
  %v9875 = vpop.permute.xlu0 %9874
  %9876 = vrot.lane.b32.xlu0 %v5924, 72
  %v9877 = vpop.permute.xlu0 %9876
  %9878 = vrot.lane.b32.xlu0 %v5856, 72
  %v9879 = vpop.permute.xlu0 %9878
  %9880 = vrot.lane.b32.xlu0 %v5925, 72
  %v9881 = vpop.permute.xlu0 %9880
  %9882 = vrot.lane.b32.xlu0 %v5859, 72
  %v9883 = vpop.permute.xlu0 %9882
  %9884 = vrot.lane.b32.xlu0 %v5926, 72
  %v9885 = vpop.permute.xlu0 %9884
  %9886 = vrot.lane.b32.xlu0 %v5862, 72
  %v9887 = vpop.permute.xlu0 %9886
  %9888 = vrot.lane.b32.xlu0 %v5910, 72
  %v9889 = vpop.permute.xlu0 %9888
  %9890 = vrot.lane.b32.xlu0 %v5814, 72
  %v9891 = vpop.permute.xlu0 %9890
  %v9924 = vadd.f32 %v9796, %v9829
  %v9925 = vadd.f32 %v9797, %v9831
  %v9926 = vadd.f32 %v9798, %v9833
  %v9927 = vadd.f32 %v9799, %v9835
  %v9928 = vadd.f32 %v9800, %v9837
  %v9929 = vadd.f32 %v9801, %v9839
  %v9930 = vadd.f32 %v9802, %v9841
  %v9931 = vadd.f32 %v9803, %v9843
  %v9932 = vadd.f32 %v9804, %v9845
  %v9933 = vadd.f32 %v9805, %v9847
  %v9934 = vadd.f32 %v9806, %v9849
  %v9935 = vadd.f32 %v9807, %v9851
  %v9936 = vadd.f32 %v9808, %v9853
  %v9937 = vadd.f32 %v9809, %v9855
  %v9938 = vadd.f32 %v9810, %v9857
  %v9939 = vadd.f32 %v9811, %v9859
  %v9940 = vadd.f32 %v9812, %v9861
  %v9941 = vadd.f32 %v9813, %v9863
  %v9942 = vadd.f32 %v9814, %v9865
  %v9943 = vadd.f32 %v9815, %v9867
  %v9944 = vadd.f32 %v9816, %v9869
  %v9945 = vadd.f32 %v9817, %v9871
  %v9946 = vadd.f32 %v9818, %v9873
  %v9947 = vadd.f32 %v9819, %v9875
  %v9948 = vadd.f32 %v9820, %v9877
  %v9949 = vadd.f32 %v9821, %v9879
  %v9950 = vadd.f32 %v9822, %v9881
  %v9951 = vadd.f32 %v9823, %v9883
  %v9952 = vadd.f32 %v9824, %v9885
  %v9953 = vadd.f32 %v9825, %v9887
  %v9954 = vadd.f32 %v9826, %v9889
  %v9955 = vadd.f32 %v9827, %v9891
  %9956 = vrot.lane.b32.xlu0 %v6020, 70
  %v9957 = vpop.permute.xlu0 %9956
  %9958 = vrot.lane.b32.xlu0 %v6022, 70
  %v9959 = vpop.permute.xlu0 %9958
  %9960 = vrot.lane.b32.xlu0 %v6025, 70
  %v9961 = vpop.permute.xlu0 %9960
  %9962 = vrot.lane.b32.xlu0 %v6027, 70
  %v9963 = vpop.permute.xlu0 %9962
  %9964 = vrot.lane.b32.xlu0 %v6030, 70
  %v9965 = vpop.permute.xlu0 %9964
  %9966 = vrot.lane.b32.xlu0 %v6032, 70
  %v9967 = vpop.permute.xlu0 %9966
  %9968 = vrot.lane.b32.xlu0 %v6035, 70
  %v9969 = vpop.permute.xlu0 %9968
  %9970 = vrot.lane.b32.xlu0 %v6037, 70
  %v9971 = vpop.permute.xlu0 %9970
  %9972 = vrot.lane.b32.xlu0 %v6040, 70
  %v9973 = vpop.permute.xlu0 %9972
  %9974 = vrot.lane.b32.xlu0 %v6042, 70
  %v9975 = vpop.permute.xlu0 %9974
  %9976 = vrot.lane.b32.xlu0 %v6045, 70
  %v9977 = vpop.permute.xlu0 %9976
  %9978 = vrot.lane.b32.xlu0 %v6047, 70
  %v9979 = vpop.permute.xlu0 %9978
  %9980 = vrot.lane.b32.xlu0 %v6050, 70
  %v9981 = vpop.permute.xlu0 %9980
  %9982 = vrot.lane.b32.xlu0 %v6052, 70
  %v9983 = vpop.permute.xlu0 %9982
  %9984 = vrot.lane.b32.xlu0 %v6055, 70
  %v9985 = vpop.permute.xlu0 %9984
  %9986 = vrot.lane.b32.xlu0 %v6057, 70
  %v9987 = vpop.permute.xlu0 %9986
  %9988 = vrot.lane.b32.xlu0 %v6060, 70
  %v9989 = vpop.permute.xlu0 %9988
  %9990 = vrot.lane.b32.xlu0 %v6062, 70
  %v9991 = vpop.permute.xlu0 %9990
  %9992 = vrot.lane.b32.xlu0 %v6065, 70
  %v9993 = vpop.permute.xlu0 %9992
  %9994 = vrot.lane.b32.xlu0 %v6067, 70
  %v9995 = vpop.permute.xlu0 %9994
  %9996 = vrot.lane.b32.xlu0 %v6070, 70
  %v9997 = vpop.permute.xlu0 %9996
  %9998 = vrot.lane.b32.xlu0 %v6072, 70
  %v9999 = vpop.permute.xlu0 %9998
  %10000 = vrot.lane.b32.xlu0 %v6075, 70
  %v10001 = vpop.permute.xlu0 %10000
  %10002 = vrot.lane.b32.xlu0 %v6077, 70
  %v10003 = vpop.permute.xlu0 %10002
  %10004 = vrot.lane.b32.xlu0 %v7224, 70
  %v10005 = vpop.permute.xlu0 %10004
  %10006 = vrot.lane.b32.xlu0 %v7226, 70
  %v10007 = vpop.permute.xlu0 %10006
  %10008 = vrot.lane.b32.xlu0 %v8104, 70
  %v10009 = vpop.permute.xlu0 %10008
  %10010 = vrot.lane.b32.xlu0 %v8106, 70
  %v10011 = vpop.permute.xlu0 %10010
  %10012 = vrot.lane.b32.xlu0 %v9032, 70
  %v10013 = vpop.permute.xlu0 %10012
  %10014 = vrot.lane.b32.xlu0 %v9034, 70
  %v10015 = vpop.permute.xlu0 %10014
  %10016 = vrot.lane.b32.xlu0 %v6010, 70
  %v10017 = vpop.permute.xlu0 %10016
  %10018 = vrot.lane.b32.xlu0 %v6012, 70
  %v10019 = vpop.permute.xlu0 %10018
  %v10052 = vadd.f32 %v9924, %v9957
  %v10053 = vadd.f32 %v9925, %v9959
  %v10054 = vadd.f32 %v9926, %v9961
  %v10055 = vadd.f32 %v9927, %v9963
  %v10056 = vadd.f32 %v9928, %v9965
  %v10057 = vadd.f32 %v9929, %v9967
  %v10058 = vadd.f32 %v9930, %v9969
  %v10059 = vadd.f32 %v9931, %v9971
  %v10060 = vadd.f32 %v9932, %v9973
  %v10061 = vadd.f32 %v9933, %v9975
  %v10062 = vadd.f32 %v9934, %v9977
  %v10063 = vadd.f32 %v9935, %v9979
  %v10064 = vadd.f32 %v9936, %v9981
  %v10065 = vadd.f32 %v9937, %v9983
  %v10066 = vadd.f32 %v9938, %v9985
  %v10067 = vadd.f32 %v9939, %v9987
  %v10068 = vadd.f32 %v9940, %v9989
  %v10069 = vadd.f32 %v9941, %v9991
  %v10070 = vadd.f32 %v9942, %v9993
  %v10071 = vadd.f32 %v9943, %v9995
  %v10072 = vadd.f32 %v9944, %v9997
  %v10073 = vadd.f32 %v9945, %v9999
  %v10074 = vadd.f32 %v9946, %v10001
  %v10075 = vadd.f32 %v9947, %v10003
  %v10076 = vadd.f32 %v9948, %v10005
  %v10077 = vadd.f32 %v9949, %v10007
  %v10078 = vadd.f32 %v9950, %v10009
  %v10079 = vadd.f32 %v9951, %v10011
  %v10080 = vadd.f32 %v9952, %v10013
  %v10081 = vadd.f32 %v9953, %v10015
  %v10082 = vadd.f32 %v9954, %v10017
  %v10083 = vadd.f32 %v9955, %v10019
  %10084 = vrot.lane.b32.xlu0 %v6202, 68
  %v10085 = vpop.permute.xlu0 %10084
  %10086 = vrot.lane.b32.xlu0 %v6204, 68
  %v10087 = vpop.permute.xlu0 %10086
  %10088 = vrot.lane.b32.xlu0 %v6207, 68
  %v10089 = vpop.permute.xlu0 %10088
  %10090 = vrot.lane.b32.xlu0 %v6209, 68
  %v10091 = vpop.permute.xlu0 %10090
  %10092 = vrot.lane.b32.xlu0 %v6212, 68
  %v10093 = vpop.permute.xlu0 %10092
  %10094 = vrot.lane.b32.xlu0 %v6214, 68
  %v10095 = vpop.permute.xlu0 %10094
  %10096 = vrot.lane.b32.xlu0 %v6217, 68
  %v10097 = vpop.permute.xlu0 %10096
  %10098 = vrot.lane.b32.xlu0 %v6219, 68
  %v10099 = vpop.permute.xlu0 %10098
  %10100 = vrot.lane.b32.xlu0 %v6222, 68
  %v10101 = vpop.permute.xlu0 %10100
  %10102 = vrot.lane.b32.xlu0 %v6224, 68
  %v10103 = vpop.permute.xlu0 %10102
  %10104 = vrot.lane.b32.xlu0 %v6227, 68
  %v10105 = vpop.permute.xlu0 %10104
  %10106 = vrot.lane.b32.xlu0 %v6229, 68
  %v10107 = vpop.permute.xlu0 %10106
  %10108 = vrot.lane.b32.xlu0 %v6232, 68
  %v10109 = vpop.permute.xlu0 %10108
  %10110 = vrot.lane.b32.xlu0 %v6234, 68
  %v10111 = vpop.permute.xlu0 %10110
  %10112 = vrot.lane.b32.xlu0 %v6237, 68
  %v10113 = vpop.permute.xlu0 %10112
  %10114 = vrot.lane.b32.xlu0 %v6239, 68
  %v10115 = vpop.permute.xlu0 %10114
  %10116 = vrot.lane.b32.xlu0 %v6242, 68
  %v10117 = vpop.permute.xlu0 %10116
  %10118 = vrot.lane.b32.xlu0 %v6244, 68
  %v10119 = vpop.permute.xlu0 %10118
  %10120 = vrot.lane.b32.xlu0 %v6247, 68
  %v10121 = vpop.permute.xlu0 %10120
  %10122 = vrot.lane.b32.xlu0 %v6249, 68
  %v10123 = vpop.permute.xlu0 %10122
  %10124 = vrot.lane.b32.xlu0 %v6252, 68
  %v10125 = vpop.permute.xlu0 %10124
  %10126 = vrot.lane.b32.xlu0 %v6254, 68
  %v10127 = vpop.permute.xlu0 %10126
  %10128 = vrot.lane.b32.xlu0 %v6257, 68
  %v10129 = vpop.permute.xlu0 %10128
  %10130 = vrot.lane.b32.xlu0 %v6259, 68
  %v10131 = vpop.permute.xlu0 %10130
  %10132 = vrot.lane.b32.xlu0 %v7349, 68
  %v10133 = vpop.permute.xlu0 %10132
  %10134 = vrot.lane.b32.xlu0 %v7351, 68
  %v10135 = vpop.permute.xlu0 %10134
  %10136 = vrot.lane.b32.xlu0 %v8237, 68
  %v10137 = vpop.permute.xlu0 %10136
  %10138 = vrot.lane.b32.xlu0 %v8239, 68
  %v10139 = vpop.permute.xlu0 %10138
  %10140 = vrot.lane.b32.xlu0 %v9165, 68
  %v10141 = vpop.permute.xlu0 %10140
  %10142 = vrot.lane.b32.xlu0 %v9167, 68
  %v10143 = vpop.permute.xlu0 %10142
  %10144 = vrot.lane.b32.xlu0 %v6192, 68
  %v10145 = vpop.permute.xlu0 %10144
  %10146 = vrot.lane.b32.xlu0 %v6194, 68
  %v10147 = vpop.permute.xlu0 %10146
  %v10180 = vadd.f32 %v10052, %v10085
  %v10181 = vadd.f32 %v10053, %v10087
  %v10182 = vadd.f32 %v10054, %v10089
  %v10183 = vadd.f32 %v10055, %v10091
  %v10184 = vadd.f32 %v10056, %v10093
  %v10185 = vadd.f32 %v10057, %v10095
  %v10186 = vadd.f32 %v10058, %v10097
  %v10187 = vadd.f32 %v10059, %v10099
  %v10188 = vadd.f32 %v10060, %v10101
  %v10189 = vadd.f32 %v10061, %v10103
  %v10190 = vadd.f32 %v10062, %v10105
  %v10191 = vadd.f32 %v10063, %v10107
  %v10192 = vadd.f32 %v10064, %v10109
  %v10193 = vadd.f32 %v10065, %v10111
  %v10194 = vadd.f32 %v10066, %v10113
  %v10195 = vadd.f32 %v10067, %v10115
  %v10196 = vadd.f32 %v10068, %v10117
  %v10197 = vadd.f32 %v10069, %v10119
  %v10198 = vadd.f32 %v10070, %v10121
  %v10199 = vadd.f32 %v10071, %v10123
  %v10200 = vadd.f32 %v10072, %v10125
  %v10201 = vadd.f32 %v10073, %v10127
  %v10202 = vadd.f32 %v10074, %v10129
  %v10203 = vadd.f32 %v10075, %v10131
  %v10204 = vadd.f32 %v10076, %v10133
  %v10205 = vadd.f32 %v10077, %v10135
  %v10206 = vadd.f32 %v10078, %v10137
  %v10207 = vadd.f32 %v10079, %v10139
  %v10208 = vadd.f32 %v10080, %v10141
  %v10209 = vadd.f32 %v10081, %v10143
  %v10210 = vadd.f32 %v10082, %v10145
  %v10211 = vadd.f32 %v10083, %v10147
  %10212 = vrot.lane.b32.xlu0 %v6384, 66
  %v10213 = vpop.permute.xlu0 %10212
  %10214 = vrot.lane.b32.xlu0 %v6386, 66
  %v10215 = vpop.permute.xlu0 %10214
  %10216 = vrot.lane.b32.xlu0 %v6389, 66
  %v10217 = vpop.permute.xlu0 %10216
  %10218 = vrot.lane.b32.xlu0 %v6391, 66
  %v10219 = vpop.permute.xlu0 %10218
  %10220 = vrot.lane.b32.xlu0 %v6394, 66
  %v10221 = vpop.permute.xlu0 %10220
  %10222 = vrot.lane.b32.xlu0 %v6396, 66
  %v10223 = vpop.permute.xlu0 %10222
  %10224 = vrot.lane.b32.xlu0 %v6399, 66
  %v10225 = vpop.permute.xlu0 %10224
  %10226 = vrot.lane.b32.xlu0 %v6401, 66
  %v10227 = vpop.permute.xlu0 %10226
  %10228 = vrot.lane.b32.xlu0 %v6404, 66
  %v10229 = vpop.permute.xlu0 %10228
  %10230 = vrot.lane.b32.xlu0 %v6406, 66
  %v10231 = vpop.permute.xlu0 %10230
  %10232 = vrot.lane.b32.xlu0 %v6409, 66
  %v10233 = vpop.permute.xlu0 %10232
  %10234 = vrot.lane.b32.xlu0 %v6411, 66
  %v10235 = vpop.permute.xlu0 %10234
  %10236 = vrot.lane.b32.xlu0 %v6414, 66
  %v10237 = vpop.permute.xlu0 %10236
  %10238 = vrot.lane.b32.xlu0 %v6416, 66
  %v10239 = vpop.permute.xlu0 %10238
  %10240 = vrot.lane.b32.xlu0 %v6419, 66
  %v10241 = vpop.permute.xlu0 %10240
  %10242 = vrot.lane.b32.xlu0 %v6421, 66
  %v10243 = vpop.permute.xlu0 %10242
  %10244 = vrot.lane.b32.xlu0 %v6424, 66
  %v10245 = vpop.permute.xlu0 %10244
  %10246 = vrot.lane.b32.xlu0 %v6426, 66
  %v10247 = vpop.permute.xlu0 %10246
  %10248 = vrot.lane.b32.xlu0 %v6429, 66
  %v10249 = vpop.permute.xlu0 %10248
  %10250 = vrot.lane.b32.xlu0 %v6431, 66
  %v10251 = vpop.permute.xlu0 %10250
  %10252 = vrot.lane.b32.xlu0 %v6434, 66
  %v10253 = vpop.permute.xlu0 %10252
  %10254 = vrot.lane.b32.xlu0 %v6436, 66
  %v10255 = vpop.permute.xlu0 %10254
  %10256 = vrot.lane.b32.xlu0 %v6439, 66
  %v10257 = vpop.permute.xlu0 %10256
  %10258 = vrot.lane.b32.xlu0 %v6441, 66
  %v10259 = vpop.permute.xlu0 %10258
  %10260 = vrot.lane.b32.xlu0 %v7474, 66
  %v10261 = vpop.permute.xlu0 %10260
  %10262 = vrot.lane.b32.xlu0 %v7476, 66
  %v10263 = vpop.permute.xlu0 %10262
  %10264 = vrot.lane.b32.xlu0 %v8370, 66
  %v10265 = vpop.permute.xlu0 %10264
  %10266 = vrot.lane.b32.xlu0 %v8372, 66
  %v10267 = vpop.permute.xlu0 %10266
  %10268 = vrot.lane.b32.xlu0 %v9298, 66
  %v10269 = vpop.permute.xlu0 %10268
  %10270 = vrot.lane.b32.xlu0 %v9300, 66
  %v10271 = vpop.permute.xlu0 %10270
  %10272 = vrot.lane.b32.xlu0 %v6374, 66
  %v10273 = vpop.permute.xlu0 %10272
  %10274 = vrot.lane.b32.xlu0 %v6376, 66
  %v10275 = vpop.permute.xlu0 %10274
  %v10308 = vadd.f32 %v10180, %v10213
  %v10309 = vadd.f32 %v10181, %v10215
  %v10310 = vadd.f32 %v10182, %v10217
  %v10311 = vadd.f32 %v10183, %v10219
  %v10312 = vadd.f32 %v10184, %v10221
  %v10313 = vadd.f32 %v10185, %v10223
  %v10314 = vadd.f32 %v10186, %v10225
  %v10315 = vadd.f32 %v10187, %v10227
  %v10316 = vadd.f32 %v10188, %v10229
  %v10317 = vadd.f32 %v10189, %v10231
  %v10318 = vadd.f32 %v10190, %v10233
  %v10319 = vadd.f32 %v10191, %v10235
  %v10320 = vadd.f32 %v10192, %v10237
  %v10321 = vadd.f32 %v10193, %v10239
  %v10322 = vadd.f32 %v10194, %v10241
  %v10323 = vadd.f32 %v10195, %v10243
  %v10324 = vadd.f32 %v10196, %v10245
  %v10325 = vadd.f32 %v10197, %v10247
  %v10326 = vadd.f32 %v10198, %v10249
  %v10327 = vadd.f32 %v10199, %v10251
  %v10328 = vadd.f32 %v10200, %v10253
  %v10329 = vadd.f32 %v10201, %v10255
  %v10330 = vadd.f32 %v10202, %v10257
  %v10331 = vadd.f32 %v10203, %v10259
  %v10332 = vadd.f32 %v10204, %v10261
  %v10333 = vadd.f32 %v10205, %v10263
  %v10334 = vadd.f32 %v10206, %v10265
  %v10335 = vadd.f32 %v10207, %v10267
  %v10336 = vadd.f32 %v10208, %v10269
  %v10337 = vadd.f32 %v10209, %v10271
  %v10338 = vadd.f32 %v10210, %v10273
  %v10339 = vadd.f32 %v10211, %v10275
  %10340 = vrot.lane.b32.xlu0 %v6566, 64
  %v10341 = vpop.permute.xlu0 %10340
  %10342 = vrot.lane.b32.xlu0 %v6568, 64
  %v10343 = vpop.permute.xlu0 %10342
  %10344 = vrot.lane.b32.xlu0 %v6571, 64
  %v10345 = vpop.permute.xlu0 %10344
  %10346 = vrot.lane.b32.xlu0 %v6573, 64
  %v10347 = vpop.permute.xlu0 %10346
  %10348 = vrot.lane.b32.xlu0 %v6576, 64
  %v10349 = vpop.permute.xlu0 %10348
  %10350 = vrot.lane.b32.xlu0 %v6578, 64
  %v10351 = vpop.permute.xlu0 %10350
  %10352 = vrot.lane.b32.xlu0 %v6581, 64
  %v10353 = vpop.permute.xlu0 %10352
  %10354 = vrot.lane.b32.xlu0 %v6583, 64
  %v10355 = vpop.permute.xlu0 %10354
  %10356 = vrot.lane.b32.xlu0 %v6586, 64
  %v10357 = vpop.permute.xlu0 %10356
  %10358 = vrot.lane.b32.xlu0 %v6588, 64
  %v10359 = vpop.permute.xlu0 %10358
  %10360 = vrot.lane.b32.xlu0 %v6591, 64
  %v10361 = vpop.permute.xlu0 %10360
  %10362 = vrot.lane.b32.xlu0 %v6593, 64
  %v10363 = vpop.permute.xlu0 %10362
  %10364 = vrot.lane.b32.xlu0 %v6596, 64
  %v10365 = vpop.permute.xlu0 %10364
  %10366 = vrot.lane.b32.xlu0 %v6598, 64
  %v10367 = vpop.permute.xlu0 %10366
  %10368 = vrot.lane.b32.xlu0 %v6601, 64
  %v10369 = vpop.permute.xlu0 %10368
  %10370 = vrot.lane.b32.xlu0 %v6603, 64
  %v10371 = vpop.permute.xlu0 %10370
  %10372 = vrot.lane.b32.xlu0 %v6606, 64
  %v10373 = vpop.permute.xlu0 %10372
  %10374 = vrot.lane.b32.xlu0 %v6608, 64
  %v10375 = vpop.permute.xlu0 %10374
  %10376 = vrot.lane.b32.xlu0 %v6611, 64
  %v10377 = vpop.permute.xlu0 %10376
  %10378 = vrot.lane.b32.xlu0 %v6613, 64
  %v10379 = vpop.permute.xlu0 %10378
  %10380 = vrot.lane.b32.xlu0 %v6616, 64
  %v10381 = vpop.permute.xlu0 %10380
  %10382 = vrot.lane.b32.xlu0 %v6618, 64
  %v10383 = vpop.permute.xlu0 %10382
  %10384 = vrot.lane.b32.xlu0 %v6621, 64
  %v10385 = vpop.permute.xlu0 %10384
  %10386 = vrot.lane.b32.xlu0 %v6623, 64
  %v10387 = vpop.permute.xlu0 %10386
  %10388 = vrot.lane.b32.xlu0 %v7599, 64
  %v10389 = vpop.permute.xlu0 %10388
  %10390 = vrot.lane.b32.xlu0 %v7601, 64
  %v10391 = vpop.permute.xlu0 %10390
  %10392 = vrot.lane.b32.xlu0 %v8503, 64
  %v10393 = vpop.permute.xlu0 %10392
  %10394 = vrot.lane.b32.xlu0 %v8505, 64
  %v10395 = vpop.permute.xlu0 %10394
  %10396 = vrot.lane.b32.xlu0 %v9431, 64
  %v10397 = vpop.permute.xlu0 %10396
  %10398 = vrot.lane.b32.xlu0 %v9433, 64
  %v10399 = vpop.permute.xlu0 %10398
  %10400 = vrot.lane.b32.xlu0 %v6556, 64
  %v10401 = vpop.permute.xlu0 %10400
  %10402 = vrot.lane.b32.xlu0 %v6558, 64
  %v10403 = vpop.permute.xlu0 %10402
  %v10436 = vadd.f32 %v10308, %v10341
  %v10437 = vadd.f32 %v10309, %v10343
  %v10438 = vadd.f32 %v10310, %v10345
  %v10439 = vadd.f32 %v10311, %v10347
  %v10440 = vadd.f32 %v10312, %v10349
  %v10441 = vadd.f32 %v10313, %v10351
  %v10442 = vadd.f32 %v10314, %v10353
  %v10443 = vadd.f32 %v10315, %v10355
  %v10444 = vadd.f32 %v10316, %v10357
  %v10445 = vadd.f32 %v10317, %v10359
  %v10446 = vadd.f32 %v10318, %v10361
  %v10447 = vadd.f32 %v10319, %v10363
  %v10448 = vadd.f32 %v10320, %v10365
  %v10449 = vadd.f32 %v10321, %v10367
  %v10450 = vadd.f32 %v10322, %v10369
  %v10451 = vadd.f32 %v10323, %v10371
  %v10452 = vadd.f32 %v10324, %v10373
  %v10453 = vadd.f32 %v10325, %v10375
  %v10454 = vadd.f32 %v10326, %v10377
  %v10455 = vadd.f32 %v10327, %v10379
  %v10456 = vadd.f32 %v10328, %v10381
  %v10457 = vadd.f32 %v10329, %v10383
  %v10458 = vadd.f32 %v10330, %v10385
  %v10459 = vadd.f32 %v10331, %v10387
  %v10460 = vadd.f32 %v10332, %v10389
  %v10461 = vadd.f32 %v10333, %v10391
  %v10462 = vadd.f32 %v10334, %v10393
  %v10463 = vadd.f32 %v10335, %v10395
  %v10464 = vadd.f32 %v10336, %v10397
  %v10465 = vadd.f32 %v10337, %v10399
  %v10466 = vadd.f32 %v10338, %v10401
  %v10467 = vadd.f32 %v10339, %v10403
  %10468 = vrot.lane.b32.xlu0 %v6748, 62
  %v10469 = vpop.permute.xlu0 %10468
  %10470 = vrot.lane.b32.xlu0 %v6750, 62
  %v10471 = vpop.permute.xlu0 %10470
  %10472 = vrot.lane.b32.xlu0 %v6753, 62
  %v10473 = vpop.permute.xlu0 %10472
  %10474 = vrot.lane.b32.xlu0 %v6755, 62
  %v10475 = vpop.permute.xlu0 %10474
  %10476 = vrot.lane.b32.xlu0 %v6758, 62
  %v10477 = vpop.permute.xlu0 %10476
  %10478 = vrot.lane.b32.xlu0 %v6760, 62
  %v10479 = vpop.permute.xlu0 %10478
  %10480 = vrot.lane.b32.xlu0 %v6763, 62
  %v10481 = vpop.permute.xlu0 %10480
  %10482 = vrot.lane.b32.xlu0 %v6765, 62
  %v10483 = vpop.permute.xlu0 %10482
  %10484 = vrot.lane.b32.xlu0 %v6768, 62
  %v10485 = vpop.permute.xlu0 %10484
  %10486 = vrot.lane.b32.xlu0 %v6770, 62
  %v10487 = vpop.permute.xlu0 %10486
  %10488 = vrot.lane.b32.xlu0 %v6773, 62
  %v10489 = vpop.permute.xlu0 %10488
  %10490 = vrot.lane.b32.xlu0 %v6775, 62
  %v10491 = vpop.permute.xlu0 %10490
  %10492 = vrot.lane.b32.xlu0 %v6778, 62
  %v10493 = vpop.permute.xlu0 %10492
  %10494 = vrot.lane.b32.xlu0 %v6780, 62
  %v10495 = vpop.permute.xlu0 %10494
  %10496 = vrot.lane.b32.xlu0 %v6783, 62
  %v10497 = vpop.permute.xlu0 %10496
  %10498 = vrot.lane.b32.xlu0 %v6785, 62
  %v10499 = vpop.permute.xlu0 %10498
  %10500 = vrot.lane.b32.xlu0 %v6788, 62
  %v10501 = vpop.permute.xlu0 %10500
  %10502 = vrot.lane.b32.xlu0 %v6790, 62
  %v10503 = vpop.permute.xlu0 %10502
  %10504 = vrot.lane.b32.xlu0 %v6793, 62
  %v10505 = vpop.permute.xlu0 %10504
  %10506 = vrot.lane.b32.xlu0 %v6795, 62
  %v10507 = vpop.permute.xlu0 %10506
  %10508 = vrot.lane.b32.xlu0 %v6798, 62
  %v10509 = vpop.permute.xlu0 %10508
  %10510 = vrot.lane.b32.xlu0 %v6800, 62
  %v10511 = vpop.permute.xlu0 %10510
  %10512 = vrot.lane.b32.xlu0 %v6803, 62
  %v10513 = vpop.permute.xlu0 %10512
  %10514 = vrot.lane.b32.xlu0 %v6805, 62
  %v10515 = vpop.permute.xlu0 %10514
  %10516 = vrot.lane.b32.xlu0 %v7724, 62
  %v10517 = vpop.permute.xlu0 %10516
  %10518 = vrot.lane.b32.xlu0 %v7726, 62
  %v10519 = vpop.permute.xlu0 %10518
  %10520 = vrot.lane.b32.xlu0 %v8636, 62
  %v10521 = vpop.permute.xlu0 %10520
  %10522 = vrot.lane.b32.xlu0 %v8638, 62
  %v10523 = vpop.permute.xlu0 %10522
  %10524 = vrot.lane.b32.xlu0 %v9564, 62
  %v10525 = vpop.permute.xlu0 %10524
  %10526 = vrot.lane.b32.xlu0 %v9566, 62
  %v10527 = vpop.permute.xlu0 %10526
  %10528 = vrot.lane.b32.xlu0 %v6738, 62
  %v10529 = vpop.permute.xlu0 %10528
  %10530 = vrot.lane.b32.xlu0 %v6740, 62
  %v10531 = vpop.permute.xlu0 %10530
  %v10564 = vadd.f32 %v10436, %v10469
  %v10565 = vadd.f32 %v10437, %v10471
  %v10566 = vadd.f32 %v10438, %v10473
  %v10567 = vadd.f32 %v10439, %v10475
  %v10568 = vadd.f32 %v10440, %v10477
  %v10569 = vadd.f32 %v10441, %v10479
  %v10570 = vadd.f32 %v10442, %v10481
  %v10571 = vadd.f32 %v10443, %v10483
  %v10572 = vadd.f32 %v10444, %v10485
  %v10573 = vadd.f32 %v10445, %v10487
  %v10574 = vadd.f32 %v10446, %v10489
  %v10575 = vadd.f32 %v10447, %v10491
  %v10576 = vadd.f32 %v10448, %v10493
  %v10577 = vadd.f32 %v10449, %v10495
  %v10578 = vadd.f32 %v10450, %v10497
  %v10579 = vadd.f32 %v10451, %v10499
  %v10580 = vadd.f32 %v10452, %v10501
  %v10581 = vadd.f32 %v10453, %v10503
  %v10582 = vadd.f32 %v10454, %v10505
  %v10583 = vadd.f32 %v10455, %v10507
  %v10584 = vadd.f32 %v10456, %v10509
  %v10585 = vadd.f32 %v10457, %v10511
  %v10586 = vadd.f32 %v10458, %v10513
  %v10587 = vadd.f32 %v10459, %v10515
  %v10588 = vadd.f32 %v10460, %v10517
  %v10589 = vadd.f32 %v10461, %v10519
  %v10590 = vadd.f32 %v10462, %v10521
  %v10591 = vadd.f32 %v10463, %v10523
  %v10592 = vadd.f32 %v10464, %v10525
  %v10593 = vadd.f32 %v10465, %v10527
  %v10594 = vadd.f32 %v10466, %v10529
  %v10595 = vadd.f32 %v10467, %v10531
  %10596 = vrot.lane.b32.xlu0 %v6930, 60
  %v10597 = vpop.permute.xlu0 %10596
  %10598 = vrot.lane.b32.xlu0 %v6932, 60
  %v10599 = vpop.permute.xlu0 %10598
  %10600 = vrot.lane.b32.xlu0 %v6935, 60
  %v10601 = vpop.permute.xlu0 %10600
  %10602 = vrot.lane.b32.xlu0 %v6937, 60
  %v10603 = vpop.permute.xlu0 %10602
  %10604 = vrot.lane.b32.xlu0 %v6940, 60
  %v10605 = vpop.permute.xlu0 %10604
  %10606 = vrot.lane.b32.xlu0 %v6942, 60
  %v10607 = vpop.permute.xlu0 %10606
  %10608 = vrot.lane.b32.xlu0 %v6945, 60
  %v10609 = vpop.permute.xlu0 %10608
  %10610 = vrot.lane.b32.xlu0 %v6947, 60
  %v10611 = vpop.permute.xlu0 %10610
  %10612 = vrot.lane.b32.xlu0 %v6950, 60
  %v10613 = vpop.permute.xlu0 %10612
  %10614 = vrot.lane.b32.xlu0 %v6952, 60
  %v10615 = vpop.permute.xlu0 %10614
  %10616 = vrot.lane.b32.xlu0 %v6955, 60
  %v10617 = vpop.permute.xlu0 %10616
  %10618 = vrot.lane.b32.xlu0 %v6957, 60
  %v10619 = vpop.permute.xlu0 %10618
  %10620 = vrot.lane.b32.xlu0 %v6960, 60
  %v10621 = vpop.permute.xlu0 %10620
  %10622 = vrot.lane.b32.xlu0 %v6962, 60
  %v10623 = vpop.permute.xlu0 %10622
  %10624 = vrot.lane.b32.xlu0 %v6965, 60
  %v10625 = vpop.permute.xlu0 %10624
  %10626 = vrot.lane.b32.xlu0 %v6967, 60
  %v10627 = vpop.permute.xlu0 %10626
  %10628 = vrot.lane.b32.xlu0 %v6970, 60
  %v10629 = vpop.permute.xlu0 %10628
  %10630 = vrot.lane.b32.xlu0 %v6972, 60
  %v10631 = vpop.permute.xlu0 %10630
  %10632 = vrot.lane.b32.xlu0 %v6975, 60
  %v10633 = vpop.permute.xlu0 %10632
  %10634 = vrot.lane.b32.xlu0 %v6977, 60
  %v10635 = vpop.permute.xlu0 %10634
  %10636 = vrot.lane.b32.xlu0 %v6980, 60
  %v10637 = vpop.permute.xlu0 %10636
  %10638 = vrot.lane.b32.xlu0 %v6982, 60
  %v10639 = vpop.permute.xlu0 %10638
  %10640 = vrot.lane.b32.xlu0 %v6985, 60
  %v10641 = vpop.permute.xlu0 %10640
  %10642 = vrot.lane.b32.xlu0 %v6987, 60
  %v10643 = vpop.permute.xlu0 %10642
  %10644 = vrot.lane.b32.xlu0 %v7849, 60
  %v10645 = vpop.permute.xlu0 %10644
  %10646 = vrot.lane.b32.xlu0 %v7851, 60
  %v10647 = vpop.permute.xlu0 %10646
  %10648 = vrot.lane.b32.xlu0 %v8769, 60
  %v10649 = vpop.permute.xlu0 %10648
  %10650 = vrot.lane.b32.xlu0 %v8771, 60
  %v10651 = vpop.permute.xlu0 %10650
  %10652 = vrot.lane.b32.xlu0 %v9697, 60
  %v10653 = vpop.permute.xlu0 %10652
  %10654 = vrot.lane.b32.xlu0 %v9699, 60
  %v10655 = vpop.permute.xlu0 %10654
  %10656 = vrot.lane.b32.xlu0 %v6920, 60
  %v10657 = vpop.permute.xlu0 %10656
  %10658 = vrot.lane.b32.xlu0 %v6922, 60
  %v10659 = vpop.permute.xlu0 %10658
  %v10692 = vadd.f32 %v10564, %v10597
  %v10693 = vadd.f32 %v10565, %v10599
  %v10694 = vadd.f32 %v10566, %v10601
  %v10695 = vadd.f32 %v10567, %v10603
  %v10696 = vadd.f32 %v10568, %v10605
  %v10697 = vadd.f32 %v10569, %v10607
  %v10698 = vadd.f32 %v10570, %v10609
  %v10699 = vadd.f32 %v10571, %v10611
  %v10700 = vadd.f32 %v10572, %v10613
  %v10701 = vadd.f32 %v10573, %v10615
  %v10702 = vadd.f32 %v10574, %v10617
  %v10703 = vadd.f32 %v10575, %v10619
  %v10704 = vadd.f32 %v10576, %v10621
  %v10705 = vadd.f32 %v10577, %v10623
  %v10706 = vadd.f32 %v10578, %v10625
  %v10707 = vadd.f32 %v10579, %v10627
  %v10708 = vadd.f32 %v10580, %v10629
  %v10709 = vadd.f32 %v10581, %v10631
  %v10710 = vadd.f32 %v10582, %v10633
  %v10711 = vadd.f32 %v10583, %v10635
  %v10712 = vadd.f32 %v10584, %v10637
  %v10713 = vadd.f32 %v10585, %v10639
  %v10714 = vadd.f32 %v10586, %v10641
  %v10715 = vadd.f32 %v10587, %v10643
  %v10716 = vadd.f32 %v10588, %v10645
  %v10717 = vadd.f32 %v10589, %v10647
  %v10718 = vadd.f32 %v10590, %v10649
  %v10719 = vadd.f32 %v10591, %v10651
  %v10720 = vadd.f32 %v10592, %v10653
  %v10721 = vadd.f32 %v10593, %v10655
  %v10722 = vadd.f32 %v10594, %v10657
  %v10723 = vadd.f32 %v10595, %v10659
  %10724 = vrot.lane.b32.xlu0 %v5913, 58
  %v10725 = vpop.permute.xlu0 %10724
  %10726 = vrot.lane.b32.xlu0 %v5823, 58
  %v10727 = vpop.permute.xlu0 %10726
  %10728 = vrot.lane.b32.xlu0 %v5914, 58
  %v10729 = vpop.permute.xlu0 %10728
  %10730 = vrot.lane.b32.xlu0 %v5826, 58
  %v10731 = vpop.permute.xlu0 %10730
  %10732 = vrot.lane.b32.xlu0 %v5915, 58
  %v10733 = vpop.permute.xlu0 %10732
  %10734 = vrot.lane.b32.xlu0 %v5829, 58
  %v10735 = vpop.permute.xlu0 %10734
  %10736 = vrot.lane.b32.xlu0 %v5916, 58
  %v10737 = vpop.permute.xlu0 %10736
  %10738 = vrot.lane.b32.xlu0 %v5832, 58
  %v10739 = vpop.permute.xlu0 %10738
  %10740 = vrot.lane.b32.xlu0 %v5917, 58
  %v10741 = vpop.permute.xlu0 %10740
  %10742 = vrot.lane.b32.xlu0 %v5835, 58
  %v10743 = vpop.permute.xlu0 %10742
  %10744 = vrot.lane.b32.xlu0 %v5918, 58
  %v10745 = vpop.permute.xlu0 %10744
  %10746 = vrot.lane.b32.xlu0 %v5838, 58
  %v10747 = vpop.permute.xlu0 %10746
  %10748 = vrot.lane.b32.xlu0 %v5919, 58
  %v10749 = vpop.permute.xlu0 %10748
  %10750 = vrot.lane.b32.xlu0 %v5841, 58
  %v10751 = vpop.permute.xlu0 %10750
  %10752 = vrot.lane.b32.xlu0 %v5920, 58
  %v10753 = vpop.permute.xlu0 %10752
  %10754 = vrot.lane.b32.xlu0 %v5844, 58
  %v10755 = vpop.permute.xlu0 %10754
  %10756 = vrot.lane.b32.xlu0 %v5921, 58
  %v10757 = vpop.permute.xlu0 %10756
  %10758 = vrot.lane.b32.xlu0 %v5847, 58
  %v10759 = vpop.permute.xlu0 %10758
  %10760 = vrot.lane.b32.xlu0 %v5922, 58
  %v10761 = vpop.permute.xlu0 %10760
  %10762 = vrot.lane.b32.xlu0 %v5850, 58
  %v10763 = vpop.permute.xlu0 %10762
  %10764 = vrot.lane.b32.xlu0 %v5923, 58
  %v10765 = vpop.permute.xlu0 %10764
  %10766 = vrot.lane.b32.xlu0 %v5853, 58
  %v10767 = vpop.permute.xlu0 %10766
  %10768 = vrot.lane.b32.xlu0 %v5924, 58
  %v10769 = vpop.permute.xlu0 %10768
  %10770 = vrot.lane.b32.xlu0 %v5856, 58
  %v10771 = vpop.permute.xlu0 %10770
  %10772 = vrot.lane.b32.xlu0 %v5925, 58
  %v10773 = vpop.permute.xlu0 %10772
  %10774 = vrot.lane.b32.xlu0 %v5859, 58
  %v10775 = vpop.permute.xlu0 %10774
  %10776 = vrot.lane.b32.xlu0 %v5926, 58
  %v10777 = vpop.permute.xlu0 %10776
  %10778 = vrot.lane.b32.xlu0 %v5862, 58
  %v10779 = vpop.permute.xlu0 %10778
  %10780 = vrot.lane.b32.xlu0 %v5910, 58
  %v10781 = vpop.permute.xlu0 %10780
  %10782 = vrot.lane.b32.xlu0 %v5814, 58
  %v10783 = vpop.permute.xlu0 %10782
  %v10814 = vadd.f32 %v10692, %v10725
  %v10815 = vadd.f32 %v10693, %v10727
  %v10816 = vadd.f32 %v10694, %v10729
  %v10817 = vadd.f32 %v10695, %v10731
  %v10818 = vadd.f32 %v10696, %v10733
  %v10819 = vadd.f32 %v10697, %v10735
  %v10820 = vadd.f32 %v10698, %v10737
  %v10821 = vadd.f32 %v10699, %v10739
  %v10822 = vadd.f32 %v10700, %v10741
  %v10823 = vadd.f32 %v10701, %v10743
  %v10824 = vadd.f32 %v10702, %v10745
  %v10825 = vadd.f32 %v10703, %v10747
  %v10826 = vadd.f32 %v10704, %v10749
  %v10827 = vadd.f32 %v10705, %v10751
  %v10828 = vadd.f32 %v10706, %v10753
  %v10829 = vadd.f32 %v10707, %v10755
  %v10830 = vadd.f32 %v10708, %v10757
  %v10831 = vadd.f32 %v10709, %v10759
  %v10832 = vadd.f32 %v10710, %v10761
  %v10833 = vadd.f32 %v10711, %v10763
  %v10834 = vadd.f32 %v10712, %v10765
  %v10835 = vadd.f32 %v10713, %v10767
  %v10836 = vadd.f32 %v10714, %v10769
  %v10837 = vadd.f32 %v10715, %v10771
  %v10838 = vadd.f32 %v10716, %v10773
  %v10839 = vadd.f32 %v10717, %v10775
  %v10840 = vadd.f32 %v10718, %v10777
  %v10841 = vadd.f32 %v10719, %v10779
  %v10842 = vadd.f32 %v10720, %v10781
  %v10843 = vadd.f32 %v10721, %v10783
  %v10844 = vadd.f32 %v10722, %v10781
  %v10845 = vadd.f32 %v10723, %v10783
  %10846 = vrot.lane.b32.xlu0 %v6025, 56
  %v10847 = vpop.permute.xlu0 %10846
  %10848 = vrot.lane.b32.xlu0 %v6027, 56
  %v10849 = vpop.permute.xlu0 %10848
  %10850 = vrot.lane.b32.xlu0 %v6030, 56
  %v10851 = vpop.permute.xlu0 %10850
  %10852 = vrot.lane.b32.xlu0 %v6032, 56
  %v10853 = vpop.permute.xlu0 %10852
  %10854 = vrot.lane.b32.xlu0 %v6035, 56
  %v10855 = vpop.permute.xlu0 %10854
  %10856 = vrot.lane.b32.xlu0 %v6037, 56
  %v10857 = vpop.permute.xlu0 %10856
  %10858 = vrot.lane.b32.xlu0 %v6040, 56
  %v10859 = vpop.permute.xlu0 %10858
  %10860 = vrot.lane.b32.xlu0 %v6042, 56
  %v10861 = vpop.permute.xlu0 %10860
  %10862 = vrot.lane.b32.xlu0 %v6045, 56
  %v10863 = vpop.permute.xlu0 %10862
  %10864 = vrot.lane.b32.xlu0 %v6047, 56
  %v10865 = vpop.permute.xlu0 %10864
  %10866 = vrot.lane.b32.xlu0 %v6050, 56
  %v10867 = vpop.permute.xlu0 %10866
  %10868 = vrot.lane.b32.xlu0 %v6052, 56
  %v10869 = vpop.permute.xlu0 %10868
  %10870 = vrot.lane.b32.xlu0 %v6055, 56
  %v10871 = vpop.permute.xlu0 %10870
  %10872 = vrot.lane.b32.xlu0 %v6057, 56
  %v10873 = vpop.permute.xlu0 %10872
  %10874 = vrot.lane.b32.xlu0 %v6060, 56
  %v10875 = vpop.permute.xlu0 %10874
  %10876 = vrot.lane.b32.xlu0 %v6062, 56
  %v10877 = vpop.permute.xlu0 %10876
  %10878 = vrot.lane.b32.xlu0 %v6065, 56
  %v10879 = vpop.permute.xlu0 %10878
  %10880 = vrot.lane.b32.xlu0 %v6067, 56
  %v10881 = vpop.permute.xlu0 %10880
  %10882 = vrot.lane.b32.xlu0 %v6070, 56
  %v10883 = vpop.permute.xlu0 %10882
  %10884 = vrot.lane.b32.xlu0 %v6072, 56
  %v10885 = vpop.permute.xlu0 %10884
  %10886 = vrot.lane.b32.xlu0 %v6075, 56
  %v10887 = vpop.permute.xlu0 %10886
  %10888 = vrot.lane.b32.xlu0 %v6077, 56
  %v10889 = vpop.permute.xlu0 %10888
  %10890 = vrot.lane.b32.xlu0 %v7224, 56
  %v10891 = vpop.permute.xlu0 %10890
  %10892 = vrot.lane.b32.xlu0 %v7226, 56
  %v10893 = vpop.permute.xlu0 %10892
  %10894 = vrot.lane.b32.xlu0 %v8104, 56
  %v10895 = vpop.permute.xlu0 %10894
  %10896 = vrot.lane.b32.xlu0 %v8106, 56
  %v10897 = vpop.permute.xlu0 %10896
  %10898 = vrot.lane.b32.xlu0 %v9032, 56
  %v10899 = vpop.permute.xlu0 %10898
  %10900 = vrot.lane.b32.xlu0 %v9034, 56
  %v10901 = vpop.permute.xlu0 %10900
  %10902 = vrot.lane.b32.xlu0 %v6010, 56
  %v10903 = vpop.permute.xlu0 %10902
  %10904 = vrot.lane.b32.xlu0 %v6012, 56
  %v10905 = vpop.permute.xlu0 %10904
  %v10936 = vadd.f32 %v10814, %v10847
  %v10937 = vadd.f32 %v10815, %v10849
  %v10938 = vadd.f32 %v10816, %v10851
  %v10939 = vadd.f32 %v10817, %v10853
  %v10940 = vadd.f32 %v10818, %v10855
  %v10941 = vadd.f32 %v10819, %v10857
  %v10942 = vadd.f32 %v10820, %v10859
  %v10943 = vadd.f32 %v10821, %v10861
  %v10944 = vadd.f32 %v10822, %v10863
  %v10945 = vadd.f32 %v10823, %v10865
  %v10946 = vadd.f32 %v10824, %v10867
  %v10947 = vadd.f32 %v10825, %v10869
  %v10948 = vadd.f32 %v10826, %v10871
  %v10949 = vadd.f32 %v10827, %v10873
  %v10950 = vadd.f32 %v10828, %v10875
  %v10951 = vadd.f32 %v10829, %v10877
  %v10952 = vadd.f32 %v10830, %v10879
  %v10953 = vadd.f32 %v10831, %v10881
  %v10954 = vadd.f32 %v10832, %v10883
  %v10955 = vadd.f32 %v10833, %v10885
  %v10956 = vadd.f32 %v10834, %v10887
  %v10957 = vadd.f32 %v10835, %v10889
  %v10958 = vadd.f32 %v10836, %v10891
  %v10959 = vadd.f32 %v10837, %v10893
  %v10960 = vadd.f32 %v10838, %v10895
  %v10961 = vadd.f32 %v10839, %v10897
  %v10962 = vadd.f32 %v10840, %v10899
  %v10963 = vadd.f32 %v10841, %v10901
  %v10964 = vadd.f32 %v10842, %v10903
  %v10965 = vadd.f32 %v10843, %v10905
  %v10966 = vadd.f32 %v10844, %v10903
  %v10967 = vadd.f32 %v10845, %v10905
  %10968 = vrot.lane.b32.xlu0 %v6207, 54
  %v10969 = vpop.permute.xlu0 %10968
  %10970 = vrot.lane.b32.xlu0 %v6209, 54
  %v10971 = vpop.permute.xlu0 %10970
  %10972 = vrot.lane.b32.xlu0 %v6212, 54
  %v10973 = vpop.permute.xlu0 %10972
  %10974 = vrot.lane.b32.xlu0 %v6214, 54
  %v10975 = vpop.permute.xlu0 %10974
  %10976 = vrot.lane.b32.xlu0 %v6217, 54
  %v10977 = vpop.permute.xlu0 %10976
  %10978 = vrot.lane.b32.xlu0 %v6219, 54
  %v10979 = vpop.permute.xlu0 %10978
  %10980 = vrot.lane.b32.xlu0 %v6222, 54
  %v10981 = vpop.permute.xlu0 %10980
  %10982 = vrot.lane.b32.xlu0 %v6224, 54
  %v10983 = vpop.permute.xlu0 %10982
  %10984 = vrot.lane.b32.xlu0 %v6227, 54
  %v10985 = vpop.permute.xlu0 %10984
  %10986 = vrot.lane.b32.xlu0 %v6229, 54
  %v10987 = vpop.permute.xlu0 %10986
  %10988 = vrot.lane.b32.xlu0 %v6232, 54
  %v10989 = vpop.permute.xlu0 %10988
  %10990 = vrot.lane.b32.xlu0 %v6234, 54
  %v10991 = vpop.permute.xlu0 %10990
  %10992 = vrot.lane.b32.xlu0 %v6237, 54
  %v10993 = vpop.permute.xlu0 %10992
  %10994 = vrot.lane.b32.xlu0 %v6239, 54
  %v10995 = vpop.permute.xlu0 %10994
  %10996 = vrot.lane.b32.xlu0 %v6242, 54
  %v10997 = vpop.permute.xlu0 %10996
  %10998 = vrot.lane.b32.xlu0 %v6244, 54
  %v10999 = vpop.permute.xlu0 %10998
  %11000 = vrot.lane.b32.xlu0 %v6247, 54
  %v11001 = vpop.permute.xlu0 %11000
  %11002 = vrot.lane.b32.xlu0 %v6249, 54
  %v11003 = vpop.permute.xlu0 %11002
  %11004 = vrot.lane.b32.xlu0 %v6252, 54
  %v11005 = vpop.permute.xlu0 %11004
  %11006 = vrot.lane.b32.xlu0 %v6254, 54
  %v11007 = vpop.permute.xlu0 %11006
  %11008 = vrot.lane.b32.xlu0 %v6257, 54
  %v11009 = vpop.permute.xlu0 %11008
  %11010 = vrot.lane.b32.xlu0 %v6259, 54
  %v11011 = vpop.permute.xlu0 %11010
  %11012 = vrot.lane.b32.xlu0 %v7349, 54
  %v11013 = vpop.permute.xlu0 %11012
  %11014 = vrot.lane.b32.xlu0 %v7351, 54
  %v11015 = vpop.permute.xlu0 %11014
  %11016 = vrot.lane.b32.xlu0 %v8237, 54
  %v11017 = vpop.permute.xlu0 %11016
  %11018 = vrot.lane.b32.xlu0 %v8239, 54
  %v11019 = vpop.permute.xlu0 %11018
  %11020 = vrot.lane.b32.xlu0 %v9165, 54
  %v11021 = vpop.permute.xlu0 %11020
  %11022 = vrot.lane.b32.xlu0 %v9167, 54
  %v11023 = vpop.permute.xlu0 %11022
  %11024 = vrot.lane.b32.xlu0 %v6192, 54
  %v11025 = vpop.permute.xlu0 %11024
  %11026 = vrot.lane.b32.xlu0 %v6194, 54
  %v11027 = vpop.permute.xlu0 %11026
  %v11058 = vadd.f32 %v10936, %v10969
  %v11059 = vadd.f32 %v10937, %v10971
  %v11060 = vadd.f32 %v10938, %v10973
  %v11061 = vadd.f32 %v10939, %v10975
  %v11062 = vadd.f32 %v10940, %v10977
  %v11063 = vadd.f32 %v10941, %v10979
  %v11064 = vadd.f32 %v10942, %v10981
  %v11065 = vadd.f32 %v10943, %v10983
  %v11066 = vadd.f32 %v10944, %v10985
  %v11067 = vadd.f32 %v10945, %v10987
  %v11068 = vadd.f32 %v10946, %v10989
  %v11069 = vadd.f32 %v10947, %v10991
  %v11070 = vadd.f32 %v10948, %v10993
  %v11071 = vadd.f32 %v10949, %v10995
  %v11072 = vadd.f32 %v10950, %v10997
  %v11073 = vadd.f32 %v10951, %v10999
  %v11074 = vadd.f32 %v10952, %v11001
  %v11075 = vadd.f32 %v10953, %v11003
  %v11076 = vadd.f32 %v10954, %v11005
  %v11077 = vadd.f32 %v10955, %v11007
  %v11078 = vadd.f32 %v10956, %v11009
  %v11079 = vadd.f32 %v10957, %v11011
  %v11080 = vadd.f32 %v10958, %v11013
  %v11081 = vadd.f32 %v10959, %v11015
  %v11082 = vadd.f32 %v10960, %v11017
  %v11083 = vadd.f32 %v10961, %v11019
  %v11084 = vadd.f32 %v10962, %v11021
  %v11085 = vadd.f32 %v10963, %v11023
  %v11086 = vadd.f32 %v10964, %v11025
  %v11087 = vadd.f32 %v10965, %v11027
  %v11088 = vadd.f32 %v10966, %v11025
  %v11089 = vadd.f32 %v10967, %v11027
  %11090 = vrot.lane.b32.xlu0 %v6389, 52
  %v11091 = vpop.permute.xlu0 %11090
  %11092 = vrot.lane.b32.xlu0 %v6391, 52
  %v11093 = vpop.permute.xlu0 %11092
  %11094 = vrot.lane.b32.xlu0 %v6394, 52
  %v11095 = vpop.permute.xlu0 %11094
  %11096 = vrot.lane.b32.xlu0 %v6396, 52
  %v11097 = vpop.permute.xlu0 %11096
  %11098 = vrot.lane.b32.xlu0 %v6399, 52
  %v11099 = vpop.permute.xlu0 %11098
  %11100 = vrot.lane.b32.xlu0 %v6401, 52
  %v11101 = vpop.permute.xlu0 %11100
  %11102 = vrot.lane.b32.xlu0 %v6404, 52
  %v11103 = vpop.permute.xlu0 %11102
  %11104 = vrot.lane.b32.xlu0 %v6406, 52
  %v11105 = vpop.permute.xlu0 %11104
  %11106 = vrot.lane.b32.xlu0 %v6409, 52
  %v11107 = vpop.permute.xlu0 %11106
  %11108 = vrot.lane.b32.xlu0 %v6411, 52
  %v11109 = vpop.permute.xlu0 %11108
  %11110 = vrot.lane.b32.xlu0 %v6414, 52
  %v11111 = vpop.permute.xlu0 %11110
  %11112 = vrot.lane.b32.xlu0 %v6416, 52
  %v11113 = vpop.permute.xlu0 %11112
  %11114 = vrot.lane.b32.xlu0 %v6419, 52
  %v11115 = vpop.permute.xlu0 %11114
  %11116 = vrot.lane.b32.xlu0 %v6421, 52
  %v11117 = vpop.permute.xlu0 %11116
  %11118 = vrot.lane.b32.xlu0 %v6424, 52
  %v11119 = vpop.permute.xlu0 %11118
  %11120 = vrot.lane.b32.xlu0 %v6426, 52
  %v11121 = vpop.permute.xlu0 %11120
  %11122 = vrot.lane.b32.xlu0 %v6429, 52
  %v11123 = vpop.permute.xlu0 %11122
  %11124 = vrot.lane.b32.xlu0 %v6431, 52
  %v11125 = vpop.permute.xlu0 %11124
  %11126 = vrot.lane.b32.xlu0 %v6434, 52
  %v11127 = vpop.permute.xlu0 %11126
  %11128 = vrot.lane.b32.xlu0 %v6436, 52
  %v11129 = vpop.permute.xlu0 %11128
  %11130 = vrot.lane.b32.xlu0 %v6439, 52
  %v11131 = vpop.permute.xlu0 %11130
  %11132 = vrot.lane.b32.xlu0 %v6441, 52
  %v11133 = vpop.permute.xlu0 %11132
  %11134 = vrot.lane.b32.xlu0 %v7474, 52
  %v11135 = vpop.permute.xlu0 %11134
  %11136 = vrot.lane.b32.xlu0 %v7476, 52
  %v11137 = vpop.permute.xlu0 %11136
  %11138 = vrot.lane.b32.xlu0 %v8370, 52
  %v11139 = vpop.permute.xlu0 %11138
  %11140 = vrot.lane.b32.xlu0 %v8372, 52
  %v11141 = vpop.permute.xlu0 %11140
  %11142 = vrot.lane.b32.xlu0 %v9298, 52
  %v11143 = vpop.permute.xlu0 %11142
  %11144 = vrot.lane.b32.xlu0 %v9300, 52
  %v11145 = vpop.permute.xlu0 %11144
  %11146 = vrot.lane.b32.xlu0 %v6374, 52
  %v11147 = vpop.permute.xlu0 %11146
  %11148 = vrot.lane.b32.xlu0 %v6376, 52
  %v11149 = vpop.permute.xlu0 %11148
  %v11180 = vadd.f32 %v11058, %v11091
  %v11181 = vadd.f32 %v11059, %v11093
  %v11182 = vadd.f32 %v11060, %v11095
  %v11183 = vadd.f32 %v11061, %v11097
  %v11184 = vadd.f32 %v11062, %v11099
  %v11185 = vadd.f32 %v11063, %v11101
  %v11186 = vadd.f32 %v11064, %v11103
  %v11187 = vadd.f32 %v11065, %v11105
  %v11188 = vadd.f32 %v11066, %v11107
  %v11189 = vadd.f32 %v11067, %v11109
  %v11190 = vadd.f32 %v11068, %v11111
  %v11191 = vadd.f32 %v11069, %v11113
  %v11192 = vadd.f32 %v11070, %v11115
  %v11193 = vadd.f32 %v11071, %v11117
  %v11194 = vadd.f32 %v11072, %v11119
  %v11195 = vadd.f32 %v11073, %v11121
  %v11196 = vadd.f32 %v11074, %v11123
  %v11197 = vadd.f32 %v11075, %v11125
  %v11198 = vadd.f32 %v11076, %v11127
  %v11199 = vadd.f32 %v11077, %v11129
  %v11200 = vadd.f32 %v11078, %v11131
  %v11201 = vadd.f32 %v11079, %v11133
  %v11202 = vadd.f32 %v11080, %v11135
  %v11203 = vadd.f32 %v11081, %v11137
  %v11204 = vadd.f32 %v11082, %v11139
  %v11205 = vadd.f32 %v11083, %v11141
  %v11206 = vadd.f32 %v11084, %v11143
  %v11207 = vadd.f32 %v11085, %v11145
  %v11208 = vadd.f32 %v11086, %v11147
  %v11209 = vadd.f32 %v11087, %v11149
  %v11210 = vadd.f32 %v11088, %v11147
  %v11211 = vadd.f32 %v11089, %v11149
  %11212 = vrot.lane.b32.xlu0 %v6571, 50
  %v11213 = vpop.permute.xlu0 %11212
  %11214 = vrot.lane.b32.xlu0 %v6573, 50
  %v11215 = vpop.permute.xlu0 %11214
  %11216 = vrot.lane.b32.xlu0 %v6576, 50
  %v11217 = vpop.permute.xlu0 %11216
  %11218 = vrot.lane.b32.xlu0 %v6578, 50
  %v11219 = vpop.permute.xlu0 %11218
  %11220 = vrot.lane.b32.xlu0 %v6581, 50
  %v11221 = vpop.permute.xlu0 %11220
  %11222 = vrot.lane.b32.xlu0 %v6583, 50
  %v11223 = vpop.permute.xlu0 %11222
  %11224 = vrot.lane.b32.xlu0 %v6586, 50
  %v11225 = vpop.permute.xlu0 %11224
  %11226 = vrot.lane.b32.xlu0 %v6588, 50
  %v11227 = vpop.permute.xlu0 %11226
  %11228 = vrot.lane.b32.xlu0 %v6591, 50
  %v11229 = vpop.permute.xlu0 %11228
  %11230 = vrot.lane.b32.xlu0 %v6593, 50
  %v11231 = vpop.permute.xlu0 %11230
  %11232 = vrot.lane.b32.xlu0 %v6596, 50
  %v11233 = vpop.permute.xlu0 %11232
  %11234 = vrot.lane.b32.xlu0 %v6598, 50
  %v11235 = vpop.permute.xlu0 %11234
  %11236 = vrot.lane.b32.xlu0 %v6601, 50
  %v11237 = vpop.permute.xlu0 %11236
  %11238 = vrot.lane.b32.xlu0 %v6603, 50
  %v11239 = vpop.permute.xlu0 %11238
  %11240 = vrot.lane.b32.xlu0 %v6606, 50
  %v11241 = vpop.permute.xlu0 %11240
  %11242 = vrot.lane.b32.xlu0 %v6608, 50
  %v11243 = vpop.permute.xlu0 %11242
  %11244 = vrot.lane.b32.xlu0 %v6611, 50
  %v11245 = vpop.permute.xlu0 %11244
  %11246 = vrot.lane.b32.xlu0 %v6613, 50
  %v11247 = vpop.permute.xlu0 %11246
  %11248 = vrot.lane.b32.xlu0 %v6616, 50
  %v11249 = vpop.permute.xlu0 %11248
  %11250 = vrot.lane.b32.xlu0 %v6618, 50
  %v11251 = vpop.permute.xlu0 %11250
  %11252 = vrot.lane.b32.xlu0 %v6621, 50
  %v11253 = vpop.permute.xlu0 %11252
  %11254 = vrot.lane.b32.xlu0 %v6623, 50
  %v11255 = vpop.permute.xlu0 %11254
  %11256 = vrot.lane.b32.xlu0 %v7599, 50
  %v11257 = vpop.permute.xlu0 %11256
  %11258 = vrot.lane.b32.xlu0 %v7601, 50
  %v11259 = vpop.permute.xlu0 %11258
  %11260 = vrot.lane.b32.xlu0 %v8503, 50
  %v11261 = vpop.permute.xlu0 %11260
  %11262 = vrot.lane.b32.xlu0 %v8505, 50
  %v11263 = vpop.permute.xlu0 %11262
  %11264 = vrot.lane.b32.xlu0 %v9431, 50
  %v11265 = vpop.permute.xlu0 %11264
  %11266 = vrot.lane.b32.xlu0 %v9433, 50
  %v11267 = vpop.permute.xlu0 %11266
  %11268 = vrot.lane.b32.xlu0 %v6556, 50
  %v11269 = vpop.permute.xlu0 %11268
  %11270 = vrot.lane.b32.xlu0 %v6558, 50
  %v11271 = vpop.permute.xlu0 %11270
  %v11302 = vadd.f32 %v11180, %v11213
  %v11303 = vadd.f32 %v11181, %v11215
  %v11304 = vadd.f32 %v11182, %v11217
  %v11305 = vadd.f32 %v11183, %v11219
  %v11306 = vadd.f32 %v11184, %v11221
  %v11307 = vadd.f32 %v11185, %v11223
  %v11308 = vadd.f32 %v11186, %v11225
  %v11309 = vadd.f32 %v11187, %v11227
  %v11310 = vadd.f32 %v11188, %v11229
  %v11311 = vadd.f32 %v11189, %v11231
  %v11312 = vadd.f32 %v11190, %v11233
  %v11313 = vadd.f32 %v11191, %v11235
  %v11314 = vadd.f32 %v11192, %v11237
  %v11315 = vadd.f32 %v11193, %v11239
  %v11316 = vadd.f32 %v11194, %v11241
  %v11317 = vadd.f32 %v11195, %v11243
  %v11318 = vadd.f32 %v11196, %v11245
  %v11319 = vadd.f32 %v11197, %v11247
  %v11320 = vadd.f32 %v11198, %v11249
  %v11321 = vadd.f32 %v11199, %v11251
  %v11322 = vadd.f32 %v11200, %v11253
  %v11323 = vadd.f32 %v11201, %v11255
  %v11324 = vadd.f32 %v11202, %v11257
  %v11325 = vadd.f32 %v11203, %v11259
  %v11326 = vadd.f32 %v11204, %v11261
  %v11327 = vadd.f32 %v11205, %v11263
  %v11328 = vadd.f32 %v11206, %v11265
  %v11329 = vadd.f32 %v11207, %v11267
  %v11330 = vadd.f32 %v11208, %v11269
  %v11331 = vadd.f32 %v11209, %v11271
  %v11332 = vadd.f32 %v11210, %v11269
  %v11333 = vadd.f32 %v11211, %v11271
  %11334 = vrot.lane.b32.xlu0 %v6753, 48
  %v11335 = vpop.permute.xlu0 %11334
  %11336 = vrot.lane.b32.xlu0 %v6755, 48
  %v11337 = vpop.permute.xlu0 %11336
  %11338 = vrot.lane.b32.xlu0 %v6758, 48
  %v11339 = vpop.permute.xlu0 %11338
  %11340 = vrot.lane.b32.xlu0 %v6760, 48
  %v11341 = vpop.permute.xlu0 %11340
  %11342 = vrot.lane.b32.xlu0 %v6763, 48
  %v11343 = vpop.permute.xlu0 %11342
  %11344 = vrot.lane.b32.xlu0 %v6765, 48
  %v11345 = vpop.permute.xlu0 %11344
  %11346 = vrot.lane.b32.xlu0 %v6768, 48
  %v11347 = vpop.permute.xlu0 %11346
  %11348 = vrot.lane.b32.xlu0 %v6770, 48
  %v11349 = vpop.permute.xlu0 %11348
  %11350 = vrot.lane.b32.xlu0 %v6773, 48
  %v11351 = vpop.permute.xlu0 %11350
  %11352 = vrot.lane.b32.xlu0 %v6775, 48
  %v11353 = vpop.permute.xlu0 %11352
  %11354 = vrot.lane.b32.xlu0 %v6778, 48
  %v11355 = vpop.permute.xlu0 %11354
  %11356 = vrot.lane.b32.xlu0 %v6780, 48
  %v11357 = vpop.permute.xlu0 %11356
  %11358 = vrot.lane.b32.xlu0 %v6783, 48
  %v11359 = vpop.permute.xlu0 %11358
  %11360 = vrot.lane.b32.xlu0 %v6785, 48
  %v11361 = vpop.permute.xlu0 %11360
  %11362 = vrot.lane.b32.xlu0 %v6788, 48
  %v11363 = vpop.permute.xlu0 %11362
  %11364 = vrot.lane.b32.xlu0 %v6790, 48
  %v11365 = vpop.permute.xlu0 %11364
  %11366 = vrot.lane.b32.xlu0 %v6793, 48
  %v11367 = vpop.permute.xlu0 %11366
  %11368 = vrot.lane.b32.xlu0 %v6795, 48
  %v11369 = vpop.permute.xlu0 %11368
  %11370 = vrot.lane.b32.xlu0 %v6798, 48
  %v11371 = vpop.permute.xlu0 %11370
  %11372 = vrot.lane.b32.xlu0 %v6800, 48
  %v11373 = vpop.permute.xlu0 %11372
  %11374 = vrot.lane.b32.xlu0 %v6803, 48
  %v11375 = vpop.permute.xlu0 %11374
  %11376 = vrot.lane.b32.xlu0 %v6805, 48
  %v11377 = vpop.permute.xlu0 %11376
  %11378 = vrot.lane.b32.xlu0 %v7724, 48
  %v11379 = vpop.permute.xlu0 %11378
  %11380 = vrot.lane.b32.xlu0 %v7726, 48
  %v11381 = vpop.permute.xlu0 %11380
  %11382 = vrot.lane.b32.xlu0 %v8636, 48
  %v11383 = vpop.permute.xlu0 %11382
  %11384 = vrot.lane.b32.xlu0 %v8638, 48
  %v11385 = vpop.permute.xlu0 %11384
  %11386 = vrot.lane.b32.xlu0 %v9564, 48
  %v11387 = vpop.permute.xlu0 %11386
  %11388 = vrot.lane.b32.xlu0 %v9566, 48
  %v11389 = vpop.permute.xlu0 %11388
  %11390 = vrot.lane.b32.xlu0 %v6738, 48
  %v11391 = vpop.permute.xlu0 %11390
  %11392 = vrot.lane.b32.xlu0 %v6740, 48
  %v11393 = vpop.permute.xlu0 %11392
  %v11424 = vadd.f32 %v11302, %v11335
  %v11425 = vadd.f32 %v11303, %v11337
  %v11426 = vadd.f32 %v11304, %v11339
  %v11427 = vadd.f32 %v11305, %v11341
  %v11428 = vadd.f32 %v11306, %v11343
  %v11429 = vadd.f32 %v11307, %v11345
  %v11430 = vadd.f32 %v11308, %v11347
  %v11431 = vadd.f32 %v11309, %v11349
  %v11432 = vadd.f32 %v11310, %v11351
  %v11433 = vadd.f32 %v11311, %v11353
  %v11434 = vadd.f32 %v11312, %v11355
  %v11435 = vadd.f32 %v11313, %v11357
  %v11436 = vadd.f32 %v11314, %v11359
  %v11437 = vadd.f32 %v11315, %v11361
  %v11438 = vadd.f32 %v11316, %v11363
  %v11439 = vadd.f32 %v11317, %v11365
  %v11440 = vadd.f32 %v11318, %v11367
  %v11441 = vadd.f32 %v11319, %v11369
  %v11442 = vadd.f32 %v11320, %v11371
  %v11443 = vadd.f32 %v11321, %v11373
  %v11444 = vadd.f32 %v11322, %v11375
  %v11445 = vadd.f32 %v11323, %v11377
  %v11446 = vadd.f32 %v11324, %v11379
  %v11447 = vadd.f32 %v11325, %v11381
  %v11448 = vadd.f32 %v11326, %v11383
  %v11449 = vadd.f32 %v11327, %v11385
  %v11450 = vadd.f32 %v11328, %v11387
  %v11451 = vadd.f32 %v11329, %v11389
  %v11452 = vadd.f32 %v11330, %v11391
  %v11453 = vadd.f32 %v11331, %v11393
  %v11454 = vadd.f32 %v11332, %v11391
  %v11455 = vadd.f32 %v11333, %v11393
  %11456 = vrot.lane.b32.xlu0 %v6935, 46
  %v11457 = vpop.permute.xlu0 %11456
  %11458 = vrot.lane.b32.xlu0 %v6937, 46
  %v11459 = vpop.permute.xlu0 %11458
  %11460 = vrot.lane.b32.xlu0 %v6940, 46
  %v11461 = vpop.permute.xlu0 %11460
  %11462 = vrot.lane.b32.xlu0 %v6942, 46
  %v11463 = vpop.permute.xlu0 %11462
  %11464 = vrot.lane.b32.xlu0 %v6945, 46
  %v11465 = vpop.permute.xlu0 %11464
  %11466 = vrot.lane.b32.xlu0 %v6947, 46
  %v11467 = vpop.permute.xlu0 %11466
  %11468 = vrot.lane.b32.xlu0 %v6950, 46
  %v11469 = vpop.permute.xlu0 %11468
  %11470 = vrot.lane.b32.xlu0 %v6952, 46
  %v11471 = vpop.permute.xlu0 %11470
  %11472 = vrot.lane.b32.xlu0 %v6955, 46
  %v11473 = vpop.permute.xlu0 %11472
  %11474 = vrot.lane.b32.xlu0 %v6957, 46
  %v11475 = vpop.permute.xlu0 %11474
  %11476 = vrot.lane.b32.xlu0 %v6960, 46
  %v11477 = vpop.permute.xlu0 %11476
  %11478 = vrot.lane.b32.xlu0 %v6962, 46
  %v11479 = vpop.permute.xlu0 %11478
  %11480 = vrot.lane.b32.xlu0 %v6965, 46
  %v11481 = vpop.permute.xlu0 %11480
  %11482 = vrot.lane.b32.xlu0 %v6967, 46
  %v11483 = vpop.permute.xlu0 %11482
  %11484 = vrot.lane.b32.xlu0 %v6970, 46
  %v11485 = vpop.permute.xlu0 %11484
  %11486 = vrot.lane.b32.xlu0 %v6972, 46
  %v11487 = vpop.permute.xlu0 %11486
  %11488 = vrot.lane.b32.xlu0 %v6975, 46
  %v11489 = vpop.permute.xlu0 %11488
  %11490 = vrot.lane.b32.xlu0 %v6977, 46
  %v11491 = vpop.permute.xlu0 %11490
  %11492 = vrot.lane.b32.xlu0 %v6980, 46
  %v11493 = vpop.permute.xlu0 %11492
  %11494 = vrot.lane.b32.xlu0 %v6982, 46
  %v11495 = vpop.permute.xlu0 %11494
  %11496 = vrot.lane.b32.xlu0 %v6985, 46
  %v11497 = vpop.permute.xlu0 %11496
  %11498 = vrot.lane.b32.xlu0 %v6987, 46
  %v11499 = vpop.permute.xlu0 %11498
  %11500 = vrot.lane.b32.xlu0 %v7849, 46
  %v11501 = vpop.permute.xlu0 %11500
  %11502 = vrot.lane.b32.xlu0 %v7851, 46
  %v11503 = vpop.permute.xlu0 %11502
  %11504 = vrot.lane.b32.xlu0 %v8769, 46
  %v11505 = vpop.permute.xlu0 %11504
  %11506 = vrot.lane.b32.xlu0 %v8771, 46
  %v11507 = vpop.permute.xlu0 %11506
  %11508 = vrot.lane.b32.xlu0 %v9697, 46
  %v11509 = vpop.permute.xlu0 %11508
  %11510 = vrot.lane.b32.xlu0 %v9699, 46
  %v11511 = vpop.permute.xlu0 %11510
  %11512 = vrot.lane.b32.xlu0 %v6920, 46
  %v11513 = vpop.permute.xlu0 %11512
  %11514 = vrot.lane.b32.xlu0 %v6922, 46
  %v11515 = vpop.permute.xlu0 %11514
  %v11546 = vadd.f32 %v11424, %v11457
  %v11547 = vadd.f32 %v11425, %v11459
  %v11548 = vadd.f32 %v11426, %v11461
  %v11549 = vadd.f32 %v11427, %v11463
  %v11550 = vadd.f32 %v11428, %v11465
  %v11551 = vadd.f32 %v11429, %v11467
  %v11552 = vadd.f32 %v11430, %v11469
  %v11553 = vadd.f32 %v11431, %v11471
  %v11554 = vadd.f32 %v11432, %v11473
  %v11555 = vadd.f32 %v11433, %v11475
  %v11556 = vadd.f32 %v11434, %v11477
  %v11557 = vadd.f32 %v11435, %v11479
  %v11558 = vadd.f32 %v11436, %v11481
  %v11559 = vadd.f32 %v11437, %v11483
  %v11560 = vadd.f32 %v11438, %v11485
  %v11561 = vadd.f32 %v11439, %v11487
  %v11562 = vadd.f32 %v11440, %v11489
  %v11563 = vadd.f32 %v11441, %v11491
  %v11564 = vadd.f32 %v11442, %v11493
  %v11565 = vadd.f32 %v11443, %v11495
  %v11566 = vadd.f32 %v11444, %v11497
  %v11567 = vadd.f32 %v11445, %v11499
  %v11568 = vadd.f32 %v11446, %v11501
  %v11569 = vadd.f32 %v11447, %v11503
  %v11570 = vadd.f32 %v11448, %v11505
  %v11571 = vadd.f32 %v11449, %v11507
  %v11572 = vadd.f32 %v11450, %v11509
  %v11573 = vadd.f32 %v11451, %v11511
  %v11574 = vadd.f32 %v11452, %v11513
  %v11575 = vadd.f32 %v11453, %v11515
  %v11576 = vadd.f32 %v11454, %v11513
  %v11577 = vadd.f32 %v11455, %v11515
  %11578 = vrot.lane.b32.xlu0 %v5914, 44
  %v11579 = vpop.permute.xlu0 %11578
  %11580 = vrot.lane.b32.xlu0 %v5826, 44
  %v11581 = vpop.permute.xlu0 %11580
  %11582 = vrot.lane.b32.xlu0 %v5915, 44
  %v11583 = vpop.permute.xlu0 %11582
  %11584 = vrot.lane.b32.xlu0 %v5829, 44
  %v11585 = vpop.permute.xlu0 %11584
  %11586 = vrot.lane.b32.xlu0 %v5916, 44
  %v11587 = vpop.permute.xlu0 %11586
  %11588 = vrot.lane.b32.xlu0 %v5832, 44
  %v11589 = vpop.permute.xlu0 %11588
  %11590 = vrot.lane.b32.xlu0 %v5917, 44
  %v11591 = vpop.permute.xlu0 %11590
  %11592 = vrot.lane.b32.xlu0 %v5835, 44
  %v11593 = vpop.permute.xlu0 %11592
  %11594 = vrot.lane.b32.xlu0 %v5918, 44
  %v11595 = vpop.permute.xlu0 %11594
  %11596 = vrot.lane.b32.xlu0 %v5838, 44
  %v11597 = vpop.permute.xlu0 %11596
  %11598 = vrot.lane.b32.xlu0 %v5919, 44
  %v11599 = vpop.permute.xlu0 %11598
  %11600 = vrot.lane.b32.xlu0 %v5841, 44
  %v11601 = vpop.permute.xlu0 %11600
  %11602 = vrot.lane.b32.xlu0 %v5920, 44
  %v11603 = vpop.permute.xlu0 %11602
  %11604 = vrot.lane.b32.xlu0 %v5844, 44
  %v11605 = vpop.permute.xlu0 %11604
  %11606 = vrot.lane.b32.xlu0 %v5921, 44
  %v11607 = vpop.permute.xlu0 %11606
  %11608 = vrot.lane.b32.xlu0 %v5847, 44
  %v11609 = vpop.permute.xlu0 %11608
  %11610 = vrot.lane.b32.xlu0 %v5922, 44
  %v11611 = vpop.permute.xlu0 %11610
  %11612 = vrot.lane.b32.xlu0 %v5850, 44
  %v11613 = vpop.permute.xlu0 %11612
  %11614 = vrot.lane.b32.xlu0 %v5923, 44
  %v11615 = vpop.permute.xlu0 %11614
  %11616 = vrot.lane.b32.xlu0 %v5853, 44
  %v11617 = vpop.permute.xlu0 %11616
  %11618 = vrot.lane.b32.xlu0 %v5924, 44
  %v11619 = vpop.permute.xlu0 %11618
  %11620 = vrot.lane.b32.xlu0 %v5856, 44
  %v11621 = vpop.permute.xlu0 %11620
  %11622 = vrot.lane.b32.xlu0 %v5925, 44
  %v11623 = vpop.permute.xlu0 %11622
  %11624 = vrot.lane.b32.xlu0 %v5859, 44
  %v11625 = vpop.permute.xlu0 %11624
  %11626 = vrot.lane.b32.xlu0 %v5926, 44
  %v11627 = vpop.permute.xlu0 %11626
  %11628 = vrot.lane.b32.xlu0 %v5862, 44
  %v11629 = vpop.permute.xlu0 %11628
  %11630 = vrot.lane.b32.xlu0 %v5910, 44
  %v11631 = vpop.permute.xlu0 %11630
  %11632 = vrot.lane.b32.xlu0 %v5814, 44
  %v11633 = vpop.permute.xlu0 %11632
  %v11662 = vadd.f32 %v11546, %v11579
  %v11663 = vadd.f32 %v11547, %v11581
  %v11664 = vadd.f32 %v11548, %v11583
  %v11665 = vadd.f32 %v11549, %v11585
  %v11666 = vadd.f32 %v11550, %v11587
  %v11667 = vadd.f32 %v11551, %v11589
  %v11668 = vadd.f32 %v11552, %v11591
  %v11669 = vadd.f32 %v11553, %v11593
  %v11670 = vadd.f32 %v11554, %v11595
  %v11671 = vadd.f32 %v11555, %v11597
  %v11672 = vadd.f32 %v11556, %v11599
  %v11673 = vadd.f32 %v11557, %v11601
  %v11674 = vadd.f32 %v11558, %v11603
  %v11675 = vadd.f32 %v11559, %v11605
  %v11676 = vadd.f32 %v11560, %v11607
  %v11677 = vadd.f32 %v11561, %v11609
  %v11678 = vadd.f32 %v11562, %v11611
  %v11679 = vadd.f32 %v11563, %v11613
  %v11680 = vadd.f32 %v11564, %v11615
  %v11681 = vadd.f32 %v11565, %v11617
  %v11682 = vadd.f32 %v11566, %v11619
  %v11683 = vadd.f32 %v11567, %v11621
  %v11684 = vadd.f32 %v11568, %v11623
  %v11685 = vadd.f32 %v11569, %v11625
  %v11686 = vadd.f32 %v11570, %v11627
  %v11687 = vadd.f32 %v11571, %v11629
  %v11688 = vadd.f32 %v11572, %v11631
  %v11689 = vadd.f32 %v11573, %v11633
  %v11690 = vadd.f32 %v11574, %v11631
  %v11691 = vadd.f32 %v11575, %v11633
  %v11692 = vadd.f32 %v11576, %v11631
  %v11693 = vadd.f32 %v11577, %v11633
  %11694 = vrot.lane.b32.xlu0 %v6030, 42
  %v11695 = vpop.permute.xlu0 %11694
  %11696 = vrot.lane.b32.xlu0 %v6032, 42
  %v11697 = vpop.permute.xlu0 %11696
  %11698 = vrot.lane.b32.xlu0 %v6035, 42
  %v11699 = vpop.permute.xlu0 %11698
  %11700 = vrot.lane.b32.xlu0 %v6037, 42
  %v11701 = vpop.permute.xlu0 %11700
  %11702 = vrot.lane.b32.xlu0 %v6040, 42
  %v11703 = vpop.permute.xlu0 %11702
  %11704 = vrot.lane.b32.xlu0 %v6042, 42
  %v11705 = vpop.permute.xlu0 %11704
  %11706 = vrot.lane.b32.xlu0 %v6045, 42
  %v11707 = vpop.permute.xlu0 %11706
  %11708 = vrot.lane.b32.xlu0 %v6047, 42
  %v11709 = vpop.permute.xlu0 %11708
  %11710 = vrot.lane.b32.xlu0 %v6050, 42
  %v11711 = vpop.permute.xlu0 %11710
  %11712 = vrot.lane.b32.xlu0 %v6052, 42
  %v11713 = vpop.permute.xlu0 %11712
  %11714 = vrot.lane.b32.xlu0 %v6055, 42
  %v11715 = vpop.permute.xlu0 %11714
  %11716 = vrot.lane.b32.xlu0 %v6057, 42
  %v11717 = vpop.permute.xlu0 %11716
  %11718 = vrot.lane.b32.xlu0 %v6060, 42
  %v11719 = vpop.permute.xlu0 %11718
  %11720 = vrot.lane.b32.xlu0 %v6062, 42
  %v11721 = vpop.permute.xlu0 %11720
  %11722 = vrot.lane.b32.xlu0 %v6065, 42
  %v11723 = vpop.permute.xlu0 %11722
  %11724 = vrot.lane.b32.xlu0 %v6067, 42
  %v11725 = vpop.permute.xlu0 %11724
  %11726 = vrot.lane.b32.xlu0 %v6070, 42
  %v11727 = vpop.permute.xlu0 %11726
  %11728 = vrot.lane.b32.xlu0 %v6072, 42
  %v11729 = vpop.permute.xlu0 %11728
  %11730 = vrot.lane.b32.xlu0 %v6075, 42
  %v11731 = vpop.permute.xlu0 %11730
  %11732 = vrot.lane.b32.xlu0 %v6077, 42
  %v11733 = vpop.permute.xlu0 %11732
  %11734 = vrot.lane.b32.xlu0 %v7224, 42
  %v11735 = vpop.permute.xlu0 %11734
  %11736 = vrot.lane.b32.xlu0 %v7226, 42
  %v11737 = vpop.permute.xlu0 %11736
  %11738 = vrot.lane.b32.xlu0 %v8104, 42
  %v11739 = vpop.permute.xlu0 %11738
  %11740 = vrot.lane.b32.xlu0 %v8106, 42
  %v11741 = vpop.permute.xlu0 %11740
  %11742 = vrot.lane.b32.xlu0 %v9032, 42
  %v11743 = vpop.permute.xlu0 %11742
  %11744 = vrot.lane.b32.xlu0 %v9034, 42
  %v11745 = vpop.permute.xlu0 %11744
  %11746 = vrot.lane.b32.xlu0 %v6010, 42
  %v11747 = vpop.permute.xlu0 %11746
  %11748 = vrot.lane.b32.xlu0 %v6012, 42
  %v11749 = vpop.permute.xlu0 %11748
  %v11778 = vadd.f32 %v11662, %v11695
  %v11779 = vadd.f32 %v11663, %v11697
  %v11780 = vadd.f32 %v11664, %v11699
  %v11781 = vadd.f32 %v11665, %v11701
  %v11782 = vadd.f32 %v11666, %v11703
  %v11783 = vadd.f32 %v11667, %v11705
  %v11784 = vadd.f32 %v11668, %v11707
  %v11785 = vadd.f32 %v11669, %v11709
  %v11786 = vadd.f32 %v11670, %v11711
  %v11787 = vadd.f32 %v11671, %v11713
  %v11788 = vadd.f32 %v11672, %v11715
  %v11789 = vadd.f32 %v11673, %v11717
  %v11790 = vadd.f32 %v11674, %v11719
  %v11791 = vadd.f32 %v11675, %v11721
  %v11792 = vadd.f32 %v11676, %v11723
  %v11793 = vadd.f32 %v11677, %v11725
  %v11794 = vadd.f32 %v11678, %v11727
  %v11795 = vadd.f32 %v11679, %v11729
  %v11796 = vadd.f32 %v11680, %v11731
  %v11797 = vadd.f32 %v11681, %v11733
  %v11798 = vadd.f32 %v11682, %v11735
  %v11799 = vadd.f32 %v11683, %v11737
  %v11800 = vadd.f32 %v11684, %v11739
  %v11801 = vadd.f32 %v11685, %v11741
  %v11802 = vadd.f32 %v11686, %v11743
  %v11803 = vadd.f32 %v11687, %v11745
  %v11804 = vadd.f32 %v11688, %v11747
  %v11805 = vadd.f32 %v11689, %v11749
  %v11806 = vadd.f32 %v11690, %v11747
  %v11807 = vadd.f32 %v11691, %v11749
  %v11808 = vadd.f32 %v11692, %v11747
  %v11809 = vadd.f32 %v11693, %v11749
  %11810 = vrot.lane.b32.xlu0 %v6212, 40
  %v11811 = vpop.permute.xlu0 %11810
  %11812 = vrot.lane.b32.xlu0 %v6214, 40
  %v11813 = vpop.permute.xlu0 %11812
  %11814 = vrot.lane.b32.xlu0 %v6217, 40
  %v11815 = vpop.permute.xlu0 %11814
  %11816 = vrot.lane.b32.xlu0 %v6219, 40
  %v11817 = vpop.permute.xlu0 %11816
  %11818 = vrot.lane.b32.xlu0 %v6222, 40
  %v11819 = vpop.permute.xlu0 %11818
  %11820 = vrot.lane.b32.xlu0 %v6224, 40
  %v11821 = vpop.permute.xlu0 %11820
  %11822 = vrot.lane.b32.xlu0 %v6227, 40
  %v11823 = vpop.permute.xlu0 %11822
  %11824 = vrot.lane.b32.xlu0 %v6229, 40
  %v11825 = vpop.permute.xlu0 %11824
  %11826 = vrot.lane.b32.xlu0 %v6232, 40
  %v11827 = vpop.permute.xlu0 %11826
  %11828 = vrot.lane.b32.xlu0 %v6234, 40
  %v11829 = vpop.permute.xlu0 %11828
  %11830 = vrot.lane.b32.xlu0 %v6237, 40
  %v11831 = vpop.permute.xlu0 %11830
  %11832 = vrot.lane.b32.xlu0 %v6239, 40
  %v11833 = vpop.permute.xlu0 %11832
  %11834 = vrot.lane.b32.xlu0 %v6242, 40
  %v11835 = vpop.permute.xlu0 %11834
  %11836 = vrot.lane.b32.xlu0 %v6244, 40
  %v11837 = vpop.permute.xlu0 %11836
  %11838 = vrot.lane.b32.xlu0 %v6247, 40
  %v11839 = vpop.permute.xlu0 %11838
  %11840 = vrot.lane.b32.xlu0 %v6249, 40
  %v11841 = vpop.permute.xlu0 %11840
  %11842 = vrot.lane.b32.xlu0 %v6252, 40
  %v11843 = vpop.permute.xlu0 %11842
  %11844 = vrot.lane.b32.xlu0 %v6254, 40
  %v11845 = vpop.permute.xlu0 %11844
  %11846 = vrot.lane.b32.xlu0 %v6257, 40
  %v11847 = vpop.permute.xlu0 %11846
  %11848 = vrot.lane.b32.xlu0 %v6259, 40
  %v11849 = vpop.permute.xlu0 %11848
  %11850 = vrot.lane.b32.xlu0 %v7349, 40
  %v11851 = vpop.permute.xlu0 %11850
  %11852 = vrot.lane.b32.xlu0 %v7351, 40
  %v11853 = vpop.permute.xlu0 %11852
  %11854 = vrot.lane.b32.xlu0 %v8237, 40
  %v11855 = vpop.permute.xlu0 %11854
  %11856 = vrot.lane.b32.xlu0 %v8239, 40
  %v11857 = vpop.permute.xlu0 %11856
  %11858 = vrot.lane.b32.xlu0 %v9165, 40
  %v11859 = vpop.permute.xlu0 %11858
  %11860 = vrot.lane.b32.xlu0 %v9167, 40
  %v11861 = vpop.permute.xlu0 %11860
  %11862 = vrot.lane.b32.xlu0 %v6192, 40
  %v11863 = vpop.permute.xlu0 %11862
  %11864 = vrot.lane.b32.xlu0 %v6194, 40
  %v11865 = vpop.permute.xlu0 %11864
  %v11894 = vadd.f32 %v11778, %v11811
  %v11895 = vadd.f32 %v11779, %v11813
  %v11896 = vadd.f32 %v11780, %v11815
  %v11897 = vadd.f32 %v11781, %v11817
  %v11898 = vadd.f32 %v11782, %v11819
  %v11899 = vadd.f32 %v11783, %v11821
  %v11900 = vadd.f32 %v11784, %v11823
  %v11901 = vadd.f32 %v11785, %v11825
  %v11902 = vadd.f32 %v11786, %v11827
  %v11903 = vadd.f32 %v11787, %v11829
  %v11904 = vadd.f32 %v11788, %v11831
  %v11905 = vadd.f32 %v11789, %v11833
  %v11906 = vadd.f32 %v11790, %v11835
  %v11907 = vadd.f32 %v11791, %v11837
  %v11908 = vadd.f32 %v11792, %v11839
  %v11909 = vadd.f32 %v11793, %v11841
  %v11910 = vadd.f32 %v11794, %v11843
  %v11911 = vadd.f32 %v11795, %v11845
  %v11912 = vadd.f32 %v11796, %v11847
  %v11913 = vadd.f32 %v11797, %v11849
  %v11914 = vadd.f32 %v11798, %v11851
  %v11915 = vadd.f32 %v11799, %v11853
  %v11916 = vadd.f32 %v11800, %v11855
  %v11917 = vadd.f32 %v11801, %v11857
  %v11918 = vadd.f32 %v11802, %v11859
  %v11919 = vadd.f32 %v11803, %v11861
  %v11920 = vadd.f32 %v11804, %v11863
  %v11921 = vadd.f32 %v11805, %v11865
  %v11922 = vadd.f32 %v11806, %v11863
  %v11923 = vadd.f32 %v11807, %v11865
  %v11924 = vadd.f32 %v11808, %v11863
  %v11925 = vadd.f32 %v11809, %v11865
  %11926 = vrot.lane.b32.xlu0 %v6394, 38
  %v11927 = vpop.permute.xlu0 %11926
  %11928 = vrot.lane.b32.xlu0 %v6396, 38
  %v11929 = vpop.permute.xlu0 %11928
  %11930 = vrot.lane.b32.xlu0 %v6399, 38
  %v11931 = vpop.permute.xlu0 %11930
  %11932 = vrot.lane.b32.xlu0 %v6401, 38
  %v11933 = vpop.permute.xlu0 %11932
  %11934 = vrot.lane.b32.xlu0 %v6404, 38
  %v11935 = vpop.permute.xlu0 %11934
  %11936 = vrot.lane.b32.xlu0 %v6406, 38
  %v11937 = vpop.permute.xlu0 %11936
  %11938 = vrot.lane.b32.xlu0 %v6409, 38
  %v11939 = vpop.permute.xlu0 %11938
  %11940 = vrot.lane.b32.xlu0 %v6411, 38
  %v11941 = vpop.permute.xlu0 %11940
  %11942 = vrot.lane.b32.xlu0 %v6414, 38
  %v11943 = vpop.permute.xlu0 %11942
  %11944 = vrot.lane.b32.xlu0 %v6416, 38
  %v11945 = vpop.permute.xlu0 %11944
  %11946 = vrot.lane.b32.xlu0 %v6419, 38
  %v11947 = vpop.permute.xlu0 %11946
  %11948 = vrot.lane.b32.xlu0 %v6421, 38
  %v11949 = vpop.permute.xlu0 %11948
  %11950 = vrot.lane.b32.xlu0 %v6424, 38
  %v11951 = vpop.permute.xlu0 %11950
  %11952 = vrot.lane.b32.xlu0 %v6426, 38
  %v11953 = vpop.permute.xlu0 %11952
  %11954 = vrot.lane.b32.xlu0 %v6429, 38
  %v11955 = vpop.permute.xlu0 %11954
  %11956 = vrot.lane.b32.xlu0 %v6431, 38
  %v11957 = vpop.permute.xlu0 %11956
  %11958 = vrot.lane.b32.xlu0 %v6434, 38
  %v11959 = vpop.permute.xlu0 %11958
  %11960 = vrot.lane.b32.xlu0 %v6436, 38
  %v11961 = vpop.permute.xlu0 %11960
  %11962 = vrot.lane.b32.xlu0 %v6439, 38
  %v11963 = vpop.permute.xlu0 %11962
  %11964 = vrot.lane.b32.xlu0 %v6441, 38
  %v11965 = vpop.permute.xlu0 %11964
  %11966 = vrot.lane.b32.xlu0 %v7474, 38
  %v11967 = vpop.permute.xlu0 %11966
  %11968 = vrot.lane.b32.xlu0 %v7476, 38
  %v11969 = vpop.permute.xlu0 %11968
  %11970 = vrot.lane.b32.xlu0 %v8370, 38
  %v11971 = vpop.permute.xlu0 %11970
  %11972 = vrot.lane.b32.xlu0 %v8372, 38
  %v11973 = vpop.permute.xlu0 %11972
  %11974 = vrot.lane.b32.xlu0 %v9298, 38
  %v11975 = vpop.permute.xlu0 %11974
  %11976 = vrot.lane.b32.xlu0 %v9300, 38
  %v11977 = vpop.permute.xlu0 %11976
  %11978 = vrot.lane.b32.xlu0 %v6374, 38
  %v11979 = vpop.permute.xlu0 %11978
  %11980 = vrot.lane.b32.xlu0 %v6376, 38
  %v11981 = vpop.permute.xlu0 %11980
  %v12010 = vadd.f32 %v11894, %v11927
  %v12011 = vadd.f32 %v11895, %v11929
  %v12012 = vadd.f32 %v11896, %v11931
  %v12013 = vadd.f32 %v11897, %v11933
  %v12014 = vadd.f32 %v11898, %v11935
  %v12015 = vadd.f32 %v11899, %v11937
  %v12016 = vadd.f32 %v11900, %v11939
  %v12017 = vadd.f32 %v11901, %v11941
  %v12018 = vadd.f32 %v11902, %v11943
  %v12019 = vadd.f32 %v11903, %v11945
  %v12020 = vadd.f32 %v11904, %v11947
  %v12021 = vadd.f32 %v11905, %v11949
  %v12022 = vadd.f32 %v11906, %v11951
  %v12023 = vadd.f32 %v11907, %v11953
  %v12024 = vadd.f32 %v11908, %v11955
  %v12025 = vadd.f32 %v11909, %v11957
  %v12026 = vadd.f32 %v11910, %v11959
  %v12027 = vadd.f32 %v11911, %v11961
  %v12028 = vadd.f32 %v11912, %v11963
  %v12029 = vadd.f32 %v11913, %v11965
  %v12030 = vadd.f32 %v11914, %v11967
  %v12031 = vadd.f32 %v11915, %v11969
  %v12032 = vadd.f32 %v11916, %v11971
  %v12033 = vadd.f32 %v11917, %v11973
  %v12034 = vadd.f32 %v11918, %v11975
  %v12035 = vadd.f32 %v11919, %v11977
  %v12036 = vadd.f32 %v11920, %v11979
  %v12037 = vadd.f32 %v11921, %v11981
  %v12038 = vadd.f32 %v11922, %v11979
  %v12039 = vadd.f32 %v11923, %v11981
  %v12040 = vadd.f32 %v11924, %v11979
  %v12041 = vadd.f32 %v11925, %v11981
  %12042 = vrot.lane.b32.xlu0 %v6576, 36
  %v12043 = vpop.permute.xlu0 %12042
  %12044 = vrot.lane.b32.xlu0 %v6578, 36
  %v12045 = vpop.permute.xlu0 %12044
  %12046 = vrot.lane.b32.xlu0 %v6581, 36
  %v12047 = vpop.permute.xlu0 %12046
  %12048 = vrot.lane.b32.xlu0 %v6583, 36
  %v12049 = vpop.permute.xlu0 %12048
  %12050 = vrot.lane.b32.xlu0 %v6586, 36
  %v12051 = vpop.permute.xlu0 %12050
  %12052 = vrot.lane.b32.xlu0 %v6588, 36
  %v12053 = vpop.permute.xlu0 %12052
  %12054 = vrot.lane.b32.xlu0 %v6591, 36
  %v12055 = vpop.permute.xlu0 %12054
  %12056 = vrot.lane.b32.xlu0 %v6593, 36
  %v12057 = vpop.permute.xlu0 %12056
  %12058 = vrot.lane.b32.xlu0 %v6596, 36
  %v12059 = vpop.permute.xlu0 %12058
  %12060 = vrot.lane.b32.xlu0 %v6598, 36
  %v12061 = vpop.permute.xlu0 %12060
  %12062 = vrot.lane.b32.xlu0 %v6601, 36
  %v12063 = vpop.permute.xlu0 %12062
  %12064 = vrot.lane.b32.xlu0 %v6603, 36
  %v12065 = vpop.permute.xlu0 %12064
  %12066 = vrot.lane.b32.xlu0 %v6606, 36
  %v12067 = vpop.permute.xlu0 %12066
  %12068 = vrot.lane.b32.xlu0 %v6608, 36
  %v12069 = vpop.permute.xlu0 %12068
  %12070 = vrot.lane.b32.xlu0 %v6611, 36
  %v12071 = vpop.permute.xlu0 %12070
  %12072 = vrot.lane.b32.xlu0 %v6613, 36
  %v12073 = vpop.permute.xlu0 %12072
  %12074 = vrot.lane.b32.xlu0 %v6616, 36
  %v12075 = vpop.permute.xlu0 %12074
  %12076 = vrot.lane.b32.xlu0 %v6618, 36
  %v12077 = vpop.permute.xlu0 %12076
  %12078 = vrot.lane.b32.xlu0 %v6621, 36
  %v12079 = vpop.permute.xlu0 %12078
  %12080 = vrot.lane.b32.xlu0 %v6623, 36
  %v12081 = vpop.permute.xlu0 %12080
  %12082 = vrot.lane.b32.xlu0 %v7599, 36
  %v12083 = vpop.permute.xlu0 %12082
  %12084 = vrot.lane.b32.xlu0 %v7601, 36
  %v12085 = vpop.permute.xlu0 %12084
  %12086 = vrot.lane.b32.xlu0 %v8503, 36
  %v12087 = vpop.permute.xlu0 %12086
  %12088 = vrot.lane.b32.xlu0 %v8505, 36
  %v12089 = vpop.permute.xlu0 %12088
  %12090 = vrot.lane.b32.xlu0 %v9431, 36
  %v12091 = vpop.permute.xlu0 %12090
  %12092 = vrot.lane.b32.xlu0 %v9433, 36
  %v12093 = vpop.permute.xlu0 %12092
  %12094 = vrot.lane.b32.xlu0 %v6556, 36
  %v12095 = vpop.permute.xlu0 %12094
  %12096 = vrot.lane.b32.xlu0 %v6558, 36
  %v12097 = vpop.permute.xlu0 %12096
  %v12126 = vadd.f32 %v12010, %v12043
  %v12127 = vadd.f32 %v12011, %v12045
  %v12128 = vadd.f32 %v12012, %v12047
  %v12129 = vadd.f32 %v12013, %v12049
  %v12130 = vadd.f32 %v12014, %v12051
  %v12131 = vadd.f32 %v12015, %v12053
  %v12132 = vadd.f32 %v12016, %v12055
  %v12133 = vadd.f32 %v12017, %v12057
  %v12134 = vadd.f32 %v12018, %v12059
  %v12135 = vadd.f32 %v12019, %v12061
  %v12136 = vadd.f32 %v12020, %v12063
  %v12137 = vadd.f32 %v12021, %v12065
  %v12138 = vadd.f32 %v12022, %v12067
  %v12139 = vadd.f32 %v12023, %v12069
  %v12140 = vadd.f32 %v12024, %v12071
  %v12141 = vadd.f32 %v12025, %v12073
  %v12142 = vadd.f32 %v12026, %v12075
  %v12143 = vadd.f32 %v12027, %v12077
  %v12144 = vadd.f32 %v12028, %v12079
  %v12145 = vadd.f32 %v12029, %v12081
  %v12146 = vadd.f32 %v12030, %v12083
  %v12147 = vadd.f32 %v12031, %v12085
  %v12148 = vadd.f32 %v12032, %v12087
  %v12149 = vadd.f32 %v12033, %v12089
  %v12150 = vadd.f32 %v12034, %v12091
  %v12151 = vadd.f32 %v12035, %v12093
  %v12152 = vadd.f32 %v12036, %v12095
  %v12153 = vadd.f32 %v12037, %v12097
  %v12154 = vadd.f32 %v12038, %v12095
  %v12155 = vadd.f32 %v12039, %v12097
  %v12156 = vadd.f32 %v12040, %v12095
  %v12157 = vadd.f32 %v12041, %v12097
  %12158 = vrot.lane.b32.xlu0 %v6758, 34
  %v12159 = vpop.permute.xlu0 %12158
  %12160 = vrot.lane.b32.xlu0 %v6760, 34
  %v12161 = vpop.permute.xlu0 %12160
  %12162 = vrot.lane.b32.xlu0 %v6763, 34
  %v12163 = vpop.permute.xlu0 %12162
  %12164 = vrot.lane.b32.xlu0 %v6765, 34
  %v12165 = vpop.permute.xlu0 %12164
  %12166 = vrot.lane.b32.xlu0 %v6768, 34
  %v12167 = vpop.permute.xlu0 %12166
  %12168 = vrot.lane.b32.xlu0 %v6770, 34
  %v12169 = vpop.permute.xlu0 %12168
  %12170 = vrot.lane.b32.xlu0 %v6773, 34
  %v12171 = vpop.permute.xlu0 %12170
  %12172 = vrot.lane.b32.xlu0 %v6775, 34
  %v12173 = vpop.permute.xlu0 %12172
  %12174 = vrot.lane.b32.xlu0 %v6778, 34
  %v12175 = vpop.permute.xlu0 %12174
  %12176 = vrot.lane.b32.xlu0 %v6780, 34
  %v12177 = vpop.permute.xlu0 %12176
  %12178 = vrot.lane.b32.xlu0 %v6783, 34
  %v12179 = vpop.permute.xlu0 %12178
  %12180 = vrot.lane.b32.xlu0 %v6785, 34
  %v12181 = vpop.permute.xlu0 %12180
  %12182 = vrot.lane.b32.xlu0 %v6788, 34
  %v12183 = vpop.permute.xlu0 %12182
  %12184 = vrot.lane.b32.xlu0 %v6790, 34
  %v12185 = vpop.permute.xlu0 %12184
  %12186 = vrot.lane.b32.xlu0 %v6793, 34
  %v12187 = vpop.permute.xlu0 %12186
  %12188 = vrot.lane.b32.xlu0 %v6795, 34
  %v12189 = vpop.permute.xlu0 %12188
  %12190 = vrot.lane.b32.xlu0 %v6798, 34
  %v12191 = vpop.permute.xlu0 %12190
  %12192 = vrot.lane.b32.xlu0 %v6800, 34
  %v12193 = vpop.permute.xlu0 %12192
  %12194 = vrot.lane.b32.xlu0 %v6803, 34
  %v12195 = vpop.permute.xlu0 %12194
  %12196 = vrot.lane.b32.xlu0 %v6805, 34
  %v12197 = vpop.permute.xlu0 %12196
  %12198 = vrot.lane.b32.xlu0 %v7724, 34
  %v12199 = vpop.permute.xlu0 %12198
  %12200 = vrot.lane.b32.xlu0 %v7726, 34
  %v12201 = vpop.permute.xlu0 %12200
  %12202 = vrot.lane.b32.xlu0 %v8636, 34
  %v12203 = vpop.permute.xlu0 %12202
  %12204 = vrot.lane.b32.xlu0 %v8638, 34
  %v12205 = vpop.permute.xlu0 %12204
  %12206 = vrot.lane.b32.xlu0 %v9564, 34
  %v12207 = vpop.permute.xlu0 %12206
  %12208 = vrot.lane.b32.xlu0 %v9566, 34
  %v12209 = vpop.permute.xlu0 %12208
  %12210 = vrot.lane.b32.xlu0 %v6738, 34
  %v12211 = vpop.permute.xlu0 %12210
  %12212 = vrot.lane.b32.xlu0 %v6740, 34
  %v12213 = vpop.permute.xlu0 %12212
  %v12242 = vadd.f32 %v12126, %v12159
  %v12243 = vadd.f32 %v12127, %v12161
  %v12244 = vadd.f32 %v12128, %v12163
  %v12245 = vadd.f32 %v12129, %v12165
  %v12246 = vadd.f32 %v12130, %v12167
  %v12247 = vadd.f32 %v12131, %v12169
  %v12248 = vadd.f32 %v12132, %v12171
  %v12249 = vadd.f32 %v12133, %v12173
  %v12250 = vadd.f32 %v12134, %v12175
  %v12251 = vadd.f32 %v12135, %v12177
  %v12252 = vadd.f32 %v12136, %v12179
  %v12253 = vadd.f32 %v12137, %v12181
  %v12254 = vadd.f32 %v12138, %v12183
  %v12255 = vadd.f32 %v12139, %v12185
  %v12256 = vadd.f32 %v12140, %v12187
  %v12257 = vadd.f32 %v12141, %v12189
  %v12258 = vadd.f32 %v12142, %v12191
  %v12259 = vadd.f32 %v12143, %v12193
  %v12260 = vadd.f32 %v12144, %v12195
  %v12261 = vadd.f32 %v12145, %v12197
  %v12262 = vadd.f32 %v12146, %v12199
  %v12263 = vadd.f32 %v12147, %v12201
  %v12264 = vadd.f32 %v12148, %v12203
  %v12265 = vadd.f32 %v12149, %v12205
  %v12266 = vadd.f32 %v12150, %v12207
  %v12267 = vadd.f32 %v12151, %v12209
  %v12268 = vadd.f32 %v12152, %v12211
  %v12269 = vadd.f32 %v12153, %v12213
  %v12270 = vadd.f32 %v12154, %v12211
  %v12271 = vadd.f32 %v12155, %v12213
  %v12272 = vadd.f32 %v12156, %v12211
  %v12273 = vadd.f32 %v12157, %v12213
  %12274 = vrot.lane.b32.xlu0 %v6940, 32
  %v12275 = vpop.permute.xlu0 %12274
  %12276 = vrot.lane.b32.xlu0 %v6942, 32
  %v12277 = vpop.permute.xlu0 %12276
  %12278 = vrot.lane.b32.xlu0 %v6945, 32
  %v12279 = vpop.permute.xlu0 %12278
  %12280 = vrot.lane.b32.xlu0 %v6947, 32
  %v12281 = vpop.permute.xlu0 %12280
  %12282 = vrot.lane.b32.xlu0 %v6950, 32
  %v12283 = vpop.permute.xlu0 %12282
  %12284 = vrot.lane.b32.xlu0 %v6952, 32
  %v12285 = vpop.permute.xlu0 %12284
  %12286 = vrot.lane.b32.xlu0 %v6955, 32
  %v12287 = vpop.permute.xlu0 %12286
  %12288 = vrot.lane.b32.xlu0 %v6957, 32
  %v12289 = vpop.permute.xlu0 %12288
  %12290 = vrot.lane.b32.xlu0 %v6960, 32
  %v12291 = vpop.permute.xlu0 %12290
  %12292 = vrot.lane.b32.xlu0 %v6962, 32
  %v12293 = vpop.permute.xlu0 %12292
  %12294 = vrot.lane.b32.xlu0 %v6965, 32
  %v12295 = vpop.permute.xlu0 %12294
  %12296 = vrot.lane.b32.xlu0 %v6967, 32
  %v12297 = vpop.permute.xlu0 %12296
  %12298 = vrot.lane.b32.xlu0 %v6970, 32
  %v12299 = vpop.permute.xlu0 %12298
  %12300 = vrot.lane.b32.xlu0 %v6972, 32
  %v12301 = vpop.permute.xlu0 %12300
  %12302 = vrot.lane.b32.xlu0 %v6975, 32
  %v12303 = vpop.permute.xlu0 %12302
  %12304 = vrot.lane.b32.xlu0 %v6977, 32
  %v12305 = vpop.permute.xlu0 %12304
  %12306 = vrot.lane.b32.xlu0 %v6980, 32
  %v12307 = vpop.permute.xlu0 %12306
  %12308 = vrot.lane.b32.xlu0 %v6982, 32
  %v12309 = vpop.permute.xlu0 %12308
  %12310 = vrot.lane.b32.xlu0 %v6985, 32
  %v12311 = vpop.permute.xlu0 %12310
  %12312 = vrot.lane.b32.xlu0 %v6987, 32
  %v12313 = vpop.permute.xlu0 %12312
  %12314 = vrot.lane.b32.xlu0 %v7849, 32
  %v12315 = vpop.permute.xlu0 %12314
  %12316 = vrot.lane.b32.xlu0 %v7851, 32
  %v12317 = vpop.permute.xlu0 %12316
  %12318 = vrot.lane.b32.xlu0 %v8769, 32
  %v12319 = vpop.permute.xlu0 %12318
  %12320 = vrot.lane.b32.xlu0 %v8771, 32
  %v12321 = vpop.permute.xlu0 %12320
  %12322 = vrot.lane.b32.xlu0 %v9697, 32
  %v12323 = vpop.permute.xlu0 %12322
  %12324 = vrot.lane.b32.xlu0 %v9699, 32
  %v12325 = vpop.permute.xlu0 %12324
  %12326 = vrot.lane.b32.xlu0 %v6920, 32
  %v12327 = vpop.permute.xlu0 %12326
  %12328 = vrot.lane.b32.xlu0 %v6922, 32
  %v12329 = vpop.permute.xlu0 %12328
  %v12358 = vadd.f32 %v12242, %v12275
  %v12359 = vadd.f32 %v12243, %v12277
  %v12360 = vadd.f32 %v12244, %v12279
  %v12361 = vadd.f32 %v12245, %v12281
  %v12362 = vadd.f32 %v12246, %v12283
  %v12363 = vadd.f32 %v12247, %v12285
  %v12364 = vadd.f32 %v12248, %v12287
  %v12365 = vadd.f32 %v12249, %v12289
  %v12366 = vadd.f32 %v12250, %v12291
  %v12367 = vadd.f32 %v12251, %v12293
  %v12368 = vadd.f32 %v12252, %v12295
  %v12369 = vadd.f32 %v12253, %v12297
  %v12370 = vadd.f32 %v12254, %v12299
  %v12371 = vadd.f32 %v12255, %v12301
  %v12372 = vadd.f32 %v12256, %v12303
  %v12373 = vadd.f32 %v12257, %v12305
  %v12374 = vadd.f32 %v12258, %v12307
  %v12375 = vadd.f32 %v12259, %v12309
  %v12376 = vadd.f32 %v12260, %v12311
  %v12377 = vadd.f32 %v12261, %v12313
  %v12378 = vadd.f32 %v12262, %v12315
  %v12379 = vadd.f32 %v12263, %v12317
  %v12380 = vadd.f32 %v12264, %v12319
  %v12381 = vadd.f32 %v12265, %v12321
  %v12382 = vadd.f32 %v12266, %v12323
  %v12383 = vadd.f32 %v12267, %v12325
  %v12384 = vadd.f32 %v12268, %v12327
  %v12385 = vadd.f32 %v12269, %v12329
  %v12386 = vadd.f32 %v12270, %v12327
  %v12387 = vadd.f32 %v12271, %v12329
  %v12388 = vadd.f32 %v12272, %v12327
  %v12389 = vadd.f32 %v12273, %v12329
  %12390 = vst.msk [vmem:[%s7] sm:$0xff] %vm59, %v12358
  %12391 = vst.msk [vmem:[%s7 + $0x8] sm:$0xff] %vm59, %v12359
  %12392 = vst.msk [vmem:[%s7 + $0x10] sm:$0xff] %vm59, %v12360
  %12393 = vst.msk [vmem:[%s7 + $0x18] sm:$0xff] %vm59, %v12361
  %12394 = vst.msk [vmem:[%s7 + $0x20] sm:$0xff] %vm59, %v12362
  %12395 = vst.msk [vmem:[%s7 + $0x28] sm:$0xff] %vm59, %v12363
  %12396 = vst.msk [vmem:[%s7 + $0x30] sm:$0xff] %vm59, %v12364
  %12397 = vst.msk [vmem:[%s7 + $0x38] sm:$0xff] %vm59, %v12365
  %12398 = vst.msk [vmem:[%s7 + $0x40] sm:$0xff] %vm59, %v12366
  %12399 = vst.msk [vmem:[%s7 + $0x48] sm:$0xff] %vm59, %v12367
  %12400 = vst.msk [vmem:[%s7 + $0x50] sm:$0xff] %vm59, %v12368
  %12401 = vst.msk [vmem:[%s7 + $0x58] sm:$0xff] %vm59, %v12369
  %12402 = vst.msk [vmem:[%s7 + $0x60] sm:$0xff] %vm59, %v12370
  %12403 = vst.msk [vmem:[%s7 + $0x68] sm:$0xff] %vm59, %v12371
  %12404 = vst.msk [vmem:[%s7 + $0x70] sm:$0xff] %vm59, %v12372
  %12405 = vst.msk [vmem:[%s7 + $0x78] sm:$0xff] %vm59, %v12373
  %12406 = vst.msk [vmem:[%s7 + $0x80] sm:$0xff] %vm59, %v12374
  %12407 = vst.msk [vmem:[%s7 + $0x88] sm:$0xff] %vm59, %v12375
  %12408 = vst.msk [vmem:[%s7 + $0x90] sm:$0xff] %vm59, %v12376
  %12409 = vst.msk [vmem:[%s7 + $0x98] sm:$0xff] %vm59, %v12377
  %12410 = vst.msk [vmem:[%s7 + $0xa0] sm:$0xff] %vm59, %v12378
  %12411 = vst.msk [vmem:[%s7 + $0xa8] sm:$0xff] %vm59, %v12379
  %12412 = vst.msk [vmem:[%s7 + $0xb0] sm:$0xff] %vm59, %v12380
  %12413 = vst.msk [vmem:[%s7 + $0xb8] sm:$0xff] %vm59, %v12381
  %12414 = vst.msk [vmem:[%s7 + $0xc0] sm:$0xff] %vm59, %v12382
  %12415 = vst.msk [vmem:[%s7 + $0xc8] sm:$0xff] %vm59, %v12383
  %12416 = vst.msk [vmem:[%s7 + $0xd0] sm:$0xff] %vm59, %v12384
  %12417 = vst.msk [vmem:[%s7 + $0xd8] sm:$0xff] %vm59, %v12385
  %12418 = vst.msk [vmem:[%s7 + $0xe0] sm:$0xff] %vm59, %v12386
  %12419 = vst.msk [vmem:[%s7 + $0xe8] sm:$0xff] %vm59, %v12387
  %12420 = vst.msk [vmem:[%s7 + $0xf0] sm:$0xff] %vm59, %v12388
  %12421 = vst.msk [vmem:[%s7 + $0xf8] sm:$0xff] %vm59, %v12389
  // Predicated region
  $region30: #{automap_ifft.1} parent=0 // pred_check
    _
  $region31: #{automap_ifft.1} parent=0 // pred_check_branch
    %12423 = sbr.rel (0) target = $region33
  $region32: #{automap_ifft.1} parent=0 // pred_region
    _
  $region33: #{automap_ifft.1} parent=0 // pred_fallthru
    _
  // Predicated region
  $region34: #{automap_ifft.1} parent=0 // pred_check
    _
  $region35: #{automap_ifft.1} parent=0 // pred_check_branch
    %12425 = sbr.rel (0) target = $region37
  $region36: #{automap_ifft.1} parent=0 // pred_region
    _
  $region37: #{automap_ifft.1} parent=0 // pred_fallthru
    _

</llo_original>
